<compile_context>
chip_gen: v6e
topology: v6e:2x2x1
jax: 0.10.0
libtpu: 0.0.40
codegen_flags: <defaults>
</compile_context>

<pallas_src>
import jax
import jax.numpy as jnp
from jax import lax
from jax.experimental import pallas as pl
from jax.experimental.pallas import tpu as pltpu

N_FEATURE = 32
N_CLASS = 10
LEAKY_SLOPE = 0.01          # torch.nn.functional.leaky_relu default
KSIZE = 3
DILATIONS = (1, 2, 4, 8, 1)
CONV4_PAD = 3


def _leaky(x):
  return jnp.where(x >= 0.0, x, LEAKY_SLOPE * x)


# ----------------------------------------------------------------------------
# Kernel factory: all geometry is static (python ints baked into the closure).
# Flat layout convention: activation value at spatial (y, x) of a layer lives
# at lane index  p = y * W0 + x  of that layer's (C, L) buffer (W0 = original
# image width).  Because every layer shares the stride W0, a dilated 3x3 tap
# (kh, kw) is the input slab shifted by (kh*W0 + kw)*dilation lanes.
# ----------------------------------------------------------------------------
def _build_can_kernel(cfg):
  W0 = cfg["w0"]
  P1, P2, P3, P4, P5 = cfg["P1"], cfg["P2"], cfg["P3"], cfg["P4"], cfg["P5"]
  L3P, PAD_OFF = cfg["L3P"], cfg["PAD_OFF"]
  ph, pw = cfg["ph"], cfg["pw"]

  def conv_taps(in_ref, w_ref, b_ref, dil, p_out, leaky):
    # 9 accumulating (cout, cin) @ (cin, p_out) MXU matmuls over lane-dense
    # shifted views of the flat input; single (cout, p_out) result.
    cout = w_ref.shape[1]
    acc = jnp.zeros((cout, p_out), jnp.float32)
    for kh in range(KSIZE):
      for kw in range(KSIZE):
        shift = (kh * W0 + kw) * dil
        a_shift = in_ref[:, pl.ds(shift, p_out)]            # (cin, p_out)
        w_tap = w_ref[kh * KSIZE + kw]                       # (cout, cin)
        acc = acc + jnp.dot(w_tap, a_shift,
                            preferred_element_type=jnp.float32)
    acc = acc + b_ref[...]                                   # (cout, 1) bcast
    return _leaky(acc) if leaky else acc

  def kernel(x_ref, w1, b1, w2, b2, w3, b3, w4, b4, w5, b5, mask3_ref,
             out_ref, a1, a2, a3p, a4):
    # ---- conv1 (cin == 1): 9 VPU outer-product MACs on the full slab ------
    nf = w1.shape[0]
    acc1 = jnp.zeros((nf, P1), jnp.float32)
    for kh in range(KSIZE):
      for kw in range(KSIZE):
        tap = kh * KSIZE + kw
        row = x_ref[:, pl.ds((kh * W0 + kw) * DILATIONS[0], P1)]   # (1, P1)
        acc1 = acc1 + w1[:, tap:tap + 1] * row                     # (nf, P1)
    a1[...] = _leaky(acc1 + b1[...])

    # ---- conv2 -------------------------------------------------------------
    a2[...] = conv_taps(a1, w2, b2, DILATIONS[1], P2, True)

    # ---- conv3, with conv4's padding=3 folded in ---------------------------
    # a3p is conv4's zero-padded input in the same stride-W0 flat layout.
    # Interior [PAD_OFF, PAD_OFF+P3) is fully rewritten below (mask3 zeroes
    # the inter-row garbage columns so the pad region stays zero); only the
    # two flat border strips are never written, so zero just those each step
    # (cheap, and safe under per-core scratch with megacore partitioning).
    nz = a3p.shape[0]
    a3p[:, 0:PAD_OFF] = jnp.zeros((nz, PAD_OFF), jnp.float32)
    a3p[:, PAD_OFF + P3:L3P] = jnp.zeros((nz, L3P - PAD_OFF - P3), jnp.float32)
    acc3 = conv_taps(a2, w3, b3, DILATIONS[2], P3, True)
    a3p[:, pl.ds(PAD_OFF, P3)] = acc3 * mask3_ref[...]

    # ---- conv4 -------------------------------------------------------------
    a4[...] = conv_taps(a3p, w4, b4, DILATIONS[3], P4, True)

    # ---- conv5 (no activation), kept in registers --------------------------
    acc5 = conv_taps(a4, w5, b5, DILATIONS[4], P5, False)

    # ---- fused MaxPool2d(2) + final store -----------------------------------
    for py in range(ph):
      for px in range(pw):
        base = (2 * py) * W0 + 2 * px
        m = jnp.maximum(
            jnp.maximum(acc5[:, base:base + 1], acc5[:, base + 1:base + 2]),
            jnp.maximum(acc5[:, base + W0:base + W0 + 1],
                        acc5[:, base + W0 + 1:base + W0 + 2]))
        idx = py * pw + px
        out_ref[:, idx:idx + 1] = m                          # (ncls, 1)

  return kernel


# ----------------------------------------------------------------------------
# Public entry point (takes the PyTorch-style NCHW input).
# ----------------------------------------------------------------------------
@jax.jit
def can_forward(params, x_nchw):
  n, cin, h, w = x_nchw.shape
  assert cin == 1
  # NCHW with C == 1 -> flat (N, 1, H*W): pure reshape, no transpose.
  x = x_nchw.reshape(n, 1, h * w).astype(jnp.float32)

  d1, d2, d3, d4, d5 = DILATIONS
  h1, w1d = h - 2 * d1, w - 2 * d1
  h2, w2d = h1 - 2 * d2, w1d - 2 * d2
  h3, w3d = h2 - 2 * d3, w2d - 2 * d3
  h3p, w3p = h3 + 2 * CONV4_PAD, w3d + 2 * CONV4_PAD
  h4, w4d = h3p - 2 * d4, w3p - 2 * d4
  h5, w5d = h4 - 2 * d5, w4d - 2 * d5
  ph, pw = h5 // 2, w5d // 2

  nf = params["w1"].shape[-1]
  ncls = params["w5"].shape[-1]

  def flat_len(rows, cols):     # flat length needed for a (rows, cols) region
    return (rows - 1) * w + cols

  cfg = dict(
      w0=w,
      P1=flat_len(h1, w1d), P2=flat_len(h2, w2d), P3=flat_len(h3, w3d),
      P4=flat_len(h4, w4d), P5=flat_len(h5, w5d),
      L3P=flat_len(h3p, w3p), PAD_OFF=CONV4_PAD * w + CONV4_PAD,
      ph=ph, pw=pw)

  # Repack weights (tiny, traced once per shape):
  #   conv1: (3,3,1,nf)  -> (nf, 9)      [co, tap]
  #   conv2..5: (3,3,ci,co) -> (9, co, ci)
  def pack(wgt):
    k2, ci, co = KSIZE * KSIZE, wgt.shape[2], wgt.shape[3]
    return jnp.transpose(wgt.astype(jnp.float32).reshape(k2, ci, co), (0, 2, 1))

  w1m = jnp.transpose(params["w1"].astype(jnp.float32).reshape(KSIZE * KSIZE, nf))
  w2m, w3m, w4m, w5m = (pack(params[f"w{i}"]) for i in range(2, 6))
  b = [params[f"b{i}"].reshape(-1, 1).astype(jnp.float32) for i in range(1, 6)]

  # Validity mask for conv3's flat output: zero the inter-row garbage columns
  # so they become the zero padding of conv4's input.
  mask3 = ((jnp.arange(cfg["P3"]) % w) < w3d).astype(jnp.float32)[None, :]

  operands = [x, w1m, b[0], w2m, b[1], w3m, b[2], w4m, b[3], w5m, b[4], mask3]
  in_specs = [pl.BlockSpec((None, 1, h * w), lambda i: (i, 0, 0))]
  for op in operands[1:]:
    zeros = (0,) * op.ndim
    in_specs.append(pl.BlockSpec(op.shape, lambda i, _z=zeros: _z))

  n_pool = ph * pw
  out = pl.pallas_call(
      _build_can_kernel(cfg),
      out_shape=jax.ShapeDtypeStruct((n, ncls, n_pool), jnp.float32),
      grid=(n,),
      in_specs=in_specs,
      out_specs=pl.BlockSpec((None, ncls, n_pool), lambda i: (i, 0, 0)),
      scratch_shapes=[
          pltpu.VMEM((nf, cfg["P1"]), jnp.float32),    # conv1 out (flat)
          pltpu.VMEM((nf, cfg["P2"]), jnp.float32),    # conv2 out (flat)
          pltpu.VMEM((nf, cfg["L3P"]), jnp.float32),   # conv3 out, zero-padded
          pltpu.VMEM((nf, cfg["P4"]), jnp.float32),    # conv4 out (flat)
      ],
      compiler_params=pltpu.CompilerParams(
          dimension_semantics=("parallel",)),
  )(*operands)

  # torch.squeeze semantics: drop all size-1 dims (pooled 1x1; batch if n==1).
  return jnp.squeeze(out.reshape(n, ncls, ph, pw))


# ----------------------------------------------------------------------------
# Parameter init (deterministic, PyTorch Conv2d-style uniform(+-1/sqrt(fan_in))).
# Weights stored HWIO.
# ----------------------------------------------------------------------------
def init_params(key, n_feature=N_FEATURE):
  specs = [(1, n_feature), (n_feature, n_feature), (n_feature, n_feature),
           (n_feature, n_feature), (n_feature, N_CLASS)]
  params = {}
  for i, (ci, co) in enumerate(specs, start=1):
    key, kw_, kb_ = jax.random.split(key, 3)
    bound = 1.0 / ((ci * KSIZE * KSIZE) ** 0.5)
    params[f"w{i}"] = jax.random.uniform(kw_, (KSIZE, KSIZE, ci, co),
                                         jnp.float32, -bound, bound)
    params[f"b{i}"] = jax.random.uniform(kb_, (co,), jnp.float32, -bound, bound)
  return params


# ----------------------------------------------------------------------------
# Pure-JAX reference for correctness checking.
# ----------------------------------------------------------------------------
def can_forward_ref(params, x_nchw):
  x = jnp.transpose(x_nchw, (0, 2, 3, 1)).astype(jnp.float32)

  def conv(y, wgt, bias, dil, pad=0):
    y = lax.conv_general_dilated(
        y, wgt, window_strides=(1, 1), padding=((pad, pad), (pad, pad)),
        rhs_dilation=(dil, dil), dimension_numbers=("NHWC", "HWIO", "NHWC"))
    return y + bias

  x = _leaky(conv(x, params["w1"], params["b1"], 1))
  x = _leaky(conv(x, params["w2"], params["b2"], 2))
  x = _leaky(conv(x, params["w3"], params["b3"], 4))
  x = _leaky(conv(x, params["w4"], params["b4"], 8, pad=CONV4_PAD))
  x = conv(x, params["w5"], params["b5"], 1)
  x = lax.reduce_window(x, -jnp.inf, lax.max, (1, 2, 2, 1), (1, 2, 2, 1),
                        "VALID")
  x = jnp.transpose(x, (0, 3, 1, 2))   # back to NCHW like torch
  return jnp.squeeze(x)


if __name__ == "__main__":
  key = jax.random.PRNGKey(0)
  k_param, k_x = jax.random.split(key)
  params = init_params(k_param)
  # MNIST-like input implied by the architecture: (N, 1, 28, 28) NCHW.
  x = jax.random.normal(k_x, (2, 1, 28, 28), jnp.float32)

  out = jax.block_until_ready(can_forward(params, x))
  ref = jax.block_until_ready(can_forward_ref(params, x))

  assert out.shape == (2, 10), out.shape
  assert jnp.allclose(out, ref, atol=1e-4, rtol=1e-4), (out, ref)
  print("KERNEL_OK")
</pallas_src>

<mosaic_0001>
module attributes {stable_mosaic.version = 11 : i64} {
  func.func @kernel(%arg0: i32, %arg1: memref<1x1x784xf32, #tpu.memory_space<vmem>>, %arg2: memref<32x9xf32, #tpu.memory_space<vmem>>, %arg3: memref<32x1xf32, #tpu.memory_space<vmem>>, %arg4: memref<9x32x32xf32, #tpu.memory_space<vmem>>, %arg5: memref<32x1xf32, #tpu.memory_space<vmem>>, %arg6: memref<9x32x32xf32, #tpu.memory_space<vmem>>, %arg7: memref<32x1xf32, #tpu.memory_space<vmem>>, %arg8: memref<9x32x32xf32, #tpu.memory_space<vmem>>, %arg9: memref<32x1xf32, #tpu.memory_space<vmem>>, %arg10: memref<9x10x32xf32, #tpu.memory_space<vmem>>, %arg11: memref<10x1xf32, #tpu.memory_space<vmem>>, %arg12: memref<1x378xf32, #tpu.memory_space<vmem>>, %arg13: memref<1x10x1xf32, #tpu.memory_space<vmem>>, %arg14: memref<32x726xf32, #tpu.memory_space<vmem>>, %arg15: memref<32x610xf32, #tpu.memory_space<vmem>>, %arg16: memref<32x552xf32, #tpu.memory_space<vmem>>, %arg17: memref<32x88xf32, #tpu.memory_space<vmem>>) attributes {dimension_semantics = [#tpu.dimension_semantics<parallel>], iteration_bounds = array<i64: 2>, scalar_prefetch = 0 : i64, scratch_operands = 4 : i64, tpu.core_type = #tpu.core_type<tc>, window_params = [{transform_indices = @transform_0, window_bounds = array<i64: 1, 1, 784>}, {pipeline_mode = #tpu.pipeline_mode<synchronous>, transform_indices = @transform_1, window_bounds = array<i64: 32, 9>}, {pipeline_mode = #tpu.pipeline_mode<synchronous>, transform_indices = @transform_2, window_bounds = array<i64: 32, 1>}, {pipeline_mode = #tpu.pipeline_mode<synchronous>, transform_indices = @transform_3, window_bounds = array<i64: 9, 32, 32>}, {pipeline_mode = #tpu.pipeline_mode<synchronous>, transform_indices = @transform_4, window_bounds = array<i64: 32, 1>}, {pipeline_mode = #tpu.pipeline_mode<synchronous>, transform_indices = @transform_5, window_bounds = array<i64: 9, 32, 32>}, {pipeline_mode = #tpu.pipeline_mode<synchronous>, transform_indices = @transform_6, window_bounds = array<i64: 32, 1>}, {pipeline_mode = #tpu.pipeline_mode<synchronous>, transform_indices = @transform_7, window_bounds = array<i64: 9, 32, 32>}, {pipeline_mode = #tpu.pipeline_mode<synchronous>, transform_indices = @transform_8, window_bounds = array<i64: 32, 1>}, {pipeline_mode = #tpu.pipeline_mode<synchronous>, transform_indices = @transform_9, window_bounds = array<i64: 9, 10, 32>}, {pipeline_mode = #tpu.pipeline_mode<synchronous>, transform_indices = @transform_10, window_bounds = array<i64: 10, 1>}, {pipeline_mode = #tpu.pipeline_mode<synchronous>, transform_indices = @transform_11, window_bounds = array<i64: 1, 378>}, {transform_indices = @transform_12, window_bounds = array<i64: 1, 10, 1>}]} {
    %cst = arith.constant 0.000000e+00 : f32
    %0 = vector.broadcast %cst : f32 to vector<32x726xf32>
    %c0 = arith.constant 0 : index
    %c0_0 = arith.constant 0 : index
    %c0_1 = arith.constant 0 : index
    %1 = vector.load %arg1[%c0, %c0_0, %c0_1] : memref<1x1x784xf32, #tpu.memory_space<vmem>>, vector<1x1x726xf32>
    %2 = vector.shape_cast %1 : vector<1x1x726xf32> to vector<1x726xf32>
    %c0_2 = arith.constant 0 : index
    %c0_3 = arith.constant 0 : index
    %3 = vector.load %arg2[%c0_2, %c0_3] : memref<32x9xf32, #tpu.memory_space<vmem>>, vector<32x1xf32>
    %4 = vector.broadcast %3 : vector<32x1xf32> to vector<32x726xf32>
    %5 = vector.broadcast %2 : vector<1x726xf32> to vector<32x726xf32>
    %6 = arith.mulf %4, %5 : vector<32x726xf32>
    %7 = arith.addf %0, %6 : vector<32x726xf32>
    %c0_4 = arith.constant 0 : index
    %c0_5 = arith.constant 0 : index
    %c1 = arith.constant 1 : index
    %8 = vector.load %arg1[%c0_4, %c0_5, %c1] : memref<1x1x784xf32, #tpu.memory_space<vmem>>, vector<1x1x726xf32>
    %9 = vector.shape_cast %8 : vector<1x1x726xf32> to vector<1x726xf32>
    %c0_6 = arith.constant 0 : index
    %c1_7 = arith.constant 1 : index
    %10 = vector.load %arg2[%c0_6, %c1_7] : memref<32x9xf32, #tpu.memory_space<vmem>>, vector<32x1xf32>
    %11 = vector.broadcast %10 : vector<32x1xf32> to vector<32x726xf32>
    %12 = vector.broadcast %9 : vector<1x726xf32> to vector<32x726xf32>
    %13 = arith.mulf %11, %12 : vector<32x726xf32>
    %14 = arith.addf %7, %13 : vector<32x726xf32>
    %c0_8 = arith.constant 0 : index
    %c0_9 = arith.constant 0 : index
    %c2 = arith.constant 2 : index
    %15 = vector.load %arg1[%c0_8, %c0_9, %c2] : memref<1x1x784xf32, #tpu.memory_space<vmem>>, vector<1x1x726xf32>
    %16 = vector.shape_cast %15 : vector<1x1x726xf32> to vector<1x726xf32>
    %c0_10 = arith.constant 0 : index
    %c2_11 = arith.constant 2 : index
    %17 = vector.load %arg2[%c0_10, %c2_11] : memref<32x9xf32, #tpu.memory_space<vmem>>, vector<32x1xf32>
    %18 = vector.broadcast %17 : vector<32x1xf32> to vector<32x726xf32>
    %19 = vector.broadcast %16 : vector<1x726xf32> to vector<32x726xf32>
    %20 = arith.mulf %18, %19 : vector<32x726xf32>
    %21 = arith.addf %14, %20 : vector<32x726xf32>
    %c0_12 = arith.constant 0 : index
    %c0_13 = arith.constant 0 : index
    %c28 = arith.constant 28 : index
    %22 = vector.load %arg1[%c0_12, %c0_13, %c28] : memref<1x1x784xf32, #tpu.memory_space<vmem>>, vector<1x1x726xf32>
    %23 = vector.shape_cast %22 : vector<1x1x726xf32> to vector<1x726xf32>
    %c0_14 = arith.constant 0 : index
    %c3 = arith.constant 3 : index
    %24 = vector.load %arg2[%c0_14, %c3] : memref<32x9xf32, #tpu.memory_space<vmem>>, vector<32x1xf32>
    %25 = vector.broadcast %24 : vector<32x1xf32> to vector<32x726xf32>
    %26 = vector.broadcast %23 : vector<1x726xf32> to vector<32x726xf32>
    %27 = arith.mulf %25, %26 : vector<32x726xf32>
    %28 = arith.addf %21, %27 : vector<32x726xf32>
    %c0_15 = arith.constant 0 : index
    %c0_16 = arith.constant 0 : index
    %c29 = arith.constant 29 : index
    %29 = vector.load %arg1[%c0_15, %c0_16, %c29] : memref<1x1x784xf32, #tpu.memory_space<vmem>>, vector<1x1x726xf32>
    %30 = vector.shape_cast %29 : vector<1x1x726xf32> to vector<1x726xf32>
    %c0_17 = arith.constant 0 : index
    %c4 = arith.constant 4 : index
    %31 = vector.load %arg2[%c0_17, %c4] : memref<32x9xf32, #tpu.memory_space<vmem>>, vector<32x1xf32>
    %32 = vector.broadcast %31 : vector<32x1xf32> to vector<32x726xf32>
    %33 = vector.broadcast %30 : vector<1x726xf32> to vector<32x726xf32>
    %34 = arith.mulf %32, %33 : vector<32x726xf32>
    %35 = arith.addf %28, %34 : vector<32x726xf32>
    %c0_18 = arith.constant 0 : index
    %c0_19 = arith.constant 0 : index
    %c30 = arith.constant 30 : index
    %36 = vector.load %arg1[%c0_18, %c0_19, %c30] : memref<1x1x784xf32, #tpu.memory_space<vmem>>, vector<1x1x726xf32>
    %37 = vector.shape_cast %36 : vector<1x1x726xf32> to vector<1x726xf32>
    %c0_20 = arith.constant 0 : index
    %c5 = arith.constant 5 : index
    %38 = vector.load %arg2[%c0_20, %c5] : memref<32x9xf32, #tpu.memory_space<vmem>>, vector<32x1xf32>
    %39 = vector.broadcast %38 : vector<32x1xf32> to vector<32x726xf32>
    %40 = vector.broadcast %37 : vector<1x726xf32> to vector<32x726xf32>
    %41 = arith.mulf %39, %40 : vector<32x726xf32>
    %42 = arith.addf %35, %41 : vector<32x726xf32>
    %c0_21 = arith.constant 0 : index
    %c0_22 = arith.constant 0 : index
    %c56 = arith.constant 56 : index
    %43 = vector.load %arg1[%c0_21, %c0_22, %c56] : memref<1x1x784xf32, #tpu.memory_space<vmem>>, vector<1x1x726xf32>
    %44 = vector.shape_cast %43 : vector<1x1x726xf32> to vector<1x726xf32>
    %c0_23 = arith.constant 0 : index
    %c6 = arith.constant 6 : index
    %45 = vector.load %arg2[%c0_23, %c6] : memref<32x9xf32, #tpu.memory_space<vmem>>, vector<32x1xf32>
    %46 = vector.broadcast %45 : vector<32x1xf32> to vector<32x726xf32>
    %47 = vector.broadcast %44 : vector<1x726xf32> to vector<32x726xf32>
    %48 = arith.mulf %46, %47 : vector<32x726xf32>
    %49 = arith.addf %42, %48 : vector<32x726xf32>
    %c0_24 = arith.constant 0 : index
    %c0_25 = arith.constant 0 : index
    %c57 = arith.constant 57 : index
    %50 = vector.load %arg1[%c0_24, %c0_25, %c57] : memref<1x1x784xf32, #tpu.memory_space<vmem>>, vector<1x1x726xf32>
    %51 = vector.shape_cast %50 : vector<1x1x726xf32> to vector<1x726xf32>
    %c0_26 = arith.constant 0 : index
    %c7 = arith.constant 7 : index
    %52 = vector.load %arg2[%c0_26, %c7] : memref<32x9xf32, #tpu.memory_space<vmem>>, vector<32x1xf32>
    %53 = vector.broadcast %52 : vector<32x1xf32> to vector<32x726xf32>
    %54 = vector.broadcast %51 : vector<1x726xf32> to vector<32x726xf32>
    %55 = arith.mulf %53, %54 : vector<32x726xf32>
    %56 = arith.addf %49, %55 : vector<32x726xf32>
    %c0_27 = arith.constant 0 : index
    %c0_28 = arith.constant 0 : index
    %c58 = arith.constant 58 : index
    %57 = vector.load %arg1[%c0_27, %c0_28, %c58] : memref<1x1x784xf32, #tpu.memory_space<vmem>>, vector<1x1x726xf32>
    %58 = vector.shape_cast %57 : vector<1x1x726xf32> to vector<1x726xf32>
    %c0_29 = arith.constant 0 : index
    %c8 = arith.constant 8 : index
    %59 = vector.load %arg2[%c0_29, %c8] : memref<32x9xf32, #tpu.memory_space<vmem>>, vector<32x1xf32>
    %60 = vector.broadcast %59 : vector<32x1xf32> to vector<32x726xf32>
    %61 = vector.broadcast %58 : vector<1x726xf32> to vector<32x726xf32>
    %62 = arith.mulf %60, %61 : vector<32x726xf32>
    %63 = arith.addf %56, %62 : vector<32x726xf32>
    %c0_30 = arith.constant 0 : index
    %c0_31 = arith.constant 0 : index
    %64 = vector.load %arg3[%c0_30, %c0_31] : memref<32x1xf32, #tpu.memory_space<vmem>>, vector<32x1xf32>
    %65 = vector.broadcast %64 : vector<32x1xf32> to vector<32x726xf32>
    %66 = arith.addf %63, %65 : vector<32x726xf32>
    %cst_32 = arith.constant 0.000000e+00 : f32
    %67 = vector.broadcast %cst_32 : f32 to vector<32x726xf32>
    %68 = arith.cmpf oge, %66, %67 : vector<32x726xf32>
    %cst_33 = arith.constant 0.00999999977 : f32
    %69 = vector.broadcast %cst_33 : f32 to vector<32x726xf32>
    %70 = arith.mulf %69, %66 : vector<32x726xf32>
    %71 = arith.select %68, %66, %70 : vector<32x726xi1>, vector<32x726xf32>
    %c0_34 = arith.constant 0 : index
    %c0_35 = arith.constant 0 : index
    %72 = vector.load %arg14[%c0_34, %c0_35] : memref<32x726xf32, #tpu.memory_space<vmem>>, vector<32x726xf32>
    tpu.vector_store %arg14[%c0_34, %c0_35], %71 {strides = array<i32>} : memref<32x726xf32, #tpu.memory_space<vmem>>, vector<32x726xf32>,
    %cst_36 = arith.constant 0.000000e+00 : f32
    %73 = vector.broadcast %cst_36 : f32 to vector<32x610xf32>
    %c0_37 = arith.constant 0 : index
    %c0_38 = arith.constant 0 : index
    %74 = vector.load %arg14[%c0_37, %c0_38] : memref<32x726xf32, #tpu.memory_space<vmem>>, vector<32x610xf32>
    %c0_39 = arith.constant 0 : index
    %c0_40 = arith.constant 0 : index
    %c0_41 = arith.constant 0 : index
    %75 = vector.load %arg4[%c0_39, %c0_40, %c0_41] : memref<9x32x32xf32, #tpu.memory_space<vmem>>, vector<1x32x32xf32>
    %76 = vector.shape_cast %75 : vector<1x32x32xf32> to vector<32x32xf32>
    %cst_42 = arith.constant dense<0.000000e+00> : vector<32x610xf32>
    %77 = tpu.matmul %76, %74, %cst_42 {dimension_numbers = #tpu.dot_dimension_numbers<[1], [0], [0], [1], [0, 0, 1, 1], [], []>} : vector<32x32xf32>, vector<32x610xf32>, vector<32x610xf32> -> vector<32x610xf32>
    %78 = arith.addf %73, %77 : vector<32x610xf32>
    %c0_43 = arith.constant 0 : index
    %c2_44 = arith.constant 2 : index
    %79 = vector.load %arg14[%c0_43, %c2_44] : memref<32x726xf32, #tpu.memory_space<vmem>>, vector<32x610xf32>
    %c1_45 = arith.constant 1 : index
    %c0_46 = arith.constant 0 : index
    %c0_47 = arith.constant 0 : index
    %80 = vector.load %arg4[%c1_45, %c0_46, %c0_47] : memref<9x32x32xf32, #tpu.memory_space<vmem>>, vector<1x32x32xf32>
    %81 = vector.shape_cast %80 : vector<1x32x32xf32> to vector<32x32xf32>
    %cst_48 = arith.constant dense<0.000000e+00> : vector<32x610xf32>
    %82 = tpu.matmul %81, %79, %cst_48 {dimension_numbers = #tpu.dot_dimension_numbers<[1], [0], [0], [1], [0, 0, 1, 1], [], []>} : vector<32x32xf32>, vector<32x610xf32>, vector<32x610xf32> -> vector<32x610xf32>
    %83 = arith.addf %78, %82 : vector<32x610xf32>
    %c0_49 = arith.constant 0 : index
    %c4_50 = arith.constant 4 : index
    %84 = vector.load %arg14[%c0_49, %c4_50] : memref<32x726xf32, #tpu.memory_space<vmem>>, vector<32x610xf32>
    %c2_51 = arith.constant 2 : index
    %c0_52 = arith.constant 0 : index
    %c0_53 = arith.constant 0 : index
    %85 = vector.load %arg4[%c2_51, %c0_52, %c0_53] : memref<9x32x32xf32, #tpu.memory_space<vmem>>, vector<1x32x32xf32>
    %86 = vector.shape_cast %85 : vector<1x32x32xf32> to vector<32x32xf32>
    %cst_54 = arith.constant dense<0.000000e+00> : vector<32x610xf32>
    %87 = tpu.matmul %86, %84, %cst_54 {dimension_numbers = #tpu.dot_dimension_numbers<[1], [0], [0], [1], [0, 0, 1, 1], [], []>} : vector<32x32xf32>, vector<32x610xf32>, vector<32x610xf32> -> vector<32x610xf32>
    %88 = arith.addf %83, %87 : vector<32x610xf32>
    %c0_55 = arith.constant 0 : index
    %c56_56 = arith.constant 56 : index
    %89 = vector.load %arg14[%c0_55, %c56_56] : memref<32x726xf32, #tpu.memory_space<vmem>>, vector<32x610xf32>
    %c3_57 = arith.constant 3 : index
    %c0_58 = arith.constant 0 : index
    %c0_59 = arith.constant 0 : index
    %90 = vector.load %arg4[%c3_57, %c0_58, %c0_59] : memref<9x32x32xf32, #tpu.memory_space<vmem>>, vector<1x32x32xf32>
    %91 = vector.shape_cast %90 : vector<1x32x32xf32> to vector<32x32xf32>
    %cst_60 = arith.constant dense<0.000000e+00> : vector<32x610xf32>
    %92 = tpu.matmul %91, %89, %cst_60 {dimension_numbers = #tpu.dot_dimension_numbers<[1], [0], [0], [1], [0, 0, 1, 1], [], []>} : vector<32x32xf32>, vector<32x610xf32>, vector<32x610xf32> -> vector<32x610xf32>
    %93 = arith.addf %88, %92 : vector<32x610xf32>
    %c0_61 = arith.constant 0 : index
    %c58_62 = arith.constant 58 : index
    %94 = vector.load %arg14[%c0_61, %c58_62] : memref<32x726xf32, #tpu.memory_space<vmem>>, vector<32x610xf32>
    %c4_63 = arith.constant 4 : index
    %c0_64 = arith.constant 0 : index
    %c0_65 = arith.constant 0 : index
    %95 = vector.load %arg4[%c4_63, %c0_64, %c0_65] : memref<9x32x32xf32, #tpu.memory_space<vmem>>, vector<1x32x32xf32>
    %96 = vector.shape_cast %95 : vector<1x32x32xf32> to vector<32x32xf32>
    %cst_66 = arith.constant dense<0.000000e+00> : vector<32x610xf32>
    %97 = tpu.matmul %96, %94, %cst_66 {dimension_numbers = #tpu.dot_dimension_numbers<[1], [0], [0], [1], [0, 0, 1, 1], [], []>} : vector<32x32xf32>, vector<32x610xf32>, vector<32x610xf32> -> vector<32x610xf32>
    %98 = arith.addf %93, %97 : vector<32x610xf32>
    %c0_67 = arith.constant 0 : index
    %c60 = arith.constant 60 : index
    %99 = vector.load %arg14[%c0_67, %c60] : memref<32x726xf32, #tpu.memory_space<vmem>>, vector<32x610xf32>
    %c5_68 = arith.constant 5 : index
    %c0_69 = arith.constant 0 : index
    %c0_70 = arith.constant 0 : index
    %100 = vector.load %arg4[%c5_68, %c0_69, %c0_70] : memref<9x32x32xf32, #tpu.memory_space<vmem>>, vector<1x32x32xf32>
    %101 = vector.shape_cast %100 : vector<1x32x32xf32> to vector<32x32xf32>
    %cst_71 = arith.constant dense<0.000000e+00> : vector<32x610xf32>
    %102 = tpu.matmul %101, %99, %cst_71 {dimension_numbers = #tpu.dot_dimension_numbers<[1], [0], [0], [1], [0, 0, 1, 1], [], []>} : vector<32x32xf32>, vector<32x610xf32>, vector<32x610xf32> -> vector<32x610xf32>
    %103 = arith.addf %98, %102 : vector<32x610xf32>
    %c0_72 = arith.constant 0 : index
    %c112 = arith.constant 112 : index
    %104 = vector.load %arg14[%c0_72, %c112] : memref<32x726xf32, #tpu.memory_space<vmem>>, vector<32x610xf32>
    %c6_73 = arith.constant 6 : index
    %c0_74 = arith.constant 0 : index
    %c0_75 = arith.constant 0 : index
    %105 = vector.load %arg4[%c6_73, %c0_74, %c0_75] : memref<9x32x32xf32, #tpu.memory_space<vmem>>, vector<1x32x32xf32>
    %106 = vector.shape_cast %105 : vector<1x32x32xf32> to vector<32x32xf32>
    %cst_76 = arith.constant dense<0.000000e+00> : vector<32x610xf32>
    %107 = tpu.matmul %106, %104, %cst_76 {dimension_numbers = #tpu.dot_dimension_numbers<[1], [0], [0], [1], [0, 0, 1, 1], [], []>} : vector<32x32xf32>, vector<32x610xf32>, vector<32x610xf32> -> vector<32x610xf32>
    %108 = arith.addf %103, %107 : vector<32x610xf32>
    %c0_77 = arith.constant 0 : index
    %c114 = arith.constant 114 : index
    %109 = vector.load %arg14[%c0_77, %c114] : memref<32x726xf32, #tpu.memory_space<vmem>>, vector<32x610xf32>
    %c7_78 = arith.constant 7 : index
    %c0_79 = arith.constant 0 : index
    %c0_80 = arith.constant 0 : index
    %110 = vector.load %arg4[%c7_78, %c0_79, %c0_80] : memref<9x32x32xf32, #tpu.memory_space<vmem>>, vector<1x32x32xf32>
    %111 = vector.shape_cast %110 : vector<1x32x32xf32> to vector<32x32xf32>
    %cst_81 = arith.constant dense<0.000000e+00> : vector<32x610xf32>
    %112 = tpu.matmul %111, %109, %cst_81 {dimension_numbers = #tpu.dot_dimension_numbers<[1], [0], [0], [1], [0, 0, 1, 1], [], []>} : vector<32x32xf32>, vector<32x610xf32>, vector<32x610xf32> -> vector<32x610xf32>
    %113 = arith.addf %108, %112 : vector<32x610xf32>
    %c0_82 = arith.constant 0 : index
    %c116 = arith.constant 116 : index
    %114 = vector.load %arg14[%c0_82, %c116] : memref<32x726xf32, #tpu.memory_space<vmem>>, vector<32x610xf32>
    %c8_83 = arith.constant 8 : index
    %c0_84 = arith.constant 0 : index
    %c0_85 = arith.constant 0 : index
    %115 = vector.load %arg4[%c8_83, %c0_84, %c0_85] : memref<9x32x32xf32, #tpu.memory_space<vmem>>, vector<1x32x32xf32>
    %116 = vector.shape_cast %115 : vector<1x32x32xf32> to vector<32x32xf32>
    %cst_86 = arith.constant dense<0.000000e+00> : vector<32x610xf32>
    %117 = tpu.matmul %116, %114, %cst_86 {dimension_numbers = #tpu.dot_dimension_numbers<[1], [0], [0], [1], [0, 0, 1, 1], [], []>} : vector<32x32xf32>, vector<32x610xf32>, vector<32x610xf32> -> vector<32x610xf32>
    %118 = arith.addf %113, %117 : vector<32x610xf32>
    %c0_87 = arith.constant 0 : index
    %c0_88 = arith.constant 0 : index
    %119 = vector.load %arg5[%c0_87, %c0_88] : memref<32x1xf32, #tpu.memory_space<vmem>>, vector<32x1xf32>
    %120 = vector.broadcast %119 : vector<32x1xf32> to vector<32x610xf32>
    %121 = arith.addf %118, %120 : vector<32x610xf32>
    %cst_89 = arith.constant 0.000000e+00 : f32
    %122 = vector.broadcast %cst_89 : f32 to vector<32x610xf32>
    %123 = arith.cmpf oge, %121, %122 : vector<32x610xf32>
    %cst_90 = arith.constant 0.00999999977 : f32
    %124 = vector.broadcast %cst_90 : f32 to vector<32x610xf32>
    %125 = arith.mulf %124, %121 : vector<32x610xf32>
    %126 = arith.select %123, %121, %125 : vector<32x610xi1>, vector<32x610xf32>
    %c0_91 = arith.constant 0 : index
    %c0_92 = arith.constant 0 : index
    %127 = vector.load %arg15[%c0_91, %c0_92] : memref<32x610xf32, #tpu.memory_space<vmem>>, vector<32x610xf32>
    tpu.vector_store %arg15[%c0_91, %c0_92], %126 {strides = array<i32>} : memref<32x610xf32, #tpu.memory_space<vmem>>, vector<32x610xf32>,
    %cst_93 = arith.constant 0.000000e+00 : f32
    %128 = vector.broadcast %cst_93 : f32 to vector<32x87xf32>
    %c0_94 = arith.constant 0 : index
    %c0_95 = arith.constant 0 : index
    %129 = vector.load %arg16[%c0_94, %c0_95] : memref<32x552xf32, #tpu.memory_space<vmem>>, vector<32x87xf32>
    tpu.vector_store %arg16[%c0_94, %c0_95], %128 {strides = array<i32>} : memref<32x552xf32, #tpu.memory_space<vmem>>, vector<32x87xf32>,
    %cst_96 = arith.constant 0.000000e+00 : f32
    %130 = vector.broadcast %cst_96 : f32 to vector<32x87xf32>
    %c0_97 = arith.constant 0 : index
    %c465 = arith.constant 465 : index
    %131 = vector.load %arg16[%c0_97, %c465] : memref<32x552xf32, #tpu.memory_space<vmem>>, vector<32x87xf32>
    tpu.vector_store %arg16[%c0_97, %c465], %130 {strides = array<i32>} : memref<32x552xf32, #tpu.memory_space<vmem>>, vector<32x87xf32>,
    %cst_98 = arith.constant 0.000000e+00 : f32
    %132 = vector.broadcast %cst_98 : f32 to vector<32x378xf32>
    %c0_99 = arith.constant 0 : index
    %c0_100 = arith.constant 0 : index
    %133 = vector.load %arg15[%c0_99, %c0_100] : memref<32x610xf32, #tpu.memory_space<vmem>>, vector<32x378xf32>
    %c0_101 = arith.constant 0 : index
    %c0_102 = arith.constant 0 : index
    %c0_103 = arith.constant 0 : index
    %134 = vector.load %arg6[%c0_101, %c0_102, %c0_103] : memref<9x32x32xf32, #tpu.memory_space<vmem>>, vector<1x32x32xf32>
    %135 = vector.shape_cast %134 : vector<1x32x32xf32> to vector<32x32xf32>
    %cst_104 = arith.constant dense<0.000000e+00> : vector<32x378xf32>
    %136 = tpu.matmul %135, %133, %cst_104 {dimension_numbers = #tpu.dot_dimension_numbers<[1], [0], [0], [1], [0, 0, 1, 1], [], []>} : vector<32x32xf32>, vector<32x378xf32>, vector<32x378xf32> -> vector<32x378xf32>
    %137 = arith.addf %132, %136 : vector<32x378xf32>
    %c0_105 = arith.constant 0 : index
    %c4_106 = arith.constant 4 : index
    %138 = vector.load %arg15[%c0_105, %c4_106] : memref<32x610xf32, #tpu.memory_space<vmem>>, vector<32x378xf32>
    %c1_107 = arith.constant 1 : index
    %c0_108 = arith.constant 0 : index
    %c0_109 = arith.constant 0 : index
    %139 = vector.load %arg6[%c1_107, %c0_108, %c0_109] : memref<9x32x32xf32, #tpu.memory_space<vmem>>, vector<1x32x32xf32>
    %140 = vector.shape_cast %139 : vector<1x32x32xf32> to vector<32x32xf32>
    %cst_110 = arith.constant dense<0.000000e+00> : vector<32x378xf32>
    %141 = tpu.matmul %140, %138, %cst_110 {dimension_numbers = #tpu.dot_dimension_numbers<[1], [0], [0], [1], [0, 0, 1, 1], [], []>} : vector<32x32xf32>, vector<32x378xf32>, vector<32x378xf32> -> vector<32x378xf32>
    %142 = arith.addf %137, %141 : vector<32x378xf32>
    %c0_111 = arith.constant 0 : index
    %c8_112 = arith.constant 8 : index
    %143 = vector.load %arg15[%c0_111, %c8_112] : memref<32x610xf32, #tpu.memory_space<vmem>>, vector<32x378xf32>
    %c2_113 = arith.constant 2 : index
    %c0_114 = arith.constant 0 : index
    %c0_115 = arith.constant 0 : index
    %144 = vector.load %arg6[%c2_113, %c0_114, %c0_115] : memref<9x32x32xf32, #tpu.memory_space<vmem>>, vector<1x32x32xf32>
    %145 = vector.shape_cast %144 : vector<1x32x32xf32> to vector<32x32xf32>
    %cst_116 = arith.constant dense<0.000000e+00> : vector<32x378xf32>
    %146 = tpu.matmul %145, %143, %cst_116 {dimension_numbers = #tpu.dot_dimension_numbers<[1], [0], [0], [1], [0, 0, 1, 1], [], []>} : vector<32x32xf32>, vector<32x378xf32>, vector<32x378xf32> -> vector<32x378xf32>
    %147 = arith.addf %142, %146 : vector<32x378xf32>
    %c0_117 = arith.constant 0 : index
    %c112_118 = arith.constant 112 : index
    %148 = vector.load %arg15[%c0_117, %c112_118] : memref<32x610xf32, #tpu.memory_space<vmem>>, vector<32x378xf32>
    %c3_119 = arith.constant 3 : index
    %c0_120 = arith.constant 0 : index
    %c0_121 = arith.constant 0 : index
    %149 = vector.load %arg6[%c3_119, %c0_120, %c0_121] : memref<9x32x32xf32, #tpu.memory_space<vmem>>, vector<1x32x32xf32>
    %150 = vector.shape_cast %149 : vector<1x32x32xf32> to vector<32x32xf32>
    %cst_122 = arith.constant dense<0.000000e+00> : vector<32x378xf32>
    %151 = tpu.matmul %150, %148, %cst_122 {dimension_numbers = #tpu.dot_dimension_numbers<[1], [0], [0], [1], [0, 0, 1, 1], [], []>} : vector<32x32xf32>, vector<32x378xf32>, vector<32x378xf32> -> vector<32x378xf32>
    %152 = arith.addf %147, %151 : vector<32x378xf32>
    %c0_123 = arith.constant 0 : index
    %c116_124 = arith.constant 116 : index
    %153 = vector.load %arg15[%c0_123, %c116_124] : memref<32x610xf32, #tpu.memory_space<vmem>>, vector<32x378xf32>
    %c4_125 = arith.constant 4 : index
    %c0_126 = arith.constant 0 : index
    %c0_127 = arith.constant 0 : index
    %154 = vector.load %arg6[%c4_125, %c0_126, %c0_127] : memref<9x32x32xf32, #tpu.memory_space<vmem>>, vector<1x32x32xf32>
    %155 = vector.shape_cast %154 : vector<1x32x32xf32> to vector<32x32xf32>
    %cst_128 = arith.constant dense<0.000000e+00> : vector<32x378xf32>
    %156 = tpu.matmul %155, %153, %cst_128 {dimension_numbers = #tpu.dot_dimension_numbers<[1], [0], [0], [1], [0, 0, 1, 1], [], []>} : vector<32x32xf32>, vector<32x378xf32>, vector<32x378xf32> -> vector<32x378xf32>
    %157 = arith.addf %152, %156 : vector<32x378xf32>
    %c0_129 = arith.constant 0 : index
    %c120 = arith.constant 120 : index
    %158 = vector.load %arg15[%c0_129, %c120] : memref<32x610xf32, #tpu.memory_space<vmem>>, vector<32x378xf32>
    %c5_130 = arith.constant 5 : index
    %c0_131 = arith.constant 0 : index
    %c0_132 = arith.constant 0 : index
    %159 = vector.load %arg6[%c5_130, %c0_131, %c0_132] : memref<9x32x32xf32, #tpu.memory_space<vmem>>, vector<1x32x32xf32>
    %160 = vector.shape_cast %159 : vector<1x32x32xf32> to vector<32x32xf32>
    %cst_133 = arith.constant dense<0.000000e+00> : vector<32x378xf32>
    %161 = tpu.matmul %160, %158, %cst_133 {dimension_numbers = #tpu.dot_dimension_numbers<[1], [0], [0], [1], [0, 0, 1, 1], [], []>} : vector<32x32xf32>, vector<32x378xf32>, vector<32x378xf32> -> vector<32x378xf32>
    %162 = arith.addf %157, %161 : vector<32x378xf32>
    %c0_134 = arith.constant 0 : index
    %c224 = arith.constant 224 : index
    %163 = vector.load %arg15[%c0_134, %c224] : memref<32x610xf32, #tpu.memory_space<vmem>>, vector<32x378xf32>
    %c6_135 = arith.constant 6 : index
    %c0_136 = arith.constant 0 : index
    %c0_137 = arith.constant 0 : index
    %164 = vector.load %arg6[%c6_135, %c0_136, %c0_137] : memref<9x32x32xf32, #tpu.memory_space<vmem>>, vector<1x32x32xf32>
    %165 = vector.shape_cast %164 : vector<1x32x32xf32> to vector<32x32xf32>
    %cst_138 = arith.constant dense<0.000000e+00> : vector<32x378xf32>
    %166 = tpu.matmul %165, %163, %cst_138 {dimension_numbers = #tpu.dot_dimension_numbers<[1], [0], [0], [1], [0, 0, 1, 1], [], []>} : vector<32x32xf32>, vector<32x378xf32>, vector<32x378xf32> -> vector<32x378xf32>
    %167 = arith.addf %162, %166 : vector<32x378xf32>
    %c0_139 = arith.constant 0 : index
    %c228 = arith.constant 228 : index
    %168 = vector.load %arg15[%c0_139, %c228] : memref<32x610xf32, #tpu.memory_space<vmem>>, vector<32x378xf32>
    %c7_140 = arith.constant 7 : index
    %c0_141 = arith.constant 0 : index
    %c0_142 = arith.constant 0 : index
    %169 = vector.load %arg6[%c7_140, %c0_141, %c0_142] : memref<9x32x32xf32, #tpu.memory_space<vmem>>, vector<1x32x32xf32>
    %170 = vector.shape_cast %169 : vector<1x32x32xf32> to vector<32x32xf32>
    %cst_143 = arith.constant dense<0.000000e+00> : vector<32x378xf32>
    %171 = tpu.matmul %170, %168, %cst_143 {dimension_numbers = #tpu.dot_dimension_numbers<[1], [0], [0], [1], [0, 0, 1, 1], [], []>} : vector<32x32xf32>, vector<32x378xf32>, vector<32x378xf32> -> vector<32x378xf32>
    %172 = arith.addf %167, %171 : vector<32x378xf32>
    %c0_144 = arith.constant 0 : index
    %c232 = arith.constant 232 : index
    %173 = vector.load %arg15[%c0_144, %c232] : memref<32x610xf32, #tpu.memory_space<vmem>>, vector<32x378xf32>
    %c8_145 = arith.constant 8 : index
    %c0_146 = arith.constant 0 : index
    %c0_147 = arith.constant 0 : index
    %174 = vector.load %arg6[%c8_145, %c0_146, %c0_147] : memref<9x32x32xf32, #tpu.memory_space<vmem>>, vector<1x32x32xf32>
    %175 = vector.shape_cast %174 : vector<1x32x32xf32> to vector<32x32xf32>
    %cst_148 = arith.constant dense<0.000000e+00> : vector<32x378xf32>
    %176 = tpu.matmul %175, %173, %cst_148 {dimension_numbers = #tpu.dot_dimension_numbers<[1], [0], [0], [1], [0, 0, 1, 1], [], []>} : vector<32x32xf32>, vector<32x378xf32>, vector<32x378xf32> -> vector<32x378xf32>
    %177 = arith.addf %172, %176 : vector<32x378xf32>
    %c0_149 = arith.constant 0 : index
    %c0_150 = arith.constant 0 : index
    %178 = vector.load %arg7[%c0_149, %c0_150] : memref<32x1xf32, #tpu.memory_space<vmem>>, vector<32x1xf32>
    %179 = vector.broadcast %178 : vector<32x1xf32> to vector<32x378xf32>
    %180 = arith.addf %177, %179 : vector<32x378xf32>
    %cst_151 = arith.constant 0.000000e+00 : f32
    %181 = vector.broadcast %cst_151 : f32 to vector<32x378xf32>
    %182 = arith.cmpf oge, %180, %181 : vector<32x378xf32>
    %cst_152 = arith.constant 0.00999999977 : f32
    %183 = vector.broadcast %cst_152 : f32 to vector<32x378xf32>
    %184 = arith.mulf %183, %180 : vector<32x378xf32>
    %185 = arith.select %182, %180, %184 : vector<32x378xi1>, vector<32x378xf32>
    %c0_153 = arith.constant 0 : index
    %c0_154 = arith.constant 0 : index
    %186 = vector.load %arg12[%c0_153, %c0_154] : memref<1x378xf32, #tpu.memory_space<vmem>>, vector<1x378xf32>
    %187 = vector.broadcast %186 : vector<1x378xf32> to vector<32x378xf32>
    %188 = arith.mulf %185, %187 : vector<32x378xf32>
    %c0_155 = arith.constant 0 : index
    %c87 = arith.constant 87 : index
    %189 = vector.load %arg16[%c0_155, %c87] : memref<32x552xf32, #tpu.memory_space<vmem>>, vector<32x378xf32>
    tpu.vector_store %arg16[%c0_155, %c87], %188 {strides = array<i32>} : memref<32x552xf32, #tpu.memory_space<vmem>>, vector<32x378xf32>,
    %cst_156 = arith.constant 0.000000e+00 : f32
    %190 = vector.broadcast %cst_156 : f32 to vector<32x88xf32>
    %c0_157 = arith.constant 0 : index
    %c0_158 = arith.constant 0 : index
    %191 = vector.load %arg16[%c0_157, %c0_158] : memref<32x552xf32, #tpu.memory_space<vmem>>, vector<32x88xf32>
    %c0_159 = arith.constant 0 : index
    %c0_160 = arith.constant 0 : index
    %c0_161 = arith.constant 0 : index
    %192 = vector.load %arg8[%c0_159, %c0_160, %c0_161] : memref<9x32x32xf32, #tpu.memory_space<vmem>>, vector<1x32x32xf32>
    %193 = vector.shape_cast %192 : vector<1x32x32xf32> to vector<32x32xf32>
    %cst_162 = arith.constant dense<0.000000e+00> : vector<32x88xf32>
    %194 = tpu.matmul %193, %191, %cst_162 {dimension_numbers = #tpu.dot_dimension_numbers<[1], [0], [0], [1], [0, 0, 1, 1], [], []>} : vector<32x32xf32>, vector<32x88xf32>, vector<32x88xf32> -> vector<32x88xf32>
    %195 = arith.addf %190, %194 : vector<32x88xf32>
    %c0_163 = arith.constant 0 : index
    %c8_164 = arith.constant 8 : index
    %196 = vector.load %arg16[%c0_163, %c8_164] : memref<32x552xf32, #tpu.memory_space<vmem>>, vector<32x88xf32>
    %c1_165 = arith.constant 1 : index
    %c0_166 = arith.constant 0 : index
    %c0_167 = arith.constant 0 : index
    %197 = vector.load %arg8[%c1_165, %c0_166, %c0_167] : memref<9x32x32xf32, #tpu.memory_space<vmem>>, vector<1x32x32xf32>
    %198 = vector.shape_cast %197 : vector<1x32x32xf32> to vector<32x32xf32>
    %cst_168 = arith.constant dense<0.000000e+00> : vector<32x88xf32>
    %199 = tpu.matmul %198, %196, %cst_168 {dimension_numbers = #tpu.dot_dimension_numbers<[1], [0], [0], [1], [0, 0, 1, 1], [], []>} : vector<32x32xf32>, vector<32x88xf32>, vector<32x88xf32> -> vector<32x88xf32>
    %200 = arith.addf %195, %199 : vector<32x88xf32>
    %c0_169 = arith.constant 0 : index
    %c16 = arith.constant 16 : index
    %201 = vector.load %arg16[%c0_169, %c16] : memref<32x552xf32, #tpu.memory_space<vmem>>, vector<32x88xf32>
    %c2_170 = arith.constant 2 : index
    %c0_171 = arith.constant 0 : index
    %c0_172 = arith.constant 0 : index
    %202 = vector.load %arg8[%c2_170, %c0_171, %c0_172] : memref<9x32x32xf32, #tpu.memory_space<vmem>>, vector<1x32x32xf32>
    %203 = vector.shape_cast %202 : vector<1x32x32xf32> to vector<32x32xf32>
    %cst_173 = arith.constant dense<0.000000e+00> : vector<32x88xf32>
    %204 = tpu.matmul %203, %201, %cst_173 {dimension_numbers = #tpu.dot_dimension_numbers<[1], [0], [0], [1], [0, 0, 1, 1], [], []>} : vector<32x32xf32>, vector<32x88xf32>, vector<32x88xf32> -> vector<32x88xf32>
    %205 = arith.addf %200, %204 : vector<32x88xf32>
    %c0_174 = arith.constant 0 : index
    %c224_175 = arith.constant 224 : index
    %206 = vector.load %arg16[%c0_174, %c224_175] : memref<32x552xf32, #tpu.memory_space<vmem>>, vector<32x88xf32>
    %c3_176 = arith.constant 3 : index
    %c0_177 = arith.constant 0 : index
    %c0_178 = arith.constant 0 : index
    %207 = vector.load %arg8[%c3_176, %c0_177, %c0_178] : memref<9x32x32xf32, #tpu.memory_space<vmem>>, vector<1x32x32xf32>
    %208 = vector.shape_cast %207 : vector<1x32x32xf32> to vector<32x32xf32>
    %cst_179 = arith.constant dense<0.000000e+00> : vector<32x88xf32>
    %209 = tpu.matmul %208, %206, %cst_179 {dimension_numbers = #tpu.dot_dimension_numbers<[1], [0], [0], [1], [0, 0, 1, 1], [], []>} : vector<32x32xf32>, vector<32x88xf32>, vector<32x88xf32> -> vector<32x88xf32>
    %210 = arith.addf %205, %209 : vector<32x88xf32>
    %c0_180 = arith.constant 0 : index
    %c232_181 = arith.constant 232 : index
    %211 = vector.load %arg16[%c0_180, %c232_181] : memref<32x552xf32, #tpu.memory_space<vmem>>, vector<32x88xf32>
    %c4_182 = arith.constant 4 : index
    %c0_183 = arith.constant 0 : index
    %c0_184 = arith.constant 0 : index
    %212 = vector.load %arg8[%c4_182, %c0_183, %c0_184] : memref<9x32x32xf32, #tpu.memory_space<vmem>>, vector<1x32x32xf32>
    %213 = vector.shape_cast %212 : vector<1x32x32xf32> to vector<32x32xf32>
    %cst_185 = arith.constant dense<0.000000e+00> : vector<32x88xf32>
    %214 = tpu.matmul %213, %211, %cst_185 {dimension_numbers = #tpu.dot_dimension_numbers<[1], [0], [0], [1], [0, 0, 1, 1], [], []>} : vector<32x32xf32>, vector<32x88xf32>, vector<32x88xf32> -> vector<32x88xf32>
    %215 = arith.addf %210, %214 : vector<32x88xf32>
    %c0_186 = arith.constant 0 : index
    %c240 = arith.constant 240 : index
    %216 = vector.load %arg16[%c0_186, %c240] : memref<32x552xf32, #tpu.memory_space<vmem>>, vector<32x88xf32>
    %c5_187 = arith.constant 5 : index
    %c0_188 = arith.constant 0 : index
    %c0_189 = arith.constant 0 : index
    %217 = vector.load %arg8[%c5_187, %c0_188, %c0_189] : memref<9x32x32xf32, #tpu.memory_space<vmem>>, vector<1x32x32xf32>
    %218 = vector.shape_cast %217 : vector<1x32x32xf32> to vector<32x32xf32>
    %cst_190 = arith.constant dense<0.000000e+00> : vector<32x88xf32>
    %219 = tpu.matmul %218, %216, %cst_190 {dimension_numbers = #tpu.dot_dimension_numbers<[1], [0], [0], [1], [0, 0, 1, 1], [], []>} : vector<32x32xf32>, vector<32x88xf32>, vector<32x88xf32> -> vector<32x88xf32>
    %220 = arith.addf %215, %219 : vector<32x88xf32>
    %c0_191 = arith.constant 0 : index
    %c448 = arith.constant 448 : index
    %221 = vector.load %arg16[%c0_191, %c448] : memref<32x552xf32, #tpu.memory_space<vmem>>, vector<32x88xf32>
    %c6_192 = arith.constant 6 : index
    %c0_193 = arith.constant 0 : index
    %c0_194 = arith.constant 0 : index
    %222 = vector.load %arg8[%c6_192, %c0_193, %c0_194] : memref<9x32x32xf32, #tpu.memory_space<vmem>>, vector<1x32x32xf32>
    %223 = vector.shape_cast %222 : vector<1x32x32xf32> to vector<32x32xf32>
    %cst_195 = arith.constant dense<0.000000e+00> : vector<32x88xf32>
    %224 = tpu.matmul %223, %221, %cst_195 {dimension_numbers = #tpu.dot_dimension_numbers<[1], [0], [0], [1], [0, 0, 1, 1], [], []>} : vector<32x32xf32>, vector<32x88xf32>, vector<32x88xf32> -> vector<32x88xf32>
    %225 = arith.addf %220, %224 : vector<32x88xf32>
    %c0_196 = arith.constant 0 : index
    %c456 = arith.constant 456 : index
    %226 = vector.load %arg16[%c0_196, %c456] : memref<32x552xf32, #tpu.memory_space<vmem>>, vector<32x88xf32>
    %c7_197 = arith.constant 7 : index
    %c0_198 = arith.constant 0 : index
    %c0_199 = arith.constant 0 : index
    %227 = vector.load %arg8[%c7_197, %c0_198, %c0_199] : memref<9x32x32xf32, #tpu.memory_space<vmem>>, vector<1x32x32xf32>
    %228 = vector.shape_cast %227 : vector<1x32x32xf32> to vector<32x32xf32>
    %cst_200 = arith.constant dense<0.000000e+00> : vector<32x88xf32>
    %229 = tpu.matmul %228, %226, %cst_200 {dimension_numbers = #tpu.dot_dimension_numbers<[1], [0], [0], [1], [0, 0, 1, 1], [], []>} : vector<32x32xf32>, vector<32x88xf32>, vector<32x88xf32> -> vector<32x88xf32>
    %230 = arith.addf %225, %229 : vector<32x88xf32>
    %c0_201 = arith.constant 0 : index
    %c464 = arith.constant 464 : index
    %231 = vector.load %arg16[%c0_201, %c464] : memref<32x552xf32, #tpu.memory_space<vmem>>, vector<32x88xf32>
    %c8_202 = arith.constant 8 : index
    %c0_203 = arith.constant 0 : index
    %c0_204 = arith.constant 0 : index
    %232 = vector.load %arg8[%c8_202, %c0_203, %c0_204] : memref<9x32x32xf32, #tpu.memory_space<vmem>>, vector<1x32x32xf32>
    %233 = vector.shape_cast %232 : vector<1x32x32xf32> to vector<32x32xf32>
    %cst_205 = arith.constant dense<0.000000e+00> : vector<32x88xf32>
    %234 = tpu.matmul %233, %231, %cst_205 {dimension_numbers = #tpu.dot_dimension_numbers<[1], [0], [0], [1], [0, 0, 1, 1], [], []>} : vector<32x32xf32>, vector<32x88xf32>, vector<32x88xf32> -> vector<32x88xf32>
    %235 = arith.addf %230, %234 : vector<32x88xf32>
    %c0_206 = arith.constant 0 : index
    %c0_207 = arith.constant 0 : index
    %236 = vector.load %arg9[%c0_206, %c0_207] : memref<32x1xf32, #tpu.memory_space<vmem>>, vector<32x1xf32>
    %237 = vector.broadcast %236 : vector<32x1xf32> to vector<32x88xf32>
    %238 = arith.addf %235, %237 : vector<32x88xf32>
    %cst_208 = arith.constant 0.000000e+00 : f32
    %239 = vector.broadcast %cst_208 : f32 to vector<32x88xf32>
    %240 = arith.cmpf oge, %238, %239 : vector<32x88xf32>
    %cst_209 = arith.constant 0.00999999977 : f32
    %241 = vector.broadcast %cst_209 : f32 to vector<32x88xf32>
    %242 = arith.mulf %241, %238 : vector<32x88xf32>
    %243 = arith.select %240, %238, %242 : vector<32x88xi1>, vector<32x88xf32>
    %c0_210 = arith.constant 0 : index
    %c0_211 = arith.constant 0 : index
    %244 = vector.load %arg17[%c0_210, %c0_211] : memref<32x88xf32, #tpu.memory_space<vmem>>, vector<32x88xf32>
    tpu.vector_store %arg17[%c0_210, %c0_211], %243 {strides = array<i32>} : memref<32x88xf32, #tpu.memory_space<vmem>>, vector<32x88xf32>,
    %cst_212 = arith.constant 0.000000e+00 : f32
    %245 = vector.broadcast %cst_212 : f32 to vector<10x30xf32>
    %c0_213 = arith.constant 0 : index
    %c0_214 = arith.constant 0 : index
    %246 = vector.load %arg17[%c0_213, %c0_214] : memref<32x88xf32, #tpu.memory_space<vmem>>, vector<32x30xf32>
    %c0_215 = arith.constant 0 : index
    %c0_216 = arith.constant 0 : index
    %c0_217 = arith.constant 0 : index
    %247 = vector.load %arg10[%c0_215, %c0_216, %c0_217] : memref<9x10x32xf32, #tpu.memory_space<vmem>>, vector<1x10x32xf32>
    %248 = vector.shape_cast %247 : vector<1x10x32xf32> to vector<10x32xf32>
    %cst_218 = arith.constant dense<0.000000e+00> : vector<10x30xf32>
    %249 = tpu.matmul %248, %246, %cst_218 {dimension_numbers = #tpu.dot_dimension_numbers<[1], [0], [0], [1], [0, 0, 1, 1], [], []>} : vector<10x32xf32>, vector<32x30xf32>, vector<10x30xf32> -> vector<10x30xf32>
    %250 = arith.addf %245, %249 : vector<10x30xf32>
    %c0_219 = arith.constant 0 : index
    %c1_220 = arith.constant 1 : index
    %251 = vector.load %arg17[%c0_219, %c1_220] : memref<32x88xf32, #tpu.memory_space<vmem>>, vector<32x30xf32>
    %c1_221 = arith.constant 1 : index
    %c0_222 = arith.constant 0 : index
    %c0_223 = arith.constant 0 : index
    %252 = vector.load %arg10[%c1_221, %c0_222, %c0_223] : memref<9x10x32xf32, #tpu.memory_space<vmem>>, vector<1x10x32xf32>
    %253 = vector.shape_cast %252 : vector<1x10x32xf32> to vector<10x32xf32>
    %cst_224 = arith.constant dense<0.000000e+00> : vector<10x30xf32>
    %254 = tpu.matmul %253, %251, %cst_224 {dimension_numbers = #tpu.dot_dimension_numbers<[1], [0], [0], [1], [0, 0, 1, 1], [], []>} : vector<10x32xf32>, vector<32x30xf32>, vector<10x30xf32> -> vector<10x30xf32>
    %255 = arith.addf %250, %254 : vector<10x30xf32>
    %c0_225 = arith.constant 0 : index
    %c2_226 = arith.constant 2 : index
    %256 = vector.load %arg17[%c0_225, %c2_226] : memref<32x88xf32, #tpu.memory_space<vmem>>, vector<32x30xf32>
    %c2_227 = arith.constant 2 : index
    %c0_228 = arith.constant 0 : index
    %c0_229 = arith.constant 0 : index
    %257 = vector.load %arg10[%c2_227, %c0_228, %c0_229] : memref<9x10x32xf32, #tpu.memory_space<vmem>>, vector<1x10x32xf32>
    %258 = vector.shape_cast %257 : vector<1x10x32xf32> to vector<10x32xf32>
    %cst_230 = arith.constant dense<0.000000e+00> : vector<10x30xf32>
    %259 = tpu.matmul %258, %256, %cst_230 {dimension_numbers = #tpu.dot_dimension_numbers<[1], [0], [0], [1], [0, 0, 1, 1], [], []>} : vector<10x32xf32>, vector<32x30xf32>, vector<10x30xf32> -> vector<10x30xf32>
    %260 = arith.addf %255, %259 : vector<10x30xf32>
    %c0_231 = arith.constant 0 : index
    %c28_232 = arith.constant 28 : index
    %261 = vector.load %arg17[%c0_231, %c28_232] : memref<32x88xf32, #tpu.memory_space<vmem>>, vector<32x30xf32>
    %c3_233 = arith.constant 3 : index
    %c0_234 = arith.constant 0 : index
    %c0_235 = arith.constant 0 : index
    %262 = vector.load %arg10[%c3_233, %c0_234, %c0_235] : memref<9x10x32xf32, #tpu.memory_space<vmem>>, vector<1x10x32xf32>
    %263 = vector.shape_cast %262 : vector<1x10x32xf32> to vector<10x32xf32>
    %cst_236 = arith.constant dense<0.000000e+00> : vector<10x30xf32>
    %264 = tpu.matmul %263, %261, %cst_236 {dimension_numbers = #tpu.dot_dimension_numbers<[1], [0], [0], [1], [0, 0, 1, 1], [], []>} : vector<10x32xf32>, vector<32x30xf32>, vector<10x30xf32> -> vector<10x30xf32>
    %265 = arith.addf %260, %264 : vector<10x30xf32>
    %c0_237 = arith.constant 0 : index
    %c29_238 = arith.constant 29 : index
    %266 = vector.load %arg17[%c0_237, %c29_238] : memref<32x88xf32, #tpu.memory_space<vmem>>, vector<32x30xf32>
    %c4_239 = arith.constant 4 : index
    %c0_240 = arith.constant 0 : index
    %c0_241 = arith.constant 0 : index
    %267 = vector.load %arg10[%c4_239, %c0_240, %c0_241] : memref<9x10x32xf32, #tpu.memory_space<vmem>>, vector<1x10x32xf32>
    %268 = vector.shape_cast %267 : vector<1x10x32xf32> to vector<10x32xf32>
    %cst_242 = arith.constant dense<0.000000e+00> : vector<10x30xf32>
    %269 = tpu.matmul %268, %266, %cst_242 {dimension_numbers = #tpu.dot_dimension_numbers<[1], [0], [0], [1], [0, 0, 1, 1], [], []>} : vector<10x32xf32>, vector<32x30xf32>, vector<10x30xf32> -> vector<10x30xf32>
    %270 = arith.addf %265, %269 : vector<10x30xf32>
    %c0_243 = arith.constant 0 : index
    %c30_244 = arith.constant 30 : index
    %271 = vector.load %arg17[%c0_243, %c30_244] : memref<32x88xf32, #tpu.memory_space<vmem>>, vector<32x30xf32>
    %c5_245 = arith.constant 5 : index
    %c0_246 = arith.constant 0 : index
    %c0_247 = arith.constant 0 : index
    %272 = vector.load %arg10[%c5_245, %c0_246, %c0_247] : memref<9x10x32xf32, #tpu.memory_space<vmem>>, vector<1x10x32xf32>
    %273 = vector.shape_cast %272 : vector<1x10x32xf32> to vector<10x32xf32>
    %cst_248 = arith.constant dense<0.000000e+00> : vector<10x30xf32>
    %274 = tpu.matmul %273, %271, %cst_248 {dimension_numbers = #tpu.dot_dimension_numbers<[1], [0], [0], [1], [0, 0, 1, 1], [], []>} : vector<10x32xf32>, vector<32x30xf32>, vector<10x30xf32> -> vector<10x30xf32>
    %275 = arith.addf %270, %274 : vector<10x30xf32>
    %c0_249 = arith.constant 0 : index
    %c56_250 = arith.constant 56 : index
    %276 = vector.load %arg17[%c0_249, %c56_250] : memref<32x88xf32, #tpu.memory_space<vmem>>, vector<32x30xf32>
    %c6_251 = arith.constant 6 : index
    %c0_252 = arith.constant 0 : index
    %c0_253 = arith.constant 0 : index
    %277 = vector.load %arg10[%c6_251, %c0_252, %c0_253] : memref<9x10x32xf32, #tpu.memory_space<vmem>>, vector<1x10x32xf32>
    %278 = vector.shape_cast %277 : vector<1x10x32xf32> to vector<10x32xf32>
    %cst_254 = arith.constant dense<0.000000e+00> : vector<10x30xf32>
    %279 = tpu.matmul %278, %276, %cst_254 {dimension_numbers = #tpu.dot_dimension_numbers<[1], [0], [0], [1], [0, 0, 1, 1], [], []>} : vector<10x32xf32>, vector<32x30xf32>, vector<10x30xf32> -> vector<10x30xf32>
    %280 = arith.addf %275, %279 : vector<10x30xf32>
    %c0_255 = arith.constant 0 : index
    %c57_256 = arith.constant 57 : index
    %281 = vector.load %arg17[%c0_255, %c57_256] : memref<32x88xf32, #tpu.memory_space<vmem>>, vector<32x30xf32>
    %c7_257 = arith.constant 7 : index
    %c0_258 = arith.constant 0 : index
    %c0_259 = arith.constant 0 : index
    %282 = vector.load %arg10[%c7_257, %c0_258, %c0_259] : memref<9x10x32xf32, #tpu.memory_space<vmem>>, vector<1x10x32xf32>
    %283 = vector.shape_cast %282 : vector<1x10x32xf32> to vector<10x32xf32>
    %cst_260 = arith.constant dense<0.000000e+00> : vector<10x30xf32>
    %284 = tpu.matmul %283, %281, %cst_260 {dimension_numbers = #tpu.dot_dimension_numbers<[1], [0], [0], [1], [0, 0, 1, 1], [], []>} : vector<10x32xf32>, vector<32x30xf32>, vector<10x30xf32> -> vector<10x30xf32>
    %285 = arith.addf %280, %284 : vector<10x30xf32>
    %c0_261 = arith.constant 0 : index
    %c58_262 = arith.constant 58 : index
    %286 = vector.load %arg17[%c0_261, %c58_262] : memref<32x88xf32, #tpu.memory_space<vmem>>, vector<32x30xf32>
    %c8_263 = arith.constant 8 : index
    %c0_264 = arith.constant 0 : index
    %c0_265 = arith.constant 0 : index
    %287 = vector.load %arg10[%c8_263, %c0_264, %c0_265] : memref<9x10x32xf32, #tpu.memory_space<vmem>>, vector<1x10x32xf32>
    %288 = vector.shape_cast %287 : vector<1x10x32xf32> to vector<10x32xf32>
    %cst_266 = arith.constant dense<0.000000e+00> : vector<10x30xf32>
    %289 = tpu.matmul %288, %286, %cst_266 {dimension_numbers = #tpu.dot_dimension_numbers<[1], [0], [0], [1], [0, 0, 1, 1], [], []>} : vector<10x32xf32>, vector<32x30xf32>, vector<10x30xf32> -> vector<10x30xf32>
    %290 = arith.addf %285, %289 : vector<10x30xf32>
    %c0_267 = arith.constant 0 : index
    %c0_268 = arith.constant 0 : index
    %291 = vector.load %arg11[%c0_267, %c0_268] : memref<10x1xf32, #tpu.memory_space<vmem>>, vector<10x1xf32>
    %292 = vector.broadcast %291 : vector<10x1xf32> to vector<10x30xf32>
    %293 = arith.addf %290, %292 : vector<10x30xf32>
    %294 = vector.extract_strided_slice %293 {offsets = [0, 0], sizes = [10, 1], strides = [1, 1]} : vector<10x30xf32> to vector<10x1xf32>
    %295 = vector.extract_strided_slice %293 {offsets = [0, 1], sizes = [10, 1], strides = [1, 1]} : vector<10x30xf32> to vector<10x1xf32>
    %296 = arith.maximumf %294, %295 : vector<10x1xf32>
    %297 = vector.extract_strided_slice %293 {offsets = [0, 28], sizes = [10, 1], strides = [1, 1]} : vector<10x30xf32> to vector<10x1xf32>
    %298 = vector.extract_strided_slice %293 {offsets = [0, 29], sizes = [10, 1], strides = [1, 1]} : vector<10x30xf32> to vector<10x1xf32>
    %299 = arith.maximumf %297, %298 : vector<10x1xf32>
    %300 = arith.maximumf %296, %299 : vector<10x1xf32>
    %c0_269 = arith.constant 0 : index
    %c0_270 = arith.constant 0 : index
    %c0_271 = arith.constant 0 : index
    %301 = vector.load %arg13[%c0_269, %c0_270, %c0_271] : memref<1x10x1xf32, #tpu.memory_space<vmem>>, vector<1x10x1xf32>
    %302 = vector.shape_cast %301 : vector<1x10x1xf32> to vector<10x1xf32>
    %303 = vector.shape_cast %300 : vector<10x1xf32> to vector<1x10x1xf32>
    tpu.vector_store %arg13[%c0_269, %c0_270, %c0_271], %303 {strides = array<i32>} : memref<1x10x1xf32, #tpu.memory_space<vmem>>, vector<1x10x1xf32>,
    return
  }
  func.func @transform_0(%arg0: i32) -> (i32, i32, i32) {
    %c0_i32 = arith.constant 0 : i32
    %c0_i32_0 = arith.constant 0 : i32
    %c0_i32_1 = arith.constant 0 : i32
    return %arg0, %c0_i32, %c0_i32_0 : i32, i32, i32
  }
  func.func @transform_1(%arg0: i32) -> (i32, i32) {
    %c0_i32 = arith.constant 0 : i32
    %c0_i32_0 = arith.constant 0 : i32
    %c0_i32_1 = arith.constant 0 : i32
    return %c0_i32, %c0_i32_0 : i32, i32
  }
  func.func @transform_2(%arg0: i32) -> (i32, i32) {
    %c0_i32 = arith.constant 0 : i32
    %c0_i32_0 = arith.constant 0 : i32
    %c0_i32_1 = arith.constant 0 : i32
    return %c0_i32, %c0_i32_0 : i32, i32
  }
  func.func @transform_3(%arg0: i32) -> (i32, i32, i32) {
    %c0_i32 = arith.constant 0 : i32
    %c0_i32_0 = arith.constant 0 : i32
    %c0_i32_1 = arith.constant 0 : i32
    %c0_i32_2 = arith.constant 0 : i32
    return %c0_i32, %c0_i32_0, %c0_i32_1 : i32, i32, i32
  }
  func.func @transform_4(%arg0: i32) -> (i32, i32) {
    %c0_i32 = arith.constant 0 : i32
    %c0_i32_0 = arith.constant 0 : i32
    %c0_i32_1 = arith.constant 0 : i32
    return %c0_i32, %c0_i32_0 : i32, i32
  }
  func.func @transform_5(%arg0: i32) -> (i32, i32, i32) {
    %c0_i32 = arith.constant 0 : i32
    %c0_i32_0 = arith.constant 0 : i32
    %c0_i32_1 = arith.constant 0 : i32
    %c0_i32_2 = arith.constant 0 : i32
    return %c0_i32, %c0_i32_0, %c0_i32_1 : i32, i32, i32
  }
  func.func @transform_6(%arg0: i32) -> (i32, i32) {
    %c0_i32 = arith.constant 0 : i32
    %c0_i32_0 = arith.constant 0 : i32
    %c0_i32_1 = arith.constant 0 : i32
    return %c0_i32, %c0_i32_0 : i32, i32
  }
  func.func @transform_7(%arg0: i32) -> (i32, i32, i32) {
    %c0_i32 = arith.constant 0 : i32
    %c0_i32_0 = arith.constant 0 : i32
    %c0_i32_1 = arith.constant 0 : i32
    %c0_i32_2 = arith.constant 0 : i32
    return %c0_i32, %c0_i32_0, %c0_i32_1 : i32, i32, i32
  }
  func.func @transform_8(%arg0: i32) -> (i32, i32) {
    %c0_i32 = arith.constant 0 : i32
    %c0_i32_0 = arith.constant 0 : i32
    %c0_i32_1 = arith.constant 0 : i32
    return %c0_i32, %c0_i32_0 : i32, i32
  }
  func.func @transform_9(%arg0: i32) -> (i32, i32, i32) {
    %c0_i32 = arith.constant 0 : i32
    %c0_i32_0 = arith.constant 0 : i32
    %c0_i32_1 = arith.constant 0 : i32
    %c0_i32_2 = arith.constant 0 : i32
    return %c0_i32, %c0_i32_0, %c0_i32_1 : i32, i32, i32
  }
  func.func @transform_10(%arg0: i32) -> (i32, i32) {
    %c0_i32 = arith.constant 0 : i32
    %c0_i32_0 = arith.constant 0 : i32
    %c0_i32_1 = arith.constant 0 : i32
    return %c0_i32, %c0_i32_0 : i32, i32
  }
  func.func @transform_11(%arg0: i32) -> (i32, i32) {
    %c0_i32 = arith.constant 0 : i32
    %c0_i32_0 = arith.constant 0 : i32
    %c0_i32_1 = arith.constant 0 : i32
    return %c0_i32, %c0_i32_0 : i32, i32
  }
  func.func @transform_12(%arg0: i32) -> (i32, i32, i32) {
    %c0_i32 = arith.constant 0 : i32
    %c0_i32_0 = arith.constant 0 : i32
    %c0_i32_1 = arith.constant 0 : i32
    return %arg0, %c0_i32, %c0_i32_0 : i32, i32, i32
  }
}

</mosaic_0001>

<llo_original>
// kernel: can_forward.1
$region0: #{can_forward.1}
  #allocation0 [shape = 'u32[]', space=smem, size = 0x4, offset = 0x4, fixed_abs, tag = 'smem constant byte address 0x4 - core index']
  #allocation1 [shape = 'u32[144,128]{1,0:T(1,128)}', space=vmem, size = 0x12000, scoped, tag = 'internal scratch']
  #allocation2 [shape = 'f32[32,726]{1,0:T(8,128)}', space=vmem, size = 0x18000, scoped, tag = 'scratch operand']
  #allocation3 [shape = 'f32[32,610]{1,0:T(8,128)}', space=vmem, size = 0x14000, scoped, tag = 'scratch operand']
  #allocation4 [shape = 'f32[32,552]{1,0:T(8,128)}', space=vmem, size = 0x14000, scoped, tag = 'scratch operand']
  #allocation5 [shape = 'f32[32,88]{1,0:T(8,128)}', space=vmem, size = 0x4000, scoped, tag = 'scratch operand']
  %s0 = inlined_call_operand.vmem [shape: f32[2,1,784], index: 0, kind: input, shape index: {}]
  %s1 = inlined_call_operand.vmem [shape: f32[32,9], index: 1, kind: input, shape index: {}]
  %s2 = inlined_call_operand.vmem [shape: f32[32,1], index: 2, kind: input, shape index: {}]
  %s3 = inlined_call_operand.vmem [shape: f32[9,32,32], index: 3, kind: input, shape index: {}]
  %s4 = inlined_call_operand.vmem [shape: f32[32,1], index: 4, kind: input, shape index: {}]
  %s5 = inlined_call_operand.vmem [shape: f32[9,32,32], index: 5, kind: input, shape index: {}]
  %s6 = inlined_call_operand.vmem [shape: f32[32,1], index: 6, kind: input, shape index: {}]
  %s7 = inlined_call_operand.vmem [shape: f32[9,32,32], index: 7, kind: input, shape index: {}]
  %s8 = inlined_call_operand.vmem [shape: f32[32,1], index: 8, kind: input, shape index: {}]
  %s9 = inlined_call_operand.vmem [shape: f32[9,10,32], index: 9, kind: input, shape index: {}]
  %s10 = inlined_call_operand.vmem [shape: f32[10,1], index: 10, kind: input, shape index: {}]
  %s11 = inlined_call_operand.vmem [shape: f32[1,378], index: 11, kind: input, shape index: {}]
  %s12 = inlined_call_operand.vmem [shape: f32[2,10,1], index: 12, kind: output, shape index: {}]
  %s13 = sld [smem:[#allocation0]]
  $region81: #{can_forward.1} parent=0
    _
  %s15 = ssub.s32 1, %s13
  %s16 = scalar_select 0, %s15, %s13
  loop: start=0, step=1, limit=4
  $region2: #{can_forward.1} parent=0 // loop_pre_header
    _
  $region3: #{can_forward.1} parent=0 // loop_header
    %s18 = sphi 0, %s22
    %p19 = scmp.ge.s32.totalorder %s18, 4
    %s28 = sphi 0, %s30
    %s31 = sphi 0, %s28
    %s32 = sphi 0, %s31
    %s48 = sphi 0, %s32
    %s52 = sphi 0, %s52
    %s54 = sphi 0, %s52
    %s55 = sphi 0, %s54
    %s69 = sphi 0, %s55
    %s73 = sphi 0, %s73
    %s75 = sphi 0, %s73
    %s76 = sphi 0, %s75
    %s90 = sphi 0, %s76
    %s94 = sphi 0, %s94
    %s96 = sphi 0, %s94
    %s97 = sphi 0, %s96
    %s111 = sphi 0, %s97
    %s115 = sphi 0, %s115
    %s117 = sphi 0, %s115
    %s118 = sphi 0, %s117
    %s132 = sphi 0, %s118
    %s136 = sphi 0, %s136
    %s138 = sphi 0, %s136
    %s139 = sphi 0, %s138
    %s153 = sphi 0, %s139
    %s157 = sphi 0, %s157
    %s159 = sphi 0, %s157
    %s160 = sphi 0, %s159
    %s174 = sphi 0, %s160
    %s178 = sphi 0, %s178
    %s180 = sphi 0, %s178
    %s181 = sphi 0, %s180
    %s195 = sphi 0, %s181
    %s199 = sphi 0, %s199
    %s201 = sphi 0, %s199
    %s202 = sphi 0, %s201
    %s216 = sphi 0, %s202
    %s220 = sphi 0, %s220
    %s222 = sphi 0, %s220
    %s223 = sphi 0, %s222
    %s237 = sphi 0, %s223
    %s241 = sphi 0, %s241
    %s243 = sphi 0, %s241
    %s244 = sphi 0, %s243
    %s258 = sphi 0, %s244
    %s262 = sphi 0, %s262
    %s264 = sphi 0, %s262
    %s265 = sphi 0, %s264
    %s279 = sphi 0, %s265
    %s285 = sphi 0, %s287
    %s288 = sphi 0, %s285
    %s289 = sphi 0, %s288
    %s305 = sphi 0, %s289
  $region4: #{can_forward.1} parent=0 // loop_header_branch
    %21 = sbr.rel (%p19) target = $region8
  $region5: #{can_forward.1} parent=0 // loop_body
    %s23 = ssub.s32 %s18, 1
    %s24 = ssub.s32 %s18, 2
    %s25 = sadd.s32 %s18, 1
    %s26 = ssub.s32 %s18, %s25
    %p27 = scmp.eq.s32.totalorder %s26, 0
    %s29 = sadd.s32 %s28, 1
    %s30 = scalar_select %p27, %s28, %s29
    %p33 = pneg %p27
    %p34 = scmp.eq.s32.totalorder %s18, 1
    %p35 = por %p33, %p34
    %p36 = scmp.ne.s32.totalorder %s28, %s31
    %p37 = scmp.eq.s32.totalorder %s18, 0
    %p38 = por %p36, %p37
    %p39 = scmp.ne.s32.totalorder %s28, %s31
    %p40 = scmp.eq.s32.totalorder %s23, 1
    %p41 = por %p39, %p40
    %p42 = scmp.ne.s32.totalorder %s31, %s32
    %p43 = scmp.eq.s32.totalorder %s23, 0
    %p44 = por %p42, %p43
    %p45 = scmp.ne.s32.totalorder %s31, %s32
    %p46 = scmp.eq.s32.totalorder %s24, 1
    %p47 = por %p45, %p46
    %p49 = scmp.ne.s32.totalorder %s32, %s48
    %p50 = scmp.eq.s32.totalorder %s24, 0
    %p51 = por %p49, %p50
    %s53 = sadd.s32 %s52, 1
    %p56 = scmp.eq.s32.totalorder %s18, 1
    %p57 = scmp.ne.s32.totalorder %s52, %s54
    %p58 = scmp.eq.s32.totalorder %s18, 0
    %p59 = por %p57, %p58
    %p60 = scmp.ne.s32.totalorder %s52, %s54
    %p61 = scmp.eq.s32.totalorder %s23, 1
    %p62 = por %p60, %p61
    %p63 = scmp.ne.s32.totalorder %s54, %s55
    %p64 = scmp.eq.s32.totalorder %s23, 0
    %p65 = por %p63, %p64
    %p66 = scmp.ne.s32.totalorder %s54, %s55
    %p67 = scmp.eq.s32.totalorder %s24, 1
    %p68 = por %p66, %p67
    %p70 = scmp.ne.s32.totalorder %s55, %s69
    %p71 = scmp.eq.s32.totalorder %s24, 0
    %p72 = por %p70, %p71
    %s74 = sadd.s32 %s73, 1
    %p77 = scmp.eq.s32.totalorder %s18, 1
    %p78 = scmp.ne.s32.totalorder %s73, %s75
    %p79 = scmp.eq.s32.totalorder %s18, 0
    %p80 = por %p78, %p79
    %p81 = scmp.ne.s32.totalorder %s73, %s75
    %p82 = scmp.eq.s32.totalorder %s23, 1
    %p83 = por %p81, %p82
    %p84 = scmp.ne.s32.totalorder %s75, %s76
    %p85 = scmp.eq.s32.totalorder %s23, 0
    %p86 = por %p84, %p85
    %p87 = scmp.ne.s32.totalorder %s75, %s76
    %p88 = scmp.eq.s32.totalorder %s24, 1
    %p89 = por %p87, %p88
    %p91 = scmp.ne.s32.totalorder %s76, %s90
    %p92 = scmp.eq.s32.totalorder %s24, 0
    %p93 = por %p91, %p92
    %s95 = sadd.s32 %s94, 1
    %p98 = scmp.eq.s32.totalorder %s18, 1
    %p99 = scmp.ne.s32.totalorder %s94, %s96
    %p100 = scmp.eq.s32.totalorder %s18, 0
    %p101 = por %p99, %p100
    %p102 = scmp.ne.s32.totalorder %s94, %s96
    %p103 = scmp.eq.s32.totalorder %s23, 1
    %p104 = por %p102, %p103
    %p105 = scmp.ne.s32.totalorder %s96, %s97
    %p106 = scmp.eq.s32.totalorder %s23, 0
    %p107 = por %p105, %p106
    %p108 = scmp.ne.s32.totalorder %s96, %s97
    %p109 = scmp.eq.s32.totalorder %s24, 1
    %p110 = por %p108, %p109
    %p112 = scmp.ne.s32.totalorder %s97, %s111
    %p113 = scmp.eq.s32.totalorder %s24, 0
    %p114 = por %p112, %p113
    %s116 = sadd.s32 %s115, 1
    %p119 = scmp.eq.s32.totalorder %s18, 1
    %p120 = scmp.ne.s32.totalorder %s115, %s117
    %p121 = scmp.eq.s32.totalorder %s18, 0
    %p122 = por %p120, %p121
    %p123 = scmp.ne.s32.totalorder %s115, %s117
    %p124 = scmp.eq.s32.totalorder %s23, 1
    %p125 = por %p123, %p124
    %p126 = scmp.ne.s32.totalorder %s117, %s118
    %p127 = scmp.eq.s32.totalorder %s23, 0
    %p128 = por %p126, %p127
    %p129 = scmp.ne.s32.totalorder %s117, %s118
    %p130 = scmp.eq.s32.totalorder %s24, 1
    %p131 = por %p129, %p130
    %p133 = scmp.ne.s32.totalorder %s118, %s132
    %p134 = scmp.eq.s32.totalorder %s24, 0
    %p135 = por %p133, %p134
    %s137 = sadd.s32 %s136, 1
    %p140 = scmp.eq.s32.totalorder %s18, 1
    %p141 = scmp.ne.s32.totalorder %s136, %s138
    %p142 = scmp.eq.s32.totalorder %s18, 0
    %p143 = por %p141, %p142
    %p144 = scmp.ne.s32.totalorder %s136, %s138
    %p145 = scmp.eq.s32.totalorder %s23, 1
    %p146 = por %p144, %p145
    %p147 = scmp.ne.s32.totalorder %s138, %s139
    %p148 = scmp.eq.s32.totalorder %s23, 0
    %p149 = por %p147, %p148
    %p150 = scmp.ne.s32.totalorder %s138, %s139
    %p151 = scmp.eq.s32.totalorder %s24, 1
    %p152 = por %p150, %p151
    %p154 = scmp.ne.s32.totalorder %s139, %s153
    %p155 = scmp.eq.s32.totalorder %s24, 0
    %p156 = por %p154, %p155
    %s158 = sadd.s32 %s157, 1
    %p161 = scmp.eq.s32.totalorder %s18, 1
    %p162 = scmp.ne.s32.totalorder %s157, %s159
    %p163 = scmp.eq.s32.totalorder %s18, 0
    %p164 = por %p162, %p163
    %p165 = scmp.ne.s32.totalorder %s157, %s159
    %p166 = scmp.eq.s32.totalorder %s23, 1
    %p167 = por %p165, %p166
    %p168 = scmp.ne.s32.totalorder %s159, %s160
    %p169 = scmp.eq.s32.totalorder %s23, 0
    %p170 = por %p168, %p169
    %p171 = scmp.ne.s32.totalorder %s159, %s160
    %p172 = scmp.eq.s32.totalorder %s24, 1
    %p173 = por %p171, %p172
    %p175 = scmp.ne.s32.totalorder %s160, %s174
    %p176 = scmp.eq.s32.totalorder %s24, 0
    %p177 = por %p175, %p176
    %s179 = sadd.s32 %s178, 1
    %p182 = scmp.eq.s32.totalorder %s18, 1
    %p183 = scmp.ne.s32.totalorder %s178, %s180
    %p184 = scmp.eq.s32.totalorder %s18, 0
    %p185 = por %p183, %p184
    %p186 = scmp.ne.s32.totalorder %s178, %s180
    %p187 = scmp.eq.s32.totalorder %s23, 1
    %p188 = por %p186, %p187
    %p189 = scmp.ne.s32.totalorder %s180, %s181
    %p190 = scmp.eq.s32.totalorder %s23, 0
    %p191 = por %p189, %p190
    %p192 = scmp.ne.s32.totalorder %s180, %s181
    %p193 = scmp.eq.s32.totalorder %s24, 1
    %p194 = por %p192, %p193
    %p196 = scmp.ne.s32.totalorder %s181, %s195
    %p197 = scmp.eq.s32.totalorder %s24, 0
    %p198 = por %p196, %p197
    %s200 = sadd.s32 %s199, 1
    %p203 = scmp.eq.s32.totalorder %s18, 1
    %p204 = scmp.ne.s32.totalorder %s199, %s201
    %p205 = scmp.eq.s32.totalorder %s18, 0
    %p206 = por %p204, %p205
    %p207 = scmp.ne.s32.totalorder %s199, %s201
    %p208 = scmp.eq.s32.totalorder %s23, 1
    %p209 = por %p207, %p208
    %p210 = scmp.ne.s32.totalorder %s201, %s202
    %p211 = scmp.eq.s32.totalorder %s23, 0
    %p212 = por %p210, %p211
    %p213 = scmp.ne.s32.totalorder %s201, %s202
    %p214 = scmp.eq.s32.totalorder %s24, 1
    %p215 = por %p213, %p214
    %p217 = scmp.ne.s32.totalorder %s202, %s216
    %p218 = scmp.eq.s32.totalorder %s24, 0
    %p219 = por %p217, %p218
    %s221 = sadd.s32 %s220, 1
    %p224 = scmp.eq.s32.totalorder %s18, 1
    %p225 = scmp.ne.s32.totalorder %s220, %s222
    %p226 = scmp.eq.s32.totalorder %s18, 0
    %p227 = por %p225, %p226
    %p228 = scmp.ne.s32.totalorder %s220, %s222
    %p229 = scmp.eq.s32.totalorder %s23, 1
    %p230 = por %p228, %p229
    %p231 = scmp.ne.s32.totalorder %s222, %s223
    %p232 = scmp.eq.s32.totalorder %s23, 0
    %p233 = por %p231, %p232
    %p234 = scmp.ne.s32.totalorder %s222, %s223
    %p235 = scmp.eq.s32.totalorder %s24, 1
    %p236 = por %p234, %p235
    %p238 = scmp.ne.s32.totalorder %s223, %s237
    %p239 = scmp.eq.s32.totalorder %s24, 0
    %p240 = por %p238, %p239
    %s242 = sadd.s32 %s241, 1
    %p245 = scmp.eq.s32.totalorder %s18, 1
    %p246 = scmp.ne.s32.totalorder %s241, %s243
    %p247 = scmp.eq.s32.totalorder %s18, 0
    %p248 = por %p246, %p247
    %p249 = scmp.ne.s32.totalorder %s241, %s243
    %p250 = scmp.eq.s32.totalorder %s23, 1
    %p251 = por %p249, %p250
    %p252 = scmp.ne.s32.totalorder %s243, %s244
    %p253 = scmp.eq.s32.totalorder %s23, 0
    %p254 = por %p252, %p253
    %p255 = scmp.ne.s32.totalorder %s243, %s244
    %p256 = scmp.eq.s32.totalorder %s24, 1
    %p257 = por %p255, %p256
    %p259 = scmp.ne.s32.totalorder %s244, %s258
    %p260 = scmp.eq.s32.totalorder %s24, 0
    %p261 = por %p259, %p260
    %s263 = sadd.s32 %s262, 1
    %p266 = scmp.eq.s32.totalorder %s18, 1
    %p267 = scmp.ne.s32.totalorder %s262, %s264
    %p268 = scmp.eq.s32.totalorder %s18, 0
    %p269 = por %p267, %p268
    %p270 = scmp.ne.s32.totalorder %s262, %s264
    %p271 = scmp.eq.s32.totalorder %s23, 1
    %p272 = por %p270, %p271
    %p273 = scmp.ne.s32.totalorder %s264, %s265
    %p274 = scmp.eq.s32.totalorder %s23, 0
    %p275 = por %p273, %p274
    %p276 = scmp.ne.s32.totalorder %s264, %s265
    %p277 = scmp.eq.s32.totalorder %s24, 1
    %p278 = por %p276, %p277
    %p280 = scmp.ne.s32.totalorder %s265, %s279
    %p281 = scmp.eq.s32.totalorder %s24, 0
    %p282 = por %p280, %p281
    %s283 = ssub.s32 %s18, %s25
    %p284 = scmp.eq.s32.totalorder %s283, 0
    %s286 = sadd.s32 %s285, 1
    %s287 = scalar_select %p284, %s285, %s286
    %p290 = pneg %p284
    %p291 = scmp.eq.s32.totalorder %s18, 1
    %p292 = por %p290, %p291
    %p293 = scmp.ne.s32.totalorder %s285, %s288
    %p294 = scmp.eq.s32.totalorder %s18, 0
    %p295 = por %p293, %p294
    %p296 = scmp.ne.s32.totalorder %s285, %s288
    %p297 = scmp.eq.s32.totalorder %s23, 1
    %p298 = por %p296, %p297
    %p299 = scmp.ne.s32.totalorder %s288, %s289
    %p300 = scmp.eq.s32.totalorder %s23, 0
    %p301 = por %p299, %p300
    %p302 = scmp.ne.s32.totalorder %s288, %s289
    %p303 = scmp.eq.s32.totalorder %s24, 1
    %p304 = por %p302, %p303
    %p306 = scmp.ne.s32.totalorder %s289, %s305
    %p307 = scmp.eq.s32.totalorder %s24, 0
    %p308 = por %p306, %p307
    %p309 = scmp.le.s32.totalorder 1, %s18
    %p310 = scmp.lt.s32.totalorder %s18, 3
    %p311 = pnand %p309, %p310
    %p312 = pneg %p311
    // Predicated region
    $region9: #{can_forward.1} parent=5 // pred_check
      _
    $region10: #{can_forward.1} parent=5 // pred_check_branch
      %314 = sbr.rel (%p311) target = $region12
    $region11: #{can_forward.1} parent=5 // pred_region
      %s315 = ssub.s32 %s18, 1
      // Predicated region
      $region13: #{can_forward.1} parent=11 // pred_check
        %p316 = pneg %p65
      $region14: #{can_forward.1} parent=11 // pred_check_branch
        %318 = sbr.rel (%p316) target = $region16
      $region15: #{can_forward.1} parent=11 // pred_region
        _
      $region16: #{can_forward.1} parent=11 // pred_fallthru
        _
      // Predicated region
      $region17: #{can_forward.1} parent=11 // pred_check
        %p319 = pneg %p86
      $region18: #{can_forward.1} parent=11 // pred_check_branch
        %321 = sbr.rel (%p319) target = $region20
      $region19: #{can_forward.1} parent=11 // pred_region
        _
      $region20: #{can_forward.1} parent=11 // pred_fallthru
        _
      // Predicated region
      $region21: #{can_forward.1} parent=11 // pred_check
        %p322 = pneg %p107
      $region22: #{can_forward.1} parent=11 // pred_check_branch
        %324 = sbr.rel (%p322) target = $region24
      $region23: #{can_forward.1} parent=11 // pred_region
        _
      $region24: #{can_forward.1} parent=11 // pred_fallthru
        _
      // Predicated region
      $region25: #{can_forward.1} parent=11 // pred_check
        %p325 = pneg %p128
      $region26: #{can_forward.1} parent=11 // pred_check_branch
        %327 = sbr.rel (%p325) target = $region28
      $region27: #{can_forward.1} parent=11 // pred_region
        _
      $region28: #{can_forward.1} parent=11 // pred_fallthru
        _
      // Predicated region
      $region29: #{can_forward.1} parent=11 // pred_check
        %p328 = pneg %p149
      $region30: #{can_forward.1} parent=11 // pred_check_branch
        %330 = sbr.rel (%p328) target = $region32
      $region31: #{can_forward.1} parent=11 // pred_region
        _
      $region32: #{can_forward.1} parent=11 // pred_fallthru
        _
      // Predicated region
      $region33: #{can_forward.1} parent=11 // pred_check
        %p331 = pneg %p170
      $region34: #{can_forward.1} parent=11 // pred_check_branch
        %333 = sbr.rel (%p331) target = $region36
      $region35: #{can_forward.1} parent=11 // pred_region
        _
      $region36: #{can_forward.1} parent=11 // pred_fallthru
        _
      // Predicated region
      $region37: #{can_forward.1} parent=11 // pred_check
        %p334 = pneg %p191
      $region38: #{can_forward.1} parent=11 // pred_check_branch
        %336 = sbr.rel (%p334) target = $region40
      $region39: #{can_forward.1} parent=11 // pred_region
        _
      $region40: #{can_forward.1} parent=11 // pred_fallthru
        _
      // Predicated region
      $region41: #{can_forward.1} parent=11 // pred_check
        %p337 = pneg %p212
      $region42: #{can_forward.1} parent=11 // pred_check_branch
        %339 = sbr.rel (%p337) target = $region44
      $region43: #{can_forward.1} parent=11 // pred_region
        _
      $region44: #{can_forward.1} parent=11 // pred_fallthru
        _
      // Predicated region
      $region45: #{can_forward.1} parent=11 // pred_check
        %p340 = pneg %p233
      $region46: #{can_forward.1} parent=11 // pred_check_branch
        %342 = sbr.rel (%p340) target = $region48
      $region47: #{can_forward.1} parent=11 // pred_region
        _
      $region48: #{can_forward.1} parent=11 // pred_fallthru
        _
      // Predicated region
      $region49: #{can_forward.1} parent=11 // pred_check
        %p343 = pneg %p254
      $region50: #{can_forward.1} parent=11 // pred_check_branch
        %345 = sbr.rel (%p343) target = $region52
      $region51: #{can_forward.1} parent=11 // pred_region
        _
      $region52: #{can_forward.1} parent=11 // pred_fallthru
        _
      // Predicated region
      $region53: #{can_forward.1} parent=11 // pred_check
        %p346 = pneg %p275
      $region54: #{can_forward.1} parent=11 // pred_check_branch
        %348 = sbr.rel (%p346) target = $region56
      $region55: #{can_forward.1} parent=11 // pred_region
        _
      $region56: #{can_forward.1} parent=11 // pred_fallthru
        _
    $region12: #{can_forward.1} parent=5 // pred_fallthru
      _
    %p349 = scmp.lt.s32.totalorder %s18, 2
    // Predicated region
    $region57: #{can_forward.1} parent=5 // pred_check
      %p350 = pneg %p349
    $region58: #{can_forward.1} parent=5 // pred_check_branch
      %352 = sbr.rel (%p350) target = $region60
    $region59: #{can_forward.1} parent=5 // pred_region
      // Predicated region
      $region61: #{can_forward.1} parent=59 // pred_check
        %p353 = pneg %p38
      $region62: #{can_forward.1} parent=59 // pred_check_branch
        %355 = sbr.rel (%p353) target = $region64
      $region63: #{can_forward.1} parent=59 // pred_region
        %p356 = scmp.lt.s32.totalorder %s18, 1
        %s357 = scalar_select %p356, %s18, 1
        %s358 = smul.addr %s357, 7
        %s359 = scalar_lea.vmem %s0, %s358
      $region64: #{can_forward.1} parent=59 // pred_fallthru
        _
    $region60: #{can_forward.1} parent=5 // pred_fallthru
      _
    %p360 = scmp.le.s32.totalorder 1, %s18
    %p361 = scmp.lt.s32.totalorder %s18, 3
    %p362 = pnand %p360, %p361
    %p363 = pneg %p362
    // Predicated region
    $region65: #{can_forward.1} parent=5 // pred_check
      _
    $region66: #{can_forward.1} parent=5 // pred_check_branch
      %365 = sbr.rel (%p362) target = $region68
    $region67: #{can_forward.1} parent=5 // pred_region
      %s366 = ssub.s32 %s18, 1
      %p367 = scmp.lt.s32.totalorder %s23, 1
      %s368 = scalar_select %p367, %s23, 1
      %s369 = smul.addr %s368, 7
      %s370 = scalar_lea.vmem %s0, %s369
      %p371 = pneg %p44
      %p372 = pneg %p41
      %p373 = pneg %p65
      %p374 = pneg %p62
      %p375 = pneg %p86
      %p376 = pneg %p83
      %p377 = pneg %p107
      %p378 = pneg %p104
      %p379 = pneg %p128
      %p380 = pneg %p125
      %p381 = pneg %p149
      %p382 = pneg %p146
      %p383 = pneg %p170
      %p384 = pneg %p167
      %p385 = pneg %p191
      %p386 = pneg %p188
      %p387 = pneg %p212
      %p388 = pneg %p209
      %p389 = pneg %p233
      %p390 = pneg %p230
      %p391 = pneg %p254
      %p392 = pneg %p251
      %p393 = pneg %p275
      %p394 = pneg %p272
      %p395 = pneg %p301
      %p396 = pneg %p298
      %p397 = scmp.lt.s32.totalorder %s23, 1
      %s398 = scalar_select %p397, %s23, 1
      %s399 = smul.addr %s398, 2
      %s400 = smul.addr %s399, 8
      %s401 = scalar_lea.vmem %s12, %s400
      %p402 = scmp.lt.s32.totalorder %s23, 1
      %s403 = scalar_select %p402, %s23, 1
      %s404 = smul.addr %s403, 7
      %s405 = scalar_lea.vmem %s0, %s404
      %p406 = scmp.lt.s32.totalorder %s23, 1
      %s407 = scalar_select %p406, %s23, 1
      %s408 = smul.addr %s407, 2
      %s409 = smul.addr %s408, 8
      %s410 = scalar_lea.vmem %s12, %s409
      %v411 = vld [vmem:[%s405] sm:$0x3f]
      %v412 = vld [vmem:[%s1] sm:$0xff]
      %v413 = vld [vmem:[%s1 + $0x8] sm:$0xff]
      %v414 = vld [vmem:[%s1 + $0x10] sm:$0xff]
      %v415 = vld [vmem:[%s1 + $0x18] sm:$0xff]
      %417 = vset.pattern.permute.xlu0 0
      %418 = vperm.xlu0 %417, %v412
      %v419 = vpop.permute.xlu0 %418
      %422 = vset.pattern.permute.xlu0 0
      %423 = vperm.xlu0 %422, %v413
      %v424 = vpop.permute.xlu0 %423
      %427 = vset.pattern.permute.xlu0 0
      %428 = vperm.xlu0 %427, %v414
      %v429 = vpop.permute.xlu0 %428
      %432 = vset.pattern.permute.xlu0 0
      %433 = vperm.xlu0 %432, %v415
      %v434 = vpop.permute.xlu0 %433
      %v437 = vlaneseq
      %v438 = vshrl.u32 %v437, 7
      %v439 = vsub.s32 0, %v438
      %v440 = vrot.slane %v411, %v439
      %v441 = vlaneseq
      %v442 = vshrl.u32 %v441, 7
      %v443 = vsub.s32 1, %v442
      %v444 = vrot.slane %v411, %v443
      %v445 = vlaneseq
      %v446 = vshrl.u32 %v445, 7
      %v447 = vsub.s32 2, %v446
      %v448 = vrot.slane %v411, %v447
      %v449 = vlaneseq
      %v450 = vshrl.u32 %v449, 7
      %v451 = vsub.s32 3, %v450
      %v452 = vrot.slane %v411, %v451
      %v453 = vlaneseq
      %v454 = vshrl.u32 %v453, 7
      %v455 = vsub.s32 4, %v454
      %v456 = vrot.slane %v411, %v455
      %v457 = vlaneseq
      %v458 = vshrl.u32 %v457, 7
      %v459 = vsub.s32 5, %v458
      %v460 = vrot.slane %v411, %v459
      %v467 = vmul.f32 %v419, %v440
      %v468 = vmul.f32 %v419, %v444
      %v469 = vmul.f32 %v419, %v448
      %v470 = vmul.f32 %v419, %v452
      %v471 = vmul.f32 %v419, %v456
      %v472 = vmul.f32 %v419, %v460
      %v473 = vmul.f32 %v424, %v440
      %v474 = vmul.f32 %v424, %v444
      %v475 = vmul.f32 %v424, %v448
      %v476 = vmul.f32 %v424, %v452
      %v477 = vmul.f32 %v424, %v456
      %v478 = vmul.f32 %v424, %v460
      %v479 = vmul.f32 %v429, %v440
      %v480 = vmul.f32 %v429, %v444
      %v481 = vmul.f32 %v429, %v448
      %v482 = vmul.f32 %v429, %v452
      %v483 = vmul.f32 %v429, %v456
      %v484 = vmul.f32 %v429, %v460
      %v485 = vmul.f32 %v434, %v440
      %v486 = vmul.f32 %v434, %v444
      %v487 = vmul.f32 %v434, %v448
      %v488 = vmul.f32 %v434, %v452
      %v489 = vmul.f32 %v434, %v456
      %v490 = vmul.f32 %v434, %v460
      %v491 = vadd.f32 %v467, 0.0
      %v492 = vadd.f32 %v468, 0.0
      %v493 = vadd.f32 %v469, 0.0
      %v494 = vadd.f32 %v470, 0.0
      %v495 = vadd.f32 %v471, 0.0
      %v496 = vadd.f32 %v472, 0.0
      %v497 = vadd.f32 %v473, 0.0
      %v498 = vadd.f32 %v474, 0.0
      %v499 = vadd.f32 %v475, 0.0
      %v500 = vadd.f32 %v476, 0.0
      %v501 = vadd.f32 %v477, 0.0
      %v502 = vadd.f32 %v478, 0.0
      %v503 = vadd.f32 %v479, 0.0
      %v504 = vadd.f32 %v480, 0.0
      %v505 = vadd.f32 %v481, 0.0
      %v506 = vadd.f32 %v482, 0.0
      %v507 = vadd.f32 %v483, 0.0
      %v508 = vadd.f32 %v484, 0.0
      %v509 = vadd.f32 %v485, 0.0
      %v510 = vadd.f32 %v486, 0.0
      %v511 = vadd.f32 %v487, 0.0
      %v512 = vadd.f32 %v488, 0.0
      %v513 = vadd.f32 %v489, 0.0
      %v514 = vadd.f32 %v490, 0.0
      %515 = vset.pattern.permute.xlu0 1
      %516 = vperm.xlu0 %515, %v412
      %v517 = vpop.permute.xlu0 %516
      %519 = vset.pattern.permute.xlu0 1
      %520 = vperm.xlu0 %519, %v413
      %v521 = vpop.permute.xlu0 %520
      %523 = vset.pattern.permute.xlu0 1
      %524 = vperm.xlu0 %523, %v414
      %v525 = vpop.permute.xlu0 %524
      %527 = vset.pattern.permute.xlu0 1
      %528 = vperm.xlu0 %527, %v415
      %v529 = vpop.permute.xlu0 %528
      %v531 = vmul.f32 %v517, %v440
      %v532 = vmul.f32 %v517, %v444
      %v533 = vmul.f32 %v517, %v448
      %v534 = vmul.f32 %v517, %v452
      %v535 = vmul.f32 %v517, %v456
      %v536 = vmul.f32 %v517, %v460
      %v537 = vmul.f32 %v521, %v440
      %v538 = vmul.f32 %v521, %v444
      %v539 = vmul.f32 %v521, %v448
      %v540 = vmul.f32 %v521, %v452
      %v541 = vmul.f32 %v521, %v456
      %v542 = vmul.f32 %v521, %v460
      %v543 = vmul.f32 %v525, %v440
      %v544 = vmul.f32 %v525, %v444
      %v545 = vmul.f32 %v525, %v448
      %v546 = vmul.f32 %v525, %v452
      %v547 = vmul.f32 %v525, %v456
      %v548 = vmul.f32 %v525, %v460
      %v549 = vmul.f32 %v529, %v440
      %v550 = vmul.f32 %v529, %v444
      %v551 = vmul.f32 %v529, %v448
      %v552 = vmul.f32 %v529, %v452
      %v553 = vmul.f32 %v529, %v456
      %v554 = vmul.f32 %v529, %v460
      %579 = vrot.lane.b32.xlu0 %v531, 127
      %v580 = vpop.permute.xlu0 %579
      %581 = vrot.lane.b32.xlu0 %v532, 127
      %v582 = vpop.permute.xlu0 %581
      %583 = vrot.lane.b32.xlu0 %v533, 127
      %v584 = vpop.permute.xlu0 %583
      %585 = vrot.lane.b32.xlu0 %v534, 127
      %v586 = vpop.permute.xlu0 %585
      %587 = vrot.lane.b32.xlu0 %v535, 127
      %v588 = vpop.permute.xlu0 %587
      %589 = vrot.lane.b32.xlu0 %v536, 127
      %v590 = vpop.permute.xlu0 %589
      %591 = vrot.lane.b32.xlu0 %v537, 127
      %v592 = vpop.permute.xlu0 %591
      %593 = vrot.lane.b32.xlu0 %v538, 127
      %v594 = vpop.permute.xlu0 %593
      %595 = vrot.lane.b32.xlu0 %v539, 127
      %v596 = vpop.permute.xlu0 %595
      %597 = vrot.lane.b32.xlu0 %v540, 127
      %v598 = vpop.permute.xlu0 %597
      %599 = vrot.lane.b32.xlu0 %v541, 127
      %v600 = vpop.permute.xlu0 %599
      %601 = vrot.lane.b32.xlu0 %v542, 127
      %v602 = vpop.permute.xlu0 %601
      %603 = vrot.lane.b32.xlu0 %v543, 127
      %v604 = vpop.permute.xlu0 %603
      %605 = vrot.lane.b32.xlu0 %v544, 127
      %v606 = vpop.permute.xlu0 %605
      %607 = vrot.lane.b32.xlu0 %v545, 127
      %v608 = vpop.permute.xlu0 %607
      %609 = vrot.lane.b32.xlu0 %v546, 127
      %v610 = vpop.permute.xlu0 %609
      %611 = vrot.lane.b32.xlu0 %v547, 127
      %v612 = vpop.permute.xlu0 %611
      %613 = vrot.lane.b32.xlu0 %v548, 127
      %v614 = vpop.permute.xlu0 %613
      %615 = vrot.lane.b32.xlu0 %v549, 127
      %v616 = vpop.permute.xlu0 %615
      %617 = vrot.lane.b32.xlu0 %v550, 127
      %v618 = vpop.permute.xlu0 %617
      %619 = vrot.lane.b32.xlu0 %v551, 127
      %v620 = vpop.permute.xlu0 %619
      %621 = vrot.lane.b32.xlu0 %v552, 127
      %v622 = vpop.permute.xlu0 %621
      %623 = vrot.lane.b32.xlu0 %v553, 127
      %v624 = vpop.permute.xlu0 %623
      %625 = vrot.lane.b32.xlu0 %v554, 127
      %v626 = vpop.permute.xlu0 %625
      %vm627 = vcmask 1039360
      %v628 = vsel %vm627, %v580, %v582
      %v629 = vsel %vm627, %v582, %v584
      %v630 = vsel %vm627, %v584, %v586
      %v631 = vsel %vm627, %v586, %v588
      %v632 = vsel %vm627, %v588, %v590
      %v633 = vsel %vm627, %v592, %v594
      %v634 = vsel %vm627, %v594, %v596
      %v635 = vsel %vm627, %v596, %v598
      %v636 = vsel %vm627, %v598, %v600
      %v637 = vsel %vm627, %v600, %v602
      %v638 = vsel %vm627, %v604, %v606
      %v639 = vsel %vm627, %v606, %v608
      %v640 = vsel %vm627, %v608, %v610
      %v641 = vsel %vm627, %v610, %v612
      %v642 = vsel %vm627, %v612, %v614
      %v643 = vsel %vm627, %v616, %v618
      %v644 = vsel %vm627, %v618, %v620
      %v645 = vsel %vm627, %v620, %v622
      %v646 = vsel %vm627, %v622, %v624
      %v647 = vsel %vm627, %v624, %v626
      %v672 = vadd.f32 %v491, %v628
      %v673 = vadd.f32 %v492, %v629
      %v674 = vadd.f32 %v493, %v630
      %v675 = vadd.f32 %v494, %v631
      %v676 = vadd.f32 %v495, %v632
      %v677 = vadd.f32 %v496, %v590
      %v678 = vadd.f32 %v497, %v633
      %v679 = vadd.f32 %v498, %v634
      %v680 = vadd.f32 %v499, %v635
      %v681 = vadd.f32 %v500, %v636
      %v682 = vadd.f32 %v501, %v637
      %v683 = vadd.f32 %v502, %v602
      %v684 = vadd.f32 %v503, %v638
      %v685 = vadd.f32 %v504, %v639
      %v686 = vadd.f32 %v505, %v640
      %v687 = vadd.f32 %v506, %v641
      %v688 = vadd.f32 %v507, %v642
      %v689 = vadd.f32 %v508, %v614
      %v690 = vadd.f32 %v509, %v643
      %v691 = vadd.f32 %v510, %v644
      %v692 = vadd.f32 %v511, %v645
      %v693 = vadd.f32 %v512, %v646
      %v694 = vadd.f32 %v513, %v647
      %v695 = vadd.f32 %v514, %v626
      %696 = vset.pattern.permute.xlu0 2
      %697 = vperm.xlu0 %696, %v412
      %v698 = vpop.permute.xlu0 %697
      %700 = vset.pattern.permute.xlu0 2
      %701 = vperm.xlu0 %700, %v413
      %v702 = vpop.permute.xlu0 %701
      %704 = vset.pattern.permute.xlu0 2
      %705 = vperm.xlu0 %704, %v414
      %v706 = vpop.permute.xlu0 %705
      %708 = vset.pattern.permute.xlu0 2
      %709 = vperm.xlu0 %708, %v415
      %v710 = vpop.permute.xlu0 %709
      %v712 = vmul.f32 %v698, %v440
      %v713 = vmul.f32 %v698, %v444
      %v714 = vmul.f32 %v698, %v448
      %v715 = vmul.f32 %v698, %v452
      %v716 = vmul.f32 %v698, %v456
      %v717 = vmul.f32 %v698, %v460
      %v718 = vmul.f32 %v702, %v440
      %v719 = vmul.f32 %v702, %v444
      %v720 = vmul.f32 %v702, %v448
      %v721 = vmul.f32 %v702, %v452
      %v722 = vmul.f32 %v702, %v456
      %v723 = vmul.f32 %v702, %v460
      %v724 = vmul.f32 %v706, %v440
      %v725 = vmul.f32 %v706, %v444
      %v726 = vmul.f32 %v706, %v448
      %v727 = vmul.f32 %v706, %v452
      %v728 = vmul.f32 %v706, %v456
      %v729 = vmul.f32 %v706, %v460
      %v730 = vmul.f32 %v710, %v440
      %v731 = vmul.f32 %v710, %v444
      %v732 = vmul.f32 %v710, %v448
      %v733 = vmul.f32 %v710, %v452
      %v734 = vmul.f32 %v710, %v456
      %v735 = vmul.f32 %v710, %v460
      %760 = vrot.lane.b32.xlu0 %v712, 126
      %v761 = vpop.permute.xlu0 %760
      %762 = vrot.lane.b32.xlu0 %v713, 126
      %v763 = vpop.permute.xlu0 %762
      %764 = vrot.lane.b32.xlu0 %v714, 126
      %v765 = vpop.permute.xlu0 %764
      %766 = vrot.lane.b32.xlu0 %v715, 126
      %v767 = vpop.permute.xlu0 %766
      %768 = vrot.lane.b32.xlu0 %v716, 126
      %v769 = vpop.permute.xlu0 %768
      %770 = vrot.lane.b32.xlu0 %v717, 126
      %v771 = vpop.permute.xlu0 %770
      %772 = vrot.lane.b32.xlu0 %v718, 126
      %v773 = vpop.permute.xlu0 %772
      %774 = vrot.lane.b32.xlu0 %v719, 126
      %v775 = vpop.permute.xlu0 %774
      %776 = vrot.lane.b32.xlu0 %v720, 126
      %v777 = vpop.permute.xlu0 %776
      %778 = vrot.lane.b32.xlu0 %v721, 126
      %v779 = vpop.permute.xlu0 %778
      %780 = vrot.lane.b32.xlu0 %v722, 126
      %v781 = vpop.permute.xlu0 %780
      %782 = vrot.lane.b32.xlu0 %v723, 126
      %v783 = vpop.permute.xlu0 %782
      %784 = vrot.lane.b32.xlu0 %v724, 126
      %v785 = vpop.permute.xlu0 %784
      %786 = vrot.lane.b32.xlu0 %v725, 126
      %v787 = vpop.permute.xlu0 %786
      %788 = vrot.lane.b32.xlu0 %v726, 126
      %v789 = vpop.permute.xlu0 %788
      %790 = vrot.lane.b32.xlu0 %v727, 126
      %v791 = vpop.permute.xlu0 %790
      %792 = vrot.lane.b32.xlu0 %v728, 126
      %v793 = vpop.permute.xlu0 %792
      %794 = vrot.lane.b32.xlu0 %v729, 126
      %v795 = vpop.permute.xlu0 %794
      %796 = vrot.lane.b32.xlu0 %v730, 126
      %v797 = vpop.permute.xlu0 %796
      %798 = vrot.lane.b32.xlu0 %v731, 126
      %v799 = vpop.permute.xlu0 %798
      %800 = vrot.lane.b32.xlu0 %v732, 126
      %v801 = vpop.permute.xlu0 %800
      %802 = vrot.lane.b32.xlu0 %v733, 126
      %v803 = vpop.permute.xlu0 %802
      %804 = vrot.lane.b32.xlu0 %v734, 126
      %v805 = vpop.permute.xlu0 %804
      %806 = vrot.lane.b32.xlu0 %v735, 126
      %v807 = vpop.permute.xlu0 %806
      %vm808 = vcmask 1031168
      %v809 = vsel %vm808, %v761, %v763
      %v810 = vsel %vm808, %v763, %v765
      %v811 = vsel %vm808, %v765, %v767
      %v812 = vsel %vm808, %v767, %v769
      %v813 = vsel %vm808, %v769, %v771
      %v814 = vsel %vm808, %v773, %v775
      %v815 = vsel %vm808, %v775, %v777
      %v816 = vsel %vm808, %v777, %v779
      %v817 = vsel %vm808, %v779, %v781
      %v818 = vsel %vm808, %v781, %v783
      %v819 = vsel %vm808, %v785, %v787
      %v820 = vsel %vm808, %v787, %v789
      %v821 = vsel %vm808, %v789, %v791
      %v822 = vsel %vm808, %v791, %v793
      %v823 = vsel %vm808, %v793, %v795
      %v824 = vsel %vm808, %v797, %v799
      %v825 = vsel %vm808, %v799, %v801
      %v826 = vsel %vm808, %v801, %v803
      %v827 = vsel %vm808, %v803, %v805
      %v828 = vsel %vm808, %v805, %v807
      %v853 = vadd.f32 %v672, %v809
      %v854 = vadd.f32 %v673, %v810
      %v855 = vadd.f32 %v674, %v811
      %v856 = vadd.f32 %v675, %v812
      %v857 = vadd.f32 %v676, %v813
      %v858 = vadd.f32 %v677, %v771
      %v859 = vadd.f32 %v678, %v814
      %v860 = vadd.f32 %v679, %v815
      %v861 = vadd.f32 %v680, %v816
      %v862 = vadd.f32 %v681, %v817
      %v863 = vadd.f32 %v682, %v818
      %v864 = vadd.f32 %v683, %v783
      %v865 = vadd.f32 %v684, %v819
      %v866 = vadd.f32 %v685, %v820
      %v867 = vadd.f32 %v686, %v821
      %v868 = vadd.f32 %v687, %v822
      %v869 = vadd.f32 %v688, %v823
      %v870 = vadd.f32 %v689, %v795
      %v871 = vadd.f32 %v690, %v824
      %v872 = vadd.f32 %v691, %v825
      %v873 = vadd.f32 %v692, %v826
      %v874 = vadd.f32 %v693, %v827
      %v875 = vadd.f32 %v694, %v828
      %v876 = vadd.f32 %v695, %v807
      %877 = vset.pattern.permute.xlu0 3
      %878 = vperm.xlu0 %877, %v412
      %v879 = vpop.permute.xlu0 %878
      %881 = vset.pattern.permute.xlu0 3
      %882 = vperm.xlu0 %881, %v413
      %v883 = vpop.permute.xlu0 %882
      %885 = vset.pattern.permute.xlu0 3
      %886 = vperm.xlu0 %885, %v414
      %v887 = vpop.permute.xlu0 %886
      %889 = vset.pattern.permute.xlu0 3
      %890 = vperm.xlu0 %889, %v415
      %v891 = vpop.permute.xlu0 %890
      %v893 = vmul.f32 %v879, %v440
      %v894 = vmul.f32 %v879, %v444
      %v895 = vmul.f32 %v879, %v448
      %v896 = vmul.f32 %v879, %v452
      %v897 = vmul.f32 %v879, %v456
      %v898 = vmul.f32 %v879, %v460
      %v899 = vmul.f32 %v883, %v440
      %v900 = vmul.f32 %v883, %v444
      %v901 = vmul.f32 %v883, %v448
      %v902 = vmul.f32 %v883, %v452
      %v903 = vmul.f32 %v883, %v456
      %v904 = vmul.f32 %v883, %v460
      %v905 = vmul.f32 %v887, %v440
      %v906 = vmul.f32 %v887, %v444
      %v907 = vmul.f32 %v887, %v448
      %v908 = vmul.f32 %v887, %v452
      %v909 = vmul.f32 %v887, %v456
      %v910 = vmul.f32 %v887, %v460
      %v911 = vmul.f32 %v891, %v440
      %v912 = vmul.f32 %v891, %v444
      %v913 = vmul.f32 %v891, %v448
      %v914 = vmul.f32 %v891, %v452
      %v915 = vmul.f32 %v891, %v456
      %v916 = vmul.f32 %v891, %v460
      %941 = vrot.lane.b32.xlu0 %v893, 100
      %v942 = vpop.permute.xlu0 %941
      %943 = vrot.lane.b32.xlu0 %v894, 100
      %v944 = vpop.permute.xlu0 %943
      %945 = vrot.lane.b32.xlu0 %v895, 100
      %v946 = vpop.permute.xlu0 %945
      %947 = vrot.lane.b32.xlu0 %v896, 100
      %v948 = vpop.permute.xlu0 %947
      %949 = vrot.lane.b32.xlu0 %v897, 100
      %v950 = vpop.permute.xlu0 %949
      %951 = vrot.lane.b32.xlu0 %v898, 100
      %v952 = vpop.permute.xlu0 %951
      %953 = vrot.lane.b32.xlu0 %v899, 100
      %v954 = vpop.permute.xlu0 %953
      %955 = vrot.lane.b32.xlu0 %v900, 100
      %v956 = vpop.permute.xlu0 %955
      %957 = vrot.lane.b32.xlu0 %v901, 100
      %v958 = vpop.permute.xlu0 %957
      %959 = vrot.lane.b32.xlu0 %v902, 100
      %v960 = vpop.permute.xlu0 %959
      %961 = vrot.lane.b32.xlu0 %v903, 100
      %v962 = vpop.permute.xlu0 %961
      %963 = vrot.lane.b32.xlu0 %v904, 100
      %v964 = vpop.permute.xlu0 %963
      %965 = vrot.lane.b32.xlu0 %v905, 100
      %v966 = vpop.permute.xlu0 %965
      %967 = vrot.lane.b32.xlu0 %v906, 100
      %v968 = vpop.permute.xlu0 %967
      %969 = vrot.lane.b32.xlu0 %v907, 100
      %v970 = vpop.permute.xlu0 %969
      %971 = vrot.lane.b32.xlu0 %v908, 100
      %v972 = vpop.permute.xlu0 %971
      %973 = vrot.lane.b32.xlu0 %v909, 100
      %v974 = vpop.permute.xlu0 %973
      %975 = vrot.lane.b32.xlu0 %v910, 100
      %v976 = vpop.permute.xlu0 %975
      %977 = vrot.lane.b32.xlu0 %v911, 100
      %v978 = vpop.permute.xlu0 %977
      %979 = vrot.lane.b32.xlu0 %v912, 100
      %v980 = vpop.permute.xlu0 %979
      %981 = vrot.lane.b32.xlu0 %v913, 100
      %v982 = vpop.permute.xlu0 %981
      %983 = vrot.lane.b32.xlu0 %v914, 100
      %v984 = vpop.permute.xlu0 %983
      %985 = vrot.lane.b32.xlu0 %v915, 100
      %v986 = vpop.permute.xlu0 %985
      %987 = vrot.lane.b32.xlu0 %v916, 100
      %v988 = vpop.permute.xlu0 %987
      %vm989 = vcmask 818176
      %v990 = vsel %vm989, %v942, %v944
      %v991 = vsel %vm989, %v944, %v946
      %v992 = vsel %vm989, %v946, %v948
      %v993 = vsel %vm989, %v948, %v950
      %v994 = vsel %vm989, %v950, %v952
      %v995 = vsel %vm989, %v954, %v956
      %v996 = vsel %vm989, %v956, %v958
      %v997 = vsel %vm989, %v958, %v960
      %v998 = vsel %vm989, %v960, %v962
      %v999 = vsel %vm989, %v962, %v964
      %v1000 = vsel %vm989, %v966, %v968
      %v1001 = vsel %vm989, %v968, %v970
      %v1002 = vsel %vm989, %v970, %v972
      %v1003 = vsel %vm989, %v972, %v974
      %v1004 = vsel %vm989, %v974, %v976
      %v1005 = vsel %vm989, %v978, %v980
      %v1006 = vsel %vm989, %v980, %v982
      %v1007 = vsel %vm989, %v982, %v984
      %v1008 = vsel %vm989, %v984, %v986
      %v1009 = vsel %vm989, %v986, %v988
      %v1034 = vadd.f32 %v853, %v990
      %v1035 = vadd.f32 %v854, %v991
      %v1036 = vadd.f32 %v855, %v992
      %v1037 = vadd.f32 %v856, %v993
      %v1038 = vadd.f32 %v857, %v994
      %v1039 = vadd.f32 %v858, %v952
      %v1040 = vadd.f32 %v859, %v995
      %v1041 = vadd.f32 %v860, %v996
      %v1042 = vadd.f32 %v861, %v997
      %v1043 = vadd.f32 %v862, %v998
      %v1044 = vadd.f32 %v863, %v999
      %v1045 = vadd.f32 %v864, %v964
      %v1046 = vadd.f32 %v865, %v1000
      %v1047 = vadd.f32 %v866, %v1001
      %v1048 = vadd.f32 %v867, %v1002
      %v1049 = vadd.f32 %v868, %v1003
      %v1050 = vadd.f32 %v869, %v1004
      %v1051 = vadd.f32 %v870, %v976
      %v1052 = vadd.f32 %v871, %v1005
      %v1053 = vadd.f32 %v872, %v1006
      %v1054 = vadd.f32 %v873, %v1007
      %v1055 = vadd.f32 %v874, %v1008
      %v1056 = vadd.f32 %v875, %v1009
      %v1057 = vadd.f32 %v876, %v988
      %1058 = vset.pattern.permute.xlu0 4
      %1059 = vperm.xlu0 %1058, %v412
      %v1060 = vpop.permute.xlu0 %1059
      %1062 = vset.pattern.permute.xlu0 4
      %1063 = vperm.xlu0 %1062, %v413
      %v1064 = vpop.permute.xlu0 %1063
      %1066 = vset.pattern.permute.xlu0 4
      %1067 = vperm.xlu0 %1066, %v414
      %v1068 = vpop.permute.xlu0 %1067
      %1070 = vset.pattern.permute.xlu0 4
      %1071 = vperm.xlu0 %1070, %v415
      %v1072 = vpop.permute.xlu0 %1071
      %v1074 = vmul.f32 %v1060, %v440
      %v1075 = vmul.f32 %v1060, %v444
      %v1076 = vmul.f32 %v1060, %v448
      %v1077 = vmul.f32 %v1060, %v452
      %v1078 = vmul.f32 %v1060, %v456
      %v1079 = vmul.f32 %v1060, %v460
      %v1080 = vmul.f32 %v1064, %v440
      %v1081 = vmul.f32 %v1064, %v444
      %v1082 = vmul.f32 %v1064, %v448
      %v1083 = vmul.f32 %v1064, %v452
      %v1084 = vmul.f32 %v1064, %v456
      %v1085 = vmul.f32 %v1064, %v460
      %v1086 = vmul.f32 %v1068, %v440
      %v1087 = vmul.f32 %v1068, %v444
      %v1088 = vmul.f32 %v1068, %v448
      %v1089 = vmul.f32 %v1068, %v452
      %v1090 = vmul.f32 %v1068, %v456
      %v1091 = vmul.f32 %v1068, %v460
      %v1092 = vmul.f32 %v1072, %v440
      %v1093 = vmul.f32 %v1072, %v444
      %v1094 = vmul.f32 %v1072, %v448
      %v1095 = vmul.f32 %v1072, %v452
      %v1096 = vmul.f32 %v1072, %v456
      %v1097 = vmul.f32 %v1072, %v460
      %1122 = vrot.lane.b32.xlu0 %v1074, 99
      %v1123 = vpop.permute.xlu0 %1122
      %1124 = vrot.lane.b32.xlu0 %v1075, 99
      %v1125 = vpop.permute.xlu0 %1124
      %1126 = vrot.lane.b32.xlu0 %v1076, 99
      %v1127 = vpop.permute.xlu0 %1126
      %1128 = vrot.lane.b32.xlu0 %v1077, 99
      %v1129 = vpop.permute.xlu0 %1128
      %1130 = vrot.lane.b32.xlu0 %v1078, 99
      %v1131 = vpop.permute.xlu0 %1130
      %1132 = vrot.lane.b32.xlu0 %v1079, 99
      %v1133 = vpop.permute.xlu0 %1132
      %1134 = vrot.lane.b32.xlu0 %v1080, 99
      %v1135 = vpop.permute.xlu0 %1134
      %1136 = vrot.lane.b32.xlu0 %v1081, 99
      %v1137 = vpop.permute.xlu0 %1136
      %1138 = vrot.lane.b32.xlu0 %v1082, 99
      %v1139 = vpop.permute.xlu0 %1138
      %1140 = vrot.lane.b32.xlu0 %v1083, 99
      %v1141 = vpop.permute.xlu0 %1140
      %1142 = vrot.lane.b32.xlu0 %v1084, 99
      %v1143 = vpop.permute.xlu0 %1142
      %1144 = vrot.lane.b32.xlu0 %v1085, 99
      %v1145 = vpop.permute.xlu0 %1144
      %1146 = vrot.lane.b32.xlu0 %v1086, 99
      %v1147 = vpop.permute.xlu0 %1146
      %1148 = vrot.lane.b32.xlu0 %v1087, 99
      %v1149 = vpop.permute.xlu0 %1148
      %1150 = vrot.lane.b32.xlu0 %v1088, 99
      %v1151 = vpop.permute.xlu0 %1150
      %1152 = vrot.lane.b32.xlu0 %v1089, 99
      %v1153 = vpop.permute.xlu0 %1152
      %1154 = vrot.lane.b32.xlu0 %v1090, 99
      %v1155 = vpop.permute.xlu0 %1154
      %1156 = vrot.lane.b32.xlu0 %v1091, 99
      %v1157 = vpop.permute.xlu0 %1156
      %1158 = vrot.lane.b32.xlu0 %v1092, 99
      %v1159 = vpop.permute.xlu0 %1158
      %1160 = vrot.lane.b32.xlu0 %v1093, 99
      %v1161 = vpop.permute.xlu0 %1160
      %1162 = vrot.lane.b32.xlu0 %v1094, 99
      %v1163 = vpop.permute.xlu0 %1162
      %1164 = vrot.lane.b32.xlu0 %v1095, 99
      %v1165 = vpop.permute.xlu0 %1164
      %1166 = vrot.lane.b32.xlu0 %v1096, 99
      %v1167 = vpop.permute.xlu0 %1166
      %1168 = vrot.lane.b32.xlu0 %v1097, 99
      %v1169 = vpop.permute.xlu0 %1168
      %vm1170 = vcmask 809984
      %v1171 = vsel %vm1170, %v1123, %v1125
      %v1172 = vsel %vm1170, %v1125, %v1127
      %v1173 = vsel %vm1170, %v1127, %v1129
      %v1174 = vsel %vm1170, %v1129, %v1131
      %v1175 = vsel %vm1170, %v1131, %v1133
      %v1176 = vsel %vm1170, %v1135, %v1137
      %v1177 = vsel %vm1170, %v1137, %v1139
      %v1178 = vsel %vm1170, %v1139, %v1141
      %v1179 = vsel %vm1170, %v1141, %v1143
      %v1180 = vsel %vm1170, %v1143, %v1145
      %v1181 = vsel %vm1170, %v1147, %v1149
      %v1182 = vsel %vm1170, %v1149, %v1151
      %v1183 = vsel %vm1170, %v1151, %v1153
      %v1184 = vsel %vm1170, %v1153, %v1155
      %v1185 = vsel %vm1170, %v1155, %v1157
      %v1186 = vsel %vm1170, %v1159, %v1161
      %v1187 = vsel %vm1170, %v1161, %v1163
      %v1188 = vsel %vm1170, %v1163, %v1165
      %v1189 = vsel %vm1170, %v1165, %v1167
      %v1190 = vsel %vm1170, %v1167, %v1169
      %v1215 = vadd.f32 %v1034, %v1171
      %v1216 = vadd.f32 %v1035, %v1172
      %v1217 = vadd.f32 %v1036, %v1173
      %v1218 = vadd.f32 %v1037, %v1174
      %v1219 = vadd.f32 %v1038, %v1175
      %v1220 = vadd.f32 %v1039, %v1133
      %v1221 = vadd.f32 %v1040, %v1176
      %v1222 = vadd.f32 %v1041, %v1177
      %v1223 = vadd.f32 %v1042, %v1178
      %v1224 = vadd.f32 %v1043, %v1179
      %v1225 = vadd.f32 %v1044, %v1180
      %v1226 = vadd.f32 %v1045, %v1145
      %v1227 = vadd.f32 %v1046, %v1181
      %v1228 = vadd.f32 %v1047, %v1182
      %v1229 = vadd.f32 %v1048, %v1183
      %v1230 = vadd.f32 %v1049, %v1184
      %v1231 = vadd.f32 %v1050, %v1185
      %v1232 = vadd.f32 %v1051, %v1157
      %v1233 = vadd.f32 %v1052, %v1186
      %v1234 = vadd.f32 %v1053, %v1187
      %v1235 = vadd.f32 %v1054, %v1188
      %v1236 = vadd.f32 %v1055, %v1189
      %v1237 = vadd.f32 %v1056, %v1190
      %v1238 = vadd.f32 %v1057, %v1169
      %1239 = vset.pattern.permute.xlu0 5
      %1240 = vperm.xlu0 %1239, %v412
      %v1241 = vpop.permute.xlu0 %1240
      %1243 = vset.pattern.permute.xlu0 5
      %1244 = vperm.xlu0 %1243, %v413
      %v1245 = vpop.permute.xlu0 %1244
      %1247 = vset.pattern.permute.xlu0 5
      %1248 = vperm.xlu0 %1247, %v414
      %v1249 = vpop.permute.xlu0 %1248
      %1251 = vset.pattern.permute.xlu0 5
      %1252 = vperm.xlu0 %1251, %v415
      %v1253 = vpop.permute.xlu0 %1252
      %v1255 = vmul.f32 %v1241, %v440
      %v1256 = vmul.f32 %v1241, %v444
      %v1257 = vmul.f32 %v1241, %v448
      %v1258 = vmul.f32 %v1241, %v452
      %v1259 = vmul.f32 %v1241, %v456
      %v1260 = vmul.f32 %v1241, %v460
      %v1261 = vmul.f32 %v1245, %v440
      %v1262 = vmul.f32 %v1245, %v444
      %v1263 = vmul.f32 %v1245, %v448
      %v1264 = vmul.f32 %v1245, %v452
      %v1265 = vmul.f32 %v1245, %v456
      %v1266 = vmul.f32 %v1245, %v460
      %v1267 = vmul.f32 %v1249, %v440
      %v1268 = vmul.f32 %v1249, %v444
      %v1269 = vmul.f32 %v1249, %v448
      %v1270 = vmul.f32 %v1249, %v452
      %v1271 = vmul.f32 %v1249, %v456
      %v1272 = vmul.f32 %v1249, %v460
      %v1273 = vmul.f32 %v1253, %v440
      %v1274 = vmul.f32 %v1253, %v444
      %v1275 = vmul.f32 %v1253, %v448
      %v1276 = vmul.f32 %v1253, %v452
      %v1277 = vmul.f32 %v1253, %v456
      %v1278 = vmul.f32 %v1253, %v460
      %1303 = vrot.lane.b32.xlu0 %v1255, 98
      %v1304 = vpop.permute.xlu0 %1303
      %1305 = vrot.lane.b32.xlu0 %v1256, 98
      %v1306 = vpop.permute.xlu0 %1305
      %1307 = vrot.lane.b32.xlu0 %v1257, 98
      %v1308 = vpop.permute.xlu0 %1307
      %1309 = vrot.lane.b32.xlu0 %v1258, 98
      %v1310 = vpop.permute.xlu0 %1309
      %1311 = vrot.lane.b32.xlu0 %v1259, 98
      %v1312 = vpop.permute.xlu0 %1311
      %1313 = vrot.lane.b32.xlu0 %v1260, 98
      %v1314 = vpop.permute.xlu0 %1313
      %1315 = vrot.lane.b32.xlu0 %v1261, 98
      %v1316 = vpop.permute.xlu0 %1315
      %1317 = vrot.lane.b32.xlu0 %v1262, 98
      %v1318 = vpop.permute.xlu0 %1317
      %1319 = vrot.lane.b32.xlu0 %v1263, 98
      %v1320 = vpop.permute.xlu0 %1319
      %1321 = vrot.lane.b32.xlu0 %v1264, 98
      %v1322 = vpop.permute.xlu0 %1321
      %1323 = vrot.lane.b32.xlu0 %v1265, 98
      %v1324 = vpop.permute.xlu0 %1323
      %1325 = vrot.lane.b32.xlu0 %v1266, 98
      %v1326 = vpop.permute.xlu0 %1325
      %1327 = vrot.lane.b32.xlu0 %v1267, 98
      %v1328 = vpop.permute.xlu0 %1327
      %1329 = vrot.lane.b32.xlu0 %v1268, 98
      %v1330 = vpop.permute.xlu0 %1329
      %1331 = vrot.lane.b32.xlu0 %v1269, 98
      %v1332 = vpop.permute.xlu0 %1331
      %1333 = vrot.lane.b32.xlu0 %v1270, 98
      %v1334 = vpop.permute.xlu0 %1333
      %1335 = vrot.lane.b32.xlu0 %v1271, 98
      %v1336 = vpop.permute.xlu0 %1335
      %1337 = vrot.lane.b32.xlu0 %v1272, 98
      %v1338 = vpop.permute.xlu0 %1337
      %1339 = vrot.lane.b32.xlu0 %v1273, 98
      %v1340 = vpop.permute.xlu0 %1339
      %1341 = vrot.lane.b32.xlu0 %v1274, 98
      %v1342 = vpop.permute.xlu0 %1341
      %1343 = vrot.lane.b32.xlu0 %v1275, 98
      %v1344 = vpop.permute.xlu0 %1343
      %1345 = vrot.lane.b32.xlu0 %v1276, 98
      %v1346 = vpop.permute.xlu0 %1345
      %1347 = vrot.lane.b32.xlu0 %v1277, 98
      %v1348 = vpop.permute.xlu0 %1347
      %1349 = vrot.lane.b32.xlu0 %v1278, 98
      %v1350 = vpop.permute.xlu0 %1349
      %vm1351 = vcmask 801792
      %v1352 = vsel %vm1351, %v1304, %v1306
      %v1353 = vsel %vm1351, %v1306, %v1308
      %v1354 = vsel %vm1351, %v1308, %v1310
      %v1355 = vsel %vm1351, %v1310, %v1312
      %v1356 = vsel %vm1351, %v1312, %v1314
      %v1357 = vsel %vm1351, %v1316, %v1318
      %v1358 = vsel %vm1351, %v1318, %v1320
      %v1359 = vsel %vm1351, %v1320, %v1322
      %v1360 = vsel %vm1351, %v1322, %v1324
      %v1361 = vsel %vm1351, %v1324, %v1326
      %v1362 = vsel %vm1351, %v1328, %v1330
      %v1363 = vsel %vm1351, %v1330, %v1332
      %v1364 = vsel %vm1351, %v1332, %v1334
      %v1365 = vsel %vm1351, %v1334, %v1336
      %v1366 = vsel %vm1351, %v1336, %v1338
      %v1367 = vsel %vm1351, %v1340, %v1342
      %v1368 = vsel %vm1351, %v1342, %v1344
      %v1369 = vsel %vm1351, %v1344, %v1346
      %v1370 = vsel %vm1351, %v1346, %v1348
      %v1371 = vsel %vm1351, %v1348, %v1350
      %v1396 = vadd.f32 %v1215, %v1352
      %v1397 = vadd.f32 %v1216, %v1353
      %v1398 = vadd.f32 %v1217, %v1354
      %v1399 = vadd.f32 %v1218, %v1355
      %v1400 = vadd.f32 %v1219, %v1356
      %v1401 = vadd.f32 %v1220, %v1314
      %v1402 = vadd.f32 %v1221, %v1357
      %v1403 = vadd.f32 %v1222, %v1358
      %v1404 = vadd.f32 %v1223, %v1359
      %v1405 = vadd.f32 %v1224, %v1360
      %v1406 = vadd.f32 %v1225, %v1361
      %v1407 = vadd.f32 %v1226, %v1326
      %v1408 = vadd.f32 %v1227, %v1362
      %v1409 = vadd.f32 %v1228, %v1363
      %v1410 = vadd.f32 %v1229, %v1364
      %v1411 = vadd.f32 %v1230, %v1365
      %v1412 = vadd.f32 %v1231, %v1366
      %v1413 = vadd.f32 %v1232, %v1338
      %v1414 = vadd.f32 %v1233, %v1367
      %v1415 = vadd.f32 %v1234, %v1368
      %v1416 = vadd.f32 %v1235, %v1369
      %v1417 = vadd.f32 %v1236, %v1370
      %v1418 = vadd.f32 %v1237, %v1371
      %v1419 = vadd.f32 %v1238, %v1350
      %v1420 = vld [vmem:[%s405] sm:$0x7f]
      %1421 = vset.pattern.permute.xlu0 6
      %1422 = vperm.xlu0 %1421, %v412
      %v1423 = vpop.permute.xlu0 %1422
      %1425 = vset.pattern.permute.xlu0 6
      %1426 = vperm.xlu0 %1425, %v413
      %v1427 = vpop.permute.xlu0 %1426
      %1429 = vset.pattern.permute.xlu0 6
      %1430 = vperm.xlu0 %1429, %v414
      %v1431 = vpop.permute.xlu0 %1430
      %1433 = vset.pattern.permute.xlu0 6
      %1434 = vperm.xlu0 %1433, %v415
      %v1435 = vpop.permute.xlu0 %1434
      %v1438 = vlaneseq
      %v1439 = vshrl.u32 %v1438, 7
      %v1440 = vsub.s32 0, %v1439
      %v1441 = vrot.slane %v1420, %v1440
      %v1442 = vlaneseq
      %v1443 = vshrl.u32 %v1442, 7
      %v1444 = vsub.s32 1, %v1443
      %v1445 = vrot.slane %v1420, %v1444
      %v1446 = vlaneseq
      %v1447 = vshrl.u32 %v1446, 7
      %v1448 = vsub.s32 2, %v1447
      %v1449 = vrot.slane %v1420, %v1448
      %v1450 = vlaneseq
      %v1451 = vshrl.u32 %v1450, 7
      %v1452 = vsub.s32 3, %v1451
      %v1453 = vrot.slane %v1420, %v1452
      %v1454 = vlaneseq
      %v1455 = vshrl.u32 %v1454, 7
      %v1456 = vsub.s32 4, %v1455
      %v1457 = vrot.slane %v1420, %v1456
      %v1458 = vlaneseq
      %v1459 = vshrl.u32 %v1458, 7
      %v1460 = vsub.s32 5, %v1459
      %v1461 = vrot.slane %v1420, %v1460
      %v1462 = vlaneseq
      %v1463 = vshrl.u32 %v1462, 7
      %v1464 = vsub.s32 6, %v1463
      %v1465 = vrot.slane %v1420, %v1464
      %v1473 = vmul.f32 %v1423, %v1441
      %v1474 = vmul.f32 %v1423, %v1445
      %v1475 = vmul.f32 %v1423, %v1449
      %v1476 = vmul.f32 %v1423, %v1453
      %v1477 = vmul.f32 %v1423, %v1457
      %v1478 = vmul.f32 %v1423, %v1461
      %v1479 = vmul.f32 %v1423, %v1465
      %v1480 = vmul.f32 %v1427, %v1441
      %v1481 = vmul.f32 %v1427, %v1445
      %v1482 = vmul.f32 %v1427, %v1449
      %v1483 = vmul.f32 %v1427, %v1453
      %v1484 = vmul.f32 %v1427, %v1457
      %v1485 = vmul.f32 %v1427, %v1461
      %v1486 = vmul.f32 %v1427, %v1465
      %v1487 = vmul.f32 %v1431, %v1441
      %v1488 = vmul.f32 %v1431, %v1445
      %v1489 = vmul.f32 %v1431, %v1449
      %v1490 = vmul.f32 %v1431, %v1453
      %v1491 = vmul.f32 %v1431, %v1457
      %v1492 = vmul.f32 %v1431, %v1461
      %v1493 = vmul.f32 %v1431, %v1465
      %v1494 = vmul.f32 %v1435, %v1441
      %v1495 = vmul.f32 %v1435, %v1445
      %v1496 = vmul.f32 %v1435, %v1449
      %v1497 = vmul.f32 %v1435, %v1453
      %v1498 = vmul.f32 %v1435, %v1457
      %v1499 = vmul.f32 %v1435, %v1461
      %v1500 = vmul.f32 %v1435, %v1465
      %1529 = vrot.lane.b32.xlu0 %v1473, 72
      %v1530 = vpop.permute.xlu0 %1529
      %1531 = vrot.lane.b32.xlu0 %v1474, 72
      %v1532 = vpop.permute.xlu0 %1531
      %1533 = vrot.lane.b32.xlu0 %v1475, 72
      %v1534 = vpop.permute.xlu0 %1533
      %1535 = vrot.lane.b32.xlu0 %v1476, 72
      %v1536 = vpop.permute.xlu0 %1535
      %1537 = vrot.lane.b32.xlu0 %v1477, 72
      %v1538 = vpop.permute.xlu0 %1537
      %1539 = vrot.lane.b32.xlu0 %v1478, 72
      %v1540 = vpop.permute.xlu0 %1539
      %1541 = vrot.lane.b32.xlu0 %v1479, 72
      %v1542 = vpop.permute.xlu0 %1541
      %1543 = vrot.lane.b32.xlu0 %v1480, 72
      %v1544 = vpop.permute.xlu0 %1543
      %1545 = vrot.lane.b32.xlu0 %v1481, 72
      %v1546 = vpop.permute.xlu0 %1545
      %1547 = vrot.lane.b32.xlu0 %v1482, 72
      %v1548 = vpop.permute.xlu0 %1547
      %1549 = vrot.lane.b32.xlu0 %v1483, 72
      %v1550 = vpop.permute.xlu0 %1549
      %1551 = vrot.lane.b32.xlu0 %v1484, 72
      %v1552 = vpop.permute.xlu0 %1551
      %1553 = vrot.lane.b32.xlu0 %v1485, 72
      %v1554 = vpop.permute.xlu0 %1553
      %1555 = vrot.lane.b32.xlu0 %v1486, 72
      %v1556 = vpop.permute.xlu0 %1555
      %1557 = vrot.lane.b32.xlu0 %v1487, 72
      %v1558 = vpop.permute.xlu0 %1557
      %1559 = vrot.lane.b32.xlu0 %v1488, 72
      %v1560 = vpop.permute.xlu0 %1559
      %1561 = vrot.lane.b32.xlu0 %v1489, 72
      %v1562 = vpop.permute.xlu0 %1561
      %1563 = vrot.lane.b32.xlu0 %v1490, 72
      %v1564 = vpop.permute.xlu0 %1563
      %1565 = vrot.lane.b32.xlu0 %v1491, 72
      %v1566 = vpop.permute.xlu0 %1565
      %1567 = vrot.lane.b32.xlu0 %v1492, 72
      %v1568 = vpop.permute.xlu0 %1567
      %1569 = vrot.lane.b32.xlu0 %v1493, 72
      %v1570 = vpop.permute.xlu0 %1569
      %1571 = vrot.lane.b32.xlu0 %v1494, 72
      %v1572 = vpop.permute.xlu0 %1571
      %1573 = vrot.lane.b32.xlu0 %v1495, 72
      %v1574 = vpop.permute.xlu0 %1573
      %1575 = vrot.lane.b32.xlu0 %v1496, 72
      %v1576 = vpop.permute.xlu0 %1575
      %1577 = vrot.lane.b32.xlu0 %v1497, 72
      %v1578 = vpop.permute.xlu0 %1577
      %1579 = vrot.lane.b32.xlu0 %v1498, 72
      %v1580 = vpop.permute.xlu0 %1579
      %1581 = vrot.lane.b32.xlu0 %v1499, 72
      %v1582 = vpop.permute.xlu0 %1581
      %1583 = vrot.lane.b32.xlu0 %v1500, 72
      %v1584 = vpop.permute.xlu0 %1583
      %vm1585 = vcmask 588800
      %v1586 = vsel %vm1585, %v1530, %v1532
      %v1587 = vsel %vm1585, %v1532, %v1534
      %v1588 = vsel %vm1585, %v1534, %v1536
      %v1589 = vsel %vm1585, %v1536, %v1538
      %v1590 = vsel %vm1585, %v1538, %v1540
      %v1591 = vsel %vm1585, %v1540, %v1542
      %v1592 = vsel %vm1585, %v1544, %v1546
      %v1593 = vsel %vm1585, %v1546, %v1548
      %v1594 = vsel %vm1585, %v1548, %v1550
      %v1595 = vsel %vm1585, %v1550, %v1552
      %v1596 = vsel %vm1585, %v1552, %v1554
      %v1597 = vsel %vm1585, %v1554, %v1556
      %v1598 = vsel %vm1585, %v1558, %v1560
      %v1599 = vsel %vm1585, %v1560, %v1562
      %v1600 = vsel %vm1585, %v1562, %v1564
      %v1601 = vsel %vm1585, %v1564, %v1566
      %v1602 = vsel %vm1585, %v1566, %v1568
      %v1603 = vsel %vm1585, %v1568, %v1570
      %v1604 = vsel %vm1585, %v1572, %v1574
      %v1605 = vsel %vm1585, %v1574, %v1576
      %v1606 = vsel %vm1585, %v1576, %v1578
      %v1607 = vsel %vm1585, %v1578, %v1580
      %v1608 = vsel %vm1585, %v1580, %v1582
      %v1609 = vsel %vm1585, %v1582, %v1584
      %v1634 = vadd.f32 %v1396, %v1586
      %v1635 = vadd.f32 %v1397, %v1587
      %v1636 = vadd.f32 %v1398, %v1588
      %v1637 = vadd.f32 %v1399, %v1589
      %v1638 = vadd.f32 %v1400, %v1590
      %v1639 = vadd.f32 %v1401, %v1591
      %v1640 = vadd.f32 %v1402, %v1592
      %v1641 = vadd.f32 %v1403, %v1593
      %v1642 = vadd.f32 %v1404, %v1594
      %v1643 = vadd.f32 %v1405, %v1595
      %v1644 = vadd.f32 %v1406, %v1596
      %v1645 = vadd.f32 %v1407, %v1597
      %v1646 = vadd.f32 %v1408, %v1598
      %v1647 = vadd.f32 %v1409, %v1599
      %v1648 = vadd.f32 %v1410, %v1600
      %v1649 = vadd.f32 %v1411, %v1601
      %v1650 = vadd.f32 %v1412, %v1602
      %v1651 = vadd.f32 %v1413, %v1603
      %v1652 = vadd.f32 %v1414, %v1604
      %v1653 = vadd.f32 %v1415, %v1605
      %v1654 = vadd.f32 %v1416, %v1606
      %v1655 = vadd.f32 %v1417, %v1607
      %v1656 = vadd.f32 %v1418, %v1608
      %v1657 = vadd.f32 %v1419, %v1609
      %1658 = vset.pattern.permute.xlu0 7
      %1659 = vperm.xlu0 %1658, %v412
      %v1660 = vpop.permute.xlu0 %1659
      %1662 = vset.pattern.permute.xlu0 7
      %1663 = vperm.xlu0 %1662, %v413
      %v1664 = vpop.permute.xlu0 %1663
      %1666 = vset.pattern.permute.xlu0 7
      %1667 = vperm.xlu0 %1666, %v414
      %v1668 = vpop.permute.xlu0 %1667
      %1670 = vset.pattern.permute.xlu0 7
      %1671 = vperm.xlu0 %1670, %v415
      %v1672 = vpop.permute.xlu0 %1671
      %v1674 = vmul.f32 %v1660, %v1441
      %v1675 = vmul.f32 %v1660, %v1445
      %v1676 = vmul.f32 %v1660, %v1449
      %v1677 = vmul.f32 %v1660, %v1453
      %v1678 = vmul.f32 %v1660, %v1457
      %v1679 = vmul.f32 %v1660, %v1461
      %v1680 = vmul.f32 %v1660, %v1465
      %v1681 = vmul.f32 %v1664, %v1441
      %v1682 = vmul.f32 %v1664, %v1445
      %v1683 = vmul.f32 %v1664, %v1449
      %v1684 = vmul.f32 %v1664, %v1453
      %v1685 = vmul.f32 %v1664, %v1457
      %v1686 = vmul.f32 %v1664, %v1461
      %v1687 = vmul.f32 %v1664, %v1465
      %v1688 = vmul.f32 %v1668, %v1441
      %v1689 = vmul.f32 %v1668, %v1445
      %v1690 = vmul.f32 %v1668, %v1449
      %v1691 = vmul.f32 %v1668, %v1453
      %v1692 = vmul.f32 %v1668, %v1457
      %v1693 = vmul.f32 %v1668, %v1461
      %v1694 = vmul.f32 %v1668, %v1465
      %v1695 = vmul.f32 %v1672, %v1441
      %v1696 = vmul.f32 %v1672, %v1445
      %v1697 = vmul.f32 %v1672, %v1449
      %v1698 = vmul.f32 %v1672, %v1453
      %v1699 = vmul.f32 %v1672, %v1457
      %v1700 = vmul.f32 %v1672, %v1461
      %v1701 = vmul.f32 %v1672, %v1465
      %1730 = vrot.lane.b32.xlu0 %v1674, 71
      %v1731 = vpop.permute.xlu0 %1730
      %1732 = vrot.lane.b32.xlu0 %v1675, 71
      %v1733 = vpop.permute.xlu0 %1732
      %1734 = vrot.lane.b32.xlu0 %v1676, 71
      %v1735 = vpop.permute.xlu0 %1734
      %1736 = vrot.lane.b32.xlu0 %v1677, 71
      %v1737 = vpop.permute.xlu0 %1736
      %1738 = vrot.lane.b32.xlu0 %v1678, 71
      %v1739 = vpop.permute.xlu0 %1738
      %1740 = vrot.lane.b32.xlu0 %v1679, 71
      %v1741 = vpop.permute.xlu0 %1740
      %1742 = vrot.lane.b32.xlu0 %v1680, 71
      %v1743 = vpop.permute.xlu0 %1742
      %1744 = vrot.lane.b32.xlu0 %v1681, 71
      %v1745 = vpop.permute.xlu0 %1744
      %1746 = vrot.lane.b32.xlu0 %v1682, 71
      %v1747 = vpop.permute.xlu0 %1746
      %1748 = vrot.lane.b32.xlu0 %v1683, 71
      %v1749 = vpop.permute.xlu0 %1748
      %1750 = vrot.lane.b32.xlu0 %v1684, 71
      %v1751 = vpop.permute.xlu0 %1750
      %1752 = vrot.lane.b32.xlu0 %v1685, 71
      %v1753 = vpop.permute.xlu0 %1752
      %1754 = vrot.lane.b32.xlu0 %v1686, 71
      %v1755 = vpop.permute.xlu0 %1754
      %1756 = vrot.lane.b32.xlu0 %v1687, 71
      %v1757 = vpop.permute.xlu0 %1756
      %1758 = vrot.lane.b32.xlu0 %v1688, 71
      %v1759 = vpop.permute.xlu0 %1758
      %1760 = vrot.lane.b32.xlu0 %v1689, 71
      %v1761 = vpop.permute.xlu0 %1760
      %1762 = vrot.lane.b32.xlu0 %v1690, 71
      %v1763 = vpop.permute.xlu0 %1762
      %1764 = vrot.lane.b32.xlu0 %v1691, 71
      %v1765 = vpop.permute.xlu0 %1764
      %1766 = vrot.lane.b32.xlu0 %v1692, 71
      %v1767 = vpop.permute.xlu0 %1766
      %1768 = vrot.lane.b32.xlu0 %v1693, 71
      %v1769 = vpop.permute.xlu0 %1768
      %1770 = vrot.lane.b32.xlu0 %v1694, 71
      %v1771 = vpop.permute.xlu0 %1770
      %1772 = vrot.lane.b32.xlu0 %v1695, 71
      %v1773 = vpop.permute.xlu0 %1772
      %1774 = vrot.lane.b32.xlu0 %v1696, 71
      %v1775 = vpop.permute.xlu0 %1774
      %1776 = vrot.lane.b32.xlu0 %v1697, 71
      %v1777 = vpop.permute.xlu0 %1776
      %1778 = vrot.lane.b32.xlu0 %v1698, 71
      %v1779 = vpop.permute.xlu0 %1778
      %1780 = vrot.lane.b32.xlu0 %v1699, 71
      %v1781 = vpop.permute.xlu0 %1780
      %1782 = vrot.lane.b32.xlu0 %v1700, 71
      %v1783 = vpop.permute.xlu0 %1782
      %1784 = vrot.lane.b32.xlu0 %v1701, 71
      %v1785 = vpop.permute.xlu0 %1784
      %vm1786 = vcmask 580608
      %v1787 = vsel %vm1786, %v1731, %v1733
      %v1788 = vsel %vm1786, %v1733, %v1735
      %v1789 = vsel %vm1786, %v1735, %v1737
      %v1790 = vsel %vm1786, %v1737, %v1739
      %v1791 = vsel %vm1786, %v1739, %v1741
      %v1792 = vsel %vm1786, %v1741, %v1743
      %v1793 = vsel %vm1786, %v1745, %v1747
      %v1794 = vsel %vm1786, %v1747, %v1749
      %v1795 = vsel %vm1786, %v1749, %v1751
      %v1796 = vsel %vm1786, %v1751, %v1753
      %v1797 = vsel %vm1786, %v1753, %v1755
      %v1798 = vsel %vm1786, %v1755, %v1757
      %v1799 = vsel %vm1786, %v1759, %v1761
      %v1800 = vsel %vm1786, %v1761, %v1763
      %v1801 = vsel %vm1786, %v1763, %v1765
      %v1802 = vsel %vm1786, %v1765, %v1767
      %v1803 = vsel %vm1786, %v1767, %v1769
      %v1804 = vsel %vm1786, %v1769, %v1771
      %v1805 = vsel %vm1786, %v1773, %v1775
      %v1806 = vsel %vm1786, %v1775, %v1777
      %v1807 = vsel %vm1786, %v1777, %v1779
      %v1808 = vsel %vm1786, %v1779, %v1781
      %v1809 = vsel %vm1786, %v1781, %v1783
      %v1810 = vsel %vm1786, %v1783, %v1785
      %v1835 = vadd.f32 %v1634, %v1787
      %v1836 = vadd.f32 %v1635, %v1788
      %v1837 = vadd.f32 %v1636, %v1789
      %v1838 = vadd.f32 %v1637, %v1790
      %v1839 = vadd.f32 %v1638, %v1791
      %v1840 = vadd.f32 %v1639, %v1792
      %v1841 = vadd.f32 %v1640, %v1793
      %v1842 = vadd.f32 %v1641, %v1794
      %v1843 = vadd.f32 %v1642, %v1795
      %v1844 = vadd.f32 %v1643, %v1796
      %v1845 = vadd.f32 %v1644, %v1797
      %v1846 = vadd.f32 %v1645, %v1798
      %v1847 = vadd.f32 %v1646, %v1799
      %v1848 = vadd.f32 %v1647, %v1800
      %v1849 = vadd.f32 %v1648, %v1801
      %v1850 = vadd.f32 %v1649, %v1802
      %v1851 = vadd.f32 %v1650, %v1803
      %v1852 = vadd.f32 %v1651, %v1804
      %v1853 = vadd.f32 %v1652, %v1805
      %v1854 = vadd.f32 %v1653, %v1806
      %v1855 = vadd.f32 %v1654, %v1807
      %v1856 = vadd.f32 %v1655, %v1808
      %v1857 = vadd.f32 %v1656, %v1809
      %v1858 = vadd.f32 %v1657, %v1810
      %1859 = vset.pattern.permute.xlu0 8
      %1860 = vperm.xlu0 %1859, %v412
      %v1861 = vpop.permute.xlu0 %1860
      %1863 = vset.pattern.permute.xlu0 8
      %1864 = vperm.xlu0 %1863, %v413
      %v1865 = vpop.permute.xlu0 %1864
      %1867 = vset.pattern.permute.xlu0 8
      %1868 = vperm.xlu0 %1867, %v414
      %v1869 = vpop.permute.xlu0 %1868
      %1871 = vset.pattern.permute.xlu0 8
      %1872 = vperm.xlu0 %1871, %v415
      %v1873 = vpop.permute.xlu0 %1872
      %v1875 = vmul.f32 %v1861, %v1441
      %v1876 = vmul.f32 %v1861, %v1445
      %v1877 = vmul.f32 %v1861, %v1449
      %v1878 = vmul.f32 %v1861, %v1453
      %v1879 = vmul.f32 %v1861, %v1457
      %v1880 = vmul.f32 %v1861, %v1461
      %v1881 = vmul.f32 %v1861, %v1465
      %v1882 = vmul.f32 %v1865, %v1441
      %v1883 = vmul.f32 %v1865, %v1445
      %v1884 = vmul.f32 %v1865, %v1449
      %v1885 = vmul.f32 %v1865, %v1453
      %v1886 = vmul.f32 %v1865, %v1457
      %v1887 = vmul.f32 %v1865, %v1461
      %v1888 = vmul.f32 %v1865, %v1465
      %v1889 = vmul.f32 %v1869, %v1441
      %v1890 = vmul.f32 %v1869, %v1445
      %v1891 = vmul.f32 %v1869, %v1449
      %v1892 = vmul.f32 %v1869, %v1453
      %v1893 = vmul.f32 %v1869, %v1457
      %v1894 = vmul.f32 %v1869, %v1461
      %v1895 = vmul.f32 %v1869, %v1465
      %v1896 = vmul.f32 %v1873, %v1441
      %v1897 = vmul.f32 %v1873, %v1445
      %v1898 = vmul.f32 %v1873, %v1449
      %v1899 = vmul.f32 %v1873, %v1453
      %v1900 = vmul.f32 %v1873, %v1457
      %v1901 = vmul.f32 %v1873, %v1461
      %v1902 = vmul.f32 %v1873, %v1465
      %1931 = vrot.lane.b32.xlu0 %v1875, 70
      %v1932 = vpop.permute.xlu0 %1931
      %1933 = vrot.lane.b32.xlu0 %v1876, 70
      %v1934 = vpop.permute.xlu0 %1933
      %1935 = vrot.lane.b32.xlu0 %v1877, 70
      %v1936 = vpop.permute.xlu0 %1935
      %1937 = vrot.lane.b32.xlu0 %v1878, 70
      %v1938 = vpop.permute.xlu0 %1937
      %1939 = vrot.lane.b32.xlu0 %v1879, 70
      %v1940 = vpop.permute.xlu0 %1939
      %1941 = vrot.lane.b32.xlu0 %v1880, 70
      %v1942 = vpop.permute.xlu0 %1941
      %1943 = vrot.lane.b32.xlu0 %v1881, 70
      %v1944 = vpop.permute.xlu0 %1943
      %1945 = vrot.lane.b32.xlu0 %v1882, 70
      %v1946 = vpop.permute.xlu0 %1945
      %1947 = vrot.lane.b32.xlu0 %v1883, 70
      %v1948 = vpop.permute.xlu0 %1947
      %1949 = vrot.lane.b32.xlu0 %v1884, 70
      %v1950 = vpop.permute.xlu0 %1949
      %1951 = vrot.lane.b32.xlu0 %v1885, 70
      %v1952 = vpop.permute.xlu0 %1951
      %1953 = vrot.lane.b32.xlu0 %v1886, 70
      %v1954 = vpop.permute.xlu0 %1953
      %1955 = vrot.lane.b32.xlu0 %v1887, 70
      %v1956 = vpop.permute.xlu0 %1955
      %1957 = vrot.lane.b32.xlu0 %v1888, 70
      %v1958 = vpop.permute.xlu0 %1957
      %1959 = vrot.lane.b32.xlu0 %v1889, 70
      %v1960 = vpop.permute.xlu0 %1959
      %1961 = vrot.lane.b32.xlu0 %v1890, 70
      %v1962 = vpop.permute.xlu0 %1961
      %1963 = vrot.lane.b32.xlu0 %v1891, 70
      %v1964 = vpop.permute.xlu0 %1963
      %1965 = vrot.lane.b32.xlu0 %v1892, 70
      %v1966 = vpop.permute.xlu0 %1965
      %1967 = vrot.lane.b32.xlu0 %v1893, 70
      %v1968 = vpop.permute.xlu0 %1967
      %1969 = vrot.lane.b32.xlu0 %v1894, 70
      %v1970 = vpop.permute.xlu0 %1969
      %1971 = vrot.lane.b32.xlu0 %v1895, 70
      %v1972 = vpop.permute.xlu0 %1971
      %1973 = vrot.lane.b32.xlu0 %v1896, 70
      %v1974 = vpop.permute.xlu0 %1973
      %1975 = vrot.lane.b32.xlu0 %v1897, 70
      %v1976 = vpop.permute.xlu0 %1975
      %1977 = vrot.lane.b32.xlu0 %v1898, 70
      %v1978 = vpop.permute.xlu0 %1977
      %1979 = vrot.lane.b32.xlu0 %v1899, 70
      %v1980 = vpop.permute.xlu0 %1979
      %1981 = vrot.lane.b32.xlu0 %v1900, 70
      %v1982 = vpop.permute.xlu0 %1981
      %1983 = vrot.lane.b32.xlu0 %v1901, 70
      %v1984 = vpop.permute.xlu0 %1983
      %1985 = vrot.lane.b32.xlu0 %v1902, 70
      %v1986 = vpop.permute.xlu0 %1985
      %vm1987 = vcmask 572416
      %v1988 = vsel %vm1987, %v1932, %v1934
      %v1989 = vsel %vm1987, %v1934, %v1936
      %v1990 = vsel %vm1987, %v1936, %v1938
      %v1991 = vsel %vm1987, %v1938, %v1940
      %v1992 = vsel %vm1987, %v1940, %v1942
      %v1993 = vsel %vm1987, %v1942, %v1944
      %v1994 = vsel %vm1987, %v1946, %v1948
      %v1995 = vsel %vm1987, %v1948, %v1950
      %v1996 = vsel %vm1987, %v1950, %v1952
      %v1997 = vsel %vm1987, %v1952, %v1954
      %v1998 = vsel %vm1987, %v1954, %v1956
      %v1999 = vsel %vm1987, %v1956, %v1958
      %v2000 = vsel %vm1987, %v1960, %v1962
      %v2001 = vsel %vm1987, %v1962, %v1964
      %v2002 = vsel %vm1987, %v1964, %v1966
      %v2003 = vsel %vm1987, %v1966, %v1968
      %v2004 = vsel %vm1987, %v1968, %v1970
      %v2005 = vsel %vm1987, %v1970, %v1972
      %v2006 = vsel %vm1987, %v1974, %v1976
      %v2007 = vsel %vm1987, %v1976, %v1978
      %v2008 = vsel %vm1987, %v1978, %v1980
      %v2009 = vsel %vm1987, %v1980, %v1982
      %v2010 = vsel %vm1987, %v1982, %v1984
      %v2011 = vsel %vm1987, %v1984, %v1986
      %v2036 = vadd.f32 %v1835, %v1988
      %v2037 = vadd.f32 %v1836, %v1989
      %v2038 = vadd.f32 %v1837, %v1990
      %v2039 = vadd.f32 %v1838, %v1991
      %v2040 = vadd.f32 %v1839, %v1992
      %v2041 = vadd.f32 %v1840, %v1993
      %v2042 = vadd.f32 %v1841, %v1994
      %v2043 = vadd.f32 %v1842, %v1995
      %v2044 = vadd.f32 %v1843, %v1996
      %v2045 = vadd.f32 %v1844, %v1997
      %v2046 = vadd.f32 %v1845, %v1998
      %v2047 = vadd.f32 %v1846, %v1999
      %v2048 = vadd.f32 %v1847, %v2000
      %v2049 = vadd.f32 %v1848, %v2001
      %v2050 = vadd.f32 %v1849, %v2002
      %v2051 = vadd.f32 %v1850, %v2003
      %v2052 = vadd.f32 %v1851, %v2004
      %v2053 = vadd.f32 %v1852, %v2005
      %v2054 = vadd.f32 %v1853, %v2006
      %v2055 = vadd.f32 %v1854, %v2007
      %v2056 = vadd.f32 %v1855, %v2008
      %v2057 = vadd.f32 %v1856, %v2009
      %v2058 = vadd.f32 %v1857, %v2010
      %v2059 = vadd.f32 %v1858, %v2011
      %v2060 = vld [vmem:[%s2] sm:$0xff]
      %v2061 = vld [vmem:[%s2 + $0x8] sm:$0xff]
      %v2062 = vld [vmem:[%s2 + $0x10] sm:$0xff]
      %v2063 = vld [vmem:[%s2 + $0x18] sm:$0xff]
      %2065 = vset.pattern.permute.xlu0 0
      %2066 = vperm.xlu0 %2065, %v2060
      %v2067 = vpop.permute.xlu0 %2066
      %2070 = vset.pattern.permute.xlu0 0
      %2071 = vperm.xlu0 %2070, %v2061
      %v2072 = vpop.permute.xlu0 %2071
      %2075 = vset.pattern.permute.xlu0 0
      %2076 = vperm.xlu0 %2075, %v2062
      %v2077 = vpop.permute.xlu0 %2076
      %2080 = vset.pattern.permute.xlu0 0
      %2081 = vperm.xlu0 %2080, %v2063
      %v2082 = vpop.permute.xlu0 %2081
      %v2084 = vadd.f32 %v2036, %v2067
      %v2085 = vadd.f32 %v2037, %v2067
      %v2086 = vadd.f32 %v2038, %v2067
      %v2087 = vadd.f32 %v2039, %v2067
      %v2088 = vadd.f32 %v2040, %v2067
      %v2089 = vadd.f32 %v2041, %v2067
      %v2090 = vadd.f32 %v2042, %v2072
      %v2091 = vadd.f32 %v2043, %v2072
      %v2092 = vadd.f32 %v2044, %v2072
      %v2093 = vadd.f32 %v2045, %v2072
      %v2094 = vadd.f32 %v2046, %v2072
      %v2095 = vadd.f32 %v2047, %v2072
      %v2096 = vadd.f32 %v2048, %v2077
      %v2097 = vadd.f32 %v2049, %v2077
      %v2098 = vadd.f32 %v2050, %v2077
      %v2099 = vadd.f32 %v2051, %v2077
      %v2100 = vadd.f32 %v2052, %v2077
      %v2101 = vadd.f32 %v2053, %v2077
      %v2102 = vadd.f32 %v2054, %v2082
      %v2103 = vadd.f32 %v2055, %v2082
      %v2104 = vadd.f32 %v2056, %v2082
      %v2105 = vadd.f32 %v2057, %v2082
      %v2106 = vadd.f32 %v2058, %v2082
      %v2107 = vadd.f32 %v2059, %v2082
      %vm2108 = vcmp.ge.f32.partialorder %v2084, 0.0
      %vm2109 = vcmp.ge.f32.partialorder %v2085, 0.0
      %vm2110 = vcmp.ge.f32.partialorder %v2086, 0.0
      %vm2111 = vcmp.ge.f32.partialorder %v2087, 0.0
      %vm2112 = vcmp.ge.f32.partialorder %v2088, 0.0
      %vm2113 = vcmp.ge.f32.partialorder %v2089, 0.0
      %vm2114 = vcmp.ge.f32.partialorder %v2090, 0.0
      %vm2115 = vcmp.ge.f32.partialorder %v2091, 0.0
      %vm2116 = vcmp.ge.f32.partialorder %v2092, 0.0
      %vm2117 = vcmp.ge.f32.partialorder %v2093, 0.0
      %vm2118 = vcmp.ge.f32.partialorder %v2094, 0.0
      %vm2119 = vcmp.ge.f32.partialorder %v2095, 0.0
      %vm2120 = vcmp.ge.f32.partialorder %v2096, 0.0
      %vm2121 = vcmp.ge.f32.partialorder %v2097, 0.0
      %vm2122 = vcmp.ge.f32.partialorder %v2098, 0.0
      %vm2123 = vcmp.ge.f32.partialorder %v2099, 0.0
      %vm2124 = vcmp.ge.f32.partialorder %v2100, 0.0
      %vm2125 = vcmp.ge.f32.partialorder %v2101, 0.0
      %vm2126 = vcmp.ge.f32.partialorder %v2102, 0.0
      %vm2127 = vcmp.ge.f32.partialorder %v2103, 0.0
      %vm2128 = vcmp.ge.f32.partialorder %v2104, 0.0
      %vm2129 = vcmp.ge.f32.partialorder %v2105, 0.0
      %vm2130 = vcmp.ge.f32.partialorder %v2106, 0.0
      %vm2131 = vcmp.ge.f32.partialorder %v2107, 0.0
      %v2132 = vmul.f32 %v2084, 0.01
      %v2133 = vmul.f32 %v2085, 0.01
      %v2134 = vmul.f32 %v2086, 0.01
      %v2135 = vmul.f32 %v2087, 0.01
      %v2136 = vmul.f32 %v2088, 0.01
      %v2137 = vmul.f32 %v2089, 0.01
      %v2138 = vmul.f32 %v2090, 0.01
      %v2139 = vmul.f32 %v2091, 0.01
      %v2140 = vmul.f32 %v2092, 0.01
      %v2141 = vmul.f32 %v2093, 0.01
      %v2142 = vmul.f32 %v2094, 0.01
      %v2143 = vmul.f32 %v2095, 0.01
      %v2144 = vmul.f32 %v2096, 0.01
      %v2145 = vmul.f32 %v2097, 0.01
      %v2146 = vmul.f32 %v2098, 0.01
      %v2147 = vmul.f32 %v2099, 0.01
      %v2148 = vmul.f32 %v2100, 0.01
      %v2149 = vmul.f32 %v2101, 0.01
      %v2150 = vmul.f32 %v2102, 0.01
      %v2151 = vmul.f32 %v2103, 0.01
      %v2152 = vmul.f32 %v2104, 0.01
      %v2153 = vmul.f32 %v2105, 0.01
      %v2154 = vmul.f32 %v2106, 0.01
      %v2155 = vmul.f32 %v2107, 0.01
      %v2156 = vsel %vm2108, %v2084, %v2132
      %v2157 = vsel %vm2109, %v2085, %v2133
      %v2158 = vsel %vm2110, %v2086, %v2134
      %v2159 = vsel %vm2111, %v2087, %v2135
      %v2160 = vsel %vm2112, %v2088, %v2136
      %v2161 = vsel %vm2113, %v2089, %v2137
      %v2162 = vsel %vm2114, %v2090, %v2138
      %v2163 = vsel %vm2115, %v2091, %v2139
      %v2164 = vsel %vm2116, %v2092, %v2140
      %v2165 = vsel %vm2117, %v2093, %v2141
      %v2166 = vsel %vm2118, %v2094, %v2142
      %v2167 = vsel %vm2119, %v2095, %v2143
      %v2168 = vsel %vm2120, %v2096, %v2144
      %v2169 = vsel %vm2121, %v2097, %v2145
      %v2170 = vsel %vm2122, %v2098, %v2146
      %v2171 = vsel %vm2123, %v2099, %v2147
      %v2172 = vsel %vm2124, %v2100, %v2148
      %v2173 = vsel %vm2125, %v2101, %v2149
      %v2174 = vsel %vm2126, %v2102, %v2150
      %v2175 = vsel %vm2127, %v2103, %v2151
      %v2176 = vsel %vm2128, %v2104, %v2152
      %v2177 = vsel %vm2129, %v2105, %v2153
      %v2178 = vsel %vm2130, %v2106, %v2154
      %v2179 = vsel %vm2131, %v2107, %v2155
      %2180 = vst [vmem:[#allocation2] sm:$0xff] %v2156
      %2181 = vst [vmem:[#allocation2 + $0x8] sm:$0xff] %v2157
      %2182 = vst [vmem:[#allocation2 + $0x10] sm:$0xff] %v2158
      %2183 = vst [vmem:[#allocation2 + $0x18] sm:$0xff] %v2159
      %2184 = vst [vmem:[#allocation2 + $0x20] sm:$0xff] %v2160
      %vm2185 = vcmask 703488
      %2186 = vst.msk [vmem:[#allocation2 + $0x28] sm:$0xff] %vm2185, %v2161
      %2187 = vst [vmem:[#allocation2 + $0x30] sm:$0xff] %v2162
      %2188 = vst [vmem:[#allocation2 + $0x38] sm:$0xff] %v2163
      %2189 = vst [vmem:[#allocation2 + $0x40] sm:$0xff] %v2164
      %2190 = vst [vmem:[#allocation2 + $0x48] sm:$0xff] %v2165
      %2191 = vst [vmem:[#allocation2 + $0x50] sm:$0xff] %v2166
      %2192 = vst.msk [vmem:[#allocation2 + $0x58] sm:$0xff] %vm2185, %v2167
      %2193 = vst [vmem:[#allocation2 + $0x60] sm:$0xff] %v2168
      %2194 = vst [vmem:[#allocation2 + $0x68] sm:$0xff] %v2169
      %2195 = vst [vmem:[#allocation2 + $0x70] sm:$0xff] %v2170
      %2196 = vst [vmem:[#allocation2 + $0x78] sm:$0xff] %v2171
      %2197 = vst [vmem:[#allocation2 + $0x80] sm:$0xff] %v2172
      %2198 = vst.msk [vmem:[#allocation2 + $0x88] sm:$0xff] %vm2185, %v2173
      %2199 = vst [vmem:[#allocation2 + $0x90] sm:$0xff] %v2174
      %2200 = vst [vmem:[#allocation2 + $0x98] sm:$0xff] %v2175
      %2201 = vst [vmem:[#allocation2 + $0xa0] sm:$0xff] %v2176
      %2202 = vst [vmem:[#allocation2 + $0xa8] sm:$0xff] %v2177
      %2203 = vst [vmem:[#allocation2 + $0xb0] sm:$0xff] %v2178
      %2204 = vst.msk [vmem:[#allocation2 + $0xb8] sm:$0xff] %vm2185, %v2179
      %v2205 = vld [vmem:[#allocation2] sm:$0xff]
      %v2206 = vld [vmem:[#allocation2 + $0x8] sm:$0xff]
      %v2207 = vld [vmem:[#allocation2 + $0x10] sm:$0xff]
      %v2208 = vld [vmem:[#allocation2 + $0x18] sm:$0xff]
      %v2209 = vld [vmem:[#allocation2 + $0x20] sm:$0xff]
      %v2210 = vld [vmem:[#allocation2 + $0x30] sm:$0xff]
      %v2211 = vld [vmem:[#allocation2 + $0x38] sm:$0xff]
      %v2212 = vld [vmem:[#allocation2 + $0x40] sm:$0xff]
      %v2213 = vld [vmem:[#allocation2 + $0x48] sm:$0xff]
      %v2214 = vld [vmem:[#allocation2 + $0x50] sm:$0xff]
      %v2215 = vld [vmem:[#allocation2 + $0x60] sm:$0xff]
      %v2216 = vld [vmem:[#allocation2 + $0x68] sm:$0xff]
      %v2217 = vld [vmem:[#allocation2 + $0x70] sm:$0xff]
      %v2218 = vld [vmem:[#allocation2 + $0x78] sm:$0xff]
      %v2219 = vld [vmem:[#allocation2 + $0x80] sm:$0xff]
      %v2220 = vld [vmem:[#allocation2 + $0x90] sm:$0xff]
      %v2221 = vld [vmem:[#allocation2 + $0x98] sm:$0xff]
      %v2222 = vld [vmem:[#allocation2 + $0xa0] sm:$0xff]
      %v2223 = vld [vmem:[#allocation2 + $0xa8] sm:$0xff]
      %v2224 = vld [vmem:[#allocation2 + $0xb0] sm:$0xff]
      %v2225 = vld [vmem:[%s3] sm:$0xff]
      %v2226 = vld [vmem:[%s3 + $0x8] sm:$0xff]
      %v2227 = vld [vmem:[%s3 + $0x10] sm:$0xff]
      %v2228 = vld [vmem:[%s3 + $0x18] sm:$0xff]
      %s2229 = scalar_lea.vmem %s3, 32
      %v2230 = vld [vmem:[%s2229] sm:$0xff]
      %v2231 = vld [vmem:[%s2229 + $0x8] sm:$0xff]
      %v2232 = vld [vmem:[%s2229 + $0x10] sm:$0xff]
      %v2233 = vld [vmem:[%s2229 + $0x18] sm:$0xff]
      %2254 = vrot.lane.b32.xlu0 %v2205, 126
      %v2255 = vpop.permute.xlu0 %2254
      %2256 = vrot.lane.b32.xlu0 %v2206, 126
      %v2257 = vpop.permute.xlu0 %2256
      %2258 = vrot.lane.b32.xlu0 %v2207, 126
      %v2259 = vpop.permute.xlu0 %2258
      %2260 = vrot.lane.b32.xlu0 %v2208, 126
      %v2261 = vpop.permute.xlu0 %2260
      %2262 = vrot.lane.b32.xlu0 %v2209, 126
      %v2263 = vpop.permute.xlu0 %2262
      %2264 = vrot.lane.b32.xlu0 %v2210, 126
      %v2265 = vpop.permute.xlu0 %2264
      %2266 = vrot.lane.b32.xlu0 %v2211, 126
      %v2267 = vpop.permute.xlu0 %2266
      %2268 = vrot.lane.b32.xlu0 %v2212, 126
      %v2269 = vpop.permute.xlu0 %2268
      %2270 = vrot.lane.b32.xlu0 %v2213, 126
      %v2271 = vpop.permute.xlu0 %2270
      %2272 = vrot.lane.b32.xlu0 %v2214, 126
      %v2273 = vpop.permute.xlu0 %2272
      %2274 = vrot.lane.b32.xlu0 %v2215, 126
      %v2275 = vpop.permute.xlu0 %2274
      %2276 = vrot.lane.b32.xlu0 %v2216, 126
      %v2277 = vpop.permute.xlu0 %2276
      %2278 = vrot.lane.b32.xlu0 %v2217, 126
      %v2279 = vpop.permute.xlu0 %2278
      %2280 = vrot.lane.b32.xlu0 %v2218, 126
      %v2281 = vpop.permute.xlu0 %2280
      %2282 = vrot.lane.b32.xlu0 %v2219, 126
      %v2283 = vpop.permute.xlu0 %2282
      %2284 = vrot.lane.b32.xlu0 %v2220, 126
      %v2285 = vpop.permute.xlu0 %2284
      %2286 = vrot.lane.b32.xlu0 %v2221, 126
      %v2287 = vpop.permute.xlu0 %2286
      %2288 = vrot.lane.b32.xlu0 %v2222, 126
      %v2289 = vpop.permute.xlu0 %2288
      %2290 = vrot.lane.b32.xlu0 %v2223, 126
      %v2291 = vpop.permute.xlu0 %2290
      %2292 = vrot.lane.b32.xlu0 %v2224, 126
      %v2293 = vpop.permute.xlu0 %2292
      %v2294 = vsel %vm808, %v2255, %v2257
      %v2295 = vsel %vm808, %v2257, %v2259
      %v2296 = vsel %vm808, %v2259, %v2261
      %v2297 = vsel %vm808, %v2261, %v2263
      %v2298 = vsel %vm808, %v2265, %v2267
      %v2299 = vsel %vm808, %v2267, %v2269
      %v2300 = vsel %vm808, %v2269, %v2271
      %v2301 = vsel %vm808, %v2271, %v2273
      %v2302 = vsel %vm808, %v2275, %v2277
      %v2303 = vsel %vm808, %v2277, %v2279
      %v2304 = vsel %vm808, %v2279, %v2281
      %v2305 = vsel %vm808, %v2281, %v2283
      %v2306 = vsel %vm808, %v2285, %v2287
      %v2307 = vsel %vm808, %v2287, %v2289
      %v2308 = vsel %vm808, %v2289, %v2291
      %v2309 = vsel %vm808, %v2291, %v2293
      %vm2330 = vcmask 261120
      %v2332 = vsel %vm2330, %v2230, 0
      %v2335 = vsel %vm2330, %v2231, 0
      %v2338 = vsel %vm2330, %v2232, 0
      %v2341 = vsel %vm2330, %v2233, 0
      %2343 = vmatprep.subr.mxu0 0.0
      %2344 = vmatpush1.msra.mxu0 0.0
      %2345 = vmatprep.subr.mxu0 0.0
      %2346 = vmatpush1.msra.mxu0 0.0
      %2347 = vmatprep.subr.mxu0 0.0
      %2348 = vmatpush1.msra.mxu0 0.0
      %2349 = vmatprep.subr.mxu0 0.0
      %2350 = vmatpush1.msra.mxu0 0.0
      %2351 = vmatprep.subr.mxu0 0.0
      %2352 = vmatpush1.msra.mxu0 0.0
      %2353 = vmatprep.subr.mxu0 0.0
      %2354 = vmatpush1.msra.mxu0 0.0
      %2355 = vmatprep.subr.mxu0 0.0
      %2356 = vmatpush1.msra.mxu0 0.0
      %2357 = vmatprep.subr.mxu0 0.0
      %2358 = vmatpush1.msra.mxu0 0.0
      %2359 = vmatprep.subr.mxu0 0.0
      %2360 = vmatpush1.msra.mxu0 0.0
      %2361 = vmatprep.subr.mxu0 0.0
      %2362 = vmatpush1.msra.mxu0 0.0
      %2363 = vmatprep.subr.mxu0 0.0
      %2364 = vmatpush1.msra.mxu0 0.0
      %2365 = vmatprep.subr.mxu0 0.0
      %2366 = vmatpush1.msra.mxu0 0.0
      %2367 = vmatprep.subr.mxu0 %v2307
      %2368 = vmatpush1.msra.mxu0 %v2306
      %2369 = vmatprep.subr.mxu0 %v2303
      %2370 = vmatpush1.msra.mxu0 %v2302
      %2371 = vmatprep.subr.mxu0 %v2299
      %2372 = vmatpush1.msra.mxu0 %v2298
      %2373 = vmatprep.subr.mxu0 %v2295
      %2374 = vmatpush1.msra.mxu0 %v2294
      %2375 = vmatprep.subr.mxu0 0.0
      %2376 = vmatpush2.msra.mxu0 0.0
      %2377 = vmatprep.subr.mxu0 0.0
      %2378 = vmatpush2.msra.mxu0 0.0
      %2379 = vmatprep.subr.mxu0 0.0
      %2380 = vmatpush2.msra.mxu0 0.0
      %2381 = vmatprep.subr.mxu0 0.0
      %2382 = vmatpush2.msra.mxu0 0.0
      %2383 = vmatprep.subr.mxu0 0.0
      %2384 = vmatpush2.msra.mxu0 0.0
      %2385 = vmatprep.subr.mxu0 0.0
      %2386 = vmatpush2.msra.mxu0 0.0
      %2387 = vmatprep.subr.mxu0 0.0
      %2388 = vmatpush2.msra.mxu0 0.0
      %2389 = vmatprep.subr.mxu0 0.0
      %2390 = vmatpush2.msra.mxu0 0.0
      %2391 = vmatprep.subr.mxu0 0.0
      %2392 = vmatpush2.msra.mxu0 0.0
      %2393 = vmatprep.subr.mxu0 0.0
      %2394 = vmatpush2.msra.mxu0 0.0
      %2395 = vmatprep.subr.mxu0 0.0
      %2396 = vmatpush2.msra.mxu0 0.0
      %2397 = vmatprep.subr.mxu0 0.0
      %2398 = vmatpush2.msra.mxu0 0.0
      %2399 = vmatprep.subr.mxu0 0.0
      %2400 = vmatpush2.msra.mxu0 0.0
      %2401 = vmatprep.subr.mxu0 0.0
      %2402 = vmatpush2.msra.mxu0 0.0
      %2403 = vmatprep.subr.mxu0 0.0
      %2404 = vmatpush2.msra.mxu0 0.0
      %2405 = vmatprep.subr.mxu0 0.0
      %2406 = vmatpush2.msra.mxu0 0.0
      %2407 = vmatprep.mubr.f32.mxu0 0.0
      %2408 = vmatmul.mubr.f32.gmra.mxu0 %v2332
      %v2409 = vpop.f32.mrf.mxu0
      %v2410 = vadd.f32 0.0, %v2409
      %v2411 = vpop.f32.mrf.mxu0
      %v2412 = vadd.f32 0.0, %v2411
      %2413 = vmatprep.mubr.f32.mxu0 0.0
      %2414 = vmatmul.mubr.f32.gmra.mxu0 %v2335
      %v2415 = vpop.f32.mrf.mxu0
      %v2416 = vadd.f32 0.0, %v2415
      %v2417 = vpop.f32.mrf.mxu0
      %v2418 = vadd.f32 0.0, %v2417
      %2419 = vmatprep.mubr.f32.mxu0 0.0
      %2420 = vmatmul.mubr.f32.gmra.mxu0 %v2338
      %v2421 = vpop.f32.mrf.mxu0
      %v2422 = vadd.f32 0.0, %v2421
      %v2423 = vpop.f32.mrf.mxu0
      %v2424 = vadd.f32 0.0, %v2423
      %2425 = vmatprep.mubr.f32.mxu0 0.0
      %2426 = vmatmul.mubr.f32.gmra.mxu0 %v2341
      %v2427 = vpop.f32.mrf.mxu0
      %v2428 = vadd.f32 0.0, %v2427
      %v2429 = vpop.f32.mrf.mxu0
      %v2430 = vadd.f32 0.0, %v2429
      %2431 = vdwg.mxu0
      %2432 = vmatprep.subr.mxu0 0.0
      %2433 = vmatpush1.msra.mxu0 0.0
      %2434 = vmatprep.subr.mxu0 0.0
      %2435 = vmatpush1.msra.mxu0 0.0
      %2436 = vmatprep.subr.mxu0 0.0
      %2437 = vmatpush1.msra.mxu0 0.0
      %2438 = vmatprep.subr.mxu0 0.0
      %2439 = vmatpush1.msra.mxu0 0.0
      %2440 = vmatprep.subr.mxu0 0.0
      %2441 = vmatpush1.msra.mxu0 0.0
      %2442 = vmatprep.subr.mxu0 0.0
      %2443 = vmatpush1.msra.mxu0 0.0
      %2444 = vmatprep.subr.mxu0 0.0
      %2445 = vmatpush1.msra.mxu0 0.0
      %2446 = vmatprep.subr.mxu0 0.0
      %2447 = vmatpush1.msra.mxu0 0.0
      %2448 = vmatprep.subr.mxu0 0.0
      %2449 = vmatpush1.msra.mxu0 0.0
      %2450 = vmatprep.subr.mxu0 0.0
      %2451 = vmatpush1.msra.mxu0 0.0
      %2452 = vmatprep.subr.mxu0 0.0
      %2453 = vmatpush1.msra.mxu0 0.0
      %2454 = vmatprep.subr.mxu0 0.0
      %2455 = vmatpush1.msra.mxu0 0.0
      %2456 = vmatprep.subr.mxu0 %v2309
      %2457 = vmatpush1.msra.mxu0 %v2308
      %2458 = vmatprep.subr.mxu0 %v2305
      %2459 = vmatpush1.msra.mxu0 %v2304
      %2460 = vmatprep.subr.mxu0 %v2301
      %2461 = vmatpush1.msra.mxu0 %v2300
      %2462 = vmatprep.subr.mxu0 %v2297
      %2463 = vmatpush1.msra.mxu0 %v2296
      %2464 = vmatprep.subr.mxu0 0.0
      %2465 = vmatpush2.msra.mxu0 0.0
      %2466 = vmatprep.subr.mxu0 0.0
      %2467 = vmatpush2.msra.mxu0 0.0
      %2468 = vmatprep.subr.mxu0 0.0
      %2469 = vmatpush2.msra.mxu0 0.0
      %2470 = vmatprep.subr.mxu0 0.0
      %2471 = vmatpush2.msra.mxu0 0.0
      %2472 = vmatprep.subr.mxu0 0.0
      %2473 = vmatpush2.msra.mxu0 0.0
      %2474 = vmatprep.subr.mxu0 0.0
      %2475 = vmatpush2.msra.mxu0 0.0
      %2476 = vmatprep.subr.mxu0 0.0
      %2477 = vmatpush2.msra.mxu0 0.0
      %2478 = vmatprep.subr.mxu0 0.0
      %2479 = vmatpush2.msra.mxu0 0.0
      %2480 = vmatprep.subr.mxu0 0.0
      %2481 = vmatpush2.msra.mxu0 0.0
      %2482 = vmatprep.subr.mxu0 0.0
      %2483 = vmatpush2.msra.mxu0 0.0
      %2484 = vmatprep.subr.mxu0 0.0
      %2485 = vmatpush2.msra.mxu0 0.0
      %2486 = vmatprep.subr.mxu0 0.0
      %2487 = vmatpush2.msra.mxu0 0.0
      %2488 = vmatprep.subr.mxu0 0.0
      %2489 = vmatpush2.msra.mxu0 0.0
      %2490 = vmatprep.subr.mxu0 0.0
      %2491 = vmatpush2.msra.mxu0 0.0
      %2492 = vmatprep.subr.mxu0 0.0
      %2493 = vmatpush2.msra.mxu0 0.0
      %2494 = vmatprep.subr.mxu0 0.0
      %2495 = vmatpush2.msra.mxu0 0.0
      %2496 = vmatprep.mubr.f32.mxu0 0.0
      %2497 = vmatmul.mubr.f32.gmra.mxu0 %v2332
      %v2498 = vpop.f32.mrf.mxu0
      %v2499 = vadd.f32 0.0, %v2498
      %v2500 = vpop.f32.mrf.mxu0
      %v2501 = vadd.f32 0.0, %v2500
      %2502 = vmatprep.mubr.f32.mxu0 0.0
      %2503 = vmatmul.mubr.f32.gmra.mxu0 %v2335
      %v2504 = vpop.f32.mrf.mxu0
      %v2505 = vadd.f32 0.0, %v2504
      %v2506 = vpop.f32.mrf.mxu0
      %v2507 = vadd.f32 0.0, %v2506
      %2508 = vmatprep.mubr.f32.mxu0 0.0
      %2509 = vmatmul.mubr.f32.gmra.mxu0 %v2338
      %v2510 = vpop.f32.mrf.mxu0
      %v2511 = vadd.f32 0.0, %v2510
      %v2512 = vpop.f32.mrf.mxu0
      %v2513 = vadd.f32 0.0, %v2512
      %2514 = vmatprep.mubr.f32.mxu0 0.0
      %2515 = vmatmul.mubr.f32.gmra.mxu0 %v2341
      %v2516 = vpop.f32.mrf.mxu0
      %v2517 = vadd.f32 0.0, %v2516
      %v2518 = vpop.f32.mrf.mxu0
      %v2519 = vadd.f32 0.0, %v2518
      %2520 = vdwg.mxu0
      %2521 = vmatprep.subr.mxu0 0.0
      %2522 = vmatpush1.msra.mxu0 0.0
      %2523 = vmatprep.subr.mxu0 0.0
      %2524 = vmatpush1.msra.mxu0 0.0
      %2525 = vmatprep.subr.mxu0 0.0
      %2526 = vmatpush1.msra.mxu0 0.0
      %2527 = vmatprep.subr.mxu0 0.0
      %2528 = vmatpush1.msra.mxu0 0.0
      %2529 = vmatprep.subr.mxu0 0.0
      %2530 = vmatpush1.msra.mxu0 0.0
      %2531 = vmatprep.subr.mxu0 0.0
      %2532 = vmatpush1.msra.mxu0 0.0
      %2533 = vmatprep.subr.mxu0 0.0
      %2534 = vmatpush1.msra.mxu0 0.0
      %2535 = vmatprep.subr.mxu0 0.0
      %2536 = vmatpush1.msra.mxu0 0.0
      %2537 = vmatprep.subr.mxu0 0.0
      %2538 = vmatpush1.msra.mxu0 0.0
      %2539 = vmatprep.subr.mxu0 0.0
      %2540 = vmatpush1.msra.mxu0 0.0
      %2541 = vmatprep.subr.mxu0 0.0
      %2542 = vmatpush1.msra.mxu0 0.0
      %2543 = vmatprep.subr.mxu0 0.0
      %2544 = vmatpush1.msra.mxu0 0.0
      %2545 = vmatprep.subr.mxu0 0.0
      %2546 = vmatpush1.msra.mxu0 %v2293
      %2547 = vmatprep.subr.mxu0 0.0
      %2548 = vmatpush1.msra.mxu0 %v2283
      %2549 = vmatprep.subr.mxu0 0.0
      %2550 = vmatpush1.msra.mxu0 %v2273
      %2551 = vmatprep.subr.mxu0 0.0
      %2552 = vmatpush1.msra.mxu0 %v2263
      %2553 = vmatprep.subr.mxu0 0.0
      %2554 = vmatpush2.msra.mxu0 0.0
      %2555 = vmatprep.subr.mxu0 0.0
      %2556 = vmatpush2.msra.mxu0 0.0
      %2557 = vmatprep.subr.mxu0 0.0
      %2558 = vmatpush2.msra.mxu0 0.0
      %2559 = vmatprep.subr.mxu0 0.0
      %2560 = vmatpush2.msra.mxu0 0.0
      %2561 = vmatprep.subr.mxu0 0.0
      %2562 = vmatpush2.msra.mxu0 0.0
      %2563 = vmatprep.subr.mxu0 0.0
      %2564 = vmatpush2.msra.mxu0 0.0
      %2565 = vmatprep.subr.mxu0 0.0
      %2566 = vmatpush2.msra.mxu0 0.0
      %2567 = vmatprep.subr.mxu0 0.0
      %2568 = vmatpush2.msra.mxu0 0.0
      %2569 = vmatprep.subr.mxu0 0.0
      %2570 = vmatpush2.msra.mxu0 0.0
      %2571 = vmatprep.subr.mxu0 0.0
      %2572 = vmatpush2.msra.mxu0 0.0
      %2573 = vmatprep.subr.mxu0 0.0
      %2574 = vmatpush2.msra.mxu0 0.0
      %2575 = vmatprep.subr.mxu0 0.0
      %2576 = vmatpush2.msra.mxu0 0.0
      %2577 = vmatprep.subr.mxu0 0.0
      %2578 = vmatpush2.msra.mxu0 0.0
      %2579 = vmatprep.subr.mxu0 0.0
      %2580 = vmatpush2.msra.mxu0 0.0
      %2581 = vmatprep.subr.mxu0 0.0
      %2582 = vmatpush2.msra.mxu0 0.0
      %2583 = vmatprep.subr.mxu0 0.0
      %2584 = vmatpush2.msra.mxu0 0.0
      %2585 = vmatprep.mubr.f32.mxu0 0.0
      %2586 = vmatmul.mubr.f32.gmra.mxu0 %v2332
      %v2587 = vpop.f32.mrf.mxu0
      %v2588 = vadd.f32 0.0, %v2587
      %v2589 = vpop.f32.mrf.mxu0
      %2590 = vmatprep.mubr.f32.mxu0 0.0
      %2591 = vmatmul.mubr.f32.gmra.mxu0 %v2335
      %v2592 = vpop.f32.mrf.mxu0
      %v2593 = vadd.f32 0.0, %v2592
      %v2594 = vpop.f32.mrf.mxu0
      %2595 = vmatprep.mubr.f32.mxu0 0.0
      %2596 = vmatmul.mubr.f32.gmra.mxu0 %v2338
      %v2597 = vpop.f32.mrf.mxu0
      %v2598 = vadd.f32 0.0, %v2597
      %v2599 = vpop.f32.mrf.mxu0
      %2600 = vmatprep.mubr.f32.mxu0 0.0
      %2601 = vmatmul.mubr.f32.gmra.mxu0 %v2341
      %v2602 = vpop.f32.mrf.mxu0
      %v2603 = vadd.f32 0.0, %v2602
      %v2604 = vpop.f32.mrf.mxu0
      %2605 = vdwg.mxu0
      %v2607 = vsel %vm2330, %v2225, 0
      %v2610 = vsel %vm2330, %v2226, 0
      %v2613 = vsel %vm2330, %v2227, 0
      %v2616 = vsel %vm2330, %v2228, 0
      %2618 = vmatprep.subr.mxu0 0.0
      %2619 = vmatpush1.msra.mxu0 0.0
      %2620 = vmatprep.subr.mxu0 0.0
      %2621 = vmatpush1.msra.mxu0 0.0
      %2622 = vmatprep.subr.mxu0 0.0
      %2623 = vmatpush1.msra.mxu0 0.0
      %2624 = vmatprep.subr.mxu0 0.0
      %2625 = vmatpush1.msra.mxu0 0.0
      %2626 = vmatprep.subr.mxu0 0.0
      %2627 = vmatpush1.msra.mxu0 0.0
      %2628 = vmatprep.subr.mxu0 0.0
      %2629 = vmatpush1.msra.mxu0 0.0
      %2630 = vmatprep.subr.mxu0 0.0
      %2631 = vmatpush1.msra.mxu0 0.0
      %2632 = vmatprep.subr.mxu0 0.0
      %2633 = vmatpush1.msra.mxu0 0.0
      %2634 = vmatprep.subr.mxu0 0.0
      %2635 = vmatpush1.msra.mxu0 0.0
      %2636 = vmatprep.subr.mxu0 0.0
      %2637 = vmatpush1.msra.mxu0 0.0
      %2638 = vmatprep.subr.mxu0 0.0
      %2639 = vmatpush1.msra.mxu0 0.0
      %2640 = vmatprep.subr.mxu0 0.0
      %2641 = vmatpush1.msra.mxu0 0.0
      %2642 = vmatprep.subr.mxu0 %v2221
      %2643 = vmatpush1.msra.mxu0 %v2220
      %2644 = vmatprep.subr.mxu0 %v2216
      %2645 = vmatpush1.msra.mxu0 %v2215
      %2646 = vmatprep.subr.mxu0 %v2211
      %2647 = vmatpush1.msra.mxu0 %v2210
      %2648 = vmatprep.subr.mxu0 %v2206
      %2649 = vmatpush1.msra.mxu0 %v2205
      %2650 = vmatprep.subr.mxu0 0.0
      %2651 = vmatpush2.msra.mxu0 0.0
      %2652 = vmatprep.subr.mxu0 0.0
      %2653 = vmatpush2.msra.mxu0 0.0
      %2654 = vmatprep.subr.mxu0 0.0
      %2655 = vmatpush2.msra.mxu0 0.0
      %2656 = vmatprep.subr.mxu0 0.0
      %2657 = vmatpush2.msra.mxu0 0.0
      %2658 = vmatprep.subr.mxu0 0.0
      %2659 = vmatpush2.msra.mxu0 0.0
      %2660 = vmatprep.subr.mxu0 0.0
      %2661 = vmatpush2.msra.mxu0 0.0
      %2662 = vmatprep.subr.mxu0 0.0
      %2663 = vmatpush2.msra.mxu0 0.0
      %2664 = vmatprep.subr.mxu0 0.0
      %2665 = vmatpush2.msra.mxu0 0.0
      %2666 = vmatprep.subr.mxu0 0.0
      %2667 = vmatpush2.msra.mxu0 0.0
      %2668 = vmatprep.subr.mxu0 0.0
      %2669 = vmatpush2.msra.mxu0 0.0
      %2670 = vmatprep.subr.mxu0 0.0
      %2671 = vmatpush2.msra.mxu0 0.0
      %2672 = vmatprep.subr.mxu0 0.0
      %2673 = vmatpush2.msra.mxu0 0.0
      %2674 = vmatprep.subr.mxu0 0.0
      %2675 = vmatpush2.msra.mxu0 0.0
      %2676 = vmatprep.subr.mxu0 0.0
      %2677 = vmatpush2.msra.mxu0 0.0
      %2678 = vmatprep.subr.mxu0 0.0
      %2679 = vmatpush2.msra.mxu0 0.0
      %2680 = vmatprep.subr.mxu0 0.0
      %2681 = vmatpush2.msra.mxu0 0.0
      %2682 = vmatprep.mubr.f32.mxu0 0.0
      %2683 = vmatmul.mubr.f32.gmra.mxu0 %v2607
      %v2684 = vpop.f32.mrf.mxu0
      %v2685 = vadd.f32 %v2410, %v2684
      %v2686 = vpop.f32.mrf.mxu0
      %v2687 = vadd.f32 %v2412, %v2686
      %2688 = vmatprep.mubr.f32.mxu0 0.0
      %2689 = vmatmul.mubr.f32.gmra.mxu0 %v2610
      %v2690 = vpop.f32.mrf.mxu0
      %v2691 = vadd.f32 %v2416, %v2690
      %v2692 = vpop.f32.mrf.mxu0
      %v2693 = vadd.f32 %v2418, %v2692
      %2694 = vmatprep.mubr.f32.mxu0 0.0
      %2695 = vmatmul.mubr.f32.gmra.mxu0 %v2613
      %v2696 = vpop.f32.mrf.mxu0
      %v2697 = vadd.f32 %v2422, %v2696
      %v2698 = vpop.f32.mrf.mxu0
      %v2699 = vadd.f32 %v2424, %v2698
      %2700 = vmatprep.mubr.f32.mxu0 0.0
      %2701 = vmatmul.mubr.f32.gmra.mxu0 %v2616
      %v2702 = vpop.f32.mrf.mxu0
      %v2703 = vadd.f32 %v2428, %v2702
      %v2704 = vpop.f32.mrf.mxu0
      %v2705 = vadd.f32 %v2430, %v2704
      %2706 = vdwg.mxu0
      %2707 = vmatprep.subr.mxu0 0.0
      %2708 = vmatpush1.msra.mxu0 0.0
      %2709 = vmatprep.subr.mxu0 0.0
      %2710 = vmatpush1.msra.mxu0 0.0
      %2711 = vmatprep.subr.mxu0 0.0
      %2712 = vmatpush1.msra.mxu0 0.0
      %2713 = vmatprep.subr.mxu0 0.0
      %2714 = vmatpush1.msra.mxu0 0.0
      %2715 = vmatprep.subr.mxu0 0.0
      %2716 = vmatpush1.msra.mxu0 0.0
      %2717 = vmatprep.subr.mxu0 0.0
      %2718 = vmatpush1.msra.mxu0 0.0
      %2719 = vmatprep.subr.mxu0 0.0
      %2720 = vmatpush1.msra.mxu0 0.0
      %2721 = vmatprep.subr.mxu0 0.0
      %2722 = vmatpush1.msra.mxu0 0.0
      %2723 = vmatprep.subr.mxu0 0.0
      %2724 = vmatpush1.msra.mxu0 0.0
      %2725 = vmatprep.subr.mxu0 0.0
      %2726 = vmatpush1.msra.mxu0 0.0
      %2727 = vmatprep.subr.mxu0 0.0
      %2728 = vmatpush1.msra.mxu0 0.0
      %2729 = vmatprep.subr.mxu0 0.0
      %2730 = vmatpush1.msra.mxu0 0.0
      %2731 = vmatprep.subr.mxu0 %v2223
      %2732 = vmatpush1.msra.mxu0 %v2222
      %2733 = vmatprep.subr.mxu0 %v2218
      %2734 = vmatpush1.msra.mxu0 %v2217
      %2735 = vmatprep.subr.mxu0 %v2213
      %2736 = vmatpush1.msra.mxu0 %v2212
      %2737 = vmatprep.subr.mxu0 %v2208
      %2738 = vmatpush1.msra.mxu0 %v2207
      %2739 = vmatprep.subr.mxu0 0.0
      %2740 = vmatpush2.msra.mxu0 0.0
      %2741 = vmatprep.subr.mxu0 0.0
      %2742 = vmatpush2.msra.mxu0 0.0
      %2743 = vmatprep.subr.mxu0 0.0
      %2744 = vmatpush2.msra.mxu0 0.0
      %2745 = vmatprep.subr.mxu0 0.0
      %2746 = vmatpush2.msra.mxu0 0.0
      %2747 = vmatprep.subr.mxu0 0.0
      %2748 = vmatpush2.msra.mxu0 0.0
      %2749 = vmatprep.subr.mxu0 0.0
      %2750 = vmatpush2.msra.mxu0 0.0
      %2751 = vmatprep.subr.mxu0 0.0
      %2752 = vmatpush2.msra.mxu0 0.0
      %2753 = vmatprep.subr.mxu0 0.0
      %2754 = vmatpush2.msra.mxu0 0.0
      %2755 = vmatprep.subr.mxu0 0.0
      %2756 = vmatpush2.msra.mxu0 0.0
      %2757 = vmatprep.subr.mxu0 0.0
      %2758 = vmatpush2.msra.mxu0 0.0
      %2759 = vmatprep.subr.mxu0 0.0
      %2760 = vmatpush2.msra.mxu0 0.0
      %2761 = vmatprep.subr.mxu0 0.0
      %2762 = vmatpush2.msra.mxu0 0.0
      %2763 = vmatprep.subr.mxu0 0.0
      %2764 = vmatpush2.msra.mxu0 0.0
      %2765 = vmatprep.subr.mxu0 0.0
      %2766 = vmatpush2.msra.mxu0 0.0
      %2767 = vmatprep.subr.mxu0 0.0
      %2768 = vmatpush2.msra.mxu0 0.0
      %2769 = vmatprep.subr.mxu0 0.0
      %2770 = vmatpush2.msra.mxu0 0.0
      %2771 = vmatprep.mubr.f32.mxu0 0.0
      %2772 = vmatmul.mubr.f32.gmra.mxu0 %v2607
      %v2773 = vpop.f32.mrf.mxu0
      %v2774 = vadd.f32 %v2499, %v2773
      %v2775 = vpop.f32.mrf.mxu0
      %v2776 = vadd.f32 %v2501, %v2775
      %2777 = vmatprep.mubr.f32.mxu0 0.0
      %2778 = vmatmul.mubr.f32.gmra.mxu0 %v2610
      %v2779 = vpop.f32.mrf.mxu0
      %v2780 = vadd.f32 %v2505, %v2779
      %v2781 = vpop.f32.mrf.mxu0
      %v2782 = vadd.f32 %v2507, %v2781
      %2783 = vmatprep.mubr.f32.mxu0 0.0
      %2784 = vmatmul.mubr.f32.gmra.mxu0 %v2613
      %v2785 = vpop.f32.mrf.mxu0
      %v2786 = vadd.f32 %v2511, %v2785
      %v2787 = vpop.f32.mrf.mxu0
      %v2788 = vadd.f32 %v2513, %v2787
      %2789 = vmatprep.mubr.f32.mxu0 0.0
      %2790 = vmatmul.mubr.f32.gmra.mxu0 %v2616
      %v2791 = vpop.f32.mrf.mxu0
      %v2792 = vadd.f32 %v2517, %v2791
      %v2793 = vpop.f32.mrf.mxu0
      %v2794 = vadd.f32 %v2519, %v2793
      %2795 = vdwg.mxu0
      %2796 = vmatprep.subr.mxu0 0.0
      %2797 = vmatpush1.msra.mxu0 0.0
      %2798 = vmatprep.subr.mxu0 0.0
      %2799 = vmatpush1.msra.mxu0 0.0
      %2800 = vmatprep.subr.mxu0 0.0
      %2801 = vmatpush1.msra.mxu0 0.0
      %2802 = vmatprep.subr.mxu0 0.0
      %2803 = vmatpush1.msra.mxu0 0.0
      %2804 = vmatprep.subr.mxu0 0.0
      %2805 = vmatpush1.msra.mxu0 0.0
      %2806 = vmatprep.subr.mxu0 0.0
      %2807 = vmatpush1.msra.mxu0 0.0
      %2808 = vmatprep.subr.mxu0 0.0
      %2809 = vmatpush1.msra.mxu0 0.0
      %2810 = vmatprep.subr.mxu0 0.0
      %2811 = vmatpush1.msra.mxu0 0.0
      %2812 = vmatprep.subr.mxu0 0.0
      %2813 = vmatpush1.msra.mxu0 0.0
      %2814 = vmatprep.subr.mxu0 0.0
      %2815 = vmatpush1.msra.mxu0 0.0
      %2816 = vmatprep.subr.mxu0 0.0
      %2817 = vmatpush1.msra.mxu0 0.0
      %2818 = vmatprep.subr.mxu0 0.0
      %2819 = vmatpush1.msra.mxu0 0.0
      %2820 = vmatprep.subr.mxu0 0.0
      %2821 = vmatpush1.msra.mxu0 %v2224
      %2822 = vmatprep.subr.mxu0 0.0
      %2823 = vmatpush1.msra.mxu0 %v2219
      %2824 = vmatprep.subr.mxu0 0.0
      %2825 = vmatpush1.msra.mxu0 %v2214
      %2826 = vmatprep.subr.mxu0 0.0
      %2827 = vmatpush1.msra.mxu0 %v2209
      %2828 = vmatprep.subr.mxu0 0.0
      %2829 = vmatpush2.msra.mxu0 0.0
      %2830 = vmatprep.subr.mxu0 0.0
      %2831 = vmatpush2.msra.mxu0 0.0
      %2832 = vmatprep.subr.mxu0 0.0
      %2833 = vmatpush2.msra.mxu0 0.0
      %2834 = vmatprep.subr.mxu0 0.0
      %2835 = vmatpush2.msra.mxu0 0.0
      %2836 = vmatprep.subr.mxu0 0.0
      %2837 = vmatpush2.msra.mxu0 0.0
      %2838 = vmatprep.subr.mxu0 0.0
      %2839 = vmatpush2.msra.mxu0 0.0
      %2840 = vmatprep.subr.mxu0 0.0
      %2841 = vmatpush2.msra.mxu0 0.0
      %2842 = vmatprep.subr.mxu0 0.0
      %2843 = vmatpush2.msra.mxu0 0.0
      %2844 = vmatprep.subr.mxu0 0.0
      %2845 = vmatpush2.msra.mxu0 0.0
      %2846 = vmatprep.subr.mxu0 0.0
      %2847 = vmatpush2.msra.mxu0 0.0
      %2848 = vmatprep.subr.mxu0 0.0
      %2849 = vmatpush2.msra.mxu0 0.0
      %2850 = vmatprep.subr.mxu0 0.0
      %2851 = vmatpush2.msra.mxu0 0.0
      %2852 = vmatprep.subr.mxu0 0.0
      %2853 = vmatpush2.msra.mxu0 0.0
      %2854 = vmatprep.subr.mxu0 0.0
      %2855 = vmatpush2.msra.mxu0 0.0
      %2856 = vmatprep.subr.mxu0 0.0
      %2857 = vmatpush2.msra.mxu0 0.0
      %2858 = vmatprep.subr.mxu0 0.0
      %2859 = vmatpush2.msra.mxu0 0.0
      %2860 = vmatprep.mubr.f32.mxu0 0.0
      %2861 = vmatmul.mubr.f32.gmra.mxu0 %v2607
      %v2862 = vpop.f32.mrf.mxu0
      %v2863 = vadd.f32 %v2588, %v2862
      %v2864 = vpop.f32.mrf.mxu0
      %2865 = vmatprep.mubr.f32.mxu0 0.0
      %2866 = vmatmul.mubr.f32.gmra.mxu0 %v2610
      %v2867 = vpop.f32.mrf.mxu0
      %v2868 = vadd.f32 %v2593, %v2867
      %v2869 = vpop.f32.mrf.mxu0
      %2870 = vmatprep.mubr.f32.mxu0 0.0
      %2871 = vmatmul.mubr.f32.gmra.mxu0 %v2613
      %v2872 = vpop.f32.mrf.mxu0
      %v2873 = vadd.f32 %v2598, %v2872
      %v2874 = vpop.f32.mrf.mxu0
      %2875 = vmatprep.mubr.f32.mxu0 0.0
      %2876 = vmatmul.mubr.f32.gmra.mxu0 %v2616
      %v2877 = vpop.f32.mrf.mxu0
      %v2878 = vadd.f32 %v2603, %v2877
      %v2879 = vpop.f32.mrf.mxu0
      %2880 = vdwg.mxu0
      %s2881 = scalar_lea.vmem %s3, 64
      %v2882 = vld [vmem:[%s2881] sm:$0xff]
      %v2883 = vld [vmem:[%s2881 + $0x8] sm:$0xff]
      %v2884 = vld [vmem:[%s2881 + $0x10] sm:$0xff]
      %v2885 = vld [vmem:[%s2881 + $0x18] sm:$0xff]
      %2886 = vrot.lane.b32.xlu0 %v2205, 124
      %v2887 = vpop.permute.xlu0 %2886
      %2888 = vrot.lane.b32.xlu0 %v2206, 124
      %v2889 = vpop.permute.xlu0 %2888
      %2890 = vrot.lane.b32.xlu0 %v2207, 124
      %v2891 = vpop.permute.xlu0 %2890
      %2892 = vrot.lane.b32.xlu0 %v2208, 124
      %v2893 = vpop.permute.xlu0 %2892
      %2894 = vrot.lane.b32.xlu0 %v2209, 124
      %v2895 = vpop.permute.xlu0 %2894
      %2896 = vrot.lane.b32.xlu0 %v2210, 124
      %v2897 = vpop.permute.xlu0 %2896
      %2898 = vrot.lane.b32.xlu0 %v2211, 124
      %v2899 = vpop.permute.xlu0 %2898
      %2900 = vrot.lane.b32.xlu0 %v2212, 124
      %v2901 = vpop.permute.xlu0 %2900
      %2902 = vrot.lane.b32.xlu0 %v2213, 124
      %v2903 = vpop.permute.xlu0 %2902
      %2904 = vrot.lane.b32.xlu0 %v2214, 124
      %v2905 = vpop.permute.xlu0 %2904
      %2906 = vrot.lane.b32.xlu0 %v2215, 124
      %v2907 = vpop.permute.xlu0 %2906
      %2908 = vrot.lane.b32.xlu0 %v2216, 124
      %v2909 = vpop.permute.xlu0 %2908
      %2910 = vrot.lane.b32.xlu0 %v2217, 124
      %v2911 = vpop.permute.xlu0 %2910
      %2912 = vrot.lane.b32.xlu0 %v2218, 124
      %v2913 = vpop.permute.xlu0 %2912
      %2914 = vrot.lane.b32.xlu0 %v2219, 124
      %v2915 = vpop.permute.xlu0 %2914
      %2916 = vrot.lane.b32.xlu0 %v2220, 124
      %v2917 = vpop.permute.xlu0 %2916
      %2918 = vrot.lane.b32.xlu0 %v2221, 124
      %v2919 = vpop.permute.xlu0 %2918
      %2920 = vrot.lane.b32.xlu0 %v2222, 124
      %v2921 = vpop.permute.xlu0 %2920
      %2922 = vrot.lane.b32.xlu0 %v2223, 124
      %v2923 = vpop.permute.xlu0 %2922
      %2924 = vrot.lane.b32.xlu0 %v2224, 124
      %v2925 = vpop.permute.xlu0 %2924
      %vm2926 = vcmask 1014784
      %v2927 = vsel %vm2926, %v2887, %v2889
      %v2928 = vsel %vm2926, %v2889, %v2891
      %v2929 = vsel %vm2926, %v2891, %v2893
      %v2930 = vsel %vm2926, %v2893, %v2895
      %v2931 = vsel %vm2926, %v2897, %v2899
      %v2932 = vsel %vm2926, %v2899, %v2901
      %v2933 = vsel %vm2926, %v2901, %v2903
      %v2934 = vsel %vm2926, %v2903, %v2905
      %v2935 = vsel %vm2926, %v2907, %v2909
      %v2936 = vsel %vm2926, %v2909, %v2911
      %v2937 = vsel %vm2926, %v2911, %v2913
      %v2938 = vsel %vm2926, %v2913, %v2915
      %v2939 = vsel %vm2926, %v2917, %v2919
      %v2940 = vsel %vm2926, %v2919, %v2921
      %v2941 = vsel %vm2926, %v2921, %v2923
      %v2942 = vsel %vm2926, %v2923, %v2925
      %v2964 = vsel %vm2330, %v2882, 0
      %v2967 = vsel %vm2330, %v2883, 0
      %v2970 = vsel %vm2330, %v2884, 0
      %v2973 = vsel %vm2330, %v2885, 0
      %2975 = vmatprep.subr.mxu0 0.0
      %2976 = vmatpush1.msra.mxu0 0.0
      %2977 = vmatprep.subr.mxu0 0.0
      %2978 = vmatpush1.msra.mxu0 0.0
      %2979 = vmatprep.subr.mxu0 0.0
      %2980 = vmatpush1.msra.mxu0 0.0
      %2981 = vmatprep.subr.mxu0 0.0
      %2982 = vmatpush1.msra.mxu0 0.0
      %2983 = vmatprep.subr.mxu0 0.0
      %2984 = vmatpush1.msra.mxu0 0.0
      %2985 = vmatprep.subr.mxu0 0.0
      %2986 = vmatpush1.msra.mxu0 0.0
      %2987 = vmatprep.subr.mxu0 0.0
      %2988 = vmatpush1.msra.mxu0 0.0
      %2989 = vmatprep.subr.mxu0 0.0
      %2990 = vmatpush1.msra.mxu0 0.0
      %2991 = vmatprep.subr.mxu0 0.0
      %2992 = vmatpush1.msra.mxu0 0.0
      %2993 = vmatprep.subr.mxu0 0.0
      %2994 = vmatpush1.msra.mxu0 0.0
      %2995 = vmatprep.subr.mxu0 0.0
      %2996 = vmatpush1.msra.mxu0 0.0
      %2997 = vmatprep.subr.mxu0 0.0
      %2998 = vmatpush1.msra.mxu0 0.0
      %2999 = vmatprep.subr.mxu0 %v2940
      %3000 = vmatpush1.msra.mxu0 %v2939
      %3001 = vmatprep.subr.mxu0 %v2936
      %3002 = vmatpush1.msra.mxu0 %v2935
      %3003 = vmatprep.subr.mxu0 %v2932
      %3004 = vmatpush1.msra.mxu0 %v2931
      %3005 = vmatprep.subr.mxu0 %v2928
      %3006 = vmatpush1.msra.mxu0 %v2927
      %3007 = vmatprep.subr.mxu0 0.0
      %3008 = vmatpush2.msra.mxu0 0.0
      %3009 = vmatprep.subr.mxu0 0.0
      %3010 = vmatpush2.msra.mxu0 0.0
      %3011 = vmatprep.subr.mxu0 0.0
      %3012 = vmatpush2.msra.mxu0 0.0
      %3013 = vmatprep.subr.mxu0 0.0
      %3014 = vmatpush2.msra.mxu0 0.0
      %3015 = vmatprep.subr.mxu0 0.0
      %3016 = vmatpush2.msra.mxu0 0.0
      %3017 = vmatprep.subr.mxu0 0.0
      %3018 = vmatpush2.msra.mxu0 0.0
      %3019 = vmatprep.subr.mxu0 0.0
      %3020 = vmatpush2.msra.mxu0 0.0
      %3021 = vmatprep.subr.mxu0 0.0
      %3022 = vmatpush2.msra.mxu0 0.0
      %3023 = vmatprep.subr.mxu0 0.0
      %3024 = vmatpush2.msra.mxu0 0.0
      %3025 = vmatprep.subr.mxu0 0.0
      %3026 = vmatpush2.msra.mxu0 0.0
      %3027 = vmatprep.subr.mxu0 0.0
      %3028 = vmatpush2.msra.mxu0 0.0
      %3029 = vmatprep.subr.mxu0 0.0
      %3030 = vmatpush2.msra.mxu0 0.0
      %3031 = vmatprep.subr.mxu0 0.0
      %3032 = vmatpush2.msra.mxu0 0.0
      %3033 = vmatprep.subr.mxu0 0.0
      %3034 = vmatpush2.msra.mxu0 0.0
      %3035 = vmatprep.subr.mxu0 0.0
      %3036 = vmatpush2.msra.mxu0 0.0
      %3037 = vmatprep.subr.mxu0 0.0
      %3038 = vmatpush2.msra.mxu0 0.0
      %3039 = vmatprep.mubr.f32.mxu0 0.0
      %3040 = vmatmul.mubr.f32.gmra.mxu0 %v2964
      %v3041 = vpop.f32.mrf.mxu0
      %v3042 = vadd.f32 0.0, %v3041
      %v3043 = vpop.f32.mrf.mxu0
      %v3044 = vadd.f32 0.0, %v3043
      %3045 = vmatprep.mubr.f32.mxu0 0.0
      %3046 = vmatmul.mubr.f32.gmra.mxu0 %v2967
      %v3047 = vpop.f32.mrf.mxu0
      %v3048 = vadd.f32 0.0, %v3047
      %v3049 = vpop.f32.mrf.mxu0
      %v3050 = vadd.f32 0.0, %v3049
      %3051 = vmatprep.mubr.f32.mxu0 0.0
      %3052 = vmatmul.mubr.f32.gmra.mxu0 %v2970
      %v3053 = vpop.f32.mrf.mxu0
      %v3054 = vadd.f32 0.0, %v3053
      %v3055 = vpop.f32.mrf.mxu0
      %v3056 = vadd.f32 0.0, %v3055
      %3057 = vmatprep.mubr.f32.mxu0 0.0
      %3058 = vmatmul.mubr.f32.gmra.mxu0 %v2973
      %v3059 = vpop.f32.mrf.mxu0
      %v3060 = vadd.f32 0.0, %v3059
      %v3061 = vpop.f32.mrf.mxu0
      %v3062 = vadd.f32 0.0, %v3061
      %3063 = vdwg.mxu0
      %3064 = vmatprep.subr.mxu0 0.0
      %3065 = vmatpush1.msra.mxu0 0.0
      %3066 = vmatprep.subr.mxu0 0.0
      %3067 = vmatpush1.msra.mxu0 0.0
      %3068 = vmatprep.subr.mxu0 0.0
      %3069 = vmatpush1.msra.mxu0 0.0
      %3070 = vmatprep.subr.mxu0 0.0
      %3071 = vmatpush1.msra.mxu0 0.0
      %3072 = vmatprep.subr.mxu0 0.0
      %3073 = vmatpush1.msra.mxu0 0.0
      %3074 = vmatprep.subr.mxu0 0.0
      %3075 = vmatpush1.msra.mxu0 0.0
      %3076 = vmatprep.subr.mxu0 0.0
      %3077 = vmatpush1.msra.mxu0 0.0
      %3078 = vmatprep.subr.mxu0 0.0
      %3079 = vmatpush1.msra.mxu0 0.0
      %3080 = vmatprep.subr.mxu0 0.0
      %3081 = vmatpush1.msra.mxu0 0.0
      %3082 = vmatprep.subr.mxu0 0.0
      %3083 = vmatpush1.msra.mxu0 0.0
      %3084 = vmatprep.subr.mxu0 0.0
      %3085 = vmatpush1.msra.mxu0 0.0
      %3086 = vmatprep.subr.mxu0 0.0
      %3087 = vmatpush1.msra.mxu0 0.0
      %3088 = vmatprep.subr.mxu0 %v2942
      %3089 = vmatpush1.msra.mxu0 %v2941
      %3090 = vmatprep.subr.mxu0 %v2938
      %3091 = vmatpush1.msra.mxu0 %v2937
      %3092 = vmatprep.subr.mxu0 %v2934
      %3093 = vmatpush1.msra.mxu0 %v2933
      %3094 = vmatprep.subr.mxu0 %v2930
      %3095 = vmatpush1.msra.mxu0 %v2929
      %3096 = vmatprep.subr.mxu0 0.0
      %3097 = vmatpush2.msra.mxu0 0.0
      %3098 = vmatprep.subr.mxu0 0.0
      %3099 = vmatpush2.msra.mxu0 0.0
      %3100 = vmatprep.subr.mxu0 0.0
      %3101 = vmatpush2.msra.mxu0 0.0
      %3102 = vmatprep.subr.mxu0 0.0
      %3103 = vmatpush2.msra.mxu0 0.0
      %3104 = vmatprep.subr.mxu0 0.0
      %3105 = vmatpush2.msra.mxu0 0.0
      %3106 = vmatprep.subr.mxu0 0.0
      %3107 = vmatpush2.msra.mxu0 0.0
      %3108 = vmatprep.subr.mxu0 0.0
      %3109 = vmatpush2.msra.mxu0 0.0
      %3110 = vmatprep.subr.mxu0 0.0
      %3111 = vmatpush2.msra.mxu0 0.0
      %3112 = vmatprep.subr.mxu0 0.0
      %3113 = vmatpush2.msra.mxu0 0.0
      %3114 = vmatprep.subr.mxu0 0.0
      %3115 = vmatpush2.msra.mxu0 0.0
      %3116 = vmatprep.subr.mxu0 0.0
      %3117 = vmatpush2.msra.mxu0 0.0
      %3118 = vmatprep.subr.mxu0 0.0
      %3119 = vmatpush2.msra.mxu0 0.0
      %3120 = vmatprep.subr.mxu0 0.0
      %3121 = vmatpush2.msra.mxu0 0.0
      %3122 = vmatprep.subr.mxu0 0.0
      %3123 = vmatpush2.msra.mxu0 0.0
      %3124 = vmatprep.subr.mxu0 0.0
      %3125 = vmatpush2.msra.mxu0 0.0
      %3126 = vmatprep.subr.mxu0 0.0
      %3127 = vmatpush2.msra.mxu0 0.0
      %3128 = vmatprep.mubr.f32.mxu0 0.0
      %3129 = vmatmul.mubr.f32.gmra.mxu0 %v2964
      %v3130 = vpop.f32.mrf.mxu0
      %v3131 = vadd.f32 0.0, %v3130
      %v3132 = vpop.f32.mrf.mxu0
      %v3133 = vadd.f32 0.0, %v3132
      %3134 = vmatprep.mubr.f32.mxu0 0.0
      %3135 = vmatmul.mubr.f32.gmra.mxu0 %v2967
      %v3136 = vpop.f32.mrf.mxu0
      %v3137 = vadd.f32 0.0, %v3136
      %v3138 = vpop.f32.mrf.mxu0
      %v3139 = vadd.f32 0.0, %v3138
      %3140 = vmatprep.mubr.f32.mxu0 0.0
      %3141 = vmatmul.mubr.f32.gmra.mxu0 %v2970
      %v3142 = vpop.f32.mrf.mxu0
      %v3143 = vadd.f32 0.0, %v3142
      %v3144 = vpop.f32.mrf.mxu0
      %v3145 = vadd.f32 0.0, %v3144
      %3146 = vmatprep.mubr.f32.mxu0 0.0
      %3147 = vmatmul.mubr.f32.gmra.mxu0 %v2973
      %v3148 = vpop.f32.mrf.mxu0
      %v3149 = vadd.f32 0.0, %v3148
      %v3150 = vpop.f32.mrf.mxu0
      %v3151 = vadd.f32 0.0, %v3150
      %3152 = vdwg.mxu0
      %3153 = vmatprep.subr.mxu0 0.0
      %3154 = vmatpush1.msra.mxu0 0.0
      %3155 = vmatprep.subr.mxu0 0.0
      %3156 = vmatpush1.msra.mxu0 0.0
      %3157 = vmatprep.subr.mxu0 0.0
      %3158 = vmatpush1.msra.mxu0 0.0
      %3159 = vmatprep.subr.mxu0 0.0
      %3160 = vmatpush1.msra.mxu0 0.0
      %3161 = vmatprep.subr.mxu0 0.0
      %3162 = vmatpush1.msra.mxu0 0.0
      %3163 = vmatprep.subr.mxu0 0.0
      %3164 = vmatpush1.msra.mxu0 0.0
      %3165 = vmatprep.subr.mxu0 0.0
      %3166 = vmatpush1.msra.mxu0 0.0
      %3167 = vmatprep.subr.mxu0 0.0
      %3168 = vmatpush1.msra.mxu0 0.0
      %3169 = vmatprep.subr.mxu0 0.0
      %3170 = vmatpush1.msra.mxu0 0.0
      %3171 = vmatprep.subr.mxu0 0.0
      %3172 = vmatpush1.msra.mxu0 0.0
      %3173 = vmatprep.subr.mxu0 0.0
      %3174 = vmatpush1.msra.mxu0 0.0
      %3175 = vmatprep.subr.mxu0 0.0
      %3176 = vmatpush1.msra.mxu0 0.0
      %3177 = vmatprep.subr.mxu0 0.0
      %3178 = vmatpush1.msra.mxu0 %v2925
      %3179 = vmatprep.subr.mxu0 0.0
      %3180 = vmatpush1.msra.mxu0 %v2915
      %3181 = vmatprep.subr.mxu0 0.0
      %3182 = vmatpush1.msra.mxu0 %v2905
      %3183 = vmatprep.subr.mxu0 0.0
      %3184 = vmatpush1.msra.mxu0 %v2895
      %3185 = vmatprep.subr.mxu0 0.0
      %3186 = vmatpush2.msra.mxu0 0.0
      %3187 = vmatprep.subr.mxu0 0.0
      %3188 = vmatpush2.msra.mxu0 0.0
      %3189 = vmatprep.subr.mxu0 0.0
      %3190 = vmatpush2.msra.mxu0 0.0
      %3191 = vmatprep.subr.mxu0 0.0
      %3192 = vmatpush2.msra.mxu0 0.0
      %3193 = vmatprep.subr.mxu0 0.0
      %3194 = vmatpush2.msra.mxu0 0.0
      %3195 = vmatprep.subr.mxu0 0.0
      %3196 = vmatpush2.msra.mxu0 0.0
      %3197 = vmatprep.subr.mxu0 0.0
      %3198 = vmatpush2.msra.mxu0 0.0
      %3199 = vmatprep.subr.mxu0 0.0
      %3200 = vmatpush2.msra.mxu0 0.0
      %3201 = vmatprep.subr.mxu0 0.0
      %3202 = vmatpush2.msra.mxu0 0.0
      %3203 = vmatprep.subr.mxu0 0.0
      %3204 = vmatpush2.msra.mxu0 0.0
      %3205 = vmatprep.subr.mxu0 0.0
      %3206 = vmatpush2.msra.mxu0 0.0
      %3207 = vmatprep.subr.mxu0 0.0
      %3208 = vmatpush2.msra.mxu0 0.0
      %3209 = vmatprep.subr.mxu0 0.0
      %3210 = vmatpush2.msra.mxu0 0.0
      %3211 = vmatprep.subr.mxu0 0.0
      %3212 = vmatpush2.msra.mxu0 0.0
      %3213 = vmatprep.subr.mxu0 0.0
      %3214 = vmatpush2.msra.mxu0 0.0
      %3215 = vmatprep.subr.mxu0 0.0
      %3216 = vmatpush2.msra.mxu0 0.0
      %3217 = vmatprep.mubr.f32.mxu0 0.0
      %3218 = vmatmul.mubr.f32.gmra.mxu0 %v2964
      %v3219 = vpop.f32.mrf.mxu0
      %v3220 = vadd.f32 0.0, %v3219
      %v3221 = vpop.f32.mrf.mxu0
      %3222 = vmatprep.mubr.f32.mxu0 0.0
      %3223 = vmatmul.mubr.f32.gmra.mxu0 %v2967
      %v3224 = vpop.f32.mrf.mxu0
      %v3225 = vadd.f32 0.0, %v3224
      %v3226 = vpop.f32.mrf.mxu0
      %3227 = vmatprep.mubr.f32.mxu0 0.0
      %3228 = vmatmul.mubr.f32.gmra.mxu0 %v2970
      %v3229 = vpop.f32.mrf.mxu0
      %v3230 = vadd.f32 0.0, %v3229
      %v3231 = vpop.f32.mrf.mxu0
      %3232 = vmatprep.mubr.f32.mxu0 0.0
      %3233 = vmatmul.mubr.f32.gmra.mxu0 %v2973
      %v3234 = vpop.f32.mrf.mxu0
      %v3235 = vadd.f32 0.0, %v3234
      %v3236 = vpop.f32.mrf.mxu0
      %3237 = vdwg.mxu0
      %v3238 = vadd.f32 %v2685, %v3042
      %v3239 = vadd.f32 %v2687, %v3044
      %v3240 = vadd.f32 %v2774, %v3131
      %v3241 = vadd.f32 %v2776, %v3133
      %v3242 = vadd.f32 %v2863, %v3220
      %v3243 = vadd.f32 %v2691, %v3048
      %v3244 = vadd.f32 %v2693, %v3050
      %v3245 = vadd.f32 %v2780, %v3137
      %v3246 = vadd.f32 %v2782, %v3139
      %v3247 = vadd.f32 %v2868, %v3225
      %v3248 = vadd.f32 %v2697, %v3054
      %v3249 = vadd.f32 %v2699, %v3056
      %v3250 = vadd.f32 %v2786, %v3143
      %v3251 = vadd.f32 %v2788, %v3145
      %v3252 = vadd.f32 %v2873, %v3230
      %v3253 = vadd.f32 %v2703, %v3060
      %v3254 = vadd.f32 %v2705, %v3062
      %v3255 = vadd.f32 %v2792, %v3149
      %v3256 = vadd.f32 %v2794, %v3151
      %v3257 = vadd.f32 %v2878, %v3235
      %v3258 = vld [vmem:[#allocation2] sm:$0xff]
      %v3259 = vld [vmem:[#allocation2 + $0x8] sm:$0xff]
      %v3260 = vld [vmem:[#allocation2 + $0x10] sm:$0xff]
      %v3261 = vld [vmem:[#allocation2 + $0x18] sm:$0xff]
      %v3262 = vld [vmem:[#allocation2 + $0x20] sm:$0xff]
      %v3263 = vld [vmem:[#allocation2 + $0x28] sm:$0xff]
      %v3264 = vld [vmem:[#allocation2 + $0x30] sm:$0xff]
      %v3265 = vld [vmem:[#allocation2 + $0x38] sm:$0xff]
      %v3266 = vld [vmem:[#allocation2 + $0x40] sm:$0xff]
      %v3267 = vld [vmem:[#allocation2 + $0x48] sm:$0xff]
      %v3268 = vld [vmem:[#allocation2 + $0x50] sm:$0xff]
      %v3269 = vld [vmem:[#allocation2 + $0x58] sm:$0xff]
      %v3270 = vld [vmem:[#allocation2 + $0x60] sm:$0xff]
      %v3271 = vld [vmem:[#allocation2 + $0x68] sm:$0xff]
      %v3272 = vld [vmem:[#allocation2 + $0x70] sm:$0xff]
      %v3273 = vld [vmem:[#allocation2 + $0x78] sm:$0xff]
      %v3274 = vld [vmem:[#allocation2 + $0x80] sm:$0xff]
      %v3275 = vld [vmem:[#allocation2 + $0x88] sm:$0xff]
      %v3276 = vld [vmem:[#allocation2 + $0x90] sm:$0xff]
      %v3277 = vld [vmem:[#allocation2 + $0x98] sm:$0xff]
      %v3278 = vld [vmem:[#allocation2 + $0xa0] sm:$0xff]
      %v3279 = vld [vmem:[#allocation2 + $0xa8] sm:$0xff]
      %v3280 = vld [vmem:[#allocation2 + $0xb0] sm:$0xff]
      %v3281 = vld [vmem:[#allocation2 + $0xb8] sm:$0xff]
      %s3282 = scalar_lea.vmem %s3, 96
      %v3283 = vld [vmem:[%s3282] sm:$0xff]
      %v3284 = vld [vmem:[%s3282 + $0x8] sm:$0xff]
      %v3285 = vld [vmem:[%s3282 + $0x10] sm:$0xff]
      %v3286 = vld [vmem:[%s3282 + $0x18] sm:$0xff]
      %3311 = vrot.lane.b32.xlu0 %v3258, 72
      %v3312 = vpop.permute.xlu0 %3311
      %3313 = vrot.lane.b32.xlu0 %v3259, 72
      %v3314 = vpop.permute.xlu0 %3313
      %3315 = vrot.lane.b32.xlu0 %v3260, 72
      %v3316 = vpop.permute.xlu0 %3315
      %3317 = vrot.lane.b32.xlu0 %v3261, 72
      %v3318 = vpop.permute.xlu0 %3317
      %3319 = vrot.lane.b32.xlu0 %v3262, 72
      %v3320 = vpop.permute.xlu0 %3319
      %3321 = vrot.lane.b32.xlu0 %v3263, 72
      %v3322 = vpop.permute.xlu0 %3321
      %3323 = vrot.lane.b32.xlu0 %v3264, 72
      %v3324 = vpop.permute.xlu0 %3323
      %3325 = vrot.lane.b32.xlu0 %v3265, 72
      %v3326 = vpop.permute.xlu0 %3325
      %3327 = vrot.lane.b32.xlu0 %v3266, 72
      %v3328 = vpop.permute.xlu0 %3327
      %3329 = vrot.lane.b32.xlu0 %v3267, 72
      %v3330 = vpop.permute.xlu0 %3329
      %3331 = vrot.lane.b32.xlu0 %v3268, 72
      %v3332 = vpop.permute.xlu0 %3331
      %3333 = vrot.lane.b32.xlu0 %v3269, 72
      %v3334 = vpop.permute.xlu0 %3333
      %3335 = vrot.lane.b32.xlu0 %v3270, 72
      %v3336 = vpop.permute.xlu0 %3335
      %3337 = vrot.lane.b32.xlu0 %v3271, 72
      %v3338 = vpop.permute.xlu0 %3337
      %3339 = vrot.lane.b32.xlu0 %v3272, 72
      %v3340 = vpop.permute.xlu0 %3339
      %3341 = vrot.lane.b32.xlu0 %v3273, 72
      %v3342 = vpop.permute.xlu0 %3341
      %3343 = vrot.lane.b32.xlu0 %v3274, 72
      %v3344 = vpop.permute.xlu0 %3343
      %3345 = vrot.lane.b32.xlu0 %v3275, 72
      %v3346 = vpop.permute.xlu0 %3345
      %3347 = vrot.lane.b32.xlu0 %v3276, 72
      %v3348 = vpop.permute.xlu0 %3347
      %3349 = vrot.lane.b32.xlu0 %v3277, 72
      %v3350 = vpop.permute.xlu0 %3349
      %3351 = vrot.lane.b32.xlu0 %v3278, 72
      %v3352 = vpop.permute.xlu0 %3351
      %3353 = vrot.lane.b32.xlu0 %v3279, 72
      %v3354 = vpop.permute.xlu0 %3353
      %3355 = vrot.lane.b32.xlu0 %v3280, 72
      %v3356 = vpop.permute.xlu0 %3355
      %3357 = vrot.lane.b32.xlu0 %v3281, 72
      %v3358 = vpop.permute.xlu0 %3357
      %v3359 = vsel %vm1585, %v3312, %v3314
      %v3360 = vsel %vm1585, %v3314, %v3316
      %v3361 = vsel %vm1585, %v3316, %v3318
      %v3362 = vsel %vm1585, %v3318, %v3320
      %v3363 = vsel %vm1585, %v3320, %v3322
      %v3364 = vsel %vm1585, %v3324, %v3326
      %v3365 = vsel %vm1585, %v3326, %v3328
      %v3366 = vsel %vm1585, %v3328, %v3330
      %v3367 = vsel %vm1585, %v3330, %v3332
      %v3368 = vsel %vm1585, %v3332, %v3334
      %v3369 = vsel %vm1585, %v3336, %v3338
      %v3370 = vsel %vm1585, %v3338, %v3340
      %v3371 = vsel %vm1585, %v3340, %v3342
      %v3372 = vsel %vm1585, %v3342, %v3344
      %v3373 = vsel %vm1585, %v3344, %v3346
      %v3374 = vsel %vm1585, %v3348, %v3350
      %v3375 = vsel %vm1585, %v3350, %v3352
      %v3376 = vsel %vm1585, %v3352, %v3354
      %v3377 = vsel %vm1585, %v3354, %v3356
      %v3378 = vsel %vm1585, %v3356, %v3358
      %v3400 = vsel %vm2330, %v3283, 0
      %v3403 = vsel %vm2330, %v3284, 0
      %v3406 = vsel %vm2330, %v3285, 0
      %v3409 = vsel %vm2330, %v3286, 0
      %3411 = vmatprep.subr.mxu0 0.0
      %3412 = vmatpush1.msra.mxu0 0.0
      %3413 = vmatprep.subr.mxu0 0.0
      %3414 = vmatpush1.msra.mxu0 0.0
      %3415 = vmatprep.subr.mxu0 0.0
      %3416 = vmatpush1.msra.mxu0 0.0
      %3417 = vmatprep.subr.mxu0 0.0
      %3418 = vmatpush1.msra.mxu0 0.0
      %3419 = vmatprep.subr.mxu0 0.0
      %3420 = vmatpush1.msra.mxu0 0.0
      %3421 = vmatprep.subr.mxu0 0.0
      %3422 = vmatpush1.msra.mxu0 0.0
      %3423 = vmatprep.subr.mxu0 0.0
      %3424 = vmatpush1.msra.mxu0 0.0
      %3425 = vmatprep.subr.mxu0 0.0
      %3426 = vmatpush1.msra.mxu0 0.0
      %3427 = vmatprep.subr.mxu0 0.0
      %3428 = vmatpush1.msra.mxu0 0.0
      %3429 = vmatprep.subr.mxu0 0.0
      %3430 = vmatpush1.msra.mxu0 0.0
      %3431 = vmatprep.subr.mxu0 0.0
      %3432 = vmatpush1.msra.mxu0 0.0
      %3433 = vmatprep.subr.mxu0 0.0
      %3434 = vmatpush1.msra.mxu0 0.0
      %3435 = vmatprep.subr.mxu0 %v3375
      %3436 = vmatpush1.msra.mxu0 %v3374
      %3437 = vmatprep.subr.mxu0 %v3370
      %3438 = vmatpush1.msra.mxu0 %v3369
      %3439 = vmatprep.subr.mxu0 %v3365
      %3440 = vmatpush1.msra.mxu0 %v3364
      %3441 = vmatprep.subr.mxu0 %v3360
      %3442 = vmatpush1.msra.mxu0 %v3359
      %3443 = vmatprep.subr.mxu0 0.0
      %3444 = vmatpush2.msra.mxu0 0.0
      %3445 = vmatprep.subr.mxu0 0.0
      %3446 = vmatpush2.msra.mxu0 0.0
      %3447 = vmatprep.subr.mxu0 0.0
      %3448 = vmatpush2.msra.mxu0 0.0
      %3449 = vmatprep.subr.mxu0 0.0
      %3450 = vmatpush2.msra.mxu0 0.0
      %3451 = vmatprep.subr.mxu0 0.0
      %3452 = vmatpush2.msra.mxu0 0.0
      %3453 = vmatprep.subr.mxu0 0.0
      %3454 = vmatpush2.msra.mxu0 0.0
      %3455 = vmatprep.subr.mxu0 0.0
      %3456 = vmatpush2.msra.mxu0 0.0
      %3457 = vmatprep.subr.mxu0 0.0
      %3458 = vmatpush2.msra.mxu0 0.0
      %3459 = vmatprep.subr.mxu0 0.0
      %3460 = vmatpush2.msra.mxu0 0.0
      %3461 = vmatprep.subr.mxu0 0.0
      %3462 = vmatpush2.msra.mxu0 0.0
      %3463 = vmatprep.subr.mxu0 0.0
      %3464 = vmatpush2.msra.mxu0 0.0
      %3465 = vmatprep.subr.mxu0 0.0
      %3466 = vmatpush2.msra.mxu0 0.0
      %3467 = vmatprep.subr.mxu0 0.0
      %3468 = vmatpush2.msra.mxu0 0.0
      %3469 = vmatprep.subr.mxu0 0.0
      %3470 = vmatpush2.msra.mxu0 0.0
      %3471 = vmatprep.subr.mxu0 0.0
      %3472 = vmatpush2.msra.mxu0 0.0
      %3473 = vmatprep.subr.mxu0 0.0
      %3474 = vmatpush2.msra.mxu0 0.0
      %3475 = vmatprep.mubr.f32.mxu0 0.0
      %3476 = vmatmul.mubr.f32.gmra.mxu0 %v3400
      %v3477 = vpop.f32.mrf.mxu0
      %v3478 = vadd.f32 0.0, %v3477
      %v3479 = vpop.f32.mrf.mxu0
      %v3480 = vadd.f32 0.0, %v3479
      %3481 = vmatprep.mubr.f32.mxu0 0.0
      %3482 = vmatmul.mubr.f32.gmra.mxu0 %v3403
      %v3483 = vpop.f32.mrf.mxu0
      %v3484 = vadd.f32 0.0, %v3483
      %v3485 = vpop.f32.mrf.mxu0
      %v3486 = vadd.f32 0.0, %v3485
      %3487 = vmatprep.mubr.f32.mxu0 0.0
      %3488 = vmatmul.mubr.f32.gmra.mxu0 %v3406
      %v3489 = vpop.f32.mrf.mxu0
      %v3490 = vadd.f32 0.0, %v3489
      %v3491 = vpop.f32.mrf.mxu0
      %v3492 = vadd.f32 0.0, %v3491
      %3493 = vmatprep.mubr.f32.mxu0 0.0
      %3494 = vmatmul.mubr.f32.gmra.mxu0 %v3409
      %v3495 = vpop.f32.mrf.mxu0
      %v3496 = vadd.f32 0.0, %v3495
      %v3497 = vpop.f32.mrf.mxu0
      %v3498 = vadd.f32 0.0, %v3497
      %3499 = vdwg.mxu0
      %3500 = vmatprep.subr.mxu0 0.0
      %3501 = vmatpush1.msra.mxu0 0.0
      %3502 = vmatprep.subr.mxu0 0.0
      %3503 = vmatpush1.msra.mxu0 0.0
      %3504 = vmatprep.subr.mxu0 0.0
      %3505 = vmatpush1.msra.mxu0 0.0
      %3506 = vmatprep.subr.mxu0 0.0
      %3507 = vmatpush1.msra.mxu0 0.0
      %3508 = vmatprep.subr.mxu0 0.0
      %3509 = vmatpush1.msra.mxu0 0.0
      %3510 = vmatprep.subr.mxu0 0.0
      %3511 = vmatpush1.msra.mxu0 0.0
      %3512 = vmatprep.subr.mxu0 0.0
      %3513 = vmatpush1.msra.mxu0 0.0
      %3514 = vmatprep.subr.mxu0 0.0
      %3515 = vmatpush1.msra.mxu0 0.0
      %3516 = vmatprep.subr.mxu0 0.0
      %3517 = vmatpush1.msra.mxu0 0.0
      %3518 = vmatprep.subr.mxu0 0.0
      %3519 = vmatpush1.msra.mxu0 0.0
      %3520 = vmatprep.subr.mxu0 0.0
      %3521 = vmatpush1.msra.mxu0 0.0
      %3522 = vmatprep.subr.mxu0 0.0
      %3523 = vmatpush1.msra.mxu0 0.0
      %3524 = vmatprep.subr.mxu0 %v3377
      %3525 = vmatpush1.msra.mxu0 %v3376
      %3526 = vmatprep.subr.mxu0 %v3372
      %3527 = vmatpush1.msra.mxu0 %v3371
      %3528 = vmatprep.subr.mxu0 %v3367
      %3529 = vmatpush1.msra.mxu0 %v3366
      %3530 = vmatprep.subr.mxu0 %v3362
      %3531 = vmatpush1.msra.mxu0 %v3361
      %3532 = vmatprep.subr.mxu0 0.0
      %3533 = vmatpush2.msra.mxu0 0.0
      %3534 = vmatprep.subr.mxu0 0.0
      %3535 = vmatpush2.msra.mxu0 0.0
      %3536 = vmatprep.subr.mxu0 0.0
      %3537 = vmatpush2.msra.mxu0 0.0
      %3538 = vmatprep.subr.mxu0 0.0
      %3539 = vmatpush2.msra.mxu0 0.0
      %3540 = vmatprep.subr.mxu0 0.0
      %3541 = vmatpush2.msra.mxu0 0.0
      %3542 = vmatprep.subr.mxu0 0.0
      %3543 = vmatpush2.msra.mxu0 0.0
      %3544 = vmatprep.subr.mxu0 0.0
      %3545 = vmatpush2.msra.mxu0 0.0
      %3546 = vmatprep.subr.mxu0 0.0
      %3547 = vmatpush2.msra.mxu0 0.0
      %3548 = vmatprep.subr.mxu0 0.0
      %3549 = vmatpush2.msra.mxu0 0.0
      %3550 = vmatprep.subr.mxu0 0.0
      %3551 = vmatpush2.msra.mxu0 0.0
      %3552 = vmatprep.subr.mxu0 0.0
      %3553 = vmatpush2.msra.mxu0 0.0
      %3554 = vmatprep.subr.mxu0 0.0
      %3555 = vmatpush2.msra.mxu0 0.0
      %3556 = vmatprep.subr.mxu0 0.0
      %3557 = vmatpush2.msra.mxu0 0.0
      %3558 = vmatprep.subr.mxu0 0.0
      %3559 = vmatpush2.msra.mxu0 0.0
      %3560 = vmatprep.subr.mxu0 0.0
      %3561 = vmatpush2.msra.mxu0 0.0
      %3562 = vmatprep.subr.mxu0 0.0
      %3563 = vmatpush2.msra.mxu0 0.0
      %3564 = vmatprep.mubr.f32.mxu0 0.0
      %3565 = vmatmul.mubr.f32.gmra.mxu0 %v3400
      %v3566 = vpop.f32.mrf.mxu0
      %v3567 = vadd.f32 0.0, %v3566
      %v3568 = vpop.f32.mrf.mxu0
      %v3569 = vadd.f32 0.0, %v3568
      %3570 = vmatprep.mubr.f32.mxu0 0.0
      %3571 = vmatmul.mubr.f32.gmra.mxu0 %v3403
      %v3572 = vpop.f32.mrf.mxu0
      %v3573 = vadd.f32 0.0, %v3572
      %v3574 = vpop.f32.mrf.mxu0
      %v3575 = vadd.f32 0.0, %v3574
      %3576 = vmatprep.mubr.f32.mxu0 0.0
      %3577 = vmatmul.mubr.f32.gmra.mxu0 %v3406
      %v3578 = vpop.f32.mrf.mxu0
      %v3579 = vadd.f32 0.0, %v3578
      %v3580 = vpop.f32.mrf.mxu0
      %v3581 = vadd.f32 0.0, %v3580
      %3582 = vmatprep.mubr.f32.mxu0 0.0
      %3583 = vmatmul.mubr.f32.gmra.mxu0 %v3409
      %v3584 = vpop.f32.mrf.mxu0
      %v3585 = vadd.f32 0.0, %v3584
      %v3586 = vpop.f32.mrf.mxu0
      %v3587 = vadd.f32 0.0, %v3586
      %3588 = vdwg.mxu0
      %3589 = vmatprep.subr.mxu0 0.0
      %3590 = vmatpush1.msra.mxu0 0.0
      %3591 = vmatprep.subr.mxu0 0.0
      %3592 = vmatpush1.msra.mxu0 0.0
      %3593 = vmatprep.subr.mxu0 0.0
      %3594 = vmatpush1.msra.mxu0 0.0
      %3595 = vmatprep.subr.mxu0 0.0
      %3596 = vmatpush1.msra.mxu0 0.0
      %3597 = vmatprep.subr.mxu0 0.0
      %3598 = vmatpush1.msra.mxu0 0.0
      %3599 = vmatprep.subr.mxu0 0.0
      %3600 = vmatpush1.msra.mxu0 0.0
      %3601 = vmatprep.subr.mxu0 0.0
      %3602 = vmatpush1.msra.mxu0 0.0
      %3603 = vmatprep.subr.mxu0 0.0
      %3604 = vmatpush1.msra.mxu0 0.0
      %3605 = vmatprep.subr.mxu0 0.0
      %3606 = vmatpush1.msra.mxu0 0.0
      %3607 = vmatprep.subr.mxu0 0.0
      %3608 = vmatpush1.msra.mxu0 0.0
      %3609 = vmatprep.subr.mxu0 0.0
      %3610 = vmatpush1.msra.mxu0 0.0
      %3611 = vmatprep.subr.mxu0 0.0
      %3612 = vmatpush1.msra.mxu0 0.0
      %3613 = vmatprep.subr.mxu0 0.0
      %3614 = vmatpush1.msra.mxu0 %v3378
      %3615 = vmatprep.subr.mxu0 0.0
      %3616 = vmatpush1.msra.mxu0 %v3373
      %3617 = vmatprep.subr.mxu0 0.0
      %3618 = vmatpush1.msra.mxu0 %v3368
      %3619 = vmatprep.subr.mxu0 0.0
      %3620 = vmatpush1.msra.mxu0 %v3363
      %3621 = vmatprep.subr.mxu0 0.0
      %3622 = vmatpush2.msra.mxu0 0.0
      %3623 = vmatprep.subr.mxu0 0.0
      %3624 = vmatpush2.msra.mxu0 0.0
      %3625 = vmatprep.subr.mxu0 0.0
      %3626 = vmatpush2.msra.mxu0 0.0
      %3627 = vmatprep.subr.mxu0 0.0
      %3628 = vmatpush2.msra.mxu0 0.0
      %3629 = vmatprep.subr.mxu0 0.0
      %3630 = vmatpush2.msra.mxu0 0.0
      %3631 = vmatprep.subr.mxu0 0.0
      %3632 = vmatpush2.msra.mxu0 0.0
      %3633 = vmatprep.subr.mxu0 0.0
      %3634 = vmatpush2.msra.mxu0 0.0
      %3635 = vmatprep.subr.mxu0 0.0
      %3636 = vmatpush2.msra.mxu0 0.0
      %3637 = vmatprep.subr.mxu0 0.0
      %3638 = vmatpush2.msra.mxu0 0.0
      %3639 = vmatprep.subr.mxu0 0.0
      %3640 = vmatpush2.msra.mxu0 0.0
      %3641 = vmatprep.subr.mxu0 0.0
      %3642 = vmatpush2.msra.mxu0 0.0
      %3643 = vmatprep.subr.mxu0 0.0
      %3644 = vmatpush2.msra.mxu0 0.0
      %3645 = vmatprep.subr.mxu0 0.0
      %3646 = vmatpush2.msra.mxu0 0.0
      %3647 = vmatprep.subr.mxu0 0.0
      %3648 = vmatpush2.msra.mxu0 0.0
      %3649 = vmatprep.subr.mxu0 0.0
      %3650 = vmatpush2.msra.mxu0 0.0
      %3651 = vmatprep.subr.mxu0 0.0
      %3652 = vmatpush2.msra.mxu0 0.0
      %3653 = vmatprep.mubr.f32.mxu0 0.0
      %3654 = vmatmul.mubr.f32.gmra.mxu0 %v3400
      %v3655 = vpop.f32.mrf.mxu0
      %v3656 = vadd.f32 0.0, %v3655
      %v3657 = vpop.f32.mrf.mxu0
      %3658 = vmatprep.mubr.f32.mxu0 0.0
      %3659 = vmatmul.mubr.f32.gmra.mxu0 %v3403
      %v3660 = vpop.f32.mrf.mxu0
      %v3661 = vadd.f32 0.0, %v3660
      %v3662 = vpop.f32.mrf.mxu0
      %3663 = vmatprep.mubr.f32.mxu0 0.0
      %3664 = vmatmul.mubr.f32.gmra.mxu0 %v3406
      %v3665 = vpop.f32.mrf.mxu0
      %v3666 = vadd.f32 0.0, %v3665
      %v3667 = vpop.f32.mrf.mxu0
      %3668 = vmatprep.mubr.f32.mxu0 0.0
      %3669 = vmatmul.mubr.f32.gmra.mxu0 %v3409
      %v3670 = vpop.f32.mrf.mxu0
      %v3671 = vadd.f32 0.0, %v3670
      %v3672 = vpop.f32.mrf.mxu0
      %3673 = vdwg.mxu0
      %v3674 = vadd.f32 %v3238, %v3478
      %v3675 = vadd.f32 %v3239, %v3480
      %v3676 = vadd.f32 %v3240, %v3567
      %v3677 = vadd.f32 %v3241, %v3569
      %v3678 = vadd.f32 %v3242, %v3656
      %v3679 = vadd.f32 %v3243, %v3484
      %v3680 = vadd.f32 %v3244, %v3486
      %v3681 = vadd.f32 %v3245, %v3573
      %v3682 = vadd.f32 %v3246, %v3575
      %v3683 = vadd.f32 %v3247, %v3661
      %v3684 = vadd.f32 %v3248, %v3490
      %v3685 = vadd.f32 %v3249, %v3492
      %v3686 = vadd.f32 %v3250, %v3579
      %v3687 = vadd.f32 %v3251, %v3581
      %v3688 = vadd.f32 %v3252, %v3666
      %v3689 = vadd.f32 %v3253, %v3496
      %v3690 = vadd.f32 %v3254, %v3498
      %v3691 = vadd.f32 %v3255, %v3585
      %v3692 = vadd.f32 %v3256, %v3587
      %v3693 = vadd.f32 %v3257, %v3671
      %s3694 = scalar_lea.vmem %s3, 128
      %v3695 = vld [vmem:[%s3694] sm:$0xff]
      %v3696 = vld [vmem:[%s3694 + $0x8] sm:$0xff]
      %v3697 = vld [vmem:[%s3694 + $0x10] sm:$0xff]
      %v3698 = vld [vmem:[%s3694 + $0x18] sm:$0xff]
      %3699 = vrot.lane.b32.xlu0 %v3258, 70
      %v3700 = vpop.permute.xlu0 %3699
      %3701 = vrot.lane.b32.xlu0 %v3259, 70
      %v3702 = vpop.permute.xlu0 %3701
      %3703 = vrot.lane.b32.xlu0 %v3260, 70
      %v3704 = vpop.permute.xlu0 %3703
      %3705 = vrot.lane.b32.xlu0 %v3261, 70
      %v3706 = vpop.permute.xlu0 %3705
      %3707 = vrot.lane.b32.xlu0 %v3262, 70
      %v3708 = vpop.permute.xlu0 %3707
      %3709 = vrot.lane.b32.xlu0 %v3263, 70
      %v3710 = vpop.permute.xlu0 %3709
      %3711 = vrot.lane.b32.xlu0 %v3264, 70
      %v3712 = vpop.permute.xlu0 %3711
      %3713 = vrot.lane.b32.xlu0 %v3265, 70
      %v3714 = vpop.permute.xlu0 %3713
      %3715 = vrot.lane.b32.xlu0 %v3266, 70
      %v3716 = vpop.permute.xlu0 %3715
      %3717 = vrot.lane.b32.xlu0 %v3267, 70
      %v3718 = vpop.permute.xlu0 %3717
      %3719 = vrot.lane.b32.xlu0 %v3268, 70
      %v3720 = vpop.permute.xlu0 %3719
      %3721 = vrot.lane.b32.xlu0 %v3269, 70
      %v3722 = vpop.permute.xlu0 %3721
      %3723 = vrot.lane.b32.xlu0 %v3270, 70
      %v3724 = vpop.permute.xlu0 %3723
      %3725 = vrot.lane.b32.xlu0 %v3271, 70
      %v3726 = vpop.permute.xlu0 %3725
      %3727 = vrot.lane.b32.xlu0 %v3272, 70
      %v3728 = vpop.permute.xlu0 %3727
      %3729 = vrot.lane.b32.xlu0 %v3273, 70
      %v3730 = vpop.permute.xlu0 %3729
      %3731 = vrot.lane.b32.xlu0 %v3274, 70
      %v3732 = vpop.permute.xlu0 %3731
      %3733 = vrot.lane.b32.xlu0 %v3275, 70
      %v3734 = vpop.permute.xlu0 %3733
      %3735 = vrot.lane.b32.xlu0 %v3276, 70
      %v3736 = vpop.permute.xlu0 %3735
      %3737 = vrot.lane.b32.xlu0 %v3277, 70
      %v3738 = vpop.permute.xlu0 %3737
      %3739 = vrot.lane.b32.xlu0 %v3278, 70
      %v3740 = vpop.permute.xlu0 %3739
      %3741 = vrot.lane.b32.xlu0 %v3279, 70
      %v3742 = vpop.permute.xlu0 %3741
      %3743 = vrot.lane.b32.xlu0 %v3280, 70
      %v3744 = vpop.permute.xlu0 %3743
      %3745 = vrot.lane.b32.xlu0 %v3281, 70
      %v3746 = vpop.permute.xlu0 %3745
      %v3747 = vsel %vm1987, %v3700, %v3702
      %v3748 = vsel %vm1987, %v3702, %v3704
      %v3749 = vsel %vm1987, %v3704, %v3706
      %v3750 = vsel %vm1987, %v3706, %v3708
      %v3751 = vsel %vm1987, %v3708, %v3710
      %v3752 = vsel %vm1987, %v3712, %v3714
      %v3753 = vsel %vm1987, %v3714, %v3716
      %v3754 = vsel %vm1987, %v3716, %v3718
      %v3755 = vsel %vm1987, %v3718, %v3720
      %v3756 = vsel %vm1987, %v3720, %v3722
      %v3757 = vsel %vm1987, %v3724, %v3726
      %v3758 = vsel %vm1987, %v3726, %v3728
      %v3759 = vsel %vm1987, %v3728, %v3730
      %v3760 = vsel %vm1987, %v3730, %v3732
      %v3761 = vsel %vm1987, %v3732, %v3734
      %v3762 = vsel %vm1987, %v3736, %v3738
      %v3763 = vsel %vm1987, %v3738, %v3740
      %v3764 = vsel %vm1987, %v3740, %v3742
      %v3765 = vsel %vm1987, %v3742, %v3744
      %v3766 = vsel %vm1987, %v3744, %v3746
      %v3788 = vsel %vm2330, %v3695, 0
      %v3791 = vsel %vm2330, %v3696, 0
      %v3794 = vsel %vm2330, %v3697, 0
      %v3797 = vsel %vm2330, %v3698, 0
      %3799 = vmatprep.subr.mxu0 0.0
      %3800 = vmatpush1.msra.mxu0 0.0
      %3801 = vmatprep.subr.mxu0 0.0
      %3802 = vmatpush1.msra.mxu0 0.0
      %3803 = vmatprep.subr.mxu0 0.0
      %3804 = vmatpush1.msra.mxu0 0.0
      %3805 = vmatprep.subr.mxu0 0.0
      %3806 = vmatpush1.msra.mxu0 0.0
      %3807 = vmatprep.subr.mxu0 0.0
      %3808 = vmatpush1.msra.mxu0 0.0
      %3809 = vmatprep.subr.mxu0 0.0
      %3810 = vmatpush1.msra.mxu0 0.0
      %3811 = vmatprep.subr.mxu0 0.0
      %3812 = vmatpush1.msra.mxu0 0.0
      %3813 = vmatprep.subr.mxu0 0.0
      %3814 = vmatpush1.msra.mxu0 0.0
      %3815 = vmatprep.subr.mxu0 0.0
      %3816 = vmatpush1.msra.mxu0 0.0
      %3817 = vmatprep.subr.mxu0 0.0
      %3818 = vmatpush1.msra.mxu0 0.0
      %3819 = vmatprep.subr.mxu0 0.0
      %3820 = vmatpush1.msra.mxu0 0.0
      %3821 = vmatprep.subr.mxu0 0.0
      %3822 = vmatpush1.msra.mxu0 0.0
      %3823 = vmatprep.subr.mxu0 %v3763
      %3824 = vmatpush1.msra.mxu0 %v3762
      %3825 = vmatprep.subr.mxu0 %v3758
      %3826 = vmatpush1.msra.mxu0 %v3757
      %3827 = vmatprep.subr.mxu0 %v3753
      %3828 = vmatpush1.msra.mxu0 %v3752
      %3829 = vmatprep.subr.mxu0 %v3748
      %3830 = vmatpush1.msra.mxu0 %v3747
      %3831 = vmatprep.subr.mxu0 0.0
      %3832 = vmatpush2.msra.mxu0 0.0
      %3833 = vmatprep.subr.mxu0 0.0
      %3834 = vmatpush2.msra.mxu0 0.0
      %3835 = vmatprep.subr.mxu0 0.0
      %3836 = vmatpush2.msra.mxu0 0.0
      %3837 = vmatprep.subr.mxu0 0.0
      %3838 = vmatpush2.msra.mxu0 0.0
      %3839 = vmatprep.subr.mxu0 0.0
      %3840 = vmatpush2.msra.mxu0 0.0
      %3841 = vmatprep.subr.mxu0 0.0
      %3842 = vmatpush2.msra.mxu0 0.0
      %3843 = vmatprep.subr.mxu0 0.0
      %3844 = vmatpush2.msra.mxu0 0.0
      %3845 = vmatprep.subr.mxu0 0.0
      %3846 = vmatpush2.msra.mxu0 0.0
      %3847 = vmatprep.subr.mxu0 0.0
      %3848 = vmatpush2.msra.mxu0 0.0
      %3849 = vmatprep.subr.mxu0 0.0
      %3850 = vmatpush2.msra.mxu0 0.0
      %3851 = vmatprep.subr.mxu0 0.0
      %3852 = vmatpush2.msra.mxu0 0.0
      %3853 = vmatprep.subr.mxu0 0.0
      %3854 = vmatpush2.msra.mxu0 0.0
      %3855 = vmatprep.subr.mxu0 0.0
      %3856 = vmatpush2.msra.mxu0 0.0
      %3857 = vmatprep.subr.mxu0 0.0
      %3858 = vmatpush2.msra.mxu0 0.0
      %3859 = vmatprep.subr.mxu0 0.0
      %3860 = vmatpush2.msra.mxu0 0.0
      %3861 = vmatprep.subr.mxu0 0.0
      %3862 = vmatpush2.msra.mxu0 0.0
      %3863 = vmatprep.mubr.f32.mxu0 0.0
      %3864 = vmatmul.mubr.f32.gmra.mxu0 %v3788
      %v3865 = vpop.f32.mrf.mxu0
      %v3866 = vadd.f32 0.0, %v3865
      %v3867 = vpop.f32.mrf.mxu0
      %v3868 = vadd.f32 0.0, %v3867
      %3869 = vmatprep.mubr.f32.mxu0 0.0
      %3870 = vmatmul.mubr.f32.gmra.mxu0 %v3791
      %v3871 = vpop.f32.mrf.mxu0
      %v3872 = vadd.f32 0.0, %v3871
      %v3873 = vpop.f32.mrf.mxu0
      %v3874 = vadd.f32 0.0, %v3873
      %3875 = vmatprep.mubr.f32.mxu0 0.0
      %3876 = vmatmul.mubr.f32.gmra.mxu0 %v3794
      %v3877 = vpop.f32.mrf.mxu0
      %v3878 = vadd.f32 0.0, %v3877
      %v3879 = vpop.f32.mrf.mxu0
      %v3880 = vadd.f32 0.0, %v3879
      %3881 = vmatprep.mubr.f32.mxu0 0.0
      %3882 = vmatmul.mubr.f32.gmra.mxu0 %v3797
      %v3883 = vpop.f32.mrf.mxu0
      %v3884 = vadd.f32 0.0, %v3883
      %v3885 = vpop.f32.mrf.mxu0
      %v3886 = vadd.f32 0.0, %v3885
      %3887 = vdwg.mxu0
      %3888 = vmatprep.subr.mxu0 0.0
      %3889 = vmatpush1.msra.mxu0 0.0
      %3890 = vmatprep.subr.mxu0 0.0
      %3891 = vmatpush1.msra.mxu0 0.0
      %3892 = vmatprep.subr.mxu0 0.0
      %3893 = vmatpush1.msra.mxu0 0.0
      %3894 = vmatprep.subr.mxu0 0.0
      %3895 = vmatpush1.msra.mxu0 0.0
      %3896 = vmatprep.subr.mxu0 0.0
      %3897 = vmatpush1.msra.mxu0 0.0
      %3898 = vmatprep.subr.mxu0 0.0
      %3899 = vmatpush1.msra.mxu0 0.0
      %3900 = vmatprep.subr.mxu0 0.0
      %3901 = vmatpush1.msra.mxu0 0.0
      %3902 = vmatprep.subr.mxu0 0.0
      %3903 = vmatpush1.msra.mxu0 0.0
      %3904 = vmatprep.subr.mxu0 0.0
      %3905 = vmatpush1.msra.mxu0 0.0
      %3906 = vmatprep.subr.mxu0 0.0
      %3907 = vmatpush1.msra.mxu0 0.0
      %3908 = vmatprep.subr.mxu0 0.0
      %3909 = vmatpush1.msra.mxu0 0.0
      %3910 = vmatprep.subr.mxu0 0.0
      %3911 = vmatpush1.msra.mxu0 0.0
      %3912 = vmatprep.subr.mxu0 %v3765
      %3913 = vmatpush1.msra.mxu0 %v3764
      %3914 = vmatprep.subr.mxu0 %v3760
      %3915 = vmatpush1.msra.mxu0 %v3759
      %3916 = vmatprep.subr.mxu0 %v3755
      %3917 = vmatpush1.msra.mxu0 %v3754
      %3918 = vmatprep.subr.mxu0 %v3750
      %3919 = vmatpush1.msra.mxu0 %v3749
      %3920 = vmatprep.subr.mxu0 0.0
      %3921 = vmatpush2.msra.mxu0 0.0
      %3922 = vmatprep.subr.mxu0 0.0
      %3923 = vmatpush2.msra.mxu0 0.0
      %3924 = vmatprep.subr.mxu0 0.0
      %3925 = vmatpush2.msra.mxu0 0.0
      %3926 = vmatprep.subr.mxu0 0.0
      %3927 = vmatpush2.msra.mxu0 0.0
      %3928 = vmatprep.subr.mxu0 0.0
      %3929 = vmatpush2.msra.mxu0 0.0
      %3930 = vmatprep.subr.mxu0 0.0
      %3931 = vmatpush2.msra.mxu0 0.0
      %3932 = vmatprep.subr.mxu0 0.0
      %3933 = vmatpush2.msra.mxu0 0.0
      %3934 = vmatprep.subr.mxu0 0.0
      %3935 = vmatpush2.msra.mxu0 0.0
      %3936 = vmatprep.subr.mxu0 0.0
      %3937 = vmatpush2.msra.mxu0 0.0
      %3938 = vmatprep.subr.mxu0 0.0
      %3939 = vmatpush2.msra.mxu0 0.0
      %3940 = vmatprep.subr.mxu0 0.0
      %3941 = vmatpush2.msra.mxu0 0.0
      %3942 = vmatprep.subr.mxu0 0.0
      %3943 = vmatpush2.msra.mxu0 0.0
      %3944 = vmatprep.subr.mxu0 0.0
      %3945 = vmatpush2.msra.mxu0 0.0
      %3946 = vmatprep.subr.mxu0 0.0
      %3947 = vmatpush2.msra.mxu0 0.0
      %3948 = vmatprep.subr.mxu0 0.0
      %3949 = vmatpush2.msra.mxu0 0.0
      %3950 = vmatprep.subr.mxu0 0.0
      %3951 = vmatpush2.msra.mxu0 0.0
      %3952 = vmatprep.mubr.f32.mxu0 0.0
      %3953 = vmatmul.mubr.f32.gmra.mxu0 %v3788
      %v3954 = vpop.f32.mrf.mxu0
      %v3955 = vadd.f32 0.0, %v3954
      %v3956 = vpop.f32.mrf.mxu0
      %v3957 = vadd.f32 0.0, %v3956
      %3958 = vmatprep.mubr.f32.mxu0 0.0
      %3959 = vmatmul.mubr.f32.gmra.mxu0 %v3791
      %v3960 = vpop.f32.mrf.mxu0
      %v3961 = vadd.f32 0.0, %v3960
      %v3962 = vpop.f32.mrf.mxu0
      %v3963 = vadd.f32 0.0, %v3962
      %3964 = vmatprep.mubr.f32.mxu0 0.0
      %3965 = vmatmul.mubr.f32.gmra.mxu0 %v3794
      %v3966 = vpop.f32.mrf.mxu0
      %v3967 = vadd.f32 0.0, %v3966
      %v3968 = vpop.f32.mrf.mxu0
      %v3969 = vadd.f32 0.0, %v3968
      %3970 = vmatprep.mubr.f32.mxu0 0.0
      %3971 = vmatmul.mubr.f32.gmra.mxu0 %v3797
      %v3972 = vpop.f32.mrf.mxu0
      %v3973 = vadd.f32 0.0, %v3972
      %v3974 = vpop.f32.mrf.mxu0
      %v3975 = vadd.f32 0.0, %v3974
      %3976 = vdwg.mxu0
      %3977 = vmatprep.subr.mxu0 0.0
      %3978 = vmatpush1.msra.mxu0 0.0
      %3979 = vmatprep.subr.mxu0 0.0
      %3980 = vmatpush1.msra.mxu0 0.0
      %3981 = vmatprep.subr.mxu0 0.0
      %3982 = vmatpush1.msra.mxu0 0.0
      %3983 = vmatprep.subr.mxu0 0.0
      %3984 = vmatpush1.msra.mxu0 0.0
      %3985 = vmatprep.subr.mxu0 0.0
      %3986 = vmatpush1.msra.mxu0 0.0
      %3987 = vmatprep.subr.mxu0 0.0
      %3988 = vmatpush1.msra.mxu0 0.0
      %3989 = vmatprep.subr.mxu0 0.0
      %3990 = vmatpush1.msra.mxu0 0.0
      %3991 = vmatprep.subr.mxu0 0.0
      %3992 = vmatpush1.msra.mxu0 0.0
      %3993 = vmatprep.subr.mxu0 0.0
      %3994 = vmatpush1.msra.mxu0 0.0
      %3995 = vmatprep.subr.mxu0 0.0
      %3996 = vmatpush1.msra.mxu0 0.0
      %3997 = vmatprep.subr.mxu0 0.0
      %3998 = vmatpush1.msra.mxu0 0.0
      %3999 = vmatprep.subr.mxu0 0.0
      %4000 = vmatpush1.msra.mxu0 0.0
      %4001 = vmatprep.subr.mxu0 0.0
      %4002 = vmatpush1.msra.mxu0 %v3766
      %4003 = vmatprep.subr.mxu0 0.0
      %4004 = vmatpush1.msra.mxu0 %v3761
      %4005 = vmatprep.subr.mxu0 0.0
      %4006 = vmatpush1.msra.mxu0 %v3756
      %4007 = vmatprep.subr.mxu0 0.0
      %4008 = vmatpush1.msra.mxu0 %v3751
      %4009 = vmatprep.subr.mxu0 0.0
      %4010 = vmatpush2.msra.mxu0 0.0
      %4011 = vmatprep.subr.mxu0 0.0
      %4012 = vmatpush2.msra.mxu0 0.0
      %4013 = vmatprep.subr.mxu0 0.0
      %4014 = vmatpush2.msra.mxu0 0.0
      %4015 = vmatprep.subr.mxu0 0.0
      %4016 = vmatpush2.msra.mxu0 0.0
      %4017 = vmatprep.subr.mxu0 0.0
      %4018 = vmatpush2.msra.mxu0 0.0
      %4019 = vmatprep.subr.mxu0 0.0
      %4020 = vmatpush2.msra.mxu0 0.0
      %4021 = vmatprep.subr.mxu0 0.0
      %4022 = vmatpush2.msra.mxu0 0.0
      %4023 = vmatprep.subr.mxu0 0.0
      %4024 = vmatpush2.msra.mxu0 0.0
      %4025 = vmatprep.subr.mxu0 0.0
      %4026 = vmatpush2.msra.mxu0 0.0
      %4027 = vmatprep.subr.mxu0 0.0
      %4028 = vmatpush2.msra.mxu0 0.0
      %4029 = vmatprep.subr.mxu0 0.0
      %4030 = vmatpush2.msra.mxu0 0.0
      %4031 = vmatprep.subr.mxu0 0.0
      %4032 = vmatpush2.msra.mxu0 0.0
      %4033 = vmatprep.subr.mxu0 0.0
      %4034 = vmatpush2.msra.mxu0 0.0
      %4035 = vmatprep.subr.mxu0 0.0
      %4036 = vmatpush2.msra.mxu0 0.0
      %4037 = vmatprep.subr.mxu0 0.0
      %4038 = vmatpush2.msra.mxu0 0.0
      %4039 = vmatprep.subr.mxu0 0.0
      %4040 = vmatpush2.msra.mxu0 0.0
      %4041 = vmatprep.mubr.f32.mxu0 0.0
      %4042 = vmatmul.mubr.f32.gmra.mxu0 %v3788
      %v4043 = vpop.f32.mrf.mxu0
      %v4044 = vadd.f32 0.0, %v4043
      %v4045 = vpop.f32.mrf.mxu0
      %4046 = vmatprep.mubr.f32.mxu0 0.0
      %4047 = vmatmul.mubr.f32.gmra.mxu0 %v3791
      %v4048 = vpop.f32.mrf.mxu0
      %v4049 = vadd.f32 0.0, %v4048
      %v4050 = vpop.f32.mrf.mxu0
      %4051 = vmatprep.mubr.f32.mxu0 0.0
      %4052 = vmatmul.mubr.f32.gmra.mxu0 %v3794
      %v4053 = vpop.f32.mrf.mxu0
      %v4054 = vadd.f32 0.0, %v4053
      %v4055 = vpop.f32.mrf.mxu0
      %4056 = vmatprep.mubr.f32.mxu0 0.0
      %4057 = vmatmul.mubr.f32.gmra.mxu0 %v3797
      %v4058 = vpop.f32.mrf.mxu0
      %v4059 = vadd.f32 0.0, %v4058
      %v4060 = vpop.f32.mrf.mxu0
      %4061 = vdwg.mxu0
      %v4062 = vadd.f32 %v3674, %v3866
      %v4063 = vadd.f32 %v3675, %v3868
      %v4064 = vadd.f32 %v3676, %v3955
      %v4065 = vadd.f32 %v3677, %v3957
      %v4066 = vadd.f32 %v3678, %v4044
      %v4067 = vadd.f32 %v3679, %v3872
      %v4068 = vadd.f32 %v3680, %v3874
      %v4069 = vadd.f32 %v3681, %v3961
      %v4070 = vadd.f32 %v3682, %v3963
      %v4071 = vadd.f32 %v3683, %v4049
      %v4072 = vadd.f32 %v3684, %v3878
      %v4073 = vadd.f32 %v3685, %v3880
      %v4074 = vadd.f32 %v3686, %v3967
      %v4075 = vadd.f32 %v3687, %v3969
      %v4076 = vadd.f32 %v3688, %v4054
      %v4077 = vadd.f32 %v3689, %v3884
      %v4078 = vadd.f32 %v3690, %v3886
      %v4079 = vadd.f32 %v3691, %v3973
      %v4080 = vadd.f32 %v3692, %v3975
      %v4081 = vadd.f32 %v3693, %v4059
      %s4082 = scalar_lea.vmem %s3, 160
      %v4083 = vld [vmem:[%s4082] sm:$0xff]
      %v4084 = vld [vmem:[%s4082 + $0x8] sm:$0xff]
      %v4085 = vld [vmem:[%s4082 + $0x10] sm:$0xff]
      %v4086 = vld [vmem:[%s4082 + $0x18] sm:$0xff]
      %4087 = vrot.lane.b32.xlu0 %v3258, 68
      %v4088 = vpop.permute.xlu0 %4087
      %4089 = vrot.lane.b32.xlu0 %v3259, 68
      %v4090 = vpop.permute.xlu0 %4089
      %4091 = vrot.lane.b32.xlu0 %v3260, 68
      %v4092 = vpop.permute.xlu0 %4091
      %4093 = vrot.lane.b32.xlu0 %v3261, 68
      %v4094 = vpop.permute.xlu0 %4093
      %4095 = vrot.lane.b32.xlu0 %v3262, 68
      %v4096 = vpop.permute.xlu0 %4095
      %4097 = vrot.lane.b32.xlu0 %v3263, 68
      %v4098 = vpop.permute.xlu0 %4097
      %4099 = vrot.lane.b32.xlu0 %v3264, 68
      %v4100 = vpop.permute.xlu0 %4099
      %4101 = vrot.lane.b32.xlu0 %v3265, 68
      %v4102 = vpop.permute.xlu0 %4101
      %4103 = vrot.lane.b32.xlu0 %v3266, 68
      %v4104 = vpop.permute.xlu0 %4103
      %4105 = vrot.lane.b32.xlu0 %v3267, 68
      %v4106 = vpop.permute.xlu0 %4105
      %4107 = vrot.lane.b32.xlu0 %v3268, 68
      %v4108 = vpop.permute.xlu0 %4107
      %4109 = vrot.lane.b32.xlu0 %v3269, 68
      %v4110 = vpop.permute.xlu0 %4109
      %4111 = vrot.lane.b32.xlu0 %v3270, 68
      %v4112 = vpop.permute.xlu0 %4111
      %4113 = vrot.lane.b32.xlu0 %v3271, 68
      %v4114 = vpop.permute.xlu0 %4113
      %4115 = vrot.lane.b32.xlu0 %v3272, 68
      %v4116 = vpop.permute.xlu0 %4115
      %4117 = vrot.lane.b32.xlu0 %v3273, 68
      %v4118 = vpop.permute.xlu0 %4117
      %4119 = vrot.lane.b32.xlu0 %v3274, 68
      %v4120 = vpop.permute.xlu0 %4119
      %4121 = vrot.lane.b32.xlu0 %v3275, 68
      %v4122 = vpop.permute.xlu0 %4121
      %4123 = vrot.lane.b32.xlu0 %v3276, 68
      %v4124 = vpop.permute.xlu0 %4123
      %4125 = vrot.lane.b32.xlu0 %v3277, 68
      %v4126 = vpop.permute.xlu0 %4125
      %4127 = vrot.lane.b32.xlu0 %v3278, 68
      %v4128 = vpop.permute.xlu0 %4127
      %4129 = vrot.lane.b32.xlu0 %v3279, 68
      %v4130 = vpop.permute.xlu0 %4129
      %4131 = vrot.lane.b32.xlu0 %v3280, 68
      %v4132 = vpop.permute.xlu0 %4131
      %4133 = vrot.lane.b32.xlu0 %v3281, 68
      %v4134 = vpop.permute.xlu0 %4133
      %vm4135 = vcmask 556032
      %v4136 = vsel %vm4135, %v4088, %v4090
      %v4137 = vsel %vm4135, %v4090, %v4092
      %v4138 = vsel %vm4135, %v4092, %v4094
      %v4139 = vsel %vm4135, %v4094, %v4096
      %v4140 = vsel %vm4135, %v4096, %v4098
      %v4141 = vsel %vm4135, %v4100, %v4102
      %v4142 = vsel %vm4135, %v4102, %v4104
      %v4143 = vsel %vm4135, %v4104, %v4106
      %v4144 = vsel %vm4135, %v4106, %v4108
      %v4145 = vsel %vm4135, %v4108, %v4110
      %v4146 = vsel %vm4135, %v4112, %v4114
      %v4147 = vsel %vm4135, %v4114, %v4116
      %v4148 = vsel %vm4135, %v4116, %v4118
      %v4149 = vsel %vm4135, %v4118, %v4120
      %v4150 = vsel %vm4135, %v4120, %v4122
      %v4151 = vsel %vm4135, %v4124, %v4126
      %v4152 = vsel %vm4135, %v4126, %v4128
      %v4153 = vsel %vm4135, %v4128, %v4130
      %v4154 = vsel %vm4135, %v4130, %v4132
      %v4155 = vsel %vm4135, %v4132, %v4134
      %v4177 = vsel %vm2330, %v4083, 0
      %v4180 = vsel %vm2330, %v4084, 0
      %v4183 = vsel %vm2330, %v4085, 0
      %v4186 = vsel %vm2330, %v4086, 0
      %4188 = vmatprep.subr.mxu0 0.0
      %4189 = vmatpush1.msra.mxu0 0.0
      %4190 = vmatprep.subr.mxu0 0.0
      %4191 = vmatpush1.msra.mxu0 0.0
      %4192 = vmatprep.subr.mxu0 0.0
      %4193 = vmatpush1.msra.mxu0 0.0
      %4194 = vmatprep.subr.mxu0 0.0
      %4195 = vmatpush1.msra.mxu0 0.0
      %4196 = vmatprep.subr.mxu0 0.0
      %4197 = vmatpush1.msra.mxu0 0.0
      %4198 = vmatprep.subr.mxu0 0.0
      %4199 = vmatpush1.msra.mxu0 0.0
      %4200 = vmatprep.subr.mxu0 0.0
      %4201 = vmatpush1.msra.mxu0 0.0
      %4202 = vmatprep.subr.mxu0 0.0
      %4203 = vmatpush1.msra.mxu0 0.0
      %4204 = vmatprep.subr.mxu0 0.0
      %4205 = vmatpush1.msra.mxu0 0.0
      %4206 = vmatprep.subr.mxu0 0.0
      %4207 = vmatpush1.msra.mxu0 0.0
      %4208 = vmatprep.subr.mxu0 0.0
      %4209 = vmatpush1.msra.mxu0 0.0
      %4210 = vmatprep.subr.mxu0 0.0
      %4211 = vmatpush1.msra.mxu0 0.0
      %4212 = vmatprep.subr.mxu0 %v4152
      %4213 = vmatpush1.msra.mxu0 %v4151
      %4214 = vmatprep.subr.mxu0 %v4147
      %4215 = vmatpush1.msra.mxu0 %v4146
      %4216 = vmatprep.subr.mxu0 %v4142
      %4217 = vmatpush1.msra.mxu0 %v4141
      %4218 = vmatprep.subr.mxu0 %v4137
      %4219 = vmatpush1.msra.mxu0 %v4136
      %4220 = vmatprep.subr.mxu0 0.0
      %4221 = vmatpush2.msra.mxu0 0.0
      %4222 = vmatprep.subr.mxu0 0.0
      %4223 = vmatpush2.msra.mxu0 0.0
      %4224 = vmatprep.subr.mxu0 0.0
      %4225 = vmatpush2.msra.mxu0 0.0
      %4226 = vmatprep.subr.mxu0 0.0
      %4227 = vmatpush2.msra.mxu0 0.0
      %4228 = vmatprep.subr.mxu0 0.0
      %4229 = vmatpush2.msra.mxu0 0.0
      %4230 = vmatprep.subr.mxu0 0.0
      %4231 = vmatpush2.msra.mxu0 0.0
      %4232 = vmatprep.subr.mxu0 0.0
      %4233 = vmatpush2.msra.mxu0 0.0
      %4234 = vmatprep.subr.mxu0 0.0
      %4235 = vmatpush2.msra.mxu0 0.0
      %4236 = vmatprep.subr.mxu0 0.0
      %4237 = vmatpush2.msra.mxu0 0.0
      %4238 = vmatprep.subr.mxu0 0.0
      %4239 = vmatpush2.msra.mxu0 0.0
      %4240 = vmatprep.subr.mxu0 0.0
      %4241 = vmatpush2.msra.mxu0 0.0
      %4242 = vmatprep.subr.mxu0 0.0
      %4243 = vmatpush2.msra.mxu0 0.0
      %4244 = vmatprep.subr.mxu0 0.0
      %4245 = vmatpush2.msra.mxu0 0.0
      %4246 = vmatprep.subr.mxu0 0.0
      %4247 = vmatpush2.msra.mxu0 0.0
      %4248 = vmatprep.subr.mxu0 0.0
      %4249 = vmatpush2.msra.mxu0 0.0
      %4250 = vmatprep.subr.mxu0 0.0
      %4251 = vmatpush2.msra.mxu0 0.0
      %4252 = vmatprep.mubr.f32.mxu0 0.0
      %4253 = vmatmul.mubr.f32.gmra.mxu0 %v4177
      %v4254 = vpop.f32.mrf.mxu0
      %v4255 = vadd.f32 0.0, %v4254
      %v4256 = vpop.f32.mrf.mxu0
      %v4257 = vadd.f32 0.0, %v4256
      %4258 = vmatprep.mubr.f32.mxu0 0.0
      %4259 = vmatmul.mubr.f32.gmra.mxu0 %v4180
      %v4260 = vpop.f32.mrf.mxu0
      %v4261 = vadd.f32 0.0, %v4260
      %v4262 = vpop.f32.mrf.mxu0
      %v4263 = vadd.f32 0.0, %v4262
      %4264 = vmatprep.mubr.f32.mxu0 0.0
      %4265 = vmatmul.mubr.f32.gmra.mxu0 %v4183
      %v4266 = vpop.f32.mrf.mxu0
      %v4267 = vadd.f32 0.0, %v4266
      %v4268 = vpop.f32.mrf.mxu0
      %v4269 = vadd.f32 0.0, %v4268
      %4270 = vmatprep.mubr.f32.mxu0 0.0
      %4271 = vmatmul.mubr.f32.gmra.mxu0 %v4186
      %v4272 = vpop.f32.mrf.mxu0
      %v4273 = vadd.f32 0.0, %v4272
      %v4274 = vpop.f32.mrf.mxu0
      %v4275 = vadd.f32 0.0, %v4274
      %4276 = vdwg.mxu0
      %4277 = vmatprep.subr.mxu0 0.0
      %4278 = vmatpush1.msra.mxu0 0.0
      %4279 = vmatprep.subr.mxu0 0.0
      %4280 = vmatpush1.msra.mxu0 0.0
      %4281 = vmatprep.subr.mxu0 0.0
      %4282 = vmatpush1.msra.mxu0 0.0
      %4283 = vmatprep.subr.mxu0 0.0
      %4284 = vmatpush1.msra.mxu0 0.0
      %4285 = vmatprep.subr.mxu0 0.0
      %4286 = vmatpush1.msra.mxu0 0.0
      %4287 = vmatprep.subr.mxu0 0.0
      %4288 = vmatpush1.msra.mxu0 0.0
      %4289 = vmatprep.subr.mxu0 0.0
      %4290 = vmatpush1.msra.mxu0 0.0
      %4291 = vmatprep.subr.mxu0 0.0
      %4292 = vmatpush1.msra.mxu0 0.0
      %4293 = vmatprep.subr.mxu0 0.0
      %4294 = vmatpush1.msra.mxu0 0.0
      %4295 = vmatprep.subr.mxu0 0.0
      %4296 = vmatpush1.msra.mxu0 0.0
      %4297 = vmatprep.subr.mxu0 0.0
      %4298 = vmatpush1.msra.mxu0 0.0
      %4299 = vmatprep.subr.mxu0 0.0
      %4300 = vmatpush1.msra.mxu0 0.0
      %4301 = vmatprep.subr.mxu0 %v4154
      %4302 = vmatpush1.msra.mxu0 %v4153
      %4303 = vmatprep.subr.mxu0 %v4149
      %4304 = vmatpush1.msra.mxu0 %v4148
      %4305 = vmatprep.subr.mxu0 %v4144
      %4306 = vmatpush1.msra.mxu0 %v4143
      %4307 = vmatprep.subr.mxu0 %v4139
      %4308 = vmatpush1.msra.mxu0 %v4138
      %4309 = vmatprep.subr.mxu0 0.0
      %4310 = vmatpush2.msra.mxu0 0.0
      %4311 = vmatprep.subr.mxu0 0.0
      %4312 = vmatpush2.msra.mxu0 0.0
      %4313 = vmatprep.subr.mxu0 0.0
      %4314 = vmatpush2.msra.mxu0 0.0
      %4315 = vmatprep.subr.mxu0 0.0
      %4316 = vmatpush2.msra.mxu0 0.0
      %4317 = vmatprep.subr.mxu0 0.0
      %4318 = vmatpush2.msra.mxu0 0.0
      %4319 = vmatprep.subr.mxu0 0.0
      %4320 = vmatpush2.msra.mxu0 0.0
      %4321 = vmatprep.subr.mxu0 0.0
      %4322 = vmatpush2.msra.mxu0 0.0
      %4323 = vmatprep.subr.mxu0 0.0
      %4324 = vmatpush2.msra.mxu0 0.0
      %4325 = vmatprep.subr.mxu0 0.0
      %4326 = vmatpush2.msra.mxu0 0.0
      %4327 = vmatprep.subr.mxu0 0.0
      %4328 = vmatpush2.msra.mxu0 0.0
      %4329 = vmatprep.subr.mxu0 0.0
      %4330 = vmatpush2.msra.mxu0 0.0
      %4331 = vmatprep.subr.mxu0 0.0
      %4332 = vmatpush2.msra.mxu0 0.0
      %4333 = vmatprep.subr.mxu0 0.0
      %4334 = vmatpush2.msra.mxu0 0.0
      %4335 = vmatprep.subr.mxu0 0.0
      %4336 = vmatpush2.msra.mxu0 0.0
      %4337 = vmatprep.subr.mxu0 0.0
      %4338 = vmatpush2.msra.mxu0 0.0
      %4339 = vmatprep.subr.mxu0 0.0
      %4340 = vmatpush2.msra.mxu0 0.0
      %4341 = vmatprep.mubr.f32.mxu0 0.0
      %4342 = vmatmul.mubr.f32.gmra.mxu0 %v4177
      %v4343 = vpop.f32.mrf.mxu0
      %v4344 = vadd.f32 0.0, %v4343
      %v4345 = vpop.f32.mrf.mxu0
      %v4346 = vadd.f32 0.0, %v4345
      %4347 = vmatprep.mubr.f32.mxu0 0.0
      %4348 = vmatmul.mubr.f32.gmra.mxu0 %v4180
      %v4349 = vpop.f32.mrf.mxu0
      %v4350 = vadd.f32 0.0, %v4349
      %v4351 = vpop.f32.mrf.mxu0
      %v4352 = vadd.f32 0.0, %v4351
      %4353 = vmatprep.mubr.f32.mxu0 0.0
      %4354 = vmatmul.mubr.f32.gmra.mxu0 %v4183
      %v4355 = vpop.f32.mrf.mxu0
      %v4356 = vadd.f32 0.0, %v4355
      %v4357 = vpop.f32.mrf.mxu0
      %v4358 = vadd.f32 0.0, %v4357
      %4359 = vmatprep.mubr.f32.mxu0 0.0
      %4360 = vmatmul.mubr.f32.gmra.mxu0 %v4186
      %v4361 = vpop.f32.mrf.mxu0
      %v4362 = vadd.f32 0.0, %v4361
      %v4363 = vpop.f32.mrf.mxu0
      %v4364 = vadd.f32 0.0, %v4363
      %4365 = vdwg.mxu0
      %4366 = vmatprep.subr.mxu0 0.0
      %4367 = vmatpush1.msra.mxu0 0.0
      %4368 = vmatprep.subr.mxu0 0.0
      %4369 = vmatpush1.msra.mxu0 0.0
      %4370 = vmatprep.subr.mxu0 0.0
      %4371 = vmatpush1.msra.mxu0 0.0
      %4372 = vmatprep.subr.mxu0 0.0
      %4373 = vmatpush1.msra.mxu0 0.0
      %4374 = vmatprep.subr.mxu0 0.0
      %4375 = vmatpush1.msra.mxu0 0.0
      %4376 = vmatprep.subr.mxu0 0.0
      %4377 = vmatpush1.msra.mxu0 0.0
      %4378 = vmatprep.subr.mxu0 0.0
      %4379 = vmatpush1.msra.mxu0 0.0
      %4380 = vmatprep.subr.mxu0 0.0
      %4381 = vmatpush1.msra.mxu0 0.0
      %4382 = vmatprep.subr.mxu0 0.0
      %4383 = vmatpush1.msra.mxu0 0.0
      %4384 = vmatprep.subr.mxu0 0.0
      %4385 = vmatpush1.msra.mxu0 0.0
      %4386 = vmatprep.subr.mxu0 0.0
      %4387 = vmatpush1.msra.mxu0 0.0
      %4388 = vmatprep.subr.mxu0 0.0
      %4389 = vmatpush1.msra.mxu0 0.0
      %4390 = vmatprep.subr.mxu0 0.0
      %4391 = vmatpush1.msra.mxu0 %v4155
      %4392 = vmatprep.subr.mxu0 0.0
      %4393 = vmatpush1.msra.mxu0 %v4150
      %4394 = vmatprep.subr.mxu0 0.0
      %4395 = vmatpush1.msra.mxu0 %v4145
      %4396 = vmatprep.subr.mxu0 0.0
      %4397 = vmatpush1.msra.mxu0 %v4140
      %4398 = vmatprep.subr.mxu0 0.0
      %4399 = vmatpush2.msra.mxu0 0.0
      %4400 = vmatprep.subr.mxu0 0.0
      %4401 = vmatpush2.msra.mxu0 0.0
      %4402 = vmatprep.subr.mxu0 0.0
      %4403 = vmatpush2.msra.mxu0 0.0
      %4404 = vmatprep.subr.mxu0 0.0
      %4405 = vmatpush2.msra.mxu0 0.0
      %4406 = vmatprep.subr.mxu0 0.0
      %4407 = vmatpush2.msra.mxu0 0.0
      %4408 = vmatprep.subr.mxu0 0.0
      %4409 = vmatpush2.msra.mxu0 0.0
      %4410 = vmatprep.subr.mxu0 0.0
      %4411 = vmatpush2.msra.mxu0 0.0
      %4412 = vmatprep.subr.mxu0 0.0
      %4413 = vmatpush2.msra.mxu0 0.0
      %4414 = vmatprep.subr.mxu0 0.0
      %4415 = vmatpush2.msra.mxu0 0.0
      %4416 = vmatprep.subr.mxu0 0.0
      %4417 = vmatpush2.msra.mxu0 0.0
      %4418 = vmatprep.subr.mxu0 0.0
      %4419 = vmatpush2.msra.mxu0 0.0
      %4420 = vmatprep.subr.mxu0 0.0
      %4421 = vmatpush2.msra.mxu0 0.0
      %4422 = vmatprep.subr.mxu0 0.0
      %4423 = vmatpush2.msra.mxu0 0.0
      %4424 = vmatprep.subr.mxu0 0.0
      %4425 = vmatpush2.msra.mxu0 0.0
      %4426 = vmatprep.subr.mxu0 0.0
      %4427 = vmatpush2.msra.mxu0 0.0
      %4428 = vmatprep.subr.mxu0 0.0
      %4429 = vmatpush2.msra.mxu0 0.0
      %4430 = vmatprep.mubr.f32.mxu0 0.0
      %4431 = vmatmul.mubr.f32.gmra.mxu0 %v4177
      %v4432 = vpop.f32.mrf.mxu0
      %v4433 = vadd.f32 0.0, %v4432
      %v4434 = vpop.f32.mrf.mxu0
      %4435 = vmatprep.mubr.f32.mxu0 0.0
      %4436 = vmatmul.mubr.f32.gmra.mxu0 %v4180
      %v4437 = vpop.f32.mrf.mxu0
      %v4438 = vadd.f32 0.0, %v4437
      %v4439 = vpop.f32.mrf.mxu0
      %4440 = vmatprep.mubr.f32.mxu0 0.0
      %4441 = vmatmul.mubr.f32.gmra.mxu0 %v4183
      %v4442 = vpop.f32.mrf.mxu0
      %v4443 = vadd.f32 0.0, %v4442
      %v4444 = vpop.f32.mrf.mxu0
      %4445 = vmatprep.mubr.f32.mxu0 0.0
      %4446 = vmatmul.mubr.f32.gmra.mxu0 %v4186
      %v4447 = vpop.f32.mrf.mxu0
      %v4448 = vadd.f32 0.0, %v4447
      %v4449 = vpop.f32.mrf.mxu0
      %4450 = vdwg.mxu0
      %v4451 = vadd.f32 %v4062, %v4255
      %v4452 = vadd.f32 %v4063, %v4257
      %v4453 = vadd.f32 %v4064, %v4344
      %v4454 = vadd.f32 %v4065, %v4346
      %v4455 = vadd.f32 %v4066, %v4433
      %v4456 = vadd.f32 %v4067, %v4261
      %v4457 = vadd.f32 %v4068, %v4263
      %v4458 = vadd.f32 %v4069, %v4350
      %v4459 = vadd.f32 %v4070, %v4352
      %v4460 = vadd.f32 %v4071, %v4438
      %v4461 = vadd.f32 %v4072, %v4267
      %v4462 = vadd.f32 %v4073, %v4269
      %v4463 = vadd.f32 %v4074, %v4356
      %v4464 = vadd.f32 %v4075, %v4358
      %v4465 = vadd.f32 %v4076, %v4443
      %v4466 = vadd.f32 %v4077, %v4273
      %v4467 = vadd.f32 %v4078, %v4275
      %v4468 = vadd.f32 %v4079, %v4362
      %v4469 = vadd.f32 %v4080, %v4364
      %v4470 = vadd.f32 %v4081, %v4448
      %s4471 = scalar_lea.vmem %s3, 192
      %v4472 = vld [vmem:[%s4471] sm:$0xff]
      %v4473 = vld [vmem:[%s4471 + $0x8] sm:$0xff]
      %v4474 = vld [vmem:[%s4471 + $0x10] sm:$0xff]
      %v4475 = vld [vmem:[%s4471 + $0x18] sm:$0xff]
      %4476 = vrot.lane.b32.xlu0 %v3258, 16
      %v4477 = vpop.permute.xlu0 %4476
      %4478 = vrot.lane.b32.xlu0 %v3259, 16
      %v4479 = vpop.permute.xlu0 %4478
      %4480 = vrot.lane.b32.xlu0 %v3260, 16
      %v4481 = vpop.permute.xlu0 %4480
      %4482 = vrot.lane.b32.xlu0 %v3261, 16
      %v4483 = vpop.permute.xlu0 %4482
      %4484 = vrot.lane.b32.xlu0 %v3262, 16
      %v4485 = vpop.permute.xlu0 %4484
      %4486 = vrot.lane.b32.xlu0 %v3263, 16
      %v4487 = vpop.permute.xlu0 %4486
      %4488 = vrot.lane.b32.xlu0 %v3264, 16
      %v4489 = vpop.permute.xlu0 %4488
      %4490 = vrot.lane.b32.xlu0 %v3265, 16
      %v4491 = vpop.permute.xlu0 %4490
      %4492 = vrot.lane.b32.xlu0 %v3266, 16
      %v4493 = vpop.permute.xlu0 %4492
      %4494 = vrot.lane.b32.xlu0 %v3267, 16
      %v4495 = vpop.permute.xlu0 %4494
      %4496 = vrot.lane.b32.xlu0 %v3268, 16
      %v4497 = vpop.permute.xlu0 %4496
      %4498 = vrot.lane.b32.xlu0 %v3269, 16
      %v4499 = vpop.permute.xlu0 %4498
      %4500 = vrot.lane.b32.xlu0 %v3270, 16
      %v4501 = vpop.permute.xlu0 %4500
      %4502 = vrot.lane.b32.xlu0 %v3271, 16
      %v4503 = vpop.permute.xlu0 %4502
      %4504 = vrot.lane.b32.xlu0 %v3272, 16
      %v4505 = vpop.permute.xlu0 %4504
      %4506 = vrot.lane.b32.xlu0 %v3273, 16
      %v4507 = vpop.permute.xlu0 %4506
      %4508 = vrot.lane.b32.xlu0 %v3274, 16
      %v4509 = vpop.permute.xlu0 %4508
      %4510 = vrot.lane.b32.xlu0 %v3275, 16
      %v4511 = vpop.permute.xlu0 %4510
      %4512 = vrot.lane.b32.xlu0 %v3276, 16
      %v4513 = vpop.permute.xlu0 %4512
      %4514 = vrot.lane.b32.xlu0 %v3277, 16
      %v4515 = vpop.permute.xlu0 %4514
      %4516 = vrot.lane.b32.xlu0 %v3278, 16
      %v4517 = vpop.permute.xlu0 %4516
      %4518 = vrot.lane.b32.xlu0 %v3279, 16
      %v4519 = vpop.permute.xlu0 %4518
      %4520 = vrot.lane.b32.xlu0 %v3280, 16
      %v4521 = vpop.permute.xlu0 %4520
      %4522 = vrot.lane.b32.xlu0 %v3281, 16
      %v4523 = vpop.permute.xlu0 %4522
      %vm4524 = vcmask 130048
      %v4525 = vsel %vm4524, %v4477, %v4479
      %v4526 = vsel %vm4524, %v4479, %v4481
      %v4527 = vsel %vm4524, %v4481, %v4483
      %v4528 = vsel %vm4524, %v4483, %v4485
      %v4529 = vsel %vm4524, %v4485, %v4487
      %v4530 = vsel %vm4524, %v4489, %v4491
      %v4531 = vsel %vm4524, %v4491, %v4493
      %v4532 = vsel %vm4524, %v4493, %v4495
      %v4533 = vsel %vm4524, %v4495, %v4497
      %v4534 = vsel %vm4524, %v4497, %v4499
      %v4535 = vsel %vm4524, %v4501, %v4503
      %v4536 = vsel %vm4524, %v4503, %v4505
      %v4537 = vsel %vm4524, %v4505, %v4507
      %v4538 = vsel %vm4524, %v4507, %v4509
      %v4539 = vsel %vm4524, %v4509, %v4511
      %v4540 = vsel %vm4524, %v4513, %v4515
      %v4541 = vsel %vm4524, %v4515, %v4517
      %v4542 = vsel %vm4524, %v4517, %v4519
      %v4543 = vsel %vm4524, %v4519, %v4521
      %v4544 = vsel %vm4524, %v4521, %v4523
      %v4566 = vsel %vm2330, %v4472, 0
      %v4569 = vsel %vm2330, %v4473, 0
      %v4572 = vsel %vm2330, %v4474, 0
      %v4575 = vsel %vm2330, %v4475, 0
      %4577 = vmatprep.subr.mxu0 0.0
      %4578 = vmatpush1.msra.mxu0 0.0
      %4579 = vmatprep.subr.mxu0 0.0
      %4580 = vmatpush1.msra.mxu0 0.0
      %4581 = vmatprep.subr.mxu0 0.0
      %4582 = vmatpush1.msra.mxu0 0.0
      %4583 = vmatprep.subr.mxu0 0.0
      %4584 = vmatpush1.msra.mxu0 0.0
      %4585 = vmatprep.subr.mxu0 0.0
      %4586 = vmatpush1.msra.mxu0 0.0
      %4587 = vmatprep.subr.mxu0 0.0
      %4588 = vmatpush1.msra.mxu0 0.0
      %4589 = vmatprep.subr.mxu0 0.0
      %4590 = vmatpush1.msra.mxu0 0.0
      %4591 = vmatprep.subr.mxu0 0.0
      %4592 = vmatpush1.msra.mxu0 0.0
      %4593 = vmatprep.subr.mxu0 0.0
      %4594 = vmatpush1.msra.mxu0 0.0
      %4595 = vmatprep.subr.mxu0 0.0
      %4596 = vmatpush1.msra.mxu0 0.0
      %4597 = vmatprep.subr.mxu0 0.0
      %4598 = vmatpush1.msra.mxu0 0.0
      %4599 = vmatprep.subr.mxu0 0.0
      %4600 = vmatpush1.msra.mxu0 0.0
      %4601 = vmatprep.subr.mxu0 %v4541
      %4602 = vmatpush1.msra.mxu0 %v4540
      %4603 = vmatprep.subr.mxu0 %v4536
      %4604 = vmatpush1.msra.mxu0 %v4535
      %4605 = vmatprep.subr.mxu0 %v4531
      %4606 = vmatpush1.msra.mxu0 %v4530
      %4607 = vmatprep.subr.mxu0 %v4526
      %4608 = vmatpush1.msra.mxu0 %v4525
      %4609 = vmatprep.subr.mxu0 0.0
      %4610 = vmatpush2.msra.mxu0 0.0
      %4611 = vmatprep.subr.mxu0 0.0
      %4612 = vmatpush2.msra.mxu0 0.0
      %4613 = vmatprep.subr.mxu0 0.0
      %4614 = vmatpush2.msra.mxu0 0.0
      %4615 = vmatprep.subr.mxu0 0.0
      %4616 = vmatpush2.msra.mxu0 0.0
      %4617 = vmatprep.subr.mxu0 0.0
      %4618 = vmatpush2.msra.mxu0 0.0
      %4619 = vmatprep.subr.mxu0 0.0
      %4620 = vmatpush2.msra.mxu0 0.0
      %4621 = vmatprep.subr.mxu0 0.0
      %4622 = vmatpush2.msra.mxu0 0.0
      %4623 = vmatprep.subr.mxu0 0.0
      %4624 = vmatpush2.msra.mxu0 0.0
      %4625 = vmatprep.subr.mxu0 0.0
      %4626 = vmatpush2.msra.mxu0 0.0
      %4627 = vmatprep.subr.mxu0 0.0
      %4628 = vmatpush2.msra.mxu0 0.0
      %4629 = vmatprep.subr.mxu0 0.0
      %4630 = vmatpush2.msra.mxu0 0.0
      %4631 = vmatprep.subr.mxu0 0.0
      %4632 = vmatpush2.msra.mxu0 0.0
      %4633 = vmatprep.subr.mxu0 0.0
      %4634 = vmatpush2.msra.mxu0 0.0
      %4635 = vmatprep.subr.mxu0 0.0
      %4636 = vmatpush2.msra.mxu0 0.0
      %4637 = vmatprep.subr.mxu0 0.0
      %4638 = vmatpush2.msra.mxu0 0.0
      %4639 = vmatprep.subr.mxu0 0.0
      %4640 = vmatpush2.msra.mxu0 0.0
      %4641 = vmatprep.mubr.f32.mxu0 0.0
      %4642 = vmatmul.mubr.f32.gmra.mxu0 %v4566
      %v4643 = vpop.f32.mrf.mxu0
      %v4644 = vadd.f32 0.0, %v4643
      %v4645 = vpop.f32.mrf.mxu0
      %v4646 = vadd.f32 0.0, %v4645
      %4647 = vmatprep.mubr.f32.mxu0 0.0
      %4648 = vmatmul.mubr.f32.gmra.mxu0 %v4569
      %v4649 = vpop.f32.mrf.mxu0
      %v4650 = vadd.f32 0.0, %v4649
      %v4651 = vpop.f32.mrf.mxu0
      %v4652 = vadd.f32 0.0, %v4651
      %4653 = vmatprep.mubr.f32.mxu0 0.0
      %4654 = vmatmul.mubr.f32.gmra.mxu0 %v4572
      %v4655 = vpop.f32.mrf.mxu0
      %v4656 = vadd.f32 0.0, %v4655
      %v4657 = vpop.f32.mrf.mxu0
      %v4658 = vadd.f32 0.0, %v4657
      %4659 = vmatprep.mubr.f32.mxu0 0.0
      %4660 = vmatmul.mubr.f32.gmra.mxu0 %v4575
      %v4661 = vpop.f32.mrf.mxu0
      %v4662 = vadd.f32 0.0, %v4661
      %v4663 = vpop.f32.mrf.mxu0
      %v4664 = vadd.f32 0.0, %v4663
      %4665 = vdwg.mxu0
      %4666 = vmatprep.subr.mxu0 0.0
      %4667 = vmatpush1.msra.mxu0 0.0
      %4668 = vmatprep.subr.mxu0 0.0
      %4669 = vmatpush1.msra.mxu0 0.0
      %4670 = vmatprep.subr.mxu0 0.0
      %4671 = vmatpush1.msra.mxu0 0.0
      %4672 = vmatprep.subr.mxu0 0.0
      %4673 = vmatpush1.msra.mxu0 0.0
      %4674 = vmatprep.subr.mxu0 0.0
      %4675 = vmatpush1.msra.mxu0 0.0
      %4676 = vmatprep.subr.mxu0 0.0
      %4677 = vmatpush1.msra.mxu0 0.0
      %4678 = vmatprep.subr.mxu0 0.0
      %4679 = vmatpush1.msra.mxu0 0.0
      %4680 = vmatprep.subr.mxu0 0.0
      %4681 = vmatpush1.msra.mxu0 0.0
      %4682 = vmatprep.subr.mxu0 0.0
      %4683 = vmatpush1.msra.mxu0 0.0
      %4684 = vmatprep.subr.mxu0 0.0
      %4685 = vmatpush1.msra.mxu0 0.0
      %4686 = vmatprep.subr.mxu0 0.0
      %4687 = vmatpush1.msra.mxu0 0.0
      %4688 = vmatprep.subr.mxu0 0.0
      %4689 = vmatpush1.msra.mxu0 0.0
      %4690 = vmatprep.subr.mxu0 %v4543
      %4691 = vmatpush1.msra.mxu0 %v4542
      %4692 = vmatprep.subr.mxu0 %v4538
      %4693 = vmatpush1.msra.mxu0 %v4537
      %4694 = vmatprep.subr.mxu0 %v4533
      %4695 = vmatpush1.msra.mxu0 %v4532
      %4696 = vmatprep.subr.mxu0 %v4528
      %4697 = vmatpush1.msra.mxu0 %v4527
      %4698 = vmatprep.subr.mxu0 0.0
      %4699 = vmatpush2.msra.mxu0 0.0
      %4700 = vmatprep.subr.mxu0 0.0
      %4701 = vmatpush2.msra.mxu0 0.0
      %4702 = vmatprep.subr.mxu0 0.0
      %4703 = vmatpush2.msra.mxu0 0.0
      %4704 = vmatprep.subr.mxu0 0.0
      %4705 = vmatpush2.msra.mxu0 0.0
      %4706 = vmatprep.subr.mxu0 0.0
      %4707 = vmatpush2.msra.mxu0 0.0
      %4708 = vmatprep.subr.mxu0 0.0
      %4709 = vmatpush2.msra.mxu0 0.0
      %4710 = vmatprep.subr.mxu0 0.0
      %4711 = vmatpush2.msra.mxu0 0.0
      %4712 = vmatprep.subr.mxu0 0.0
      %4713 = vmatpush2.msra.mxu0 0.0
      %4714 = vmatprep.subr.mxu0 0.0
      %4715 = vmatpush2.msra.mxu0 0.0
      %4716 = vmatprep.subr.mxu0 0.0
      %4717 = vmatpush2.msra.mxu0 0.0
      %4718 = vmatprep.subr.mxu0 0.0
      %4719 = vmatpush2.msra.mxu0 0.0
      %4720 = vmatprep.subr.mxu0 0.0
      %4721 = vmatpush2.msra.mxu0 0.0
      %4722 = vmatprep.subr.mxu0 0.0
      %4723 = vmatpush2.msra.mxu0 0.0
      %4724 = vmatprep.subr.mxu0 0.0
      %4725 = vmatpush2.msra.mxu0 0.0
      %4726 = vmatprep.subr.mxu0 0.0
      %4727 = vmatpush2.msra.mxu0 0.0
      %4728 = vmatprep.subr.mxu0 0.0
      %4729 = vmatpush2.msra.mxu0 0.0
      %4730 = vmatprep.mubr.f32.mxu0 0.0
      %4731 = vmatmul.mubr.f32.gmra.mxu0 %v4566
      %v4732 = vpop.f32.mrf.mxu0
      %v4733 = vadd.f32 0.0, %v4732
      %v4734 = vpop.f32.mrf.mxu0
      %v4735 = vadd.f32 0.0, %v4734
      %4736 = vmatprep.mubr.f32.mxu0 0.0
      %4737 = vmatmul.mubr.f32.gmra.mxu0 %v4569
      %v4738 = vpop.f32.mrf.mxu0
      %v4739 = vadd.f32 0.0, %v4738
      %v4740 = vpop.f32.mrf.mxu0
      %v4741 = vadd.f32 0.0, %v4740
      %4742 = vmatprep.mubr.f32.mxu0 0.0
      %4743 = vmatmul.mubr.f32.gmra.mxu0 %v4572
      %v4744 = vpop.f32.mrf.mxu0
      %v4745 = vadd.f32 0.0, %v4744
      %v4746 = vpop.f32.mrf.mxu0
      %v4747 = vadd.f32 0.0, %v4746
      %4748 = vmatprep.mubr.f32.mxu0 0.0
      %4749 = vmatmul.mubr.f32.gmra.mxu0 %v4575
      %v4750 = vpop.f32.mrf.mxu0
      %v4751 = vadd.f32 0.0, %v4750
      %v4752 = vpop.f32.mrf.mxu0
      %v4753 = vadd.f32 0.0, %v4752
      %4754 = vdwg.mxu0
      %4755 = vmatprep.subr.mxu0 0.0
      %4756 = vmatpush1.msra.mxu0 0.0
      %4757 = vmatprep.subr.mxu0 0.0
      %4758 = vmatpush1.msra.mxu0 0.0
      %4759 = vmatprep.subr.mxu0 0.0
      %4760 = vmatpush1.msra.mxu0 0.0
      %4761 = vmatprep.subr.mxu0 0.0
      %4762 = vmatpush1.msra.mxu0 0.0
      %4763 = vmatprep.subr.mxu0 0.0
      %4764 = vmatpush1.msra.mxu0 0.0
      %4765 = vmatprep.subr.mxu0 0.0
      %4766 = vmatpush1.msra.mxu0 0.0
      %4767 = vmatprep.subr.mxu0 0.0
      %4768 = vmatpush1.msra.mxu0 0.0
      %4769 = vmatprep.subr.mxu0 0.0
      %4770 = vmatpush1.msra.mxu0 0.0
      %4771 = vmatprep.subr.mxu0 0.0
      %4772 = vmatpush1.msra.mxu0 0.0
      %4773 = vmatprep.subr.mxu0 0.0
      %4774 = vmatpush1.msra.mxu0 0.0
      %4775 = vmatprep.subr.mxu0 0.0
      %4776 = vmatpush1.msra.mxu0 0.0
      %4777 = vmatprep.subr.mxu0 0.0
      %4778 = vmatpush1.msra.mxu0 0.0
      %4779 = vmatprep.subr.mxu0 0.0
      %4780 = vmatpush1.msra.mxu0 %v4544
      %4781 = vmatprep.subr.mxu0 0.0
      %4782 = vmatpush1.msra.mxu0 %v4539
      %4783 = vmatprep.subr.mxu0 0.0
      %4784 = vmatpush1.msra.mxu0 %v4534
      %4785 = vmatprep.subr.mxu0 0.0
      %4786 = vmatpush1.msra.mxu0 %v4529
      %4787 = vmatprep.subr.mxu0 0.0
      %4788 = vmatpush2.msra.mxu0 0.0
      %4789 = vmatprep.subr.mxu0 0.0
      %4790 = vmatpush2.msra.mxu0 0.0
      %4791 = vmatprep.subr.mxu0 0.0
      %4792 = vmatpush2.msra.mxu0 0.0
      %4793 = vmatprep.subr.mxu0 0.0
      %4794 = vmatpush2.msra.mxu0 0.0
      %4795 = vmatprep.subr.mxu0 0.0
      %4796 = vmatpush2.msra.mxu0 0.0
      %4797 = vmatprep.subr.mxu0 0.0
      %4798 = vmatpush2.msra.mxu0 0.0
      %4799 = vmatprep.subr.mxu0 0.0
      %4800 = vmatpush2.msra.mxu0 0.0
      %4801 = vmatprep.subr.mxu0 0.0
      %4802 = vmatpush2.msra.mxu0 0.0
      %4803 = vmatprep.subr.mxu0 0.0
      %4804 = vmatpush2.msra.mxu0 0.0
      %4805 = vmatprep.subr.mxu0 0.0
      %4806 = vmatpush2.msra.mxu0 0.0
      %4807 = vmatprep.subr.mxu0 0.0
      %4808 = vmatpush2.msra.mxu0 0.0
      %4809 = vmatprep.subr.mxu0 0.0
      %4810 = vmatpush2.msra.mxu0 0.0
      %4811 = vmatprep.subr.mxu0 0.0
      %4812 = vmatpush2.msra.mxu0 0.0
      %4813 = vmatprep.subr.mxu0 0.0
      %4814 = vmatpush2.msra.mxu0 0.0
      %4815 = vmatprep.subr.mxu0 0.0
      %4816 = vmatpush2.msra.mxu0 0.0
      %4817 = vmatprep.subr.mxu0 0.0
      %4818 = vmatpush2.msra.mxu0 0.0
      %4819 = vmatprep.mubr.f32.mxu0 0.0
      %4820 = vmatmul.mubr.f32.gmra.mxu0 %v4566
      %v4821 = vpop.f32.mrf.mxu0
      %v4822 = vadd.f32 0.0, %v4821
      %v4823 = vpop.f32.mrf.mxu0
      %4824 = vmatprep.mubr.f32.mxu0 0.0
      %4825 = vmatmul.mubr.f32.gmra.mxu0 %v4569
      %v4826 = vpop.f32.mrf.mxu0
      %v4827 = vadd.f32 0.0, %v4826
      %v4828 = vpop.f32.mrf.mxu0
      %4829 = vmatprep.mubr.f32.mxu0 0.0
      %4830 = vmatmul.mubr.f32.gmra.mxu0 %v4572
      %v4831 = vpop.f32.mrf.mxu0
      %v4832 = vadd.f32 0.0, %v4831
      %v4833 = vpop.f32.mrf.mxu0
      %4834 = vmatprep.mubr.f32.mxu0 0.0
      %4835 = vmatmul.mubr.f32.gmra.mxu0 %v4575
      %v4836 = vpop.f32.mrf.mxu0
      %v4837 = vadd.f32 0.0, %v4836
      %v4838 = vpop.f32.mrf.mxu0
      %4839 = vdwg.mxu0
      %v4840 = vadd.f32 %v4451, %v4644
      %v4841 = vadd.f32 %v4452, %v4646
      %v4842 = vadd.f32 %v4453, %v4733
      %v4843 = vadd.f32 %v4454, %v4735
      %v4844 = vadd.f32 %v4455, %v4822
      %v4845 = vadd.f32 %v4456, %v4650
      %v4846 = vadd.f32 %v4457, %v4652
      %v4847 = vadd.f32 %v4458, %v4739
      %v4848 = vadd.f32 %v4459, %v4741
      %v4849 = vadd.f32 %v4460, %v4827
      %v4850 = vadd.f32 %v4461, %v4656
      %v4851 = vadd.f32 %v4462, %v4658
      %v4852 = vadd.f32 %v4463, %v4745
      %v4853 = vadd.f32 %v4464, %v4747
      %v4854 = vadd.f32 %v4465, %v4832
      %v4855 = vadd.f32 %v4466, %v4662
      %v4856 = vadd.f32 %v4467, %v4664
      %v4857 = vadd.f32 %v4468, %v4751
      %v4858 = vadd.f32 %v4469, %v4753
      %v4859 = vadd.f32 %v4470, %v4837
      %s4860 = scalar_lea.vmem %s3, 224
      %v4861 = vld [vmem:[%s4860] sm:$0xff]
      %v4862 = vld [vmem:[%s4860 + $0x8] sm:$0xff]
      %v4863 = vld [vmem:[%s4860 + $0x10] sm:$0xff]
      %v4864 = vld [vmem:[%s4860 + $0x18] sm:$0xff]
      %4865 = vrot.lane.b32.xlu0 %v3258, 14
      %v4866 = vpop.permute.xlu0 %4865
      %4867 = vrot.lane.b32.xlu0 %v3259, 14
      %v4868 = vpop.permute.xlu0 %4867
      %4869 = vrot.lane.b32.xlu0 %v3260, 14
      %v4870 = vpop.permute.xlu0 %4869
      %4871 = vrot.lane.b32.xlu0 %v3261, 14
      %v4872 = vpop.permute.xlu0 %4871
      %4873 = vrot.lane.b32.xlu0 %v3262, 14
      %v4874 = vpop.permute.xlu0 %4873
      %4875 = vrot.lane.b32.xlu0 %v3263, 14
      %v4876 = vpop.permute.xlu0 %4875
      %4877 = vrot.lane.b32.xlu0 %v3264, 14
      %v4878 = vpop.permute.xlu0 %4877
      %4879 = vrot.lane.b32.xlu0 %v3265, 14
      %v4880 = vpop.permute.xlu0 %4879
      %4881 = vrot.lane.b32.xlu0 %v3266, 14
      %v4882 = vpop.permute.xlu0 %4881
      %4883 = vrot.lane.b32.xlu0 %v3267, 14
      %v4884 = vpop.permute.xlu0 %4883
      %4885 = vrot.lane.b32.xlu0 %v3268, 14
      %v4886 = vpop.permute.xlu0 %4885
      %4887 = vrot.lane.b32.xlu0 %v3269, 14
      %v4888 = vpop.permute.xlu0 %4887
      %4889 = vrot.lane.b32.xlu0 %v3270, 14
      %v4890 = vpop.permute.xlu0 %4889
      %4891 = vrot.lane.b32.xlu0 %v3271, 14
      %v4892 = vpop.permute.xlu0 %4891
      %4893 = vrot.lane.b32.xlu0 %v3272, 14
      %v4894 = vpop.permute.xlu0 %4893
      %4895 = vrot.lane.b32.xlu0 %v3273, 14
      %v4896 = vpop.permute.xlu0 %4895
      %4897 = vrot.lane.b32.xlu0 %v3274, 14
      %v4898 = vpop.permute.xlu0 %4897
      %4899 = vrot.lane.b32.xlu0 %v3275, 14
      %v4900 = vpop.permute.xlu0 %4899
      %4901 = vrot.lane.b32.xlu0 %v3276, 14
      %v4902 = vpop.permute.xlu0 %4901
      %4903 = vrot.lane.b32.xlu0 %v3277, 14
      %v4904 = vpop.permute.xlu0 %4903
      %4905 = vrot.lane.b32.xlu0 %v3278, 14
      %v4906 = vpop.permute.xlu0 %4905
      %4907 = vrot.lane.b32.xlu0 %v3279, 14
      %v4908 = vpop.permute.xlu0 %4907
      %4909 = vrot.lane.b32.xlu0 %v3280, 14
      %v4910 = vpop.permute.xlu0 %4909
      %4911 = vrot.lane.b32.xlu0 %v3281, 14
      %v4912 = vpop.permute.xlu0 %4911
      %vm4913 = vcmask 113664
      %v4914 = vsel %vm4913, %v4866, %v4868
      %v4915 = vsel %vm4913, %v4868, %v4870
      %v4916 = vsel %vm4913, %v4870, %v4872
      %v4917 = vsel %vm4913, %v4872, %v4874
      %v4918 = vsel %vm4913, %v4874, %v4876
      %v4919 = vsel %vm4913, %v4878, %v4880
      %v4920 = vsel %vm4913, %v4880, %v4882
      %v4921 = vsel %vm4913, %v4882, %v4884
      %v4922 = vsel %vm4913, %v4884, %v4886
      %v4923 = vsel %vm4913, %v4886, %v4888
      %v4924 = vsel %vm4913, %v4890, %v4892
      %v4925 = vsel %vm4913, %v4892, %v4894
      %v4926 = vsel %vm4913, %v4894, %v4896
      %v4927 = vsel %vm4913, %v4896, %v4898
      %v4928 = vsel %vm4913, %v4898, %v4900
      %v4929 = vsel %vm4913, %v4902, %v4904
      %v4930 = vsel %vm4913, %v4904, %v4906
      %v4931 = vsel %vm4913, %v4906, %v4908
      %v4932 = vsel %vm4913, %v4908, %v4910
      %v4933 = vsel %vm4913, %v4910, %v4912
      %v4955 = vsel %vm2330, %v4861, 0
      %v4958 = vsel %vm2330, %v4862, 0
      %v4961 = vsel %vm2330, %v4863, 0
      %v4964 = vsel %vm2330, %v4864, 0
      %4966 = vmatprep.subr.mxu0 0.0
      %4967 = vmatpush1.msra.mxu0 0.0
      %4968 = vmatprep.subr.mxu0 0.0
      %4969 = vmatpush1.msra.mxu0 0.0
      %4970 = vmatprep.subr.mxu0 0.0
      %4971 = vmatpush1.msra.mxu0 0.0
      %4972 = vmatprep.subr.mxu0 0.0
      %4973 = vmatpush1.msra.mxu0 0.0
      %4974 = vmatprep.subr.mxu0 0.0
      %4975 = vmatpush1.msra.mxu0 0.0
      %4976 = vmatprep.subr.mxu0 0.0
      %4977 = vmatpush1.msra.mxu0 0.0
      %4978 = vmatprep.subr.mxu0 0.0
      %4979 = vmatpush1.msra.mxu0 0.0
      %4980 = vmatprep.subr.mxu0 0.0
      %4981 = vmatpush1.msra.mxu0 0.0
      %4982 = vmatprep.subr.mxu0 0.0
      %4983 = vmatpush1.msra.mxu0 0.0
      %4984 = vmatprep.subr.mxu0 0.0
      %4985 = vmatpush1.msra.mxu0 0.0
      %4986 = vmatprep.subr.mxu0 0.0
      %4987 = vmatpush1.msra.mxu0 0.0
      %4988 = vmatprep.subr.mxu0 0.0
      %4989 = vmatpush1.msra.mxu0 0.0
      %4990 = vmatprep.subr.mxu0 %v4930
      %4991 = vmatpush1.msra.mxu0 %v4929
      %4992 = vmatprep.subr.mxu0 %v4925
      %4993 = vmatpush1.msra.mxu0 %v4924
      %4994 = vmatprep.subr.mxu0 %v4920
      %4995 = vmatpush1.msra.mxu0 %v4919
      %4996 = vmatprep.subr.mxu0 %v4915
      %4997 = vmatpush1.msra.mxu0 %v4914
      %4998 = vmatprep.subr.mxu0 0.0
      %4999 = vmatpush2.msra.mxu0 0.0
      %5000 = vmatprep.subr.mxu0 0.0
      %5001 = vmatpush2.msra.mxu0 0.0
      %5002 = vmatprep.subr.mxu0 0.0
      %5003 = vmatpush2.msra.mxu0 0.0
      %5004 = vmatprep.subr.mxu0 0.0
      %5005 = vmatpush2.msra.mxu0 0.0
      %5006 = vmatprep.subr.mxu0 0.0
      %5007 = vmatpush2.msra.mxu0 0.0
      %5008 = vmatprep.subr.mxu0 0.0
      %5009 = vmatpush2.msra.mxu0 0.0
      %5010 = vmatprep.subr.mxu0 0.0
      %5011 = vmatpush2.msra.mxu0 0.0
      %5012 = vmatprep.subr.mxu0 0.0
      %5013 = vmatpush2.msra.mxu0 0.0
      %5014 = vmatprep.subr.mxu0 0.0
      %5015 = vmatpush2.msra.mxu0 0.0
      %5016 = vmatprep.subr.mxu0 0.0
      %5017 = vmatpush2.msra.mxu0 0.0
      %5018 = vmatprep.subr.mxu0 0.0
      %5019 = vmatpush2.msra.mxu0 0.0
      %5020 = vmatprep.subr.mxu0 0.0
      %5021 = vmatpush2.msra.mxu0 0.0
      %5022 = vmatprep.subr.mxu0 0.0
      %5023 = vmatpush2.msra.mxu0 0.0
      %5024 = vmatprep.subr.mxu0 0.0
      %5025 = vmatpush2.msra.mxu0 0.0
      %5026 = vmatprep.subr.mxu0 0.0
      %5027 = vmatpush2.msra.mxu0 0.0
      %5028 = vmatprep.subr.mxu0 0.0
      %5029 = vmatpush2.msra.mxu0 0.0
      %5030 = vmatprep.mubr.f32.mxu0 0.0
      %5031 = vmatmul.mubr.f32.gmra.mxu0 %v4955
      %v5032 = vpop.f32.mrf.mxu0
      %v5033 = vadd.f32 0.0, %v5032
      %v5034 = vpop.f32.mrf.mxu0
      %v5035 = vadd.f32 0.0, %v5034
      %5036 = vmatprep.mubr.f32.mxu0 0.0
      %5037 = vmatmul.mubr.f32.gmra.mxu0 %v4958
      %v5038 = vpop.f32.mrf.mxu0
      %v5039 = vadd.f32 0.0, %v5038
      %v5040 = vpop.f32.mrf.mxu0
      %v5041 = vadd.f32 0.0, %v5040
      %5042 = vmatprep.mubr.f32.mxu0 0.0
      %5043 = vmatmul.mubr.f32.gmra.mxu0 %v4961
      %v5044 = vpop.f32.mrf.mxu0
      %v5045 = vadd.f32 0.0, %v5044
      %v5046 = vpop.f32.mrf.mxu0
      %v5047 = vadd.f32 0.0, %v5046
      %5048 = vmatprep.mubr.f32.mxu0 0.0
      %5049 = vmatmul.mubr.f32.gmra.mxu0 %v4964
      %v5050 = vpop.f32.mrf.mxu0
      %v5051 = vadd.f32 0.0, %v5050
      %v5052 = vpop.f32.mrf.mxu0
      %v5053 = vadd.f32 0.0, %v5052
      %5054 = vdwg.mxu0
      %5055 = vmatprep.subr.mxu0 0.0
      %5056 = vmatpush1.msra.mxu0 0.0
      %5057 = vmatprep.subr.mxu0 0.0
      %5058 = vmatpush1.msra.mxu0 0.0
      %5059 = vmatprep.subr.mxu0 0.0
      %5060 = vmatpush1.msra.mxu0 0.0
      %5061 = vmatprep.subr.mxu0 0.0
      %5062 = vmatpush1.msra.mxu0 0.0
      %5063 = vmatprep.subr.mxu0 0.0
      %5064 = vmatpush1.msra.mxu0 0.0
      %5065 = vmatprep.subr.mxu0 0.0
      %5066 = vmatpush1.msra.mxu0 0.0
      %5067 = vmatprep.subr.mxu0 0.0
      %5068 = vmatpush1.msra.mxu0 0.0
      %5069 = vmatprep.subr.mxu0 0.0
      %5070 = vmatpush1.msra.mxu0 0.0
      %5071 = vmatprep.subr.mxu0 0.0
      %5072 = vmatpush1.msra.mxu0 0.0
      %5073 = vmatprep.subr.mxu0 0.0
      %5074 = vmatpush1.msra.mxu0 0.0
      %5075 = vmatprep.subr.mxu0 0.0
      %5076 = vmatpush1.msra.mxu0 0.0
      %5077 = vmatprep.subr.mxu0 0.0
      %5078 = vmatpush1.msra.mxu0 0.0
      %5079 = vmatprep.subr.mxu0 %v4932
      %5080 = vmatpush1.msra.mxu0 %v4931
      %5081 = vmatprep.subr.mxu0 %v4927
      %5082 = vmatpush1.msra.mxu0 %v4926
      %5083 = vmatprep.subr.mxu0 %v4922
      %5084 = vmatpush1.msra.mxu0 %v4921
      %5085 = vmatprep.subr.mxu0 %v4917
      %5086 = vmatpush1.msra.mxu0 %v4916
      %5087 = vmatprep.subr.mxu0 0.0
      %5088 = vmatpush2.msra.mxu0 0.0
      %5089 = vmatprep.subr.mxu0 0.0
      %5090 = vmatpush2.msra.mxu0 0.0
      %5091 = vmatprep.subr.mxu0 0.0
      %5092 = vmatpush2.msra.mxu0 0.0
      %5093 = vmatprep.subr.mxu0 0.0
      %5094 = vmatpush2.msra.mxu0 0.0
      %5095 = vmatprep.subr.mxu0 0.0
      %5096 = vmatpush2.msra.mxu0 0.0
      %5097 = vmatprep.subr.mxu0 0.0
      %5098 = vmatpush2.msra.mxu0 0.0
      %5099 = vmatprep.subr.mxu0 0.0
      %5100 = vmatpush2.msra.mxu0 0.0
      %5101 = vmatprep.subr.mxu0 0.0
      %5102 = vmatpush2.msra.mxu0 0.0
      %5103 = vmatprep.subr.mxu0 0.0
      %5104 = vmatpush2.msra.mxu0 0.0
      %5105 = vmatprep.subr.mxu0 0.0
      %5106 = vmatpush2.msra.mxu0 0.0
      %5107 = vmatprep.subr.mxu0 0.0
      %5108 = vmatpush2.msra.mxu0 0.0
      %5109 = vmatprep.subr.mxu0 0.0
      %5110 = vmatpush2.msra.mxu0 0.0
      %5111 = vmatprep.subr.mxu0 0.0
      %5112 = vmatpush2.msra.mxu0 0.0
      %5113 = vmatprep.subr.mxu0 0.0
      %5114 = vmatpush2.msra.mxu0 0.0
      %5115 = vmatprep.subr.mxu0 0.0
      %5116 = vmatpush2.msra.mxu0 0.0
      %5117 = vmatprep.subr.mxu0 0.0
      %5118 = vmatpush2.msra.mxu0 0.0
      %5119 = vmatprep.mubr.f32.mxu0 0.0
      %5120 = vmatmul.mubr.f32.gmra.mxu0 %v4955
      %v5121 = vpop.f32.mrf.mxu0
      %v5122 = vadd.f32 0.0, %v5121
      %v5123 = vpop.f32.mrf.mxu0
      %v5124 = vadd.f32 0.0, %v5123
      %5125 = vmatprep.mubr.f32.mxu0 0.0
      %5126 = vmatmul.mubr.f32.gmra.mxu0 %v4958
      %v5127 = vpop.f32.mrf.mxu0
      %v5128 = vadd.f32 0.0, %v5127
      %v5129 = vpop.f32.mrf.mxu0
      %v5130 = vadd.f32 0.0, %v5129
      %5131 = vmatprep.mubr.f32.mxu0 0.0
      %5132 = vmatmul.mubr.f32.gmra.mxu0 %v4961
      %v5133 = vpop.f32.mrf.mxu0
      %v5134 = vadd.f32 0.0, %v5133
      %v5135 = vpop.f32.mrf.mxu0
      %v5136 = vadd.f32 0.0, %v5135
      %5137 = vmatprep.mubr.f32.mxu0 0.0
      %5138 = vmatmul.mubr.f32.gmra.mxu0 %v4964
      %v5139 = vpop.f32.mrf.mxu0
      %v5140 = vadd.f32 0.0, %v5139
      %v5141 = vpop.f32.mrf.mxu0
      %v5142 = vadd.f32 0.0, %v5141
      %5143 = vdwg.mxu0
      %5144 = vmatprep.subr.mxu0 0.0
      %5145 = vmatpush1.msra.mxu0 0.0
      %5146 = vmatprep.subr.mxu0 0.0
      %5147 = vmatpush1.msra.mxu0 0.0
      %5148 = vmatprep.subr.mxu0 0.0
      %5149 = vmatpush1.msra.mxu0 0.0
      %5150 = vmatprep.subr.mxu0 0.0
      %5151 = vmatpush1.msra.mxu0 0.0
      %5152 = vmatprep.subr.mxu0 0.0
      %5153 = vmatpush1.msra.mxu0 0.0
      %5154 = vmatprep.subr.mxu0 0.0
      %5155 = vmatpush1.msra.mxu0 0.0
      %5156 = vmatprep.subr.mxu0 0.0
      %5157 = vmatpush1.msra.mxu0 0.0
      %5158 = vmatprep.subr.mxu0 0.0
      %5159 = vmatpush1.msra.mxu0 0.0
      %5160 = vmatprep.subr.mxu0 0.0
      %5161 = vmatpush1.msra.mxu0 0.0
      %5162 = vmatprep.subr.mxu0 0.0
      %5163 = vmatpush1.msra.mxu0 0.0
      %5164 = vmatprep.subr.mxu0 0.0
      %5165 = vmatpush1.msra.mxu0 0.0
      %5166 = vmatprep.subr.mxu0 0.0
      %5167 = vmatpush1.msra.mxu0 0.0
      %5168 = vmatprep.subr.mxu0 0.0
      %5169 = vmatpush1.msra.mxu0 %v4933
      %5170 = vmatprep.subr.mxu0 0.0
      %5171 = vmatpush1.msra.mxu0 %v4928
      %5172 = vmatprep.subr.mxu0 0.0
      %5173 = vmatpush1.msra.mxu0 %v4923
      %5174 = vmatprep.subr.mxu0 0.0
      %5175 = vmatpush1.msra.mxu0 %v4918
      %5176 = vmatprep.subr.mxu0 0.0
      %5177 = vmatpush2.msra.mxu0 0.0
      %5178 = vmatprep.subr.mxu0 0.0
      %5179 = vmatpush2.msra.mxu0 0.0
      %5180 = vmatprep.subr.mxu0 0.0
      %5181 = vmatpush2.msra.mxu0 0.0
      %5182 = vmatprep.subr.mxu0 0.0
      %5183 = vmatpush2.msra.mxu0 0.0
      %5184 = vmatprep.subr.mxu0 0.0
      %5185 = vmatpush2.msra.mxu0 0.0
      %5186 = vmatprep.subr.mxu0 0.0
      %5187 = vmatpush2.msra.mxu0 0.0
      %5188 = vmatprep.subr.mxu0 0.0
      %5189 = vmatpush2.msra.mxu0 0.0
      %5190 = vmatprep.subr.mxu0 0.0
      %5191 = vmatpush2.msra.mxu0 0.0
      %5192 = vmatprep.subr.mxu0 0.0
      %5193 = vmatpush2.msra.mxu0 0.0
      %5194 = vmatprep.subr.mxu0 0.0
      %5195 = vmatpush2.msra.mxu0 0.0
      %5196 = vmatprep.subr.mxu0 0.0
      %5197 = vmatpush2.msra.mxu0 0.0
      %5198 = vmatprep.subr.mxu0 0.0
      %5199 = vmatpush2.msra.mxu0 0.0
      %5200 = vmatprep.subr.mxu0 0.0
      %5201 = vmatpush2.msra.mxu0 0.0
      %5202 = vmatprep.subr.mxu0 0.0
      %5203 = vmatpush2.msra.mxu0 0.0
      %5204 = vmatprep.subr.mxu0 0.0
      %5205 = vmatpush2.msra.mxu0 0.0
      %5206 = vmatprep.subr.mxu0 0.0
      %5207 = vmatpush2.msra.mxu0 0.0
      %5208 = vmatprep.mubr.f32.mxu0 0.0
      %5209 = vmatmul.mubr.f32.gmra.mxu0 %v4955
      %v5210 = vpop.f32.mrf.mxu0
      %v5211 = vadd.f32 0.0, %v5210
      %v5212 = vpop.f32.mrf.mxu0
      %5213 = vmatprep.mubr.f32.mxu0 0.0
      %5214 = vmatmul.mubr.f32.gmra.mxu0 %v4958
      %v5215 = vpop.f32.mrf.mxu0
      %v5216 = vadd.f32 0.0, %v5215
      %v5217 = vpop.f32.mrf.mxu0
      %5218 = vmatprep.mubr.f32.mxu0 0.0
      %5219 = vmatmul.mubr.f32.gmra.mxu0 %v4961
      %v5220 = vpop.f32.mrf.mxu0
      %v5221 = vadd.f32 0.0, %v5220
      %v5222 = vpop.f32.mrf.mxu0
      %5223 = vmatprep.mubr.f32.mxu0 0.0
      %5224 = vmatmul.mubr.f32.gmra.mxu0 %v4964
      %v5225 = vpop.f32.mrf.mxu0
      %v5226 = vadd.f32 0.0, %v5225
      %v5227 = vpop.f32.mrf.mxu0
      %5228 = vdwg.mxu0
      %v5229 = vadd.f32 %v4840, %v5033
      %v5230 = vadd.f32 %v4841, %v5035
      %v5231 = vadd.f32 %v4842, %v5122
      %v5232 = vadd.f32 %v4843, %v5124
      %v5233 = vadd.f32 %v4844, %v5211
      %v5234 = vadd.f32 %v4845, %v5039
      %v5235 = vadd.f32 %v4846, %v5041
      %v5236 = vadd.f32 %v4847, %v5128
      %v5237 = vadd.f32 %v4848, %v5130
      %v5238 = vadd.f32 %v4849, %v5216
      %v5239 = vadd.f32 %v4850, %v5045
      %v5240 = vadd.f32 %v4851, %v5047
      %v5241 = vadd.f32 %v4852, %v5134
      %v5242 = vadd.f32 %v4853, %v5136
      %v5243 = vadd.f32 %v4854, %v5221
      %v5244 = vadd.f32 %v4855, %v5051
      %v5245 = vadd.f32 %v4856, %v5053
      %v5246 = vadd.f32 %v4857, %v5140
      %v5247 = vadd.f32 %v4858, %v5142
      %v5248 = vadd.f32 %v4859, %v5226
      %s5249 = scalar_lea.vmem %s3, 256
      %v5250 = vld [vmem:[%s5249] sm:$0xff]
      %v5251 = vld [vmem:[%s5249 + $0x8] sm:$0xff]
      %v5252 = vld [vmem:[%s5249 + $0x10] sm:$0xff]
      %v5253 = vld [vmem:[%s5249 + $0x18] sm:$0xff]
      %5254 = vrot.lane.b32.xlu0 %v3258, 12
      %v5255 = vpop.permute.xlu0 %5254
      %5256 = vrot.lane.b32.xlu0 %v3259, 12
      %v5257 = vpop.permute.xlu0 %5256
      %5258 = vrot.lane.b32.xlu0 %v3260, 12
      %v5259 = vpop.permute.xlu0 %5258
      %5260 = vrot.lane.b32.xlu0 %v3261, 12
      %v5261 = vpop.permute.xlu0 %5260
      %5262 = vrot.lane.b32.xlu0 %v3262, 12
      %v5263 = vpop.permute.xlu0 %5262
      %5264 = vrot.lane.b32.xlu0 %v3263, 12
      %v5265 = vpop.permute.xlu0 %5264
      %5266 = vrot.lane.b32.xlu0 %v3264, 12
      %v5267 = vpop.permute.xlu0 %5266
      %5268 = vrot.lane.b32.xlu0 %v3265, 12
      %v5269 = vpop.permute.xlu0 %5268
      %5270 = vrot.lane.b32.xlu0 %v3266, 12
      %v5271 = vpop.permute.xlu0 %5270
      %5272 = vrot.lane.b32.xlu0 %v3267, 12
      %v5273 = vpop.permute.xlu0 %5272
      %5274 = vrot.lane.b32.xlu0 %v3268, 12
      %v5275 = vpop.permute.xlu0 %5274
      %5276 = vrot.lane.b32.xlu0 %v3269, 12
      %v5277 = vpop.permute.xlu0 %5276
      %5278 = vrot.lane.b32.xlu0 %v3270, 12
      %v5279 = vpop.permute.xlu0 %5278
      %5280 = vrot.lane.b32.xlu0 %v3271, 12
      %v5281 = vpop.permute.xlu0 %5280
      %5282 = vrot.lane.b32.xlu0 %v3272, 12
      %v5283 = vpop.permute.xlu0 %5282
      %5284 = vrot.lane.b32.xlu0 %v3273, 12
      %v5285 = vpop.permute.xlu0 %5284
      %5286 = vrot.lane.b32.xlu0 %v3274, 12
      %v5287 = vpop.permute.xlu0 %5286
      %5288 = vrot.lane.b32.xlu0 %v3275, 12
      %v5289 = vpop.permute.xlu0 %5288
      %5290 = vrot.lane.b32.xlu0 %v3276, 12
      %v5291 = vpop.permute.xlu0 %5290
      %5292 = vrot.lane.b32.xlu0 %v3277, 12
      %v5293 = vpop.permute.xlu0 %5292
      %5294 = vrot.lane.b32.xlu0 %v3278, 12
      %v5295 = vpop.permute.xlu0 %5294
      %5296 = vrot.lane.b32.xlu0 %v3279, 12
      %v5297 = vpop.permute.xlu0 %5296
      %5298 = vrot.lane.b32.xlu0 %v3280, 12
      %v5299 = vpop.permute.xlu0 %5298
      %5300 = vrot.lane.b32.xlu0 %v3281, 12
      %v5301 = vpop.permute.xlu0 %5300
      %vm5302 = vcmask 97280
      %v5303 = vsel %vm5302, %v5255, %v5257
      %v5304 = vsel %vm5302, %v5257, %v5259
      %v5305 = vsel %vm5302, %v5259, %v5261
      %v5306 = vsel %vm5302, %v5261, %v5263
      %v5307 = vsel %vm5302, %v5263, %v5265
      %v5308 = vsel %vm5302, %v5267, %v5269
      %v5309 = vsel %vm5302, %v5269, %v5271
      %v5310 = vsel %vm5302, %v5271, %v5273
      %v5311 = vsel %vm5302, %v5273, %v5275
      %v5312 = vsel %vm5302, %v5275, %v5277
      %v5313 = vsel %vm5302, %v5279, %v5281
      %v5314 = vsel %vm5302, %v5281, %v5283
      %v5315 = vsel %vm5302, %v5283, %v5285
      %v5316 = vsel %vm5302, %v5285, %v5287
      %v5317 = vsel %vm5302, %v5287, %v5289
      %v5318 = vsel %vm5302, %v5291, %v5293
      %v5319 = vsel %vm5302, %v5293, %v5295
      %v5320 = vsel %vm5302, %v5295, %v5297
      %v5321 = vsel %vm5302, %v5297, %v5299
      %v5322 = vsel %vm5302, %v5299, %v5301
      %v5344 = vsel %vm2330, %v5250, 0
      %v5347 = vsel %vm2330, %v5251, 0
      %v5350 = vsel %vm2330, %v5252, 0
      %v5353 = vsel %vm2330, %v5253, 0
      %5355 = vmatprep.subr.mxu0 0.0
      %5356 = vmatpush1.msra.mxu0 0.0
      %5357 = vmatprep.subr.mxu0 0.0
      %5358 = vmatpush1.msra.mxu0 0.0
      %5359 = vmatprep.subr.mxu0 0.0
      %5360 = vmatpush1.msra.mxu0 0.0
      %5361 = vmatprep.subr.mxu0 0.0
      %5362 = vmatpush1.msra.mxu0 0.0
      %5363 = vmatprep.subr.mxu0 0.0
      %5364 = vmatpush1.msra.mxu0 0.0
      %5365 = vmatprep.subr.mxu0 0.0
      %5366 = vmatpush1.msra.mxu0 0.0
      %5367 = vmatprep.subr.mxu0 0.0
      %5368 = vmatpush1.msra.mxu0 0.0
      %5369 = vmatprep.subr.mxu0 0.0
      %5370 = vmatpush1.msra.mxu0 0.0
      %5371 = vmatprep.subr.mxu0 0.0
      %5372 = vmatpush1.msra.mxu0 0.0
      %5373 = vmatprep.subr.mxu0 0.0
      %5374 = vmatpush1.msra.mxu0 0.0
      %5375 = vmatprep.subr.mxu0 0.0
      %5376 = vmatpush1.msra.mxu0 0.0
      %5377 = vmatprep.subr.mxu0 0.0
      %5378 = vmatpush1.msra.mxu0 0.0
      %5379 = vmatprep.subr.mxu0 %v5319
      %5380 = vmatpush1.msra.mxu0 %v5318
      %5381 = vmatprep.subr.mxu0 %v5314
      %5382 = vmatpush1.msra.mxu0 %v5313
      %5383 = vmatprep.subr.mxu0 %v5309
      %5384 = vmatpush1.msra.mxu0 %v5308
      %5385 = vmatprep.subr.mxu0 %v5304
      %5386 = vmatpush1.msra.mxu0 %v5303
      %5387 = vmatprep.subr.mxu0 0.0
      %5388 = vmatpush2.msra.mxu0 0.0
      %5389 = vmatprep.subr.mxu0 0.0
      %5390 = vmatpush2.msra.mxu0 0.0
      %5391 = vmatprep.subr.mxu0 0.0
      %5392 = vmatpush2.msra.mxu0 0.0
      %5393 = vmatprep.subr.mxu0 0.0
      %5394 = vmatpush2.msra.mxu0 0.0
      %5395 = vmatprep.subr.mxu0 0.0
      %5396 = vmatpush2.msra.mxu0 0.0
      %5397 = vmatprep.subr.mxu0 0.0
      %5398 = vmatpush2.msra.mxu0 0.0
      %5399 = vmatprep.subr.mxu0 0.0
      %5400 = vmatpush2.msra.mxu0 0.0
      %5401 = vmatprep.subr.mxu0 0.0
      %5402 = vmatpush2.msra.mxu0 0.0
      %5403 = vmatprep.subr.mxu0 0.0
      %5404 = vmatpush2.msra.mxu0 0.0
      %5405 = vmatprep.subr.mxu0 0.0
      %5406 = vmatpush2.msra.mxu0 0.0
      %5407 = vmatprep.subr.mxu0 0.0
      %5408 = vmatpush2.msra.mxu0 0.0
      %5409 = vmatprep.subr.mxu0 0.0
      %5410 = vmatpush2.msra.mxu0 0.0
      %5411 = vmatprep.subr.mxu0 0.0
      %5412 = vmatpush2.msra.mxu0 0.0
      %5413 = vmatprep.subr.mxu0 0.0
      %5414 = vmatpush2.msra.mxu0 0.0
      %5415 = vmatprep.subr.mxu0 0.0
      %5416 = vmatpush2.msra.mxu0 0.0
      %5417 = vmatprep.subr.mxu0 0.0
      %5418 = vmatpush2.msra.mxu0 0.0
      %5419 = vmatprep.mubr.f32.mxu0 0.0
      %5420 = vmatmul.mubr.f32.gmra.mxu0 %v5344
      %v5421 = vpop.f32.mrf.mxu0
      %v5422 = vadd.f32 0.0, %v5421
      %v5423 = vpop.f32.mrf.mxu0
      %v5424 = vadd.f32 0.0, %v5423
      %5425 = vmatprep.mubr.f32.mxu0 0.0
      %5426 = vmatmul.mubr.f32.gmra.mxu0 %v5347
      %v5427 = vpop.f32.mrf.mxu0
      %v5428 = vadd.f32 0.0, %v5427
      %v5429 = vpop.f32.mrf.mxu0
      %v5430 = vadd.f32 0.0, %v5429
      %5431 = vmatprep.mubr.f32.mxu0 0.0
      %5432 = vmatmul.mubr.f32.gmra.mxu0 %v5350
      %v5433 = vpop.f32.mrf.mxu0
      %v5434 = vadd.f32 0.0, %v5433
      %v5435 = vpop.f32.mrf.mxu0
      %v5436 = vadd.f32 0.0, %v5435
      %5437 = vmatprep.mubr.f32.mxu0 0.0
      %5438 = vmatmul.mubr.f32.gmra.mxu0 %v5353
      %v5439 = vpop.f32.mrf.mxu0
      %v5440 = vadd.f32 0.0, %v5439
      %v5441 = vpop.f32.mrf.mxu0
      %v5442 = vadd.f32 0.0, %v5441
      %5443 = vdwg.mxu0
      %5444 = vmatprep.subr.mxu0 0.0
      %5445 = vmatpush1.msra.mxu0 0.0
      %5446 = vmatprep.subr.mxu0 0.0
      %5447 = vmatpush1.msra.mxu0 0.0
      %5448 = vmatprep.subr.mxu0 0.0
      %5449 = vmatpush1.msra.mxu0 0.0
      %5450 = vmatprep.subr.mxu0 0.0
      %5451 = vmatpush1.msra.mxu0 0.0
      %5452 = vmatprep.subr.mxu0 0.0
      %5453 = vmatpush1.msra.mxu0 0.0
      %5454 = vmatprep.subr.mxu0 0.0
      %5455 = vmatpush1.msra.mxu0 0.0
      %5456 = vmatprep.subr.mxu0 0.0
      %5457 = vmatpush1.msra.mxu0 0.0
      %5458 = vmatprep.subr.mxu0 0.0
      %5459 = vmatpush1.msra.mxu0 0.0
      %5460 = vmatprep.subr.mxu0 0.0
      %5461 = vmatpush1.msra.mxu0 0.0
      %5462 = vmatprep.subr.mxu0 0.0
      %5463 = vmatpush1.msra.mxu0 0.0
      %5464 = vmatprep.subr.mxu0 0.0
      %5465 = vmatpush1.msra.mxu0 0.0
      %5466 = vmatprep.subr.mxu0 0.0
      %5467 = vmatpush1.msra.mxu0 0.0
      %5468 = vmatprep.subr.mxu0 %v5321
      %5469 = vmatpush1.msra.mxu0 %v5320
      %5470 = vmatprep.subr.mxu0 %v5316
      %5471 = vmatpush1.msra.mxu0 %v5315
      %5472 = vmatprep.subr.mxu0 %v5311
      %5473 = vmatpush1.msra.mxu0 %v5310
      %5474 = vmatprep.subr.mxu0 %v5306
      %5475 = vmatpush1.msra.mxu0 %v5305
      %5476 = vmatprep.subr.mxu0 0.0
      %5477 = vmatpush2.msra.mxu0 0.0
      %5478 = vmatprep.subr.mxu0 0.0
      %5479 = vmatpush2.msra.mxu0 0.0
      %5480 = vmatprep.subr.mxu0 0.0
      %5481 = vmatpush2.msra.mxu0 0.0
      %5482 = vmatprep.subr.mxu0 0.0
      %5483 = vmatpush2.msra.mxu0 0.0
      %5484 = vmatprep.subr.mxu0 0.0
      %5485 = vmatpush2.msra.mxu0 0.0
      %5486 = vmatprep.subr.mxu0 0.0
      %5487 = vmatpush2.msra.mxu0 0.0
      %5488 = vmatprep.subr.mxu0 0.0
      %5489 = vmatpush2.msra.mxu0 0.0
      %5490 = vmatprep.subr.mxu0 0.0
      %5491 = vmatpush2.msra.mxu0 0.0
      %5492 = vmatprep.subr.mxu0 0.0
      %5493 = vmatpush2.msra.mxu0 0.0
      %5494 = vmatprep.subr.mxu0 0.0
      %5495 = vmatpush2.msra.mxu0 0.0
      %5496 = vmatprep.subr.mxu0 0.0
      %5497 = vmatpush2.msra.mxu0 0.0
      %5498 = vmatprep.subr.mxu0 0.0
      %5499 = vmatpush2.msra.mxu0 0.0
      %5500 = vmatprep.subr.mxu0 0.0
      %5501 = vmatpush2.msra.mxu0 0.0
      %5502 = vmatprep.subr.mxu0 0.0
      %5503 = vmatpush2.msra.mxu0 0.0
      %5504 = vmatprep.subr.mxu0 0.0
      %5505 = vmatpush2.msra.mxu0 0.0
      %5506 = vmatprep.subr.mxu0 0.0
      %5507 = vmatpush2.msra.mxu0 0.0
      %5508 = vmatprep.mubr.f32.mxu0 0.0
      %5509 = vmatmul.mubr.f32.gmra.mxu0 %v5344
      %v5510 = vpop.f32.mrf.mxu0
      %v5511 = vadd.f32 0.0, %v5510
      %v5512 = vpop.f32.mrf.mxu0
      %v5513 = vadd.f32 0.0, %v5512
      %5514 = vmatprep.mubr.f32.mxu0 0.0
      %5515 = vmatmul.mubr.f32.gmra.mxu0 %v5347
      %v5516 = vpop.f32.mrf.mxu0
      %v5517 = vadd.f32 0.0, %v5516
      %v5518 = vpop.f32.mrf.mxu0
      %v5519 = vadd.f32 0.0, %v5518
      %5520 = vmatprep.mubr.f32.mxu0 0.0
      %5521 = vmatmul.mubr.f32.gmra.mxu0 %v5350
      %v5522 = vpop.f32.mrf.mxu0
      %v5523 = vadd.f32 0.0, %v5522
      %v5524 = vpop.f32.mrf.mxu0
      %v5525 = vadd.f32 0.0, %v5524
      %5526 = vmatprep.mubr.f32.mxu0 0.0
      %5527 = vmatmul.mubr.f32.gmra.mxu0 %v5353
      %v5528 = vpop.f32.mrf.mxu0
      %v5529 = vadd.f32 0.0, %v5528
      %v5530 = vpop.f32.mrf.mxu0
      %v5531 = vadd.f32 0.0, %v5530
      %5532 = vdwg.mxu0
      %5533 = vmatprep.subr.mxu0 0.0
      %5534 = vmatpush1.msra.mxu0 0.0
      %5535 = vmatprep.subr.mxu0 0.0
      %5536 = vmatpush1.msra.mxu0 0.0
      %5537 = vmatprep.subr.mxu0 0.0
      %5538 = vmatpush1.msra.mxu0 0.0
      %5539 = vmatprep.subr.mxu0 0.0
      %5540 = vmatpush1.msra.mxu0 0.0
      %5541 = vmatprep.subr.mxu0 0.0
      %5542 = vmatpush1.msra.mxu0 0.0
      %5543 = vmatprep.subr.mxu0 0.0
      %5544 = vmatpush1.msra.mxu0 0.0
      %5545 = vmatprep.subr.mxu0 0.0
      %5546 = vmatpush1.msra.mxu0 0.0
      %5547 = vmatprep.subr.mxu0 0.0
      %5548 = vmatpush1.msra.mxu0 0.0
      %5549 = vmatprep.subr.mxu0 0.0
      %5550 = vmatpush1.msra.mxu0 0.0
      %5551 = vmatprep.subr.mxu0 0.0
      %5552 = vmatpush1.msra.mxu0 0.0
      %5553 = vmatprep.subr.mxu0 0.0
      %5554 = vmatpush1.msra.mxu0 0.0
      %5555 = vmatprep.subr.mxu0 0.0
      %5556 = vmatpush1.msra.mxu0 0.0
      %5557 = vmatprep.subr.mxu0 0.0
      %5558 = vmatpush1.msra.mxu0 %v5322
      %5559 = vmatprep.subr.mxu0 0.0
      %5560 = vmatpush1.msra.mxu0 %v5317
      %5561 = vmatprep.subr.mxu0 0.0
      %5562 = vmatpush1.msra.mxu0 %v5312
      %5563 = vmatprep.subr.mxu0 0.0
      %5564 = vmatpush1.msra.mxu0 %v5307
      %5565 = vmatprep.subr.mxu0 0.0
      %5566 = vmatpush2.msra.mxu0 0.0
      %5567 = vmatprep.subr.mxu0 0.0
      %5568 = vmatpush2.msra.mxu0 0.0
      %5569 = vmatprep.subr.mxu0 0.0
      %5570 = vmatpush2.msra.mxu0 0.0
      %5571 = vmatprep.subr.mxu0 0.0
      %5572 = vmatpush2.msra.mxu0 0.0
      %5573 = vmatprep.subr.mxu0 0.0
      %5574 = vmatpush2.msra.mxu0 0.0
      %5575 = vmatprep.subr.mxu0 0.0
      %5576 = vmatpush2.msra.mxu0 0.0
      %5577 = vmatprep.subr.mxu0 0.0
      %5578 = vmatpush2.msra.mxu0 0.0
      %5579 = vmatprep.subr.mxu0 0.0
      %5580 = vmatpush2.msra.mxu0 0.0
      %5581 = vmatprep.subr.mxu0 0.0
      %5582 = vmatpush2.msra.mxu0 0.0
      %5583 = vmatprep.subr.mxu0 0.0
      %5584 = vmatpush2.msra.mxu0 0.0
      %5585 = vmatprep.subr.mxu0 0.0
      %5586 = vmatpush2.msra.mxu0 0.0
      %5587 = vmatprep.subr.mxu0 0.0
      %5588 = vmatpush2.msra.mxu0 0.0
      %5589 = vmatprep.subr.mxu0 0.0
      %5590 = vmatpush2.msra.mxu0 0.0
      %5591 = vmatprep.subr.mxu0 0.0
      %5592 = vmatpush2.msra.mxu0 0.0
      %5593 = vmatprep.subr.mxu0 0.0
      %5594 = vmatpush2.msra.mxu0 0.0
      %5595 = vmatprep.subr.mxu0 0.0
      %5596 = vmatpush2.msra.mxu0 0.0
      %5597 = vmatprep.mubr.f32.mxu0 0.0
      %5598 = vmatmul.mubr.f32.gmra.mxu0 %v5344
      %v5599 = vpop.f32.mrf.mxu0
      %v5600 = vadd.f32 0.0, %v5599
      %v5601 = vpop.f32.mrf.mxu0
      %5602 = vmatprep.mubr.f32.mxu0 0.0
      %5603 = vmatmul.mubr.f32.gmra.mxu0 %v5347
      %v5604 = vpop.f32.mrf.mxu0
      %v5605 = vadd.f32 0.0, %v5604
      %v5606 = vpop.f32.mrf.mxu0
      %5607 = vmatprep.mubr.f32.mxu0 0.0
      %5608 = vmatmul.mubr.f32.gmra.mxu0 %v5350
      %v5609 = vpop.f32.mrf.mxu0
      %v5610 = vadd.f32 0.0, %v5609
      %v5611 = vpop.f32.mrf.mxu0
      %5612 = vmatprep.mubr.f32.mxu0 0.0
      %5613 = vmatmul.mubr.f32.gmra.mxu0 %v5353
      %v5614 = vpop.f32.mrf.mxu0
      %v5615 = vadd.f32 0.0, %v5614
      %v5616 = vpop.f32.mrf.mxu0
      %5617 = vdwg.mxu0
      %v5618 = vadd.f32 %v5229, %v5422
      %v5619 = vadd.f32 %v5230, %v5424
      %v5620 = vadd.f32 %v5231, %v5511
      %v5621 = vadd.f32 %v5232, %v5513
      %v5622 = vadd.f32 %v5233, %v5600
      %v5623 = vadd.f32 %v5234, %v5428
      %v5624 = vadd.f32 %v5235, %v5430
      %v5625 = vadd.f32 %v5236, %v5517
      %v5626 = vadd.f32 %v5237, %v5519
      %v5627 = vadd.f32 %v5238, %v5605
      %v5628 = vadd.f32 %v5239, %v5434
      %v5629 = vadd.f32 %v5240, %v5436
      %v5630 = vadd.f32 %v5241, %v5523
      %v5631 = vadd.f32 %v5242, %v5525
      %v5632 = vadd.f32 %v5243, %v5610
      %v5633 = vadd.f32 %v5244, %v5440
      %v5634 = vadd.f32 %v5245, %v5442
      %v5635 = vadd.f32 %v5246, %v5529
      %v5636 = vadd.f32 %v5247, %v5531
      %v5637 = vadd.f32 %v5248, %v5615
      %v5638 = vld [vmem:[%s4] sm:$0xff]
      %v5639 = vld [vmem:[%s4 + $0x8] sm:$0xff]
      %v5640 = vld [vmem:[%s4 + $0x10] sm:$0xff]
      %v5641 = vld [vmem:[%s4 + $0x18] sm:$0xff]
      %5643 = vset.pattern.permute.xlu0 0
      %5644 = vperm.xlu0 %5643, %v5638
      %v5645 = vpop.permute.xlu0 %5644
      %5648 = vset.pattern.permute.xlu0 0
      %5649 = vperm.xlu0 %5648, %v5639
      %v5650 = vpop.permute.xlu0 %5649
      %5653 = vset.pattern.permute.xlu0 0
      %5654 = vperm.xlu0 %5653, %v5640
      %v5655 = vpop.permute.xlu0 %5654
      %5658 = vset.pattern.permute.xlu0 0
      %5659 = vperm.xlu0 %5658, %v5641
      %v5660 = vpop.permute.xlu0 %5659
      %v5662 = vadd.f32 %v5618, %v5645
      %v5663 = vadd.f32 %v5619, %v5645
      %v5664 = vadd.f32 %v5620, %v5645
      %v5665 = vadd.f32 %v5621, %v5645
      %v5666 = vadd.f32 %v5622, %v5645
      %v5667 = vadd.f32 %v5623, %v5650
      %v5668 = vadd.f32 %v5624, %v5650
      %v5669 = vadd.f32 %v5625, %v5650
      %v5670 = vadd.f32 %v5626, %v5650
      %v5671 = vadd.f32 %v5627, %v5650
      %v5672 = vadd.f32 %v5628, %v5655
      %v5673 = vadd.f32 %v5629, %v5655
      %v5674 = vadd.f32 %v5630, %v5655
      %v5675 = vadd.f32 %v5631, %v5655
      %v5676 = vadd.f32 %v5632, %v5655
      %v5677 = vadd.f32 %v5633, %v5660
      %v5678 = vadd.f32 %v5634, %v5660
      %v5679 = vadd.f32 %v5635, %v5660
      %v5680 = vadd.f32 %v5636, %v5660
      %v5681 = vadd.f32 %v5637, %v5660
      %vm5682 = vcmp.ge.f32.partialorder %v5662, 0.0
      %vm5683 = vcmp.ge.f32.partialorder %v5663, 0.0
      %vm5684 = vcmp.ge.f32.partialorder %v5664, 0.0
      %vm5685 = vcmp.ge.f32.partialorder %v5665, 0.0
      %vm5686 = vcmp.ge.f32.partialorder %v5666, 0.0
      %vm5687 = vcmp.ge.f32.partialorder %v5667, 0.0
      %vm5688 = vcmp.ge.f32.partialorder %v5668, 0.0
      %vm5689 = vcmp.ge.f32.partialorder %v5669, 0.0
      %vm5690 = vcmp.ge.f32.partialorder %v5670, 0.0
      %vm5691 = vcmp.ge.f32.partialorder %v5671, 0.0
      %vm5692 = vcmp.ge.f32.partialorder %v5672, 0.0
      %vm5693 = vcmp.ge.f32.partialorder %v5673, 0.0
      %vm5694 = vcmp.ge.f32.partialorder %v5674, 0.0
      %vm5695 = vcmp.ge.f32.partialorder %v5675, 0.0
      %vm5696 = vcmp.ge.f32.partialorder %v5676, 0.0
      %vm5697 = vcmp.ge.f32.partialorder %v5677, 0.0
      %vm5698 = vcmp.ge.f32.partialorder %v5678, 0.0
      %vm5699 = vcmp.ge.f32.partialorder %v5679, 0.0
      %vm5700 = vcmp.ge.f32.partialorder %v5680, 0.0
      %vm5701 = vcmp.ge.f32.partialorder %v5681, 0.0
      %v5702 = vmul.f32 %v5662, 0.01
      %v5703 = vmul.f32 %v5663, 0.01
      %v5704 = vmul.f32 %v5664, 0.01
      %v5705 = vmul.f32 %v5665, 0.01
      %v5706 = vmul.f32 %v5666, 0.01
      %v5707 = vmul.f32 %v5667, 0.01
      %v5708 = vmul.f32 %v5668, 0.01
      %v5709 = vmul.f32 %v5669, 0.01
      %v5710 = vmul.f32 %v5670, 0.01
      %v5711 = vmul.f32 %v5671, 0.01
      %v5712 = vmul.f32 %v5672, 0.01
      %v5713 = vmul.f32 %v5673, 0.01
      %v5714 = vmul.f32 %v5674, 0.01
      %v5715 = vmul.f32 %v5675, 0.01
      %v5716 = vmul.f32 %v5676, 0.01
      %v5717 = vmul.f32 %v5677, 0.01
      %v5718 = vmul.f32 %v5678, 0.01
      %v5719 = vmul.f32 %v5679, 0.01
      %v5720 = vmul.f32 %v5680, 0.01
      %v5721 = vmul.f32 %v5681, 0.01
      %v5722 = vsel %vm5682, %v5662, %v5702
      %v5723 = vsel %vm5683, %v5663, %v5703
      %v5724 = vsel %vm5684, %v5664, %v5704
      %v5725 = vsel %vm5685, %v5665, %v5705
      %v5726 = vsel %vm5686, %v5666, %v5706
      %v5727 = vsel %vm5687, %v5667, %v5707
      %v5728 = vsel %vm5688, %v5668, %v5708
      %v5729 = vsel %vm5689, %v5669, %v5709
      %v5730 = vsel %vm5690, %v5670, %v5710
      %v5731 = vsel %vm5691, %v5671, %v5711
      %v5732 = vsel %vm5692, %v5672, %v5712
      %v5733 = vsel %vm5693, %v5673, %v5713
      %v5734 = vsel %vm5694, %v5674, %v5714
      %v5735 = vsel %vm5695, %v5675, %v5715
      %v5736 = vsel %vm5696, %v5676, %v5716
      %v5737 = vsel %vm5697, %v5677, %v5717
      %v5738 = vsel %vm5698, %v5678, %v5718
      %v5739 = vsel %vm5699, %v5679, %v5719
      %v5740 = vsel %vm5700, %v5680, %v5720
      %v5741 = vsel %vm5701, %v5681, %v5721
      %5742 = vst [vmem:[#allocation3] sm:$0xff] %v5722
      %5743 = vst [vmem:[#allocation3 + $0x8] sm:$0xff] %v5723
      %5744 = vst [vmem:[#allocation3 + $0x10] sm:$0xff] %v5724
      %5745 = vst [vmem:[#allocation3 + $0x18] sm:$0xff] %v5725
      %5746 = vst.msk [vmem:[#allocation3 + $0x20] sm:$0xff] %vm1351, %v5726
      %5747 = vst [vmem:[#allocation3 + $0x28] sm:$0xff] %v5727
      %5748 = vst [vmem:[#allocation3 + $0x30] sm:$0xff] %v5728
      %5749 = vst [vmem:[#allocation3 + $0x38] sm:$0xff] %v5729
      %5750 = vst [vmem:[#allocation3 + $0x40] sm:$0xff] %v5730
      %5751 = vst.msk [vmem:[#allocation3 + $0x48] sm:$0xff] %vm1351, %v5731
      %5752 = vst [vmem:[#allocation3 + $0x50] sm:$0xff] %v5732
      %5753 = vst [vmem:[#allocation3 + $0x58] sm:$0xff] %v5733
      %5754 = vst [vmem:[#allocation3 + $0x60] sm:$0xff] %v5734
      %5755 = vst [vmem:[#allocation3 + $0x68] sm:$0xff] %v5735
      %5756 = vst.msk [vmem:[#allocation3 + $0x70] sm:$0xff] %vm1351, %v5736
      %5757 = vst [vmem:[#allocation3 + $0x78] sm:$0xff] %v5737
      %5758 = vst [vmem:[#allocation3 + $0x80] sm:$0xff] %v5738
      %5759 = vst [vmem:[#allocation3 + $0x88] sm:$0xff] %v5739
      %5760 = vst [vmem:[#allocation3 + $0x90] sm:$0xff] %v5740
      %5761 = vst.msk [vmem:[#allocation3 + $0x98] sm:$0xff] %vm1351, %v5741
      %vm5762 = vcmask 711680
      %5763 = vst.msk [vmem:[#allocation4] sm:$0xff] %vm5762, 0.0
      %5764 = vst.msk [vmem:[#allocation4 + $0x28] sm:$0xff] %vm5762, 0.0
      %5765 = vst.msk [vmem:[#allocation4 + $0x50] sm:$0xff] %vm5762, 0.0
      %5766 = vst.msk [vmem:[#allocation4 + $0x78] sm:$0xff] %vm5762, 0.0
      %vm5767 = vcmask 1048200
      %5768 = vst.msk [vmem:[#allocation4 + $0x18] sm:$0xff] %vm5767, 0.0
      %vm5769 = vcmask 326656
      %5770 = vst.msk [vmem:[#allocation4 + $0x20] sm:$0xff] %vm5769, 0.0
      %5771 = vst.msk [vmem:[#allocation4 + $0x40] sm:$0xff] %vm5767, 0.0
      %5772 = vst.msk [vmem:[#allocation4 + $0x48] sm:$0xff] %vm5769, 0.0
      %5773 = vst.msk [vmem:[#allocation4 + $0x68] sm:$0xff] %vm5767, 0.0
      %5774 = vst.msk [vmem:[#allocation4 + $0x70] sm:$0xff] %vm5769, 0.0
      %5775 = vst.msk [vmem:[#allocation4 + $0x90] sm:$0xff] %vm5767, 0.0
      %5776 = vst.msk [vmem:[#allocation4 + $0x98] sm:$0xff] %vm5769, 0.0
      %v5777 = vld [vmem:[#allocation3] sm:$0xff]
      %v5778 = vld [vmem:[#allocation3 + $0x8] sm:$0xff]
      %v5779 = vld [vmem:[#allocation3 + $0x10] sm:$0xff]
      %v5780 = vld [vmem:[#allocation3 + $0x28] sm:$0xff]
      %v5781 = vld [vmem:[#allocation3 + $0x30] sm:$0xff]
      %v5782 = vld [vmem:[#allocation3 + $0x38] sm:$0xff]
      %v5783 = vld [vmem:[#allocation3 + $0x50] sm:$0xff]
      %v5784 = vld [vmem:[#allocation3 + $0x58] sm:$0xff]
      %v5785 = vld [vmem:[#allocation3 + $0x60] sm:$0xff]
      %v5786 = vld [vmem:[#allocation3 + $0x78] sm:$0xff]
      %v5787 = vld [vmem:[#allocation3 + $0x80] sm:$0xff]
      %v5788 = vld [vmem:[#allocation3 + $0x88] sm:$0xff]
      %v5789 = vld [vmem:[%s5] sm:$0xff]
      %v5790 = vld [vmem:[%s5 + $0x8] sm:$0xff]
      %v5791 = vld [vmem:[%s5 + $0x10] sm:$0xff]
      %v5792 = vld [vmem:[%s5 + $0x18] sm:$0xff]
      %s5793 = scalar_lea.vmem %s5, 32
      %v5794 = vld [vmem:[%s5793] sm:$0xff]
      %v5795 = vld [vmem:[%s5793 + $0x8] sm:$0xff]
      %v5796 = vld [vmem:[%s5793 + $0x10] sm:$0xff]
      %v5797 = vld [vmem:[%s5793 + $0x18] sm:$0xff]
      %5810 = vrot.lane.b32.xlu0 %v5777, 124
      %v5811 = vpop.permute.xlu0 %5810
      %5812 = vrot.lane.b32.xlu0 %v5778, 124
      %v5813 = vpop.permute.xlu0 %5812
      %5814 = vrot.lane.b32.xlu0 %v5779, 124
      %v5815 = vpop.permute.xlu0 %5814
      %5816 = vrot.lane.b32.xlu0 %v5780, 124
      %v5817 = vpop.permute.xlu0 %5816
      %5818 = vrot.lane.b32.xlu0 %v5781, 124
      %v5819 = vpop.permute.xlu0 %5818
      %5820 = vrot.lane.b32.xlu0 %v5782, 124
      %v5821 = vpop.permute.xlu0 %5820
      %5822 = vrot.lane.b32.xlu0 %v5783, 124
      %v5823 = vpop.permute.xlu0 %5822
      %5824 = vrot.lane.b32.xlu0 %v5784, 124
      %v5825 = vpop.permute.xlu0 %5824
      %5826 = vrot.lane.b32.xlu0 %v5785, 124
      %v5827 = vpop.permute.xlu0 %5826
      %5828 = vrot.lane.b32.xlu0 %v5786, 124
      %v5829 = vpop.permute.xlu0 %5828
      %5830 = vrot.lane.b32.xlu0 %v5787, 124
      %v5831 = vpop.permute.xlu0 %5830
      %5832 = vrot.lane.b32.xlu0 %v5788, 124
      %v5833 = vpop.permute.xlu0 %5832
      %v5834 = vsel %vm2926, %v5811, %v5813
      %v5835 = vsel %vm2926, %v5813, %v5815
      %v5836 = vsel %vm2926, %v5817, %v5819
      %v5837 = vsel %vm2926, %v5819, %v5821
      %v5838 = vsel %vm2926, %v5823, %v5825
      %v5839 = vsel %vm2926, %v5825, %v5827
      %v5840 = vsel %vm2926, %v5829, %v5831
      %v5841 = vsel %vm2926, %v5831, %v5833
      %v5855 = vsel %vm2330, %v5794, 0
      %v5858 = vsel %vm2330, %v5795, 0
      %v5861 = vsel %vm2330, %v5796, 0
      %v5864 = vsel %vm2330, %v5797, 0
      %5866 = vmatprep.subr.mxu0 0.0
      %5867 = vmatpush1.msra.mxu0 0.0
      %5868 = vmatprep.subr.mxu0 0.0
      %5869 = vmatpush1.msra.mxu0 0.0
      %5870 = vmatprep.subr.mxu0 0.0
      %5871 = vmatpush1.msra.mxu0 0.0
      %5872 = vmatprep.subr.mxu0 0.0
      %5873 = vmatpush1.msra.mxu0 0.0
      %5874 = vmatprep.subr.mxu0 0.0
      %5875 = vmatpush1.msra.mxu0 0.0
      %5876 = vmatprep.subr.mxu0 0.0
      %5877 = vmatpush1.msra.mxu0 0.0
      %5878 = vmatprep.subr.mxu0 0.0
      %5879 = vmatpush1.msra.mxu0 0.0
      %5880 = vmatprep.subr.mxu0 0.0
      %5881 = vmatpush1.msra.mxu0 0.0
      %5882 = vmatprep.subr.mxu0 0.0
      %5883 = vmatpush1.msra.mxu0 0.0
      %5884 = vmatprep.subr.mxu0 0.0
      %5885 = vmatpush1.msra.mxu0 0.0
      %5886 = vmatprep.subr.mxu0 0.0
      %5887 = vmatpush1.msra.mxu0 0.0
      %5888 = vmatprep.subr.mxu0 0.0
      %5889 = vmatpush1.msra.mxu0 0.0
      %5890 = vmatprep.subr.mxu0 %v5841
      %5891 = vmatpush1.msra.mxu0 %v5840
      %5892 = vmatprep.subr.mxu0 %v5839
      %5893 = vmatpush1.msra.mxu0 %v5838
      %5894 = vmatprep.subr.mxu0 %v5837
      %5895 = vmatpush1.msra.mxu0 %v5836
      %5896 = vmatprep.subr.mxu0 %v5835
      %5897 = vmatpush1.msra.mxu0 %v5834
      %5898 = vmatprep.subr.mxu0 0.0
      %5899 = vmatpush2.msra.mxu0 0.0
      %5900 = vmatprep.subr.mxu0 0.0
      %5901 = vmatpush2.msra.mxu0 0.0
      %5902 = vmatprep.subr.mxu0 0.0
      %5903 = vmatpush2.msra.mxu0 0.0
      %5904 = vmatprep.subr.mxu0 0.0
      %5905 = vmatpush2.msra.mxu0 0.0
      %5906 = vmatprep.subr.mxu0 0.0
      %5907 = vmatpush2.msra.mxu0 0.0
      %5908 = vmatprep.subr.mxu0 0.0
      %5909 = vmatpush2.msra.mxu0 0.0
      %5910 = vmatprep.subr.mxu0 0.0
      %5911 = vmatpush2.msra.mxu0 0.0
      %5912 = vmatprep.subr.mxu0 0.0
      %5913 = vmatpush2.msra.mxu0 0.0
      %5914 = vmatprep.subr.mxu0 0.0
      %5915 = vmatpush2.msra.mxu0 0.0
      %5916 = vmatprep.subr.mxu0 0.0
      %5917 = vmatpush2.msra.mxu0 0.0
      %5918 = vmatprep.subr.mxu0 0.0
      %5919 = vmatpush2.msra.mxu0 0.0
      %5920 = vmatprep.subr.mxu0 0.0
      %5921 = vmatpush2.msra.mxu0 0.0
      %5922 = vmatprep.subr.mxu0 0.0
      %5923 = vmatpush2.msra.mxu0 0.0
      %5924 = vmatprep.subr.mxu0 0.0
      %5925 = vmatpush2.msra.mxu0 0.0
      %5926 = vmatprep.subr.mxu0 0.0
      %5927 = vmatpush2.msra.mxu0 0.0
      %5928 = vmatprep.subr.mxu0 0.0
      %5929 = vmatpush2.msra.mxu0 0.0
      %5930 = vmatprep.mubr.f32.mxu0 0.0
      %5931 = vmatmul.mubr.f32.gmra.mxu0 %v5855
      %v5932 = vpop.f32.mrf.mxu0
      %v5933 = vadd.f32 0.0, %v5932
      %v5934 = vpop.f32.mrf.mxu0
      %v5935 = vadd.f32 0.0, %v5934
      %5936 = vmatprep.mubr.f32.mxu0 0.0
      %5937 = vmatmul.mubr.f32.gmra.mxu0 %v5858
      %v5938 = vpop.f32.mrf.mxu0
      %v5939 = vadd.f32 0.0, %v5938
      %v5940 = vpop.f32.mrf.mxu0
      %v5941 = vadd.f32 0.0, %v5940
      %5942 = vmatprep.mubr.f32.mxu0 0.0
      %5943 = vmatmul.mubr.f32.gmra.mxu0 %v5861
      %v5944 = vpop.f32.mrf.mxu0
      %v5945 = vadd.f32 0.0, %v5944
      %v5946 = vpop.f32.mrf.mxu0
      %v5947 = vadd.f32 0.0, %v5946
      %5948 = vmatprep.mubr.f32.mxu0 0.0
      %5949 = vmatmul.mubr.f32.gmra.mxu0 %v5864
      %v5950 = vpop.f32.mrf.mxu0
      %v5951 = vadd.f32 0.0, %v5950
      %v5952 = vpop.f32.mrf.mxu0
      %v5953 = vadd.f32 0.0, %v5952
      %5954 = vdwg.mxu0
      %5955 = vmatprep.subr.mxu0 0.0
      %5956 = vmatpush1.msra.mxu0 0.0
      %5957 = vmatprep.subr.mxu0 0.0
      %5958 = vmatpush1.msra.mxu0 0.0
      %5959 = vmatprep.subr.mxu0 0.0
      %5960 = vmatpush1.msra.mxu0 0.0
      %5961 = vmatprep.subr.mxu0 0.0
      %5962 = vmatpush1.msra.mxu0 0.0
      %5963 = vmatprep.subr.mxu0 0.0
      %5964 = vmatpush1.msra.mxu0 0.0
      %5965 = vmatprep.subr.mxu0 0.0
      %5966 = vmatpush1.msra.mxu0 0.0
      %5967 = vmatprep.subr.mxu0 0.0
      %5968 = vmatpush1.msra.mxu0 0.0
      %5969 = vmatprep.subr.mxu0 0.0
      %5970 = vmatpush1.msra.mxu0 0.0
      %5971 = vmatprep.subr.mxu0 0.0
      %5972 = vmatpush1.msra.mxu0 0.0
      %5973 = vmatprep.subr.mxu0 0.0
      %5974 = vmatpush1.msra.mxu0 0.0
      %5975 = vmatprep.subr.mxu0 0.0
      %5976 = vmatpush1.msra.mxu0 0.0
      %5977 = vmatprep.subr.mxu0 0.0
      %5978 = vmatpush1.msra.mxu0 0.0
      %5979 = vmatprep.subr.mxu0 0.0
      %5980 = vmatpush1.msra.mxu0 %v5833
      %5981 = vmatprep.subr.mxu0 0.0
      %5982 = vmatpush1.msra.mxu0 %v5827
      %5983 = vmatprep.subr.mxu0 0.0
      %5984 = vmatpush1.msra.mxu0 %v5821
      %5985 = vmatprep.subr.mxu0 0.0
      %5986 = vmatpush1.msra.mxu0 %v5815
      %5987 = vmatprep.subr.mxu0 0.0
      %5988 = vmatpush2.msra.mxu0 0.0
      %5989 = vmatprep.subr.mxu0 0.0
      %5990 = vmatpush2.msra.mxu0 0.0
      %5991 = vmatprep.subr.mxu0 0.0
      %5992 = vmatpush2.msra.mxu0 0.0
      %5993 = vmatprep.subr.mxu0 0.0
      %5994 = vmatpush2.msra.mxu0 0.0
      %5995 = vmatprep.subr.mxu0 0.0
      %5996 = vmatpush2.msra.mxu0 0.0
      %5997 = vmatprep.subr.mxu0 0.0
      %5998 = vmatpush2.msra.mxu0 0.0
      %5999 = vmatprep.subr.mxu0 0.0
      %6000 = vmatpush2.msra.mxu0 0.0
      %6001 = vmatprep.subr.mxu0 0.0
      %6002 = vmatpush2.msra.mxu0 0.0
      %6003 = vmatprep.subr.mxu0 0.0
      %6004 = vmatpush2.msra.mxu0 0.0
      %6005 = vmatprep.subr.mxu0 0.0
      %6006 = vmatpush2.msra.mxu0 0.0
      %6007 = vmatprep.subr.mxu0 0.0
      %6008 = vmatpush2.msra.mxu0 0.0
      %6009 = vmatprep.subr.mxu0 0.0
      %6010 = vmatpush2.msra.mxu0 0.0
      %6011 = vmatprep.subr.mxu0 0.0
      %6012 = vmatpush2.msra.mxu0 0.0
      %6013 = vmatprep.subr.mxu0 0.0
      %6014 = vmatpush2.msra.mxu0 0.0
      %6015 = vmatprep.subr.mxu0 0.0
      %6016 = vmatpush2.msra.mxu0 0.0
      %6017 = vmatprep.subr.mxu0 0.0
      %6018 = vmatpush2.msra.mxu0 0.0
      %6019 = vmatprep.mubr.f32.mxu0 0.0
      %6020 = vmatmul.mubr.f32.gmra.mxu0 %v5855
      %v6021 = vpop.f32.mrf.mxu0
      %v6022 = vadd.f32 0.0, %v6021
      %v6023 = vpop.f32.mrf.mxu0
      %6024 = vmatprep.mubr.f32.mxu0 0.0
      %6025 = vmatmul.mubr.f32.gmra.mxu0 %v5858
      %v6026 = vpop.f32.mrf.mxu0
      %v6027 = vadd.f32 0.0, %v6026
      %v6028 = vpop.f32.mrf.mxu0
      %6029 = vmatprep.mubr.f32.mxu0 0.0
      %6030 = vmatmul.mubr.f32.gmra.mxu0 %v5861
      %v6031 = vpop.f32.mrf.mxu0
      %v6032 = vadd.f32 0.0, %v6031
      %v6033 = vpop.f32.mrf.mxu0
      %6034 = vmatprep.mubr.f32.mxu0 0.0
      %6035 = vmatmul.mubr.f32.gmra.mxu0 %v5864
      %v6036 = vpop.f32.mrf.mxu0
      %v6037 = vadd.f32 0.0, %v6036
      %v6038 = vpop.f32.mrf.mxu0
      %6039 = vdwg.mxu0
      %v6041 = vsel %vm2330, %v5789, 0
      %v6044 = vsel %vm2330, %v5790, 0
      %v6047 = vsel %vm2330, %v5791, 0
      %v6050 = vsel %vm2330, %v5792, 0
      %6052 = vmatprep.subr.mxu0 0.0
      %6053 = vmatpush1.msra.mxu0 0.0
      %6054 = vmatprep.subr.mxu0 0.0
      %6055 = vmatpush1.msra.mxu0 0.0
      %6056 = vmatprep.subr.mxu0 0.0
      %6057 = vmatpush1.msra.mxu0 0.0
      %6058 = vmatprep.subr.mxu0 0.0
      %6059 = vmatpush1.msra.mxu0 0.0
      %6060 = vmatprep.subr.mxu0 0.0
      %6061 = vmatpush1.msra.mxu0 0.0
      %6062 = vmatprep.subr.mxu0 0.0
      %6063 = vmatpush1.msra.mxu0 0.0
      %6064 = vmatprep.subr.mxu0 0.0
      %6065 = vmatpush1.msra.mxu0 0.0
      %6066 = vmatprep.subr.mxu0 0.0
      %6067 = vmatpush1.msra.mxu0 0.0
      %6068 = vmatprep.subr.mxu0 0.0
      %6069 = vmatpush1.msra.mxu0 0.0
      %6070 = vmatprep.subr.mxu0 0.0
      %6071 = vmatpush1.msra.mxu0 0.0
      %6072 = vmatprep.subr.mxu0 0.0
      %6073 = vmatpush1.msra.mxu0 0.0
      %6074 = vmatprep.subr.mxu0 0.0
      %6075 = vmatpush1.msra.mxu0 0.0
      %6076 = vmatprep.subr.mxu0 %v5787
      %6077 = vmatpush1.msra.mxu0 %v5786
      %6078 = vmatprep.subr.mxu0 %v5784
      %6079 = vmatpush1.msra.mxu0 %v5783
      %6080 = vmatprep.subr.mxu0 %v5781
      %6081 = vmatpush1.msra.mxu0 %v5780
      %6082 = vmatprep.subr.mxu0 %v5778
      %6083 = vmatpush1.msra.mxu0 %v5777
      %6084 = vmatprep.subr.mxu0 0.0
      %6085 = vmatpush2.msra.mxu0 0.0
      %6086 = vmatprep.subr.mxu0 0.0
      %6087 = vmatpush2.msra.mxu0 0.0
      %6088 = vmatprep.subr.mxu0 0.0
      %6089 = vmatpush2.msra.mxu0 0.0
      %6090 = vmatprep.subr.mxu0 0.0
      %6091 = vmatpush2.msra.mxu0 0.0
      %6092 = vmatprep.subr.mxu0 0.0
      %6093 = vmatpush2.msra.mxu0 0.0
      %6094 = vmatprep.subr.mxu0 0.0
      %6095 = vmatpush2.msra.mxu0 0.0
      %6096 = vmatprep.subr.mxu0 0.0
      %6097 = vmatpush2.msra.mxu0 0.0
      %6098 = vmatprep.subr.mxu0 0.0
      %6099 = vmatpush2.msra.mxu0 0.0
      %6100 = vmatprep.subr.mxu0 0.0
      %6101 = vmatpush2.msra.mxu0 0.0
      %6102 = vmatprep.subr.mxu0 0.0
      %6103 = vmatpush2.msra.mxu0 0.0
      %6104 = vmatprep.subr.mxu0 0.0
      %6105 = vmatpush2.msra.mxu0 0.0
      %6106 = vmatprep.subr.mxu0 0.0
      %6107 = vmatpush2.msra.mxu0 0.0
      %6108 = vmatprep.subr.mxu0 0.0
      %6109 = vmatpush2.msra.mxu0 0.0
      %6110 = vmatprep.subr.mxu0 0.0
      %6111 = vmatpush2.msra.mxu0 0.0
      %6112 = vmatprep.subr.mxu0 0.0
      %6113 = vmatpush2.msra.mxu0 0.0
      %6114 = vmatprep.subr.mxu0 0.0
      %6115 = vmatpush2.msra.mxu0 0.0
      %6116 = vmatprep.mubr.f32.mxu0 0.0
      %6117 = vmatmul.mubr.f32.gmra.mxu0 %v6041
      %v6118 = vpop.f32.mrf.mxu0
      %v6119 = vadd.f32 %v5933, %v6118
      %v6120 = vpop.f32.mrf.mxu0
      %v6121 = vadd.f32 %v5935, %v6120
      %6122 = vmatprep.mubr.f32.mxu0 0.0
      %6123 = vmatmul.mubr.f32.gmra.mxu0 %v6044
      %v6124 = vpop.f32.mrf.mxu0
      %v6125 = vadd.f32 %v5939, %v6124
      %v6126 = vpop.f32.mrf.mxu0
      %v6127 = vadd.f32 %v5941, %v6126
      %6128 = vmatprep.mubr.f32.mxu0 0.0
      %6129 = vmatmul.mubr.f32.gmra.mxu0 %v6047
      %v6130 = vpop.f32.mrf.mxu0
      %v6131 = vadd.f32 %v5945, %v6130
      %v6132 = vpop.f32.mrf.mxu0
      %v6133 = vadd.f32 %v5947, %v6132
      %6134 = vmatprep.mubr.f32.mxu0 0.0
      %6135 = vmatmul.mubr.f32.gmra.mxu0 %v6050
      %v6136 = vpop.f32.mrf.mxu0
      %v6137 = vadd.f32 %v5951, %v6136
      %v6138 = vpop.f32.mrf.mxu0
      %v6139 = vadd.f32 %v5953, %v6138
      %6140 = vdwg.mxu0
      %6141 = vmatprep.subr.mxu0 0.0
      %6142 = vmatpush1.msra.mxu0 0.0
      %6143 = vmatprep.subr.mxu0 0.0
      %6144 = vmatpush1.msra.mxu0 0.0
      %6145 = vmatprep.subr.mxu0 0.0
      %6146 = vmatpush1.msra.mxu0 0.0
      %6147 = vmatprep.subr.mxu0 0.0
      %6148 = vmatpush1.msra.mxu0 0.0
      %6149 = vmatprep.subr.mxu0 0.0
      %6150 = vmatpush1.msra.mxu0 0.0
      %6151 = vmatprep.subr.mxu0 0.0
      %6152 = vmatpush1.msra.mxu0 0.0
      %6153 = vmatprep.subr.mxu0 0.0
      %6154 = vmatpush1.msra.mxu0 0.0
      %6155 = vmatprep.subr.mxu0 0.0
      %6156 = vmatpush1.msra.mxu0 0.0
      %6157 = vmatprep.subr.mxu0 0.0
      %6158 = vmatpush1.msra.mxu0 0.0
      %6159 = vmatprep.subr.mxu0 0.0
      %6160 = vmatpush1.msra.mxu0 0.0
      %6161 = vmatprep.subr.mxu0 0.0
      %6162 = vmatpush1.msra.mxu0 0.0
      %6163 = vmatprep.subr.mxu0 0.0
      %6164 = vmatpush1.msra.mxu0 0.0
      %6165 = vmatprep.subr.mxu0 0.0
      %6166 = vmatpush1.msra.mxu0 %v5788
      %6167 = vmatprep.subr.mxu0 0.0
      %6168 = vmatpush1.msra.mxu0 %v5785
      %6169 = vmatprep.subr.mxu0 0.0
      %6170 = vmatpush1.msra.mxu0 %v5782
      %6171 = vmatprep.subr.mxu0 0.0
      %6172 = vmatpush1.msra.mxu0 %v5779
      %6173 = vmatprep.subr.mxu0 0.0
      %6174 = vmatpush2.msra.mxu0 0.0
      %6175 = vmatprep.subr.mxu0 0.0
      %6176 = vmatpush2.msra.mxu0 0.0
      %6177 = vmatprep.subr.mxu0 0.0
      %6178 = vmatpush2.msra.mxu0 0.0
      %6179 = vmatprep.subr.mxu0 0.0
      %6180 = vmatpush2.msra.mxu0 0.0
      %6181 = vmatprep.subr.mxu0 0.0
      %6182 = vmatpush2.msra.mxu0 0.0
      %6183 = vmatprep.subr.mxu0 0.0
      %6184 = vmatpush2.msra.mxu0 0.0
      %6185 = vmatprep.subr.mxu0 0.0
      %6186 = vmatpush2.msra.mxu0 0.0
      %6187 = vmatprep.subr.mxu0 0.0
      %6188 = vmatpush2.msra.mxu0 0.0
      %6189 = vmatprep.subr.mxu0 0.0
      %6190 = vmatpush2.msra.mxu0 0.0
      %6191 = vmatprep.subr.mxu0 0.0
      %6192 = vmatpush2.msra.mxu0 0.0
      %6193 = vmatprep.subr.mxu0 0.0
      %6194 = vmatpush2.msra.mxu0 0.0
      %6195 = vmatprep.subr.mxu0 0.0
      %6196 = vmatpush2.msra.mxu0 0.0
      %6197 = vmatprep.subr.mxu0 0.0
      %6198 = vmatpush2.msra.mxu0 0.0
      %6199 = vmatprep.subr.mxu0 0.0
      %6200 = vmatpush2.msra.mxu0 0.0
      %6201 = vmatprep.subr.mxu0 0.0
      %6202 = vmatpush2.msra.mxu0 0.0
      %6203 = vmatprep.subr.mxu0 0.0
      %6204 = vmatpush2.msra.mxu0 0.0
      %6205 = vmatprep.mubr.f32.mxu0 0.0
      %6206 = vmatmul.mubr.f32.gmra.mxu0 %v6041
      %v6207 = vpop.f32.mrf.mxu0
      %v6208 = vadd.f32 %v6022, %v6207
      %v6209 = vpop.f32.mrf.mxu0
      %6210 = vmatprep.mubr.f32.mxu0 0.0
      %6211 = vmatmul.mubr.f32.gmra.mxu0 %v6044
      %v6212 = vpop.f32.mrf.mxu0
      %v6213 = vadd.f32 %v6027, %v6212
      %v6214 = vpop.f32.mrf.mxu0
      %6215 = vmatprep.mubr.f32.mxu0 0.0
      %6216 = vmatmul.mubr.f32.gmra.mxu0 %v6047
      %v6217 = vpop.f32.mrf.mxu0
      %v6218 = vadd.f32 %v6032, %v6217
      %v6219 = vpop.f32.mrf.mxu0
      %6220 = vmatprep.mubr.f32.mxu0 0.0
      %6221 = vmatmul.mubr.f32.gmra.mxu0 %v6050
      %v6222 = vpop.f32.mrf.mxu0
      %v6223 = vadd.f32 %v6037, %v6222
      %v6224 = vpop.f32.mrf.mxu0
      %6225 = vdwg.mxu0
      %v6226 = vld [vmem:[#allocation3] sm:$0xff]
      %v6227 = vld [vmem:[#allocation3 + $0x8] sm:$0xff]
      %v6228 = vld [vmem:[#allocation3 + $0x10] sm:$0xff]
      %v6229 = vld [vmem:[#allocation3 + $0x18] sm:$0xff]
      %v6230 = vld [vmem:[#allocation3 + $0x28] sm:$0xff]
      %v6231 = vld [vmem:[#allocation3 + $0x30] sm:$0xff]
      %v6232 = vld [vmem:[#allocation3 + $0x38] sm:$0xff]
      %v6233 = vld [vmem:[#allocation3 + $0x40] sm:$0xff]
      %v6234 = vld [vmem:[#allocation3 + $0x50] sm:$0xff]
      %v6235 = vld [vmem:[#allocation3 + $0x58] sm:$0xff]
      %v6236 = vld [vmem:[#allocation3 + $0x60] sm:$0xff]
      %v6237 = vld [vmem:[#allocation3 + $0x68] sm:$0xff]
      %v6238 = vld [vmem:[#allocation3 + $0x78] sm:$0xff]
      %v6239 = vld [vmem:[#allocation3 + $0x80] sm:$0xff]
      %v6240 = vld [vmem:[#allocation3 + $0x88] sm:$0xff]
      %v6241 = vld [vmem:[#allocation3 + $0x90] sm:$0xff]
      %s6242 = scalar_lea.vmem %s5, 64
      %v6243 = vld [vmem:[%s6242] sm:$0xff]
      %v6244 = vld [vmem:[%s6242 + $0x8] sm:$0xff]
      %v6245 = vld [vmem:[%s6242 + $0x10] sm:$0xff]
      %v6246 = vld [vmem:[%s6242 + $0x18] sm:$0xff]
      %6263 = vrot.lane.b32.xlu0 %v6226, 120
      %v6264 = vpop.permute.xlu0 %6263
      %6265 = vrot.lane.b32.xlu0 %v6227, 120
      %v6266 = vpop.permute.xlu0 %6265
      %6267 = vrot.lane.b32.xlu0 %v6228, 120
      %v6268 = vpop.permute.xlu0 %6267
      %6269 = vrot.lane.b32.xlu0 %v6229, 120
      %v6270 = vpop.permute.xlu0 %6269
      %6271 = vrot.lane.b32.xlu0 %v6230, 120
      %v6272 = vpop.permute.xlu0 %6271
      %6273 = vrot.lane.b32.xlu0 %v6231, 120
      %v6274 = vpop.permute.xlu0 %6273
      %6275 = vrot.lane.b32.xlu0 %v6232, 120
      %v6276 = vpop.permute.xlu0 %6275
      %6277 = vrot.lane.b32.xlu0 %v6233, 120
      %v6278 = vpop.permute.xlu0 %6277
      %6279 = vrot.lane.b32.xlu0 %v6234, 120
      %v6280 = vpop.permute.xlu0 %6279
      %6281 = vrot.lane.b32.xlu0 %v6235, 120
      %v6282 = vpop.permute.xlu0 %6281
      %6283 = vrot.lane.b32.xlu0 %v6236, 120
      %v6284 = vpop.permute.xlu0 %6283
      %6285 = vrot.lane.b32.xlu0 %v6237, 120
      %v6286 = vpop.permute.xlu0 %6285
      %6287 = vrot.lane.b32.xlu0 %v6238, 120
      %v6288 = vpop.permute.xlu0 %6287
      %6289 = vrot.lane.b32.xlu0 %v6239, 120
      %v6290 = vpop.permute.xlu0 %6289
      %6291 = vrot.lane.b32.xlu0 %v6240, 120
      %v6292 = vpop.permute.xlu0 %6291
      %6293 = vrot.lane.b32.xlu0 %v6241, 120
      %v6294 = vpop.permute.xlu0 %6293
      %vm6295 = vcmask 982016
      %v6296 = vsel %vm6295, %v6264, %v6266
      %v6297 = vsel %vm6295, %v6266, %v6268
      %v6298 = vsel %vm6295, %v6268, %v6270
      %v6299 = vsel %vm6295, %v6272, %v6274
      %v6300 = vsel %vm6295, %v6274, %v6276
      %v6301 = vsel %vm6295, %v6276, %v6278
      %v6302 = vsel %vm6295, %v6280, %v6282
      %v6303 = vsel %vm6295, %v6282, %v6284
      %v6304 = vsel %vm6295, %v6284, %v6286
      %v6305 = vsel %vm6295, %v6288, %v6290
      %v6306 = vsel %vm6295, %v6290, %v6292
      %v6307 = vsel %vm6295, %v6292, %v6294
      %v6321 = vsel %vm2330, %v6243, 0
      %v6324 = vsel %vm2330, %v6244, 0
      %v6327 = vsel %vm2330, %v6245, 0
      %v6330 = vsel %vm2330, %v6246, 0
      %6332 = vmatprep.subr.mxu0 0.0
      %6333 = vmatpush1.msra.mxu0 0.0
      %6334 = vmatprep.subr.mxu0 0.0
      %6335 = vmatpush1.msra.mxu0 0.0
      %6336 = vmatprep.subr.mxu0 0.0
      %6337 = vmatpush1.msra.mxu0 0.0
      %6338 = vmatprep.subr.mxu0 0.0
      %6339 = vmatpush1.msra.mxu0 0.0
      %6340 = vmatprep.subr.mxu0 0.0
      %6341 = vmatpush1.msra.mxu0 0.0
      %6342 = vmatprep.subr.mxu0 0.0
      %6343 = vmatpush1.msra.mxu0 0.0
      %6344 = vmatprep.subr.mxu0 0.0
      %6345 = vmatpush1.msra.mxu0 0.0
      %6346 = vmatprep.subr.mxu0 0.0
      %6347 = vmatpush1.msra.mxu0 0.0
      %6348 = vmatprep.subr.mxu0 0.0
      %6349 = vmatpush1.msra.mxu0 0.0
      %6350 = vmatprep.subr.mxu0 0.0
      %6351 = vmatpush1.msra.mxu0 0.0
      %6352 = vmatprep.subr.mxu0 0.0
      %6353 = vmatpush1.msra.mxu0 0.0
      %6354 = vmatprep.subr.mxu0 0.0
      %6355 = vmatpush1.msra.mxu0 0.0
      %6356 = vmatprep.subr.mxu0 %v6306
      %6357 = vmatpush1.msra.mxu0 %v6305
      %6358 = vmatprep.subr.mxu0 %v6303
      %6359 = vmatpush1.msra.mxu0 %v6302
      %6360 = vmatprep.subr.mxu0 %v6300
      %6361 = vmatpush1.msra.mxu0 %v6299
      %6362 = vmatprep.subr.mxu0 %v6297
      %6363 = vmatpush1.msra.mxu0 %v6296
      %6364 = vmatprep.subr.mxu0 0.0
      %6365 = vmatpush2.msra.mxu0 0.0
      %6366 = vmatprep.subr.mxu0 0.0
      %6367 = vmatpush2.msra.mxu0 0.0
      %6368 = vmatprep.subr.mxu0 0.0
      %6369 = vmatpush2.msra.mxu0 0.0
      %6370 = vmatprep.subr.mxu0 0.0
      %6371 = vmatpush2.msra.mxu0 0.0
      %6372 = vmatprep.subr.mxu0 0.0
      %6373 = vmatpush2.msra.mxu0 0.0
      %6374 = vmatprep.subr.mxu0 0.0
      %6375 = vmatpush2.msra.mxu0 0.0
      %6376 = vmatprep.subr.mxu0 0.0
      %6377 = vmatpush2.msra.mxu0 0.0
      %6378 = vmatprep.subr.mxu0 0.0
      %6379 = vmatpush2.msra.mxu0 0.0
      %6380 = vmatprep.subr.mxu0 0.0
      %6381 = vmatpush2.msra.mxu0 0.0
      %6382 = vmatprep.subr.mxu0 0.0
      %6383 = vmatpush2.msra.mxu0 0.0
      %6384 = vmatprep.subr.mxu0 0.0
      %6385 = vmatpush2.msra.mxu0 0.0
      %6386 = vmatprep.subr.mxu0 0.0
      %6387 = vmatpush2.msra.mxu0 0.0
      %6388 = vmatprep.subr.mxu0 0.0
      %6389 = vmatpush2.msra.mxu0 0.0
      %6390 = vmatprep.subr.mxu0 0.0
      %6391 = vmatpush2.msra.mxu0 0.0
      %6392 = vmatprep.subr.mxu0 0.0
      %6393 = vmatpush2.msra.mxu0 0.0
      %6394 = vmatprep.subr.mxu0 0.0
      %6395 = vmatpush2.msra.mxu0 0.0
      %6396 = vmatprep.mubr.f32.mxu0 0.0
      %6397 = vmatmul.mubr.f32.gmra.mxu0 %v6321
      %v6398 = vpop.f32.mrf.mxu0
      %v6399 = vadd.f32 0.0, %v6398
      %v6400 = vpop.f32.mrf.mxu0
      %v6401 = vadd.f32 0.0, %v6400
      %6402 = vmatprep.mubr.f32.mxu0 0.0
      %6403 = vmatmul.mubr.f32.gmra.mxu0 %v6324
      %v6404 = vpop.f32.mrf.mxu0
      %v6405 = vadd.f32 0.0, %v6404
      %v6406 = vpop.f32.mrf.mxu0
      %v6407 = vadd.f32 0.0, %v6406
      %6408 = vmatprep.mubr.f32.mxu0 0.0
      %6409 = vmatmul.mubr.f32.gmra.mxu0 %v6327
      %v6410 = vpop.f32.mrf.mxu0
      %v6411 = vadd.f32 0.0, %v6410
      %v6412 = vpop.f32.mrf.mxu0
      %v6413 = vadd.f32 0.0, %v6412
      %6414 = vmatprep.mubr.f32.mxu0 0.0
      %6415 = vmatmul.mubr.f32.gmra.mxu0 %v6330
      %v6416 = vpop.f32.mrf.mxu0
      %v6417 = vadd.f32 0.0, %v6416
      %v6418 = vpop.f32.mrf.mxu0
      %v6419 = vadd.f32 0.0, %v6418
      %6420 = vdwg.mxu0
      %6421 = vmatprep.subr.mxu0 0.0
      %6422 = vmatpush1.msra.mxu0 0.0
      %6423 = vmatprep.subr.mxu0 0.0
      %6424 = vmatpush1.msra.mxu0 0.0
      %6425 = vmatprep.subr.mxu0 0.0
      %6426 = vmatpush1.msra.mxu0 0.0
      %6427 = vmatprep.subr.mxu0 0.0
      %6428 = vmatpush1.msra.mxu0 0.0
      %6429 = vmatprep.subr.mxu0 0.0
      %6430 = vmatpush1.msra.mxu0 0.0
      %6431 = vmatprep.subr.mxu0 0.0
      %6432 = vmatpush1.msra.mxu0 0.0
      %6433 = vmatprep.subr.mxu0 0.0
      %6434 = vmatpush1.msra.mxu0 0.0
      %6435 = vmatprep.subr.mxu0 0.0
      %6436 = vmatpush1.msra.mxu0 0.0
      %6437 = vmatprep.subr.mxu0 0.0
      %6438 = vmatpush1.msra.mxu0 0.0
      %6439 = vmatprep.subr.mxu0 0.0
      %6440 = vmatpush1.msra.mxu0 0.0
      %6441 = vmatprep.subr.mxu0 0.0
      %6442 = vmatpush1.msra.mxu0 0.0
      %6443 = vmatprep.subr.mxu0 0.0
      %6444 = vmatpush1.msra.mxu0 0.0
      %6445 = vmatprep.subr.mxu0 0.0
      %6446 = vmatpush1.msra.mxu0 %v6307
      %6447 = vmatprep.subr.mxu0 0.0
      %6448 = vmatpush1.msra.mxu0 %v6304
      %6449 = vmatprep.subr.mxu0 0.0
      %6450 = vmatpush1.msra.mxu0 %v6301
      %6451 = vmatprep.subr.mxu0 0.0
      %6452 = vmatpush1.msra.mxu0 %v6298
      %6453 = vmatprep.subr.mxu0 0.0
      %6454 = vmatpush2.msra.mxu0 0.0
      %6455 = vmatprep.subr.mxu0 0.0
      %6456 = vmatpush2.msra.mxu0 0.0
      %6457 = vmatprep.subr.mxu0 0.0
      %6458 = vmatpush2.msra.mxu0 0.0
      %6459 = vmatprep.subr.mxu0 0.0
      %6460 = vmatpush2.msra.mxu0 0.0
      %6461 = vmatprep.subr.mxu0 0.0
      %6462 = vmatpush2.msra.mxu0 0.0
      %6463 = vmatprep.subr.mxu0 0.0
      %6464 = vmatpush2.msra.mxu0 0.0
      %6465 = vmatprep.subr.mxu0 0.0
      %6466 = vmatpush2.msra.mxu0 0.0
      %6467 = vmatprep.subr.mxu0 0.0
      %6468 = vmatpush2.msra.mxu0 0.0
      %6469 = vmatprep.subr.mxu0 0.0
      %6470 = vmatpush2.msra.mxu0 0.0
      %6471 = vmatprep.subr.mxu0 0.0
      %6472 = vmatpush2.msra.mxu0 0.0
      %6473 = vmatprep.subr.mxu0 0.0
      %6474 = vmatpush2.msra.mxu0 0.0
      %6475 = vmatprep.subr.mxu0 0.0
      %6476 = vmatpush2.msra.mxu0 0.0
      %6477 = vmatprep.subr.mxu0 0.0
      %6478 = vmatpush2.msra.mxu0 0.0
      %6479 = vmatprep.subr.mxu0 0.0
      %6480 = vmatpush2.msra.mxu0 0.0
      %6481 = vmatprep.subr.mxu0 0.0
      %6482 = vmatpush2.msra.mxu0 0.0
      %6483 = vmatprep.subr.mxu0 0.0
      %6484 = vmatpush2.msra.mxu0 0.0
      %6485 = vmatprep.mubr.f32.mxu0 0.0
      %6486 = vmatmul.mubr.f32.gmra.mxu0 %v6321
      %v6487 = vpop.f32.mrf.mxu0
      %v6488 = vadd.f32 0.0, %v6487
      %v6489 = vpop.f32.mrf.mxu0
      %6490 = vmatprep.mubr.f32.mxu0 0.0
      %6491 = vmatmul.mubr.f32.gmra.mxu0 %v6324
      %v6492 = vpop.f32.mrf.mxu0
      %v6493 = vadd.f32 0.0, %v6492
      %v6494 = vpop.f32.mrf.mxu0
      %6495 = vmatprep.mubr.f32.mxu0 0.0
      %6496 = vmatmul.mubr.f32.gmra.mxu0 %v6327
      %v6497 = vpop.f32.mrf.mxu0
      %v6498 = vadd.f32 0.0, %v6497
      %v6499 = vpop.f32.mrf.mxu0
      %6500 = vmatprep.mubr.f32.mxu0 0.0
      %6501 = vmatmul.mubr.f32.gmra.mxu0 %v6330
      %v6502 = vpop.f32.mrf.mxu0
      %v6503 = vadd.f32 0.0, %v6502
      %v6504 = vpop.f32.mrf.mxu0
      %6505 = vdwg.mxu0
      %v6506 = vadd.f32 %v6119, %v6399
      %v6507 = vadd.f32 %v6121, %v6401
      %v6508 = vadd.f32 %v6208, %v6488
      %v6509 = vadd.f32 %v6125, %v6405
      %v6510 = vadd.f32 %v6127, %v6407
      %v6511 = vadd.f32 %v6213, %v6493
      %v6512 = vadd.f32 %v6131, %v6411
      %v6513 = vadd.f32 %v6133, %v6413
      %v6514 = vadd.f32 %v6218, %v6498
      %v6515 = vadd.f32 %v6137, %v6417
      %v6516 = vadd.f32 %v6139, %v6419
      %v6517 = vadd.f32 %v6223, %v6503
      %s6518 = scalar_lea.vmem %s5, 96
      %v6519 = vld [vmem:[%s6518] sm:$0xff]
      %v6520 = vld [vmem:[%s6518 + $0x8] sm:$0xff]
      %v6521 = vld [vmem:[%s6518 + $0x10] sm:$0xff]
      %v6522 = vld [vmem:[%s6518 + $0x18] sm:$0xff]
      %6523 = vrot.lane.b32.xlu0 %v6226, 16
      %v6524 = vpop.permute.xlu0 %6523
      %6525 = vrot.lane.b32.xlu0 %v6227, 16
      %v6526 = vpop.permute.xlu0 %6525
      %6527 = vrot.lane.b32.xlu0 %v6228, 16
      %v6528 = vpop.permute.xlu0 %6527
      %6529 = vrot.lane.b32.xlu0 %v6229, 16
      %v6530 = vpop.permute.xlu0 %6529
      %6531 = vrot.lane.b32.xlu0 %v6230, 16
      %v6532 = vpop.permute.xlu0 %6531
      %6533 = vrot.lane.b32.xlu0 %v6231, 16
      %v6534 = vpop.permute.xlu0 %6533
      %6535 = vrot.lane.b32.xlu0 %v6232, 16
      %v6536 = vpop.permute.xlu0 %6535
      %6537 = vrot.lane.b32.xlu0 %v6233, 16
      %v6538 = vpop.permute.xlu0 %6537
      %6539 = vrot.lane.b32.xlu0 %v6234, 16
      %v6540 = vpop.permute.xlu0 %6539
      %6541 = vrot.lane.b32.xlu0 %v6235, 16
      %v6542 = vpop.permute.xlu0 %6541
      %6543 = vrot.lane.b32.xlu0 %v6236, 16
      %v6544 = vpop.permute.xlu0 %6543
      %6545 = vrot.lane.b32.xlu0 %v6237, 16
      %v6546 = vpop.permute.xlu0 %6545
      %6547 = vrot.lane.b32.xlu0 %v6238, 16
      %v6548 = vpop.permute.xlu0 %6547
      %6549 = vrot.lane.b32.xlu0 %v6239, 16
      %v6550 = vpop.permute.xlu0 %6549
      %6551 = vrot.lane.b32.xlu0 %v6240, 16
      %v6552 = vpop.permute.xlu0 %6551
      %6553 = vrot.lane.b32.xlu0 %v6241, 16
      %v6554 = vpop.permute.xlu0 %6553
      %v6555 = vsel %vm4524, %v6524, %v6526
      %v6556 = vsel %vm4524, %v6526, %v6528
      %v6557 = vsel %vm4524, %v6528, %v6530
      %v6558 = vsel %vm4524, %v6532, %v6534
      %v6559 = vsel %vm4524, %v6534, %v6536
      %v6560 = vsel %vm4524, %v6536, %v6538
      %v6561 = vsel %vm4524, %v6540, %v6542
      %v6562 = vsel %vm4524, %v6542, %v6544
      %v6563 = vsel %vm4524, %v6544, %v6546
      %v6564 = vsel %vm4524, %v6548, %v6550
      %v6565 = vsel %vm4524, %v6550, %v6552
      %v6566 = vsel %vm4524, %v6552, %v6554
      %v6580 = vsel %vm2330, %v6519, 0
      %v6583 = vsel %vm2330, %v6520, 0
      %v6586 = vsel %vm2330, %v6521, 0
      %v6589 = vsel %vm2330, %v6522, 0
      %6591 = vmatprep.subr.mxu0 0.0
      %6592 = vmatpush1.msra.mxu0 0.0
      %6593 = vmatprep.subr.mxu0 0.0
      %6594 = vmatpush1.msra.mxu0 0.0
      %6595 = vmatprep.subr.mxu0 0.0
      %6596 = vmatpush1.msra.mxu0 0.0
      %6597 = vmatprep.subr.mxu0 0.0
      %6598 = vmatpush1.msra.mxu0 0.0
      %6599 = vmatprep.subr.mxu0 0.0
      %6600 = vmatpush1.msra.mxu0 0.0
      %6601 = vmatprep.subr.mxu0 0.0
      %6602 = vmatpush1.msra.mxu0 0.0
      %6603 = vmatprep.subr.mxu0 0.0
      %6604 = vmatpush1.msra.mxu0 0.0
      %6605 = vmatprep.subr.mxu0 0.0
      %6606 = vmatpush1.msra.mxu0 0.0
      %6607 = vmatprep.subr.mxu0 0.0
      %6608 = vmatpush1.msra.mxu0 0.0
      %6609 = vmatprep.subr.mxu0 0.0
      %6610 = vmatpush1.msra.mxu0 0.0
      %6611 = vmatprep.subr.mxu0 0.0
      %6612 = vmatpush1.msra.mxu0 0.0
      %6613 = vmatprep.subr.mxu0 0.0
      %6614 = vmatpush1.msra.mxu0 0.0
      %6615 = vmatprep.subr.mxu0 %v6565
      %6616 = vmatpush1.msra.mxu0 %v6564
      %6617 = vmatprep.subr.mxu0 %v6562
      %6618 = vmatpush1.msra.mxu0 %v6561
      %6619 = vmatprep.subr.mxu0 %v6559
      %6620 = vmatpush1.msra.mxu0 %v6558
      %6621 = vmatprep.subr.mxu0 %v6556
      %6622 = vmatpush1.msra.mxu0 %v6555
      %6623 = vmatprep.subr.mxu0 0.0
      %6624 = vmatpush2.msra.mxu0 0.0
      %6625 = vmatprep.subr.mxu0 0.0
      %6626 = vmatpush2.msra.mxu0 0.0
      %6627 = vmatprep.subr.mxu0 0.0
      %6628 = vmatpush2.msra.mxu0 0.0
      %6629 = vmatprep.subr.mxu0 0.0
      %6630 = vmatpush2.msra.mxu0 0.0
      %6631 = vmatprep.subr.mxu0 0.0
      %6632 = vmatpush2.msra.mxu0 0.0
      %6633 = vmatprep.subr.mxu0 0.0
      %6634 = vmatpush2.msra.mxu0 0.0
      %6635 = vmatprep.subr.mxu0 0.0
      %6636 = vmatpush2.msra.mxu0 0.0
      %6637 = vmatprep.subr.mxu0 0.0
      %6638 = vmatpush2.msra.mxu0 0.0
      %6639 = vmatprep.subr.mxu0 0.0
      %6640 = vmatpush2.msra.mxu0 0.0
      %6641 = vmatprep.subr.mxu0 0.0
      %6642 = vmatpush2.msra.mxu0 0.0
      %6643 = vmatprep.subr.mxu0 0.0
      %6644 = vmatpush2.msra.mxu0 0.0
      %6645 = vmatprep.subr.mxu0 0.0
      %6646 = vmatpush2.msra.mxu0 0.0
      %6647 = vmatprep.subr.mxu0 0.0
      %6648 = vmatpush2.msra.mxu0 0.0
      %6649 = vmatprep.subr.mxu0 0.0
      %6650 = vmatpush2.msra.mxu0 0.0
      %6651 = vmatprep.subr.mxu0 0.0
      %6652 = vmatpush2.msra.mxu0 0.0
      %6653 = vmatprep.subr.mxu0 0.0
      %6654 = vmatpush2.msra.mxu0 0.0
      %6655 = vmatprep.mubr.f32.mxu0 0.0
      %6656 = vmatmul.mubr.f32.gmra.mxu0 %v6580
      %v6657 = vpop.f32.mrf.mxu0
      %v6658 = vadd.f32 0.0, %v6657
      %v6659 = vpop.f32.mrf.mxu0
      %v6660 = vadd.f32 0.0, %v6659
      %6661 = vmatprep.mubr.f32.mxu0 0.0
      %6662 = vmatmul.mubr.f32.gmra.mxu0 %v6583
      %v6663 = vpop.f32.mrf.mxu0
      %v6664 = vadd.f32 0.0, %v6663
      %v6665 = vpop.f32.mrf.mxu0
      %v6666 = vadd.f32 0.0, %v6665
      %6667 = vmatprep.mubr.f32.mxu0 0.0
      %6668 = vmatmul.mubr.f32.gmra.mxu0 %v6586
      %v6669 = vpop.f32.mrf.mxu0
      %v6670 = vadd.f32 0.0, %v6669
      %v6671 = vpop.f32.mrf.mxu0
      %v6672 = vadd.f32 0.0, %v6671
      %6673 = vmatprep.mubr.f32.mxu0 0.0
      %6674 = vmatmul.mubr.f32.gmra.mxu0 %v6589
      %v6675 = vpop.f32.mrf.mxu0
      %v6676 = vadd.f32 0.0, %v6675
      %v6677 = vpop.f32.mrf.mxu0
      %v6678 = vadd.f32 0.0, %v6677
      %6679 = vdwg.mxu0
      %6680 = vmatprep.subr.mxu0 0.0
      %6681 = vmatpush1.msra.mxu0 0.0
      %6682 = vmatprep.subr.mxu0 0.0
      %6683 = vmatpush1.msra.mxu0 0.0
      %6684 = vmatprep.subr.mxu0 0.0
      %6685 = vmatpush1.msra.mxu0 0.0
      %6686 = vmatprep.subr.mxu0 0.0
      %6687 = vmatpush1.msra.mxu0 0.0
      %6688 = vmatprep.subr.mxu0 0.0
      %6689 = vmatpush1.msra.mxu0 0.0
      %6690 = vmatprep.subr.mxu0 0.0
      %6691 = vmatpush1.msra.mxu0 0.0
      %6692 = vmatprep.subr.mxu0 0.0
      %6693 = vmatpush1.msra.mxu0 0.0
      %6694 = vmatprep.subr.mxu0 0.0
      %6695 = vmatpush1.msra.mxu0 0.0
      %6696 = vmatprep.subr.mxu0 0.0
      %6697 = vmatpush1.msra.mxu0 0.0
      %6698 = vmatprep.subr.mxu0 0.0
      %6699 = vmatpush1.msra.mxu0 0.0
      %6700 = vmatprep.subr.mxu0 0.0
      %6701 = vmatpush1.msra.mxu0 0.0
      %6702 = vmatprep.subr.mxu0 0.0
      %6703 = vmatpush1.msra.mxu0 0.0
      %6704 = vmatprep.subr.mxu0 0.0
      %6705 = vmatpush1.msra.mxu0 %v6566
      %6706 = vmatprep.subr.mxu0 0.0
      %6707 = vmatpush1.msra.mxu0 %v6563
      %6708 = vmatprep.subr.mxu0 0.0
      %6709 = vmatpush1.msra.mxu0 %v6560
      %6710 = vmatprep.subr.mxu0 0.0
      %6711 = vmatpush1.msra.mxu0 %v6557
      %6712 = vmatprep.subr.mxu0 0.0
      %6713 = vmatpush2.msra.mxu0 0.0
      %6714 = vmatprep.subr.mxu0 0.0
      %6715 = vmatpush2.msra.mxu0 0.0
      %6716 = vmatprep.subr.mxu0 0.0
      %6717 = vmatpush2.msra.mxu0 0.0
      %6718 = vmatprep.subr.mxu0 0.0
      %6719 = vmatpush2.msra.mxu0 0.0
      %6720 = vmatprep.subr.mxu0 0.0
      %6721 = vmatpush2.msra.mxu0 0.0
      %6722 = vmatprep.subr.mxu0 0.0
      %6723 = vmatpush2.msra.mxu0 0.0
      %6724 = vmatprep.subr.mxu0 0.0
      %6725 = vmatpush2.msra.mxu0 0.0
      %6726 = vmatprep.subr.mxu0 0.0
      %6727 = vmatpush2.msra.mxu0 0.0
      %6728 = vmatprep.subr.mxu0 0.0
      %6729 = vmatpush2.msra.mxu0 0.0
      %6730 = vmatprep.subr.mxu0 0.0
      %6731 = vmatpush2.msra.mxu0 0.0
      %6732 = vmatprep.subr.mxu0 0.0
      %6733 = vmatpush2.msra.mxu0 0.0
      %6734 = vmatprep.subr.mxu0 0.0
      %6735 = vmatpush2.msra.mxu0 0.0
      %6736 = vmatprep.subr.mxu0 0.0
      %6737 = vmatpush2.msra.mxu0 0.0
      %6738 = vmatprep.subr.mxu0 0.0
      %6739 = vmatpush2.msra.mxu0 0.0
      %6740 = vmatprep.subr.mxu0 0.0
      %6741 = vmatpush2.msra.mxu0 0.0
      %6742 = vmatprep.subr.mxu0 0.0
      %6743 = vmatpush2.msra.mxu0 0.0
      %6744 = vmatprep.mubr.f32.mxu0 0.0
      %6745 = vmatmul.mubr.f32.gmra.mxu0 %v6580
      %v6746 = vpop.f32.mrf.mxu0
      %v6747 = vadd.f32 0.0, %v6746
      %v6748 = vpop.f32.mrf.mxu0
      %6749 = vmatprep.mubr.f32.mxu0 0.0
      %6750 = vmatmul.mubr.f32.gmra.mxu0 %v6583
      %v6751 = vpop.f32.mrf.mxu0
      %v6752 = vadd.f32 0.0, %v6751
      %v6753 = vpop.f32.mrf.mxu0
      %6754 = vmatprep.mubr.f32.mxu0 0.0
      %6755 = vmatmul.mubr.f32.gmra.mxu0 %v6586
      %v6756 = vpop.f32.mrf.mxu0
      %v6757 = vadd.f32 0.0, %v6756
      %v6758 = vpop.f32.mrf.mxu0
      %6759 = vmatprep.mubr.f32.mxu0 0.0
      %6760 = vmatmul.mubr.f32.gmra.mxu0 %v6589
      %v6761 = vpop.f32.mrf.mxu0
      %v6762 = vadd.f32 0.0, %v6761
      %v6763 = vpop.f32.mrf.mxu0
      %6764 = vdwg.mxu0
      %v6765 = vadd.f32 %v6506, %v6658
      %v6766 = vadd.f32 %v6507, %v6660
      %v6767 = vadd.f32 %v6508, %v6747
      %v6768 = vadd.f32 %v6509, %v6664
      %v6769 = vadd.f32 %v6510, %v6666
      %v6770 = vadd.f32 %v6511, %v6752
      %v6771 = vadd.f32 %v6512, %v6670
      %v6772 = vadd.f32 %v6513, %v6672
      %v6773 = vadd.f32 %v6514, %v6757
      %v6774 = vadd.f32 %v6515, %v6676
      %v6775 = vadd.f32 %v6516, %v6678
      %v6776 = vadd.f32 %v6517, %v6762
      %s6777 = scalar_lea.vmem %s5, 128
      %v6778 = vld [vmem:[%s6777] sm:$0xff]
      %v6779 = vld [vmem:[%s6777 + $0x8] sm:$0xff]
      %v6780 = vld [vmem:[%s6777 + $0x10] sm:$0xff]
      %v6781 = vld [vmem:[%s6777 + $0x18] sm:$0xff]
      %6782 = vrot.lane.b32.xlu0 %v6226, 12
      %v6783 = vpop.permute.xlu0 %6782
      %6784 = vrot.lane.b32.xlu0 %v6227, 12
      %v6785 = vpop.permute.xlu0 %6784
      %6786 = vrot.lane.b32.xlu0 %v6228, 12
      %v6787 = vpop.permute.xlu0 %6786
      %6788 = vrot.lane.b32.xlu0 %v6229, 12
      %v6789 = vpop.permute.xlu0 %6788
      %6790 = vrot.lane.b32.xlu0 %v6230, 12
      %v6791 = vpop.permute.xlu0 %6790
      %6792 = vrot.lane.b32.xlu0 %v6231, 12
      %v6793 = vpop.permute.xlu0 %6792
      %6794 = vrot.lane.b32.xlu0 %v6232, 12
      %v6795 = vpop.permute.xlu0 %6794
      %6796 = vrot.lane.b32.xlu0 %v6233, 12
      %v6797 = vpop.permute.xlu0 %6796
      %6798 = vrot.lane.b32.xlu0 %v6234, 12
      %v6799 = vpop.permute.xlu0 %6798
      %6800 = vrot.lane.b32.xlu0 %v6235, 12
      %v6801 = vpop.permute.xlu0 %6800
      %6802 = vrot.lane.b32.xlu0 %v6236, 12
      %v6803 = vpop.permute.xlu0 %6802
      %6804 = vrot.lane.b32.xlu0 %v6237, 12
      %v6805 = vpop.permute.xlu0 %6804
      %6806 = vrot.lane.b32.xlu0 %v6238, 12
      %v6807 = vpop.permute.xlu0 %6806
      %6808 = vrot.lane.b32.xlu0 %v6239, 12
      %v6809 = vpop.permute.xlu0 %6808
      %6810 = vrot.lane.b32.xlu0 %v6240, 12
      %v6811 = vpop.permute.xlu0 %6810
      %6812 = vrot.lane.b32.xlu0 %v6241, 12
      %v6813 = vpop.permute.xlu0 %6812
      %v6814 = vsel %vm5302, %v6783, %v6785
      %v6815 = vsel %vm5302, %v6785, %v6787
      %v6816 = vsel %vm5302, %v6787, %v6789
      %v6817 = vsel %vm5302, %v6791, %v6793
      %v6818 = vsel %vm5302, %v6793, %v6795
      %v6819 = vsel %vm5302, %v6795, %v6797
      %v6820 = vsel %vm5302, %v6799, %v6801
      %v6821 = vsel %vm5302, %v6801, %v6803
      %v6822 = vsel %vm5302, %v6803, %v6805
      %v6823 = vsel %vm5302, %v6807, %v6809
      %v6824 = vsel %vm5302, %v6809, %v6811
      %v6825 = vsel %vm5302, %v6811, %v6813
      %v6839 = vsel %vm2330, %v6778, 0
      %v6842 = vsel %vm2330, %v6779, 0
      %v6845 = vsel %vm2330, %v6780, 0
      %v6848 = vsel %vm2330, %v6781, 0
      %6850 = vmatprep.subr.mxu0 0.0
      %6851 = vmatpush1.msra.mxu0 0.0
      %6852 = vmatprep.subr.mxu0 0.0
      %6853 = vmatpush1.msra.mxu0 0.0
      %6854 = vmatprep.subr.mxu0 0.0
      %6855 = vmatpush1.msra.mxu0 0.0
      %6856 = vmatprep.subr.mxu0 0.0
      %6857 = vmatpush1.msra.mxu0 0.0
      %6858 = vmatprep.subr.mxu0 0.0
      %6859 = vmatpush1.msra.mxu0 0.0
      %6860 = vmatprep.subr.mxu0 0.0
      %6861 = vmatpush1.msra.mxu0 0.0
      %6862 = vmatprep.subr.mxu0 0.0
      %6863 = vmatpush1.msra.mxu0 0.0
      %6864 = vmatprep.subr.mxu0 0.0
      %6865 = vmatpush1.msra.mxu0 0.0
      %6866 = vmatprep.subr.mxu0 0.0
      %6867 = vmatpush1.msra.mxu0 0.0
      %6868 = vmatprep.subr.mxu0 0.0
      %6869 = vmatpush1.msra.mxu0 0.0
      %6870 = vmatprep.subr.mxu0 0.0
      %6871 = vmatpush1.msra.mxu0 0.0
      %6872 = vmatprep.subr.mxu0 0.0
      %6873 = vmatpush1.msra.mxu0 0.0
      %6874 = vmatprep.subr.mxu0 %v6824
      %6875 = vmatpush1.msra.mxu0 %v6823
      %6876 = vmatprep.subr.mxu0 %v6821
      %6877 = vmatpush1.msra.mxu0 %v6820
      %6878 = vmatprep.subr.mxu0 %v6818
      %6879 = vmatpush1.msra.mxu0 %v6817
      %6880 = vmatprep.subr.mxu0 %v6815
      %6881 = vmatpush1.msra.mxu0 %v6814
      %6882 = vmatprep.subr.mxu0 0.0
      %6883 = vmatpush2.msra.mxu0 0.0
      %6884 = vmatprep.subr.mxu0 0.0
      %6885 = vmatpush2.msra.mxu0 0.0
      %6886 = vmatprep.subr.mxu0 0.0
      %6887 = vmatpush2.msra.mxu0 0.0
      %6888 = vmatprep.subr.mxu0 0.0
      %6889 = vmatpush2.msra.mxu0 0.0
      %6890 = vmatprep.subr.mxu0 0.0
      %6891 = vmatpush2.msra.mxu0 0.0
      %6892 = vmatprep.subr.mxu0 0.0
      %6893 = vmatpush2.msra.mxu0 0.0
      %6894 = vmatprep.subr.mxu0 0.0
      %6895 = vmatpush2.msra.mxu0 0.0
      %6896 = vmatprep.subr.mxu0 0.0
      %6897 = vmatpush2.msra.mxu0 0.0
      %6898 = vmatprep.subr.mxu0 0.0
      %6899 = vmatpush2.msra.mxu0 0.0
      %6900 = vmatprep.subr.mxu0 0.0
      %6901 = vmatpush2.msra.mxu0 0.0
      %6902 = vmatprep.subr.mxu0 0.0
      %6903 = vmatpush2.msra.mxu0 0.0
      %6904 = vmatprep.subr.mxu0 0.0
      %6905 = vmatpush2.msra.mxu0 0.0
      %6906 = vmatprep.subr.mxu0 0.0
      %6907 = vmatpush2.msra.mxu0 0.0
      %6908 = vmatprep.subr.mxu0 0.0
      %6909 = vmatpush2.msra.mxu0 0.0
      %6910 = vmatprep.subr.mxu0 0.0
      %6911 = vmatpush2.msra.mxu0 0.0
      %6912 = vmatprep.subr.mxu0 0.0
      %6913 = vmatpush2.msra.mxu0 0.0
      %6914 = vmatprep.mubr.f32.mxu0 0.0
      %6915 = vmatmul.mubr.f32.gmra.mxu0 %v6839
      %v6916 = vpop.f32.mrf.mxu0
      %v6917 = vadd.f32 0.0, %v6916
      %v6918 = vpop.f32.mrf.mxu0
      %v6919 = vadd.f32 0.0, %v6918
      %6920 = vmatprep.mubr.f32.mxu0 0.0
      %6921 = vmatmul.mubr.f32.gmra.mxu0 %v6842
      %v6922 = vpop.f32.mrf.mxu0
      %v6923 = vadd.f32 0.0, %v6922
      %v6924 = vpop.f32.mrf.mxu0
      %v6925 = vadd.f32 0.0, %v6924
      %6926 = vmatprep.mubr.f32.mxu0 0.0
      %6927 = vmatmul.mubr.f32.gmra.mxu0 %v6845
      %v6928 = vpop.f32.mrf.mxu0
      %v6929 = vadd.f32 0.0, %v6928
      %v6930 = vpop.f32.mrf.mxu0
      %v6931 = vadd.f32 0.0, %v6930
      %6932 = vmatprep.mubr.f32.mxu0 0.0
      %6933 = vmatmul.mubr.f32.gmra.mxu0 %v6848
      %v6934 = vpop.f32.mrf.mxu0
      %v6935 = vadd.f32 0.0, %v6934
      %v6936 = vpop.f32.mrf.mxu0
      %v6937 = vadd.f32 0.0, %v6936
      %6938 = vdwg.mxu0
      %6939 = vmatprep.subr.mxu0 0.0
      %6940 = vmatpush1.msra.mxu0 0.0
      %6941 = vmatprep.subr.mxu0 0.0
      %6942 = vmatpush1.msra.mxu0 0.0
      %6943 = vmatprep.subr.mxu0 0.0
      %6944 = vmatpush1.msra.mxu0 0.0
      %6945 = vmatprep.subr.mxu0 0.0
      %6946 = vmatpush1.msra.mxu0 0.0
      %6947 = vmatprep.subr.mxu0 0.0
      %6948 = vmatpush1.msra.mxu0 0.0
      %6949 = vmatprep.subr.mxu0 0.0
      %6950 = vmatpush1.msra.mxu0 0.0
      %6951 = vmatprep.subr.mxu0 0.0
      %6952 = vmatpush1.msra.mxu0 0.0
      %6953 = vmatprep.subr.mxu0 0.0
      %6954 = vmatpush1.msra.mxu0 0.0
      %6955 = vmatprep.subr.mxu0 0.0
      %6956 = vmatpush1.msra.mxu0 0.0
      %6957 = vmatprep.subr.mxu0 0.0
      %6958 = vmatpush1.msra.mxu0 0.0
      %6959 = vmatprep.subr.mxu0 0.0
      %6960 = vmatpush1.msra.mxu0 0.0
      %6961 = vmatprep.subr.mxu0 0.0
      %6962 = vmatpush1.msra.mxu0 0.0
      %6963 = vmatprep.subr.mxu0 0.0
      %6964 = vmatpush1.msra.mxu0 %v6825
      %6965 = vmatprep.subr.mxu0 0.0
      %6966 = vmatpush1.msra.mxu0 %v6822
      %6967 = vmatprep.subr.mxu0 0.0
      %6968 = vmatpush1.msra.mxu0 %v6819
      %6969 = vmatprep.subr.mxu0 0.0
      %6970 = vmatpush1.msra.mxu0 %v6816
      %6971 = vmatprep.subr.mxu0 0.0
      %6972 = vmatpush2.msra.mxu0 0.0
      %6973 = vmatprep.subr.mxu0 0.0
      %6974 = vmatpush2.msra.mxu0 0.0
      %6975 = vmatprep.subr.mxu0 0.0
      %6976 = vmatpush2.msra.mxu0 0.0
      %6977 = vmatprep.subr.mxu0 0.0
      %6978 = vmatpush2.msra.mxu0 0.0
      %6979 = vmatprep.subr.mxu0 0.0
      %6980 = vmatpush2.msra.mxu0 0.0
      %6981 = vmatprep.subr.mxu0 0.0
      %6982 = vmatpush2.msra.mxu0 0.0
      %6983 = vmatprep.subr.mxu0 0.0
      %6984 = vmatpush2.msra.mxu0 0.0
      %6985 = vmatprep.subr.mxu0 0.0
      %6986 = vmatpush2.msra.mxu0 0.0
      %6987 = vmatprep.subr.mxu0 0.0
      %6988 = vmatpush2.msra.mxu0 0.0
      %6989 = vmatprep.subr.mxu0 0.0
      %6990 = vmatpush2.msra.mxu0 0.0
      %6991 = vmatprep.subr.mxu0 0.0
      %6992 = vmatpush2.msra.mxu0 0.0
      %6993 = vmatprep.subr.mxu0 0.0
      %6994 = vmatpush2.msra.mxu0 0.0
      %6995 = vmatprep.subr.mxu0 0.0
      %6996 = vmatpush2.msra.mxu0 0.0
      %6997 = vmatprep.subr.mxu0 0.0
      %6998 = vmatpush2.msra.mxu0 0.0
      %6999 = vmatprep.subr.mxu0 0.0
      %7000 = vmatpush2.msra.mxu0 0.0
      %7001 = vmatprep.subr.mxu0 0.0
      %7002 = vmatpush2.msra.mxu0 0.0
      %7003 = vmatprep.mubr.f32.mxu0 0.0
      %7004 = vmatmul.mubr.f32.gmra.mxu0 %v6839
      %v7005 = vpop.f32.mrf.mxu0
      %v7006 = vadd.f32 0.0, %v7005
      %v7007 = vpop.f32.mrf.mxu0
      %7008 = vmatprep.mubr.f32.mxu0 0.0
      %7009 = vmatmul.mubr.f32.gmra.mxu0 %v6842
      %v7010 = vpop.f32.mrf.mxu0
      %v7011 = vadd.f32 0.0, %v7010
      %v7012 = vpop.f32.mrf.mxu0
      %7013 = vmatprep.mubr.f32.mxu0 0.0
      %7014 = vmatmul.mubr.f32.gmra.mxu0 %v6845
      %v7015 = vpop.f32.mrf.mxu0
      %v7016 = vadd.f32 0.0, %v7015
      %v7017 = vpop.f32.mrf.mxu0
      %7018 = vmatprep.mubr.f32.mxu0 0.0
      %7019 = vmatmul.mubr.f32.gmra.mxu0 %v6848
      %v7020 = vpop.f32.mrf.mxu0
      %v7021 = vadd.f32 0.0, %v7020
      %v7022 = vpop.f32.mrf.mxu0
      %7023 = vdwg.mxu0
      %v7024 = vadd.f32 %v6765, %v6917
      %v7025 = vadd.f32 %v6766, %v6919
      %v7026 = vadd.f32 %v6767, %v7006
      %v7027 = vadd.f32 %v6768, %v6923
      %v7028 = vadd.f32 %v6769, %v6925
      %v7029 = vadd.f32 %v6770, %v7011
      %v7030 = vadd.f32 %v6771, %v6929
      %v7031 = vadd.f32 %v6772, %v6931
      %v7032 = vadd.f32 %v6773, %v7016
      %v7033 = vadd.f32 %v6774, %v6935
      %v7034 = vadd.f32 %v6775, %v6937
      %v7035 = vadd.f32 %v6776, %v7021
      %s7036 = scalar_lea.vmem %s5, 160
      %v7037 = vld [vmem:[%s7036] sm:$0xff]
      %v7038 = vld [vmem:[%s7036 + $0x8] sm:$0xff]
      %v7039 = vld [vmem:[%s7036 + $0x10] sm:$0xff]
      %v7040 = vld [vmem:[%s7036 + $0x18] sm:$0xff]
      %7041 = vrot.lane.b32.xlu0 %v6226, 8
      %v7042 = vpop.permute.xlu0 %7041
      %7043 = vrot.lane.b32.xlu0 %v6227, 8
      %v7044 = vpop.permute.xlu0 %7043
      %7045 = vrot.lane.b32.xlu0 %v6228, 8
      %v7046 = vpop.permute.xlu0 %7045
      %7047 = vrot.lane.b32.xlu0 %v6229, 8
      %v7048 = vpop.permute.xlu0 %7047
      %7049 = vrot.lane.b32.xlu0 %v6230, 8
      %v7050 = vpop.permute.xlu0 %7049
      %7051 = vrot.lane.b32.xlu0 %v6231, 8
      %v7052 = vpop.permute.xlu0 %7051
      %7053 = vrot.lane.b32.xlu0 %v6232, 8
      %v7054 = vpop.permute.xlu0 %7053
      %7055 = vrot.lane.b32.xlu0 %v6233, 8
      %v7056 = vpop.permute.xlu0 %7055
      %7057 = vrot.lane.b32.xlu0 %v6234, 8
      %v7058 = vpop.permute.xlu0 %7057
      %7059 = vrot.lane.b32.xlu0 %v6235, 8
      %v7060 = vpop.permute.xlu0 %7059
      %7061 = vrot.lane.b32.xlu0 %v6236, 8
      %v7062 = vpop.permute.xlu0 %7061
      %7063 = vrot.lane.b32.xlu0 %v6237, 8
      %v7064 = vpop.permute.xlu0 %7063
      %7065 = vrot.lane.b32.xlu0 %v6238, 8
      %v7066 = vpop.permute.xlu0 %7065
      %7067 = vrot.lane.b32.xlu0 %v6239, 8
      %v7068 = vpop.permute.xlu0 %7067
      %7069 = vrot.lane.b32.xlu0 %v6240, 8
      %v7070 = vpop.permute.xlu0 %7069
      %7071 = vrot.lane.b32.xlu0 %v6241, 8
      %v7072 = vpop.permute.xlu0 %7071
      %vm7073 = vcmask 64512
      %v7074 = vsel %vm7073, %v7042, %v7044
      %v7075 = vsel %vm7073, %v7044, %v7046
      %v7076 = vsel %vm7073, %v7046, %v7048
      %v7077 = vsel %vm7073, %v7050, %v7052
      %v7078 = vsel %vm7073, %v7052, %v7054
      %v7079 = vsel %vm7073, %v7054, %v7056
      %v7080 = vsel %vm7073, %v7058, %v7060
      %v7081 = vsel %vm7073, %v7060, %v7062
      %v7082 = vsel %vm7073, %v7062, %v7064
      %v7083 = vsel %vm7073, %v7066, %v7068
      %v7084 = vsel %vm7073, %v7068, %v7070
      %v7085 = vsel %vm7073, %v7070, %v7072
      %v7099 = vsel %vm2330, %v7037, 0
      %v7102 = vsel %vm2330, %v7038, 0
      %v7105 = vsel %vm2330, %v7039, 0
      %v7108 = vsel %vm2330, %v7040, 0
      %7110 = vmatprep.subr.mxu0 0.0
      %7111 = vmatpush1.msra.mxu0 0.0
      %7112 = vmatprep.subr.mxu0 0.0
      %7113 = vmatpush1.msra.mxu0 0.0
      %7114 = vmatprep.subr.mxu0 0.0
      %7115 = vmatpush1.msra.mxu0 0.0
      %7116 = vmatprep.subr.mxu0 0.0
      %7117 = vmatpush1.msra.mxu0 0.0
      %7118 = vmatprep.subr.mxu0 0.0
      %7119 = vmatpush1.msra.mxu0 0.0
      %7120 = vmatprep.subr.mxu0 0.0
      %7121 = vmatpush1.msra.mxu0 0.0
      %7122 = vmatprep.subr.mxu0 0.0
      %7123 = vmatpush1.msra.mxu0 0.0
      %7124 = vmatprep.subr.mxu0 0.0
      %7125 = vmatpush1.msra.mxu0 0.0
      %7126 = vmatprep.subr.mxu0 0.0
      %7127 = vmatpush1.msra.mxu0 0.0
      %7128 = vmatprep.subr.mxu0 0.0
      %7129 = vmatpush1.msra.mxu0 0.0
      %7130 = vmatprep.subr.mxu0 0.0
      %7131 = vmatpush1.msra.mxu0 0.0
      %7132 = vmatprep.subr.mxu0 0.0
      %7133 = vmatpush1.msra.mxu0 0.0
      %7134 = vmatprep.subr.mxu0 %v7084
      %7135 = vmatpush1.msra.mxu0 %v7083
      %7136 = vmatprep.subr.mxu0 %v7081
      %7137 = vmatpush1.msra.mxu0 %v7080
      %7138 = vmatprep.subr.mxu0 %v7078
      %7139 = vmatpush1.msra.mxu0 %v7077
      %7140 = vmatprep.subr.mxu0 %v7075
      %7141 = vmatpush1.msra.mxu0 %v7074
      %7142 = vmatprep.subr.mxu0 0.0
      %7143 = vmatpush2.msra.mxu0 0.0
      %7144 = vmatprep.subr.mxu0 0.0
      %7145 = vmatpush2.msra.mxu0 0.0
      %7146 = vmatprep.subr.mxu0 0.0
      %7147 = vmatpush2.msra.mxu0 0.0
      %7148 = vmatprep.subr.mxu0 0.0
      %7149 = vmatpush2.msra.mxu0 0.0
      %7150 = vmatprep.subr.mxu0 0.0
      %7151 = vmatpush2.msra.mxu0 0.0
      %7152 = vmatprep.subr.mxu0 0.0
      %7153 = vmatpush2.msra.mxu0 0.0
      %7154 = vmatprep.subr.mxu0 0.0
      %7155 = vmatpush2.msra.mxu0 0.0
      %7156 = vmatprep.subr.mxu0 0.0
      %7157 = vmatpush2.msra.mxu0 0.0
      %7158 = vmatprep.subr.mxu0 0.0
      %7159 = vmatpush2.msra.mxu0 0.0
      %7160 = vmatprep.subr.mxu0 0.0
      %7161 = vmatpush2.msra.mxu0 0.0
      %7162 = vmatprep.subr.mxu0 0.0
      %7163 = vmatpush2.msra.mxu0 0.0
      %7164 = vmatprep.subr.mxu0 0.0
      %7165 = vmatpush2.msra.mxu0 0.0
      %7166 = vmatprep.subr.mxu0 0.0
      %7167 = vmatpush2.msra.mxu0 0.0
      %7168 = vmatprep.subr.mxu0 0.0
      %7169 = vmatpush2.msra.mxu0 0.0
      %7170 = vmatprep.subr.mxu0 0.0
      %7171 = vmatpush2.msra.mxu0 0.0
      %7172 = vmatprep.subr.mxu0 0.0
      %7173 = vmatpush2.msra.mxu0 0.0
      %7174 = vmatprep.mubr.f32.mxu0 0.0
      %7175 = vmatmul.mubr.f32.gmra.mxu0 %v7099
      %v7176 = vpop.f32.mrf.mxu0
      %v7177 = vadd.f32 0.0, %v7176
      %v7178 = vpop.f32.mrf.mxu0
      %v7179 = vadd.f32 0.0, %v7178
      %7180 = vmatprep.mubr.f32.mxu0 0.0
      %7181 = vmatmul.mubr.f32.gmra.mxu0 %v7102
      %v7182 = vpop.f32.mrf.mxu0
      %v7183 = vadd.f32 0.0, %v7182
      %v7184 = vpop.f32.mrf.mxu0
      %v7185 = vadd.f32 0.0, %v7184
      %7186 = vmatprep.mubr.f32.mxu0 0.0
      %7187 = vmatmul.mubr.f32.gmra.mxu0 %v7105
      %v7188 = vpop.f32.mrf.mxu0
      %v7189 = vadd.f32 0.0, %v7188
      %v7190 = vpop.f32.mrf.mxu0
      %v7191 = vadd.f32 0.0, %v7190
      %7192 = vmatprep.mubr.f32.mxu0 0.0
      %7193 = vmatmul.mubr.f32.gmra.mxu0 %v7108
      %v7194 = vpop.f32.mrf.mxu0
      %v7195 = vadd.f32 0.0, %v7194
      %v7196 = vpop.f32.mrf.mxu0
      %v7197 = vadd.f32 0.0, %v7196
      %7198 = vdwg.mxu0
      %7199 = vmatprep.subr.mxu0 0.0
      %7200 = vmatpush1.msra.mxu0 0.0
      %7201 = vmatprep.subr.mxu0 0.0
      %7202 = vmatpush1.msra.mxu0 0.0
      %7203 = vmatprep.subr.mxu0 0.0
      %7204 = vmatpush1.msra.mxu0 0.0
      %7205 = vmatprep.subr.mxu0 0.0
      %7206 = vmatpush1.msra.mxu0 0.0
      %7207 = vmatprep.subr.mxu0 0.0
      %7208 = vmatpush1.msra.mxu0 0.0
      %7209 = vmatprep.subr.mxu0 0.0
      %7210 = vmatpush1.msra.mxu0 0.0
      %7211 = vmatprep.subr.mxu0 0.0
      %7212 = vmatpush1.msra.mxu0 0.0
      %7213 = vmatprep.subr.mxu0 0.0
      %7214 = vmatpush1.msra.mxu0 0.0
      %7215 = vmatprep.subr.mxu0 0.0
      %7216 = vmatpush1.msra.mxu0 0.0
      %7217 = vmatprep.subr.mxu0 0.0
      %7218 = vmatpush1.msra.mxu0 0.0
      %7219 = vmatprep.subr.mxu0 0.0
      %7220 = vmatpush1.msra.mxu0 0.0
      %7221 = vmatprep.subr.mxu0 0.0
      %7222 = vmatpush1.msra.mxu0 0.0
      %7223 = vmatprep.subr.mxu0 0.0
      %7224 = vmatpush1.msra.mxu0 %v7085
      %7225 = vmatprep.subr.mxu0 0.0
      %7226 = vmatpush1.msra.mxu0 %v7082
      %7227 = vmatprep.subr.mxu0 0.0
      %7228 = vmatpush1.msra.mxu0 %v7079
      %7229 = vmatprep.subr.mxu0 0.0
      %7230 = vmatpush1.msra.mxu0 %v7076
      %7231 = vmatprep.subr.mxu0 0.0
      %7232 = vmatpush2.msra.mxu0 0.0
      %7233 = vmatprep.subr.mxu0 0.0
      %7234 = vmatpush2.msra.mxu0 0.0
      %7235 = vmatprep.subr.mxu0 0.0
      %7236 = vmatpush2.msra.mxu0 0.0
      %7237 = vmatprep.subr.mxu0 0.0
      %7238 = vmatpush2.msra.mxu0 0.0
      %7239 = vmatprep.subr.mxu0 0.0
      %7240 = vmatpush2.msra.mxu0 0.0
      %7241 = vmatprep.subr.mxu0 0.0
      %7242 = vmatpush2.msra.mxu0 0.0
      %7243 = vmatprep.subr.mxu0 0.0
      %7244 = vmatpush2.msra.mxu0 0.0
      %7245 = vmatprep.subr.mxu0 0.0
      %7246 = vmatpush2.msra.mxu0 0.0
      %7247 = vmatprep.subr.mxu0 0.0
      %7248 = vmatpush2.msra.mxu0 0.0
      %7249 = vmatprep.subr.mxu0 0.0
      %7250 = vmatpush2.msra.mxu0 0.0
      %7251 = vmatprep.subr.mxu0 0.0
      %7252 = vmatpush2.msra.mxu0 0.0
      %7253 = vmatprep.subr.mxu0 0.0
      %7254 = vmatpush2.msra.mxu0 0.0
      %7255 = vmatprep.subr.mxu0 0.0
      %7256 = vmatpush2.msra.mxu0 0.0
      %7257 = vmatprep.subr.mxu0 0.0
      %7258 = vmatpush2.msra.mxu0 0.0
      %7259 = vmatprep.subr.mxu0 0.0
      %7260 = vmatpush2.msra.mxu0 0.0
      %7261 = vmatprep.subr.mxu0 0.0
      %7262 = vmatpush2.msra.mxu0 0.0
      %7263 = vmatprep.mubr.f32.mxu0 0.0
      %7264 = vmatmul.mubr.f32.gmra.mxu0 %v7099
      %v7265 = vpop.f32.mrf.mxu0
      %v7266 = vadd.f32 0.0, %v7265
      %v7267 = vpop.f32.mrf.mxu0
      %7268 = vmatprep.mubr.f32.mxu0 0.0
      %7269 = vmatmul.mubr.f32.gmra.mxu0 %v7102
      %v7270 = vpop.f32.mrf.mxu0
      %v7271 = vadd.f32 0.0, %v7270
      %v7272 = vpop.f32.mrf.mxu0
      %7273 = vmatprep.mubr.f32.mxu0 0.0
      %7274 = vmatmul.mubr.f32.gmra.mxu0 %v7105
      %v7275 = vpop.f32.mrf.mxu0
      %v7276 = vadd.f32 0.0, %v7275
      %v7277 = vpop.f32.mrf.mxu0
      %7278 = vmatprep.mubr.f32.mxu0 0.0
      %7279 = vmatmul.mubr.f32.gmra.mxu0 %v7108
      %v7280 = vpop.f32.mrf.mxu0
      %v7281 = vadd.f32 0.0, %v7280
      %v7282 = vpop.f32.mrf.mxu0
      %7283 = vdwg.mxu0
      %v7284 = vadd.f32 %v7024, %v7177
      %v7285 = vadd.f32 %v7025, %v7179
      %v7286 = vadd.f32 %v7026, %v7266
      %v7287 = vadd.f32 %v7027, %v7183
      %v7288 = vadd.f32 %v7028, %v7185
      %v7289 = vadd.f32 %v7029, %v7271
      %v7290 = vadd.f32 %v7030, %v7189
      %v7291 = vadd.f32 %v7031, %v7191
      %v7292 = vadd.f32 %v7032, %v7276
      %v7293 = vadd.f32 %v7033, %v7195
      %v7294 = vadd.f32 %v7034, %v7197
      %v7295 = vadd.f32 %v7035, %v7281
      %v7296 = vld [vmem:[#allocation3 + $0x8] sm:$0xff]
      %v7297 = vld [vmem:[#allocation3 + $0x10] sm:$0xff]
      %v7298 = vld [vmem:[#allocation3 + $0x18] sm:$0xff]
      %v7299 = vld [vmem:[#allocation3 + $0x20] sm:$0xff]
      %v7300 = vld [vmem:[#allocation3 + $0x30] sm:$0xff]
      %v7301 = vld [vmem:[#allocation3 + $0x38] sm:$0xff]
      %v7302 = vld [vmem:[#allocation3 + $0x40] sm:$0xff]
      %v7303 = vld [vmem:[#allocation3 + $0x48] sm:$0xff]
      %v7304 = vld [vmem:[#allocation3 + $0x58] sm:$0xff]
      %v7305 = vld [vmem:[#allocation3 + $0x60] sm:$0xff]
      %v7306 = vld [vmem:[#allocation3 + $0x68] sm:$0xff]
      %v7307 = vld [vmem:[#allocation3 + $0x70] sm:$0xff]
      %v7308 = vld [vmem:[#allocation3 + $0x80] sm:$0xff]
      %v7309 = vld [vmem:[#allocation3 + $0x88] sm:$0xff]
      %v7310 = vld [vmem:[#allocation3 + $0x90] sm:$0xff]
      %v7311 = vld [vmem:[#allocation3 + $0x98] sm:$0xff]
      %s7312 = scalar_lea.vmem %s5, 192
      %v7313 = vld [vmem:[%s7312] sm:$0xff]
      %v7314 = vld [vmem:[%s7312 + $0x8] sm:$0xff]
      %v7315 = vld [vmem:[%s7312 + $0x10] sm:$0xff]
      %v7316 = vld [vmem:[%s7312 + $0x18] sm:$0xff]
      %7333 = vrot.lane.b32.xlu0 %v7296, 32
      %v7334 = vpop.permute.xlu0 %7333
      %7335 = vrot.lane.b32.xlu0 %v7297, 32
      %v7336 = vpop.permute.xlu0 %7335
      %7337 = vrot.lane.b32.xlu0 %v7298, 32
      %v7338 = vpop.permute.xlu0 %7337
      %7339 = vrot.lane.b32.xlu0 %v7299, 32
      %v7340 = vpop.permute.xlu0 %7339
      %7341 = vrot.lane.b32.xlu0 %v7300, 32
      %v7342 = vpop.permute.xlu0 %7341
      %7343 = vrot.lane.b32.xlu0 %v7301, 32
      %v7344 = vpop.permute.xlu0 %7343
      %7345 = vrot.lane.b32.xlu0 %v7302, 32
      %v7346 = vpop.permute.xlu0 %7345
      %7347 = vrot.lane.b32.xlu0 %v7303, 32
      %v7348 = vpop.permute.xlu0 %7347
      %7349 = vrot.lane.b32.xlu0 %v7304, 32
      %v7350 = vpop.permute.xlu0 %7349
      %7351 = vrot.lane.b32.xlu0 %v7305, 32
      %v7352 = vpop.permute.xlu0 %7351
      %7353 = vrot.lane.b32.xlu0 %v7306, 32
      %v7354 = vpop.permute.xlu0 %7353
      %7355 = vrot.lane.b32.xlu0 %v7307, 32
      %v7356 = vpop.permute.xlu0 %7355
      %7357 = vrot.lane.b32.xlu0 %v7308, 32
      %v7358 = vpop.permute.xlu0 %7357
      %7359 = vrot.lane.b32.xlu0 %v7309, 32
      %v7360 = vpop.permute.xlu0 %7359
      %7361 = vrot.lane.b32.xlu0 %v7310, 32
      %v7362 = vpop.permute.xlu0 %7361
      %7363 = vrot.lane.b32.xlu0 %v7311, 32
      %v7364 = vpop.permute.xlu0 %7363
      %v7365 = vsel %vm2330, %v7334, %v7336
      %v7366 = vsel %vm2330, %v7336, %v7338
      %v7367 = vsel %vm2330, %v7338, %v7340
      %v7368 = vsel %vm2330, %v7342, %v7344
      %v7369 = vsel %vm2330, %v7344, %v7346
      %v7370 = vsel %vm2330, %v7346, %v7348
      %v7371 = vsel %vm2330, %v7350, %v7352
      %v7372 = vsel %vm2330, %v7352, %v7354
      %v7373 = vsel %vm2330, %v7354, %v7356
      %v7374 = vsel %vm2330, %v7358, %v7360
      %v7375 = vsel %vm2330, %v7360, %v7362
      %v7376 = vsel %vm2330, %v7362, %v7364
      %v7390 = vsel %vm2330, %v7313, 0
      %v7393 = vsel %vm2330, %v7314, 0
      %v7396 = vsel %vm2330, %v7315, 0
      %v7399 = vsel %vm2330, %v7316, 0
      %7401 = vmatprep.subr.mxu0 0.0
      %7402 = vmatpush1.msra.mxu0 0.0
      %7403 = vmatprep.subr.mxu0 0.0
      %7404 = vmatpush1.msra.mxu0 0.0
      %7405 = vmatprep.subr.mxu0 0.0
      %7406 = vmatpush1.msra.mxu0 0.0
      %7407 = vmatprep.subr.mxu0 0.0
      %7408 = vmatpush1.msra.mxu0 0.0
      %7409 = vmatprep.subr.mxu0 0.0
      %7410 = vmatpush1.msra.mxu0 0.0
      %7411 = vmatprep.subr.mxu0 0.0
      %7412 = vmatpush1.msra.mxu0 0.0
      %7413 = vmatprep.subr.mxu0 0.0
      %7414 = vmatpush1.msra.mxu0 0.0
      %7415 = vmatprep.subr.mxu0 0.0
      %7416 = vmatpush1.msra.mxu0 0.0
      %7417 = vmatprep.subr.mxu0 0.0
      %7418 = vmatpush1.msra.mxu0 0.0
      %7419 = vmatprep.subr.mxu0 0.0
      %7420 = vmatpush1.msra.mxu0 0.0
      %7421 = vmatprep.subr.mxu0 0.0
      %7422 = vmatpush1.msra.mxu0 0.0
      %7423 = vmatprep.subr.mxu0 0.0
      %7424 = vmatpush1.msra.mxu0 0.0
      %7425 = vmatprep.subr.mxu0 %v7375
      %7426 = vmatpush1.msra.mxu0 %v7374
      %7427 = vmatprep.subr.mxu0 %v7372
      %7428 = vmatpush1.msra.mxu0 %v7371
      %7429 = vmatprep.subr.mxu0 %v7369
      %7430 = vmatpush1.msra.mxu0 %v7368
      %7431 = vmatprep.subr.mxu0 %v7366
      %7432 = vmatpush1.msra.mxu0 %v7365
      %7433 = vmatprep.subr.mxu0 0.0
      %7434 = vmatpush2.msra.mxu0 0.0
      %7435 = vmatprep.subr.mxu0 0.0
      %7436 = vmatpush2.msra.mxu0 0.0
      %7437 = vmatprep.subr.mxu0 0.0
      %7438 = vmatpush2.msra.mxu0 0.0
      %7439 = vmatprep.subr.mxu0 0.0
      %7440 = vmatpush2.msra.mxu0 0.0
      %7441 = vmatprep.subr.mxu0 0.0
      %7442 = vmatpush2.msra.mxu0 0.0
      %7443 = vmatprep.subr.mxu0 0.0
      %7444 = vmatpush2.msra.mxu0 0.0
      %7445 = vmatprep.subr.mxu0 0.0
      %7446 = vmatpush2.msra.mxu0 0.0
      %7447 = vmatprep.subr.mxu0 0.0
      %7448 = vmatpush2.msra.mxu0 0.0
      %7449 = vmatprep.subr.mxu0 0.0
      %7450 = vmatpush2.msra.mxu0 0.0
      %7451 = vmatprep.subr.mxu0 0.0
      %7452 = vmatpush2.msra.mxu0 0.0
      %7453 = vmatprep.subr.mxu0 0.0
      %7454 = vmatpush2.msra.mxu0 0.0
      %7455 = vmatprep.subr.mxu0 0.0
      %7456 = vmatpush2.msra.mxu0 0.0
      %7457 = vmatprep.subr.mxu0 0.0
      %7458 = vmatpush2.msra.mxu0 0.0
      %7459 = vmatprep.subr.mxu0 0.0
      %7460 = vmatpush2.msra.mxu0 0.0
      %7461 = vmatprep.subr.mxu0 0.0
      %7462 = vmatpush2.msra.mxu0 0.0
      %7463 = vmatprep.subr.mxu0 0.0
      %7464 = vmatpush2.msra.mxu0 0.0
      %7465 = vmatprep.mubr.f32.mxu0 0.0
      %7466 = vmatmul.mubr.f32.gmra.mxu0 %v7390
      %v7467 = vpop.f32.mrf.mxu0
      %v7468 = vadd.f32 0.0, %v7467
      %v7469 = vpop.f32.mrf.mxu0
      %v7470 = vadd.f32 0.0, %v7469
      %7471 = vmatprep.mubr.f32.mxu0 0.0
      %7472 = vmatmul.mubr.f32.gmra.mxu0 %v7393
      %v7473 = vpop.f32.mrf.mxu0
      %v7474 = vadd.f32 0.0, %v7473
      %v7475 = vpop.f32.mrf.mxu0
      %v7476 = vadd.f32 0.0, %v7475
      %7477 = vmatprep.mubr.f32.mxu0 0.0
      %7478 = vmatmul.mubr.f32.gmra.mxu0 %v7396
      %v7479 = vpop.f32.mrf.mxu0
      %v7480 = vadd.f32 0.0, %v7479
      %v7481 = vpop.f32.mrf.mxu0
      %v7482 = vadd.f32 0.0, %v7481
      %7483 = vmatprep.mubr.f32.mxu0 0.0
      %7484 = vmatmul.mubr.f32.gmra.mxu0 %v7399
      %v7485 = vpop.f32.mrf.mxu0
      %v7486 = vadd.f32 0.0, %v7485
      %v7487 = vpop.f32.mrf.mxu0
      %v7488 = vadd.f32 0.0, %v7487
      %7489 = vdwg.mxu0
      %7490 = vmatprep.subr.mxu0 0.0
      %7491 = vmatpush1.msra.mxu0 0.0
      %7492 = vmatprep.subr.mxu0 0.0
      %7493 = vmatpush1.msra.mxu0 0.0
      %7494 = vmatprep.subr.mxu0 0.0
      %7495 = vmatpush1.msra.mxu0 0.0
      %7496 = vmatprep.subr.mxu0 0.0
      %7497 = vmatpush1.msra.mxu0 0.0
      %7498 = vmatprep.subr.mxu0 0.0
      %7499 = vmatpush1.msra.mxu0 0.0
      %7500 = vmatprep.subr.mxu0 0.0
      %7501 = vmatpush1.msra.mxu0 0.0
      %7502 = vmatprep.subr.mxu0 0.0
      %7503 = vmatpush1.msra.mxu0 0.0
      %7504 = vmatprep.subr.mxu0 0.0
      %7505 = vmatpush1.msra.mxu0 0.0
      %7506 = vmatprep.subr.mxu0 0.0
      %7507 = vmatpush1.msra.mxu0 0.0
      %7508 = vmatprep.subr.mxu0 0.0
      %7509 = vmatpush1.msra.mxu0 0.0
      %7510 = vmatprep.subr.mxu0 0.0
      %7511 = vmatpush1.msra.mxu0 0.0
      %7512 = vmatprep.subr.mxu0 0.0
      %7513 = vmatpush1.msra.mxu0 0.0
      %7514 = vmatprep.subr.mxu0 0.0
      %7515 = vmatpush1.msra.mxu0 %v7376
      %7516 = vmatprep.subr.mxu0 0.0
      %7517 = vmatpush1.msra.mxu0 %v7373
      %7518 = vmatprep.subr.mxu0 0.0
      %7519 = vmatpush1.msra.mxu0 %v7370
      %7520 = vmatprep.subr.mxu0 0.0
      %7521 = vmatpush1.msra.mxu0 %v7367
      %7522 = vmatprep.subr.mxu0 0.0
      %7523 = vmatpush2.msra.mxu0 0.0
      %7524 = vmatprep.subr.mxu0 0.0
      %7525 = vmatpush2.msra.mxu0 0.0
      %7526 = vmatprep.subr.mxu0 0.0
      %7527 = vmatpush2.msra.mxu0 0.0
      %7528 = vmatprep.subr.mxu0 0.0
      %7529 = vmatpush2.msra.mxu0 0.0
      %7530 = vmatprep.subr.mxu0 0.0
      %7531 = vmatpush2.msra.mxu0 0.0
      %7532 = vmatprep.subr.mxu0 0.0
      %7533 = vmatpush2.msra.mxu0 0.0
      %7534 = vmatprep.subr.mxu0 0.0
      %7535 = vmatpush2.msra.mxu0 0.0
      %7536 = vmatprep.subr.mxu0 0.0
      %7537 = vmatpush2.msra.mxu0 0.0
      %7538 = vmatprep.subr.mxu0 0.0
      %7539 = vmatpush2.msra.mxu0 0.0
      %7540 = vmatprep.subr.mxu0 0.0
      %7541 = vmatpush2.msra.mxu0 0.0
      %7542 = vmatprep.subr.mxu0 0.0
      %7543 = vmatpush2.msra.mxu0 0.0
      %7544 = vmatprep.subr.mxu0 0.0
      %7545 = vmatpush2.msra.mxu0 0.0
      %7546 = vmatprep.subr.mxu0 0.0
      %7547 = vmatpush2.msra.mxu0 0.0
      %7548 = vmatprep.subr.mxu0 0.0
      %7549 = vmatpush2.msra.mxu0 0.0
      %7550 = vmatprep.subr.mxu0 0.0
      %7551 = vmatpush2.msra.mxu0 0.0
      %7552 = vmatprep.subr.mxu0 0.0
      %7553 = vmatpush2.msra.mxu0 0.0
      %7554 = vmatprep.mubr.f32.mxu0 0.0
      %7555 = vmatmul.mubr.f32.gmra.mxu0 %v7390
      %v7556 = vpop.f32.mrf.mxu0
      %v7557 = vadd.f32 0.0, %v7556
      %v7558 = vpop.f32.mrf.mxu0
      %7559 = vmatprep.mubr.f32.mxu0 0.0
      %7560 = vmatmul.mubr.f32.gmra.mxu0 %v7393
      %v7561 = vpop.f32.mrf.mxu0
      %v7562 = vadd.f32 0.0, %v7561
      %v7563 = vpop.f32.mrf.mxu0
      %7564 = vmatprep.mubr.f32.mxu0 0.0
      %7565 = vmatmul.mubr.f32.gmra.mxu0 %v7396
      %v7566 = vpop.f32.mrf.mxu0
      %v7567 = vadd.f32 0.0, %v7566
      %v7568 = vpop.f32.mrf.mxu0
      %7569 = vmatprep.mubr.f32.mxu0 0.0
      %7570 = vmatmul.mubr.f32.gmra.mxu0 %v7399
      %v7571 = vpop.f32.mrf.mxu0
      %v7572 = vadd.f32 0.0, %v7571
      %v7573 = vpop.f32.mrf.mxu0
      %7574 = vdwg.mxu0
      %v7575 = vadd.f32 %v7284, %v7468
      %v7576 = vadd.f32 %v7285, %v7470
      %v7577 = vadd.f32 %v7286, %v7557
      %v7578 = vadd.f32 %v7287, %v7474
      %v7579 = vadd.f32 %v7288, %v7476
      %v7580 = vadd.f32 %v7289, %v7562
      %v7581 = vadd.f32 %v7290, %v7480
      %v7582 = vadd.f32 %v7291, %v7482
      %v7583 = vadd.f32 %v7292, %v7567
      %v7584 = vadd.f32 %v7293, %v7486
      %v7585 = vadd.f32 %v7294, %v7488
      %v7586 = vadd.f32 %v7295, %v7572
      %s7587 = scalar_lea.vmem %s5, 224
      %v7588 = vld [vmem:[%s7587] sm:$0xff]
      %v7589 = vld [vmem:[%s7587 + $0x8] sm:$0xff]
      %v7590 = vld [vmem:[%s7587 + $0x10] sm:$0xff]
      %v7591 = vld [vmem:[%s7587 + $0x18] sm:$0xff]
      %7592 = vrot.lane.b32.xlu0 %v7296, 28
      %v7593 = vpop.permute.xlu0 %7592
      %7594 = vrot.lane.b32.xlu0 %v7297, 28
      %v7595 = vpop.permute.xlu0 %7594
      %7596 = vrot.lane.b32.xlu0 %v7298, 28
      %v7597 = vpop.permute.xlu0 %7596
      %7598 = vrot.lane.b32.xlu0 %v7299, 28
      %v7599 = vpop.permute.xlu0 %7598
      %7600 = vrot.lane.b32.xlu0 %v7300, 28
      %v7601 = vpop.permute.xlu0 %7600
      %7602 = vrot.lane.b32.xlu0 %v7301, 28
      %v7603 = vpop.permute.xlu0 %7602
      %7604 = vrot.lane.b32.xlu0 %v7302, 28
      %v7605 = vpop.permute.xlu0 %7604
      %7606 = vrot.lane.b32.xlu0 %v7303, 28
      %v7607 = vpop.permute.xlu0 %7606
      %7608 = vrot.lane.b32.xlu0 %v7304, 28
      %v7609 = vpop.permute.xlu0 %7608
      %7610 = vrot.lane.b32.xlu0 %v7305, 28
      %v7611 = vpop.permute.xlu0 %7610
      %7612 = vrot.lane.b32.xlu0 %v7306, 28
      %v7613 = vpop.permute.xlu0 %7612
      %7614 = vrot.lane.b32.xlu0 %v7307, 28
      %v7615 = vpop.permute.xlu0 %7614
      %7616 = vrot.lane.b32.xlu0 %v7308, 28
      %v7617 = vpop.permute.xlu0 %7616
      %7618 = vrot.lane.b32.xlu0 %v7309, 28
      %v7619 = vpop.permute.xlu0 %7618
      %7620 = vrot.lane.b32.xlu0 %v7310, 28
      %v7621 = vpop.permute.xlu0 %7620
      %7622 = vrot.lane.b32.xlu0 %v7311, 28
      %v7623 = vpop.permute.xlu0 %7622
      %vm7624 = vcmask 228352
      %v7625 = vsel %vm7624, %v7593, %v7595
      %v7626 = vsel %vm7624, %v7595, %v7597
      %v7627 = vsel %vm7624, %v7597, %v7599
      %v7628 = vsel %vm7624, %v7601, %v7603
      %v7629 = vsel %vm7624, %v7603, %v7605
      %v7630 = vsel %vm7624, %v7605, %v7607
      %v7631 = vsel %vm7624, %v7609, %v7611
      %v7632 = vsel %vm7624, %v7611, %v7613
      %v7633 = vsel %vm7624, %v7613, %v7615
      %v7634 = vsel %vm7624, %v7617, %v7619
      %v7635 = vsel %vm7624, %v7619, %v7621
      %v7636 = vsel %vm7624, %v7621, %v7623
      %v7650 = vsel %vm2330, %v7588, 0
      %v7653 = vsel %vm2330, %v7589, 0
      %v7656 = vsel %vm2330, %v7590, 0
      %v7659 = vsel %vm2330, %v7591, 0
      %7661 = vmatprep.subr.mxu0 0.0
      %7662 = vmatpush1.msra.mxu0 0.0
      %7663 = vmatprep.subr.mxu0 0.0
      %7664 = vmatpush1.msra.mxu0 0.0
      %7665 = vmatprep.subr.mxu0 0.0
      %7666 = vmatpush1.msra.mxu0 0.0
      %7667 = vmatprep.subr.mxu0 0.0
      %7668 = vmatpush1.msra.mxu0 0.0
      %7669 = vmatprep.subr.mxu0 0.0
      %7670 = vmatpush1.msra.mxu0 0.0
      %7671 = vmatprep.subr.mxu0 0.0
      %7672 = vmatpush1.msra.mxu0 0.0
      %7673 = vmatprep.subr.mxu0 0.0
      %7674 = vmatpush1.msra.mxu0 0.0
      %7675 = vmatprep.subr.mxu0 0.0
      %7676 = vmatpush1.msra.mxu0 0.0
      %7677 = vmatprep.subr.mxu0 0.0
      %7678 = vmatpush1.msra.mxu0 0.0
      %7679 = vmatprep.subr.mxu0 0.0
      %7680 = vmatpush1.msra.mxu0 0.0
      %7681 = vmatprep.subr.mxu0 0.0
      %7682 = vmatpush1.msra.mxu0 0.0
      %7683 = vmatprep.subr.mxu0 0.0
      %7684 = vmatpush1.msra.mxu0 0.0
      %7685 = vmatprep.subr.mxu0 %v7635
      %7686 = vmatpush1.msra.mxu0 %v7634
      %7687 = vmatprep.subr.mxu0 %v7632
      %7688 = vmatpush1.msra.mxu0 %v7631
      %7689 = vmatprep.subr.mxu0 %v7629
      %7690 = vmatpush1.msra.mxu0 %v7628
      %7691 = vmatprep.subr.mxu0 %v7626
      %7692 = vmatpush1.msra.mxu0 %v7625
      %7693 = vmatprep.subr.mxu0 0.0
      %7694 = vmatpush2.msra.mxu0 0.0
      %7695 = vmatprep.subr.mxu0 0.0
      %7696 = vmatpush2.msra.mxu0 0.0
      %7697 = vmatprep.subr.mxu0 0.0
      %7698 = vmatpush2.msra.mxu0 0.0
      %7699 = vmatprep.subr.mxu0 0.0
      %7700 = vmatpush2.msra.mxu0 0.0
      %7701 = vmatprep.subr.mxu0 0.0
      %7702 = vmatpush2.msra.mxu0 0.0
      %7703 = vmatprep.subr.mxu0 0.0
      %7704 = vmatpush2.msra.mxu0 0.0
      %7705 = vmatprep.subr.mxu0 0.0
      %7706 = vmatpush2.msra.mxu0 0.0
      %7707 = vmatprep.subr.mxu0 0.0
      %7708 = vmatpush2.msra.mxu0 0.0
      %7709 = vmatprep.subr.mxu0 0.0
      %7710 = vmatpush2.msra.mxu0 0.0
      %7711 = vmatprep.subr.mxu0 0.0
      %7712 = vmatpush2.msra.mxu0 0.0
      %7713 = vmatprep.subr.mxu0 0.0
      %7714 = vmatpush2.msra.mxu0 0.0
      %7715 = vmatprep.subr.mxu0 0.0
      %7716 = vmatpush2.msra.mxu0 0.0
      %7717 = vmatprep.subr.mxu0 0.0
      %7718 = vmatpush2.msra.mxu0 0.0
      %7719 = vmatprep.subr.mxu0 0.0
      %7720 = vmatpush2.msra.mxu0 0.0
      %7721 = vmatprep.subr.mxu0 0.0
      %7722 = vmatpush2.msra.mxu0 0.0
      %7723 = vmatprep.subr.mxu0 0.0
      %7724 = vmatpush2.msra.mxu0 0.0
      %7725 = vmatprep.mubr.f32.mxu0 0.0
      %7726 = vmatmul.mubr.f32.gmra.mxu0 %v7650
      %v7727 = vpop.f32.mrf.mxu0
      %v7728 = vadd.f32 0.0, %v7727
      %v7729 = vpop.f32.mrf.mxu0
      %v7730 = vadd.f32 0.0, %v7729
      %7731 = vmatprep.mubr.f32.mxu0 0.0
      %7732 = vmatmul.mubr.f32.gmra.mxu0 %v7653
      %v7733 = vpop.f32.mrf.mxu0
      %v7734 = vadd.f32 0.0, %v7733
      %v7735 = vpop.f32.mrf.mxu0
      %v7736 = vadd.f32 0.0, %v7735
      %7737 = vmatprep.mubr.f32.mxu0 0.0
      %7738 = vmatmul.mubr.f32.gmra.mxu0 %v7656
      %v7739 = vpop.f32.mrf.mxu0
      %v7740 = vadd.f32 0.0, %v7739
      %v7741 = vpop.f32.mrf.mxu0
      %v7742 = vadd.f32 0.0, %v7741
      %7743 = vmatprep.mubr.f32.mxu0 0.0
      %7744 = vmatmul.mubr.f32.gmra.mxu0 %v7659
      %v7745 = vpop.f32.mrf.mxu0
      %v7746 = vadd.f32 0.0, %v7745
      %v7747 = vpop.f32.mrf.mxu0
      %v7748 = vadd.f32 0.0, %v7747
      %7749 = vdwg.mxu0
      %7750 = vmatprep.subr.mxu0 0.0
      %7751 = vmatpush1.msra.mxu0 0.0
      %7752 = vmatprep.subr.mxu0 0.0
      %7753 = vmatpush1.msra.mxu0 0.0
      %7754 = vmatprep.subr.mxu0 0.0
      %7755 = vmatpush1.msra.mxu0 0.0
      %7756 = vmatprep.subr.mxu0 0.0
      %7757 = vmatpush1.msra.mxu0 0.0
      %7758 = vmatprep.subr.mxu0 0.0
      %7759 = vmatpush1.msra.mxu0 0.0
      %7760 = vmatprep.subr.mxu0 0.0
      %7761 = vmatpush1.msra.mxu0 0.0
      %7762 = vmatprep.subr.mxu0 0.0
      %7763 = vmatpush1.msra.mxu0 0.0
      %7764 = vmatprep.subr.mxu0 0.0
      %7765 = vmatpush1.msra.mxu0 0.0
      %7766 = vmatprep.subr.mxu0 0.0
      %7767 = vmatpush1.msra.mxu0 0.0
      %7768 = vmatprep.subr.mxu0 0.0
      %7769 = vmatpush1.msra.mxu0 0.0
      %7770 = vmatprep.subr.mxu0 0.0
      %7771 = vmatpush1.msra.mxu0 0.0
      %7772 = vmatprep.subr.mxu0 0.0
      %7773 = vmatpush1.msra.mxu0 0.0
      %7774 = vmatprep.subr.mxu0 0.0
      %7775 = vmatpush1.msra.mxu0 %v7636
      %7776 = vmatprep.subr.mxu0 0.0
      %7777 = vmatpush1.msra.mxu0 %v7633
      %7778 = vmatprep.subr.mxu0 0.0
      %7779 = vmatpush1.msra.mxu0 %v7630
      %7780 = vmatprep.subr.mxu0 0.0
      %7781 = vmatpush1.msra.mxu0 %v7627
      %7782 = vmatprep.subr.mxu0 0.0
      %7783 = vmatpush2.msra.mxu0 0.0
      %7784 = vmatprep.subr.mxu0 0.0
      %7785 = vmatpush2.msra.mxu0 0.0
      %7786 = vmatprep.subr.mxu0 0.0
      %7787 = vmatpush2.msra.mxu0 0.0
      %7788 = vmatprep.subr.mxu0 0.0
      %7789 = vmatpush2.msra.mxu0 0.0
      %7790 = vmatprep.subr.mxu0 0.0
      %7791 = vmatpush2.msra.mxu0 0.0
      %7792 = vmatprep.subr.mxu0 0.0
      %7793 = vmatpush2.msra.mxu0 0.0
      %7794 = vmatprep.subr.mxu0 0.0
      %7795 = vmatpush2.msra.mxu0 0.0
      %7796 = vmatprep.subr.mxu0 0.0
      %7797 = vmatpush2.msra.mxu0 0.0
      %7798 = vmatprep.subr.mxu0 0.0
      %7799 = vmatpush2.msra.mxu0 0.0
      %7800 = vmatprep.subr.mxu0 0.0
      %7801 = vmatpush2.msra.mxu0 0.0
      %7802 = vmatprep.subr.mxu0 0.0
      %7803 = vmatpush2.msra.mxu0 0.0
      %7804 = vmatprep.subr.mxu0 0.0
      %7805 = vmatpush2.msra.mxu0 0.0
      %7806 = vmatprep.subr.mxu0 0.0
      %7807 = vmatpush2.msra.mxu0 0.0
      %7808 = vmatprep.subr.mxu0 0.0
      %7809 = vmatpush2.msra.mxu0 0.0
      %7810 = vmatprep.subr.mxu0 0.0
      %7811 = vmatpush2.msra.mxu0 0.0
      %7812 = vmatprep.subr.mxu0 0.0
      %7813 = vmatpush2.msra.mxu0 0.0
      %7814 = vmatprep.mubr.f32.mxu0 0.0
      %7815 = vmatmul.mubr.f32.gmra.mxu0 %v7650
      %v7816 = vpop.f32.mrf.mxu0
      %v7817 = vadd.f32 0.0, %v7816
      %v7818 = vpop.f32.mrf.mxu0
      %7819 = vmatprep.mubr.f32.mxu0 0.0
      %7820 = vmatmul.mubr.f32.gmra.mxu0 %v7653
      %v7821 = vpop.f32.mrf.mxu0
      %v7822 = vadd.f32 0.0, %v7821
      %v7823 = vpop.f32.mrf.mxu0
      %7824 = vmatprep.mubr.f32.mxu0 0.0
      %7825 = vmatmul.mubr.f32.gmra.mxu0 %v7656
      %v7826 = vpop.f32.mrf.mxu0
      %v7827 = vadd.f32 0.0, %v7826
      %v7828 = vpop.f32.mrf.mxu0
      %7829 = vmatprep.mubr.f32.mxu0 0.0
      %7830 = vmatmul.mubr.f32.gmra.mxu0 %v7659
      %v7831 = vpop.f32.mrf.mxu0
      %v7832 = vadd.f32 0.0, %v7831
      %v7833 = vpop.f32.mrf.mxu0
      %7834 = vdwg.mxu0
      %v7835 = vadd.f32 %v7575, %v7728
      %v7836 = vadd.f32 %v7576, %v7730
      %v7837 = vadd.f32 %v7577, %v7817
      %v7838 = vadd.f32 %v7578, %v7734
      %v7839 = vadd.f32 %v7579, %v7736
      %v7840 = vadd.f32 %v7580, %v7822
      %v7841 = vadd.f32 %v7581, %v7740
      %v7842 = vadd.f32 %v7582, %v7742
      %v7843 = vadd.f32 %v7583, %v7827
      %v7844 = vadd.f32 %v7584, %v7746
      %v7845 = vadd.f32 %v7585, %v7748
      %v7846 = vadd.f32 %v7586, %v7832
      %s7847 = scalar_lea.vmem %s5, 256
      %v7848 = vld [vmem:[%s7847] sm:$0xff]
      %v7849 = vld [vmem:[%s7847 + $0x8] sm:$0xff]
      %v7850 = vld [vmem:[%s7847 + $0x10] sm:$0xff]
      %v7851 = vld [vmem:[%s7847 + $0x18] sm:$0xff]
      %7852 = vrot.lane.b32.xlu0 %v7296, 24
      %v7853 = vpop.permute.xlu0 %7852
      %7854 = vrot.lane.b32.xlu0 %v7297, 24
      %v7855 = vpop.permute.xlu0 %7854
      %7856 = vrot.lane.b32.xlu0 %v7298, 24
      %v7857 = vpop.permute.xlu0 %7856
      %7858 = vrot.lane.b32.xlu0 %v7299, 24
      %v7859 = vpop.permute.xlu0 %7858
      %7860 = vrot.lane.b32.xlu0 %v7300, 24
      %v7861 = vpop.permute.xlu0 %7860
      %7862 = vrot.lane.b32.xlu0 %v7301, 24
      %v7863 = vpop.permute.xlu0 %7862
      %7864 = vrot.lane.b32.xlu0 %v7302, 24
      %v7865 = vpop.permute.xlu0 %7864
      %7866 = vrot.lane.b32.xlu0 %v7303, 24
      %v7867 = vpop.permute.xlu0 %7866
      %7868 = vrot.lane.b32.xlu0 %v7304, 24
      %v7869 = vpop.permute.xlu0 %7868
      %7870 = vrot.lane.b32.xlu0 %v7305, 24
      %v7871 = vpop.permute.xlu0 %7870
      %7872 = vrot.lane.b32.xlu0 %v7306, 24
      %v7873 = vpop.permute.xlu0 %7872
      %7874 = vrot.lane.b32.xlu0 %v7307, 24
      %v7875 = vpop.permute.xlu0 %7874
      %7876 = vrot.lane.b32.xlu0 %v7308, 24
      %v7877 = vpop.permute.xlu0 %7876
      %7878 = vrot.lane.b32.xlu0 %v7309, 24
      %v7879 = vpop.permute.xlu0 %7878
      %7880 = vrot.lane.b32.xlu0 %v7310, 24
      %v7881 = vpop.permute.xlu0 %7880
      %7882 = vrot.lane.b32.xlu0 %v7311, 24
      %v7883 = vpop.permute.xlu0 %7882
      %vm7884 = vcmask 195584
      %v7885 = vsel %vm7884, %v7853, %v7855
      %v7886 = vsel %vm7884, %v7855, %v7857
      %v7887 = vsel %vm7884, %v7857, %v7859
      %v7888 = vsel %vm7884, %v7861, %v7863
      %v7889 = vsel %vm7884, %v7863, %v7865
      %v7890 = vsel %vm7884, %v7865, %v7867
      %v7891 = vsel %vm7884, %v7869, %v7871
      %v7892 = vsel %vm7884, %v7871, %v7873
      %v7893 = vsel %vm7884, %v7873, %v7875
      %v7894 = vsel %vm7884, %v7877, %v7879
      %v7895 = vsel %vm7884, %v7879, %v7881
      %v7896 = vsel %vm7884, %v7881, %v7883
      %v7910 = vsel %vm2330, %v7848, 0
      %v7913 = vsel %vm2330, %v7849, 0
      %v7916 = vsel %vm2330, %v7850, 0
      %v7919 = vsel %vm2330, %v7851, 0
      %7921 = vmatprep.subr.mxu0 0.0
      %7922 = vmatpush1.msra.mxu0 0.0
      %7923 = vmatprep.subr.mxu0 0.0
      %7924 = vmatpush1.msra.mxu0 0.0
      %7925 = vmatprep.subr.mxu0 0.0
      %7926 = vmatpush1.msra.mxu0 0.0
      %7927 = vmatprep.subr.mxu0 0.0
      %7928 = vmatpush1.msra.mxu0 0.0
      %7929 = vmatprep.subr.mxu0 0.0
      %7930 = vmatpush1.msra.mxu0 0.0
      %7931 = vmatprep.subr.mxu0 0.0
      %7932 = vmatpush1.msra.mxu0 0.0
      %7933 = vmatprep.subr.mxu0 0.0
      %7934 = vmatpush1.msra.mxu0 0.0
      %7935 = vmatprep.subr.mxu0 0.0
      %7936 = vmatpush1.msra.mxu0 0.0
      %7937 = vmatprep.subr.mxu0 0.0
      %7938 = vmatpush1.msra.mxu0 0.0
      %7939 = vmatprep.subr.mxu0 0.0
      %7940 = vmatpush1.msra.mxu0 0.0
      %7941 = vmatprep.subr.mxu0 0.0
      %7942 = vmatpush1.msra.mxu0 0.0
      %7943 = vmatprep.subr.mxu0 0.0
      %7944 = vmatpush1.msra.mxu0 0.0
      %7945 = vmatprep.subr.mxu0 %v7895
      %7946 = vmatpush1.msra.mxu0 %v7894
      %7947 = vmatprep.subr.mxu0 %v7892
      %7948 = vmatpush1.msra.mxu0 %v7891
      %7949 = vmatprep.subr.mxu0 %v7889
      %7950 = vmatpush1.msra.mxu0 %v7888
      %7951 = vmatprep.subr.mxu0 %v7886
      %7952 = vmatpush1.msra.mxu0 %v7885
      %7953 = vmatprep.subr.mxu0 0.0
      %7954 = vmatpush2.msra.mxu0 0.0
      %7955 = vmatprep.subr.mxu0 0.0
      %7956 = vmatpush2.msra.mxu0 0.0
      %7957 = vmatprep.subr.mxu0 0.0
      %7958 = vmatpush2.msra.mxu0 0.0
      %7959 = vmatprep.subr.mxu0 0.0
      %7960 = vmatpush2.msra.mxu0 0.0
      %7961 = vmatprep.subr.mxu0 0.0
      %7962 = vmatpush2.msra.mxu0 0.0
      %7963 = vmatprep.subr.mxu0 0.0
      %7964 = vmatpush2.msra.mxu0 0.0
      %7965 = vmatprep.subr.mxu0 0.0
      %7966 = vmatpush2.msra.mxu0 0.0
      %7967 = vmatprep.subr.mxu0 0.0
      %7968 = vmatpush2.msra.mxu0 0.0
      %7969 = vmatprep.subr.mxu0 0.0
      %7970 = vmatpush2.msra.mxu0 0.0
      %7971 = vmatprep.subr.mxu0 0.0
      %7972 = vmatpush2.msra.mxu0 0.0
      %7973 = vmatprep.subr.mxu0 0.0
      %7974 = vmatpush2.msra.mxu0 0.0
      %7975 = vmatprep.subr.mxu0 0.0
      %7976 = vmatpush2.msra.mxu0 0.0
      %7977 = vmatprep.subr.mxu0 0.0
      %7978 = vmatpush2.msra.mxu0 0.0
      %7979 = vmatprep.subr.mxu0 0.0
      %7980 = vmatpush2.msra.mxu0 0.0
      %7981 = vmatprep.subr.mxu0 0.0
      %7982 = vmatpush2.msra.mxu0 0.0
      %7983 = vmatprep.subr.mxu0 0.0
      %7984 = vmatpush2.msra.mxu0 0.0
      %7985 = vmatprep.mubr.f32.mxu0 0.0
      %7986 = vmatmul.mubr.f32.gmra.mxu0 %v7910
      %v7987 = vpop.f32.mrf.mxu0
      %v7988 = vadd.f32 0.0, %v7987
      %v7989 = vpop.f32.mrf.mxu0
      %v7990 = vadd.f32 0.0, %v7989
      %7991 = vmatprep.mubr.f32.mxu0 0.0
      %7992 = vmatmul.mubr.f32.gmra.mxu0 %v7913
      %v7993 = vpop.f32.mrf.mxu0
      %v7994 = vadd.f32 0.0, %v7993
      %v7995 = vpop.f32.mrf.mxu0
      %v7996 = vadd.f32 0.0, %v7995
      %7997 = vmatprep.mubr.f32.mxu0 0.0
      %7998 = vmatmul.mubr.f32.gmra.mxu0 %v7916
      %v7999 = vpop.f32.mrf.mxu0
      %v8000 = vadd.f32 0.0, %v7999
      %v8001 = vpop.f32.mrf.mxu0
      %v8002 = vadd.f32 0.0, %v8001
      %8003 = vmatprep.mubr.f32.mxu0 0.0
      %8004 = vmatmul.mubr.f32.gmra.mxu0 %v7919
      %v8005 = vpop.f32.mrf.mxu0
      %v8006 = vadd.f32 0.0, %v8005
      %v8007 = vpop.f32.mrf.mxu0
      %v8008 = vadd.f32 0.0, %v8007
      %8009 = vdwg.mxu0
      %8010 = vmatprep.subr.mxu0 0.0
      %8011 = vmatpush1.msra.mxu0 0.0
      %8012 = vmatprep.subr.mxu0 0.0
      %8013 = vmatpush1.msra.mxu0 0.0
      %8014 = vmatprep.subr.mxu0 0.0
      %8015 = vmatpush1.msra.mxu0 0.0
      %8016 = vmatprep.subr.mxu0 0.0
      %8017 = vmatpush1.msra.mxu0 0.0
      %8018 = vmatprep.subr.mxu0 0.0
      %8019 = vmatpush1.msra.mxu0 0.0
      %8020 = vmatprep.subr.mxu0 0.0
      %8021 = vmatpush1.msra.mxu0 0.0
      %8022 = vmatprep.subr.mxu0 0.0
      %8023 = vmatpush1.msra.mxu0 0.0
      %8024 = vmatprep.subr.mxu0 0.0
      %8025 = vmatpush1.msra.mxu0 0.0
      %8026 = vmatprep.subr.mxu0 0.0
      %8027 = vmatpush1.msra.mxu0 0.0
      %8028 = vmatprep.subr.mxu0 0.0
      %8029 = vmatpush1.msra.mxu0 0.0
      %8030 = vmatprep.subr.mxu0 0.0
      %8031 = vmatpush1.msra.mxu0 0.0
      %8032 = vmatprep.subr.mxu0 0.0
      %8033 = vmatpush1.msra.mxu0 0.0
      %8034 = vmatprep.subr.mxu0 0.0
      %8035 = vmatpush1.msra.mxu0 %v7896
      %8036 = vmatprep.subr.mxu0 0.0
      %8037 = vmatpush1.msra.mxu0 %v7893
      %8038 = vmatprep.subr.mxu0 0.0
      %8039 = vmatpush1.msra.mxu0 %v7890
      %8040 = vmatprep.subr.mxu0 0.0
      %8041 = vmatpush1.msra.mxu0 %v7887
      %8042 = vmatprep.subr.mxu0 0.0
      %8043 = vmatpush2.msra.mxu0 0.0
      %8044 = vmatprep.subr.mxu0 0.0
      %8045 = vmatpush2.msra.mxu0 0.0
      %8046 = vmatprep.subr.mxu0 0.0
      %8047 = vmatpush2.msra.mxu0 0.0
      %8048 = vmatprep.subr.mxu0 0.0
      %8049 = vmatpush2.msra.mxu0 0.0
      %8050 = vmatprep.subr.mxu0 0.0
      %8051 = vmatpush2.msra.mxu0 0.0
      %8052 = vmatprep.subr.mxu0 0.0
      %8053 = vmatpush2.msra.mxu0 0.0
      %8054 = vmatprep.subr.mxu0 0.0
      %8055 = vmatpush2.msra.mxu0 0.0
      %8056 = vmatprep.subr.mxu0 0.0
      %8057 = vmatpush2.msra.mxu0 0.0
      %8058 = vmatprep.subr.mxu0 0.0
      %8059 = vmatpush2.msra.mxu0 0.0
      %8060 = vmatprep.subr.mxu0 0.0
      %8061 = vmatpush2.msra.mxu0 0.0
      %8062 = vmatprep.subr.mxu0 0.0
      %8063 = vmatpush2.msra.mxu0 0.0
      %8064 = vmatprep.subr.mxu0 0.0
      %8065 = vmatpush2.msra.mxu0 0.0
      %8066 = vmatprep.subr.mxu0 0.0
      %8067 = vmatpush2.msra.mxu0 0.0
      %8068 = vmatprep.subr.mxu0 0.0
      %8069 = vmatpush2.msra.mxu0 0.0
      %8070 = vmatprep.subr.mxu0 0.0
      %8071 = vmatpush2.msra.mxu0 0.0
      %8072 = vmatprep.subr.mxu0 0.0
      %8073 = vmatpush2.msra.mxu0 0.0
      %8074 = vmatprep.mubr.f32.mxu0 0.0
      %8075 = vmatmul.mubr.f32.gmra.mxu0 %v7910
      %v8076 = vpop.f32.mrf.mxu0
      %v8077 = vadd.f32 0.0, %v8076
      %v8078 = vpop.f32.mrf.mxu0
      %8079 = vmatprep.mubr.f32.mxu0 0.0
      %8080 = vmatmul.mubr.f32.gmra.mxu0 %v7913
      %v8081 = vpop.f32.mrf.mxu0
      %v8082 = vadd.f32 0.0, %v8081
      %v8083 = vpop.f32.mrf.mxu0
      %8084 = vmatprep.mubr.f32.mxu0 0.0
      %8085 = vmatmul.mubr.f32.gmra.mxu0 %v7916
      %v8086 = vpop.f32.mrf.mxu0
      %v8087 = vadd.f32 0.0, %v8086
      %v8088 = vpop.f32.mrf.mxu0
      %8089 = vmatprep.mubr.f32.mxu0 0.0
      %8090 = vmatmul.mubr.f32.gmra.mxu0 %v7919
      %v8091 = vpop.f32.mrf.mxu0
      %v8092 = vadd.f32 0.0, %v8091
      %v8093 = vpop.f32.mrf.mxu0
      %8094 = vdwg.mxu0
      %v8095 = vadd.f32 %v7835, %v7988
      %v8096 = vadd.f32 %v7836, %v7990
      %v8097 = vadd.f32 %v7837, %v8077
      %v8098 = vadd.f32 %v7838, %v7994
      %v8099 = vadd.f32 %v7839, %v7996
      %v8100 = vadd.f32 %v7840, %v8082
      %v8101 = vadd.f32 %v7841, %v8000
      %v8102 = vadd.f32 %v7842, %v8002
      %v8103 = vadd.f32 %v7843, %v8087
      %v8104 = vadd.f32 %v7844, %v8006
      %v8105 = vadd.f32 %v7845, %v8008
      %v8106 = vadd.f32 %v7846, %v8092
      %v8107 = vld [vmem:[%s6] sm:$0xff]
      %v8108 = vld [vmem:[%s6 + $0x8] sm:$0xff]
      %v8109 = vld [vmem:[%s6 + $0x10] sm:$0xff]
      %v8110 = vld [vmem:[%s6 + $0x18] sm:$0xff]
      %8112 = vset.pattern.permute.xlu0 0
      %8113 = vperm.xlu0 %8112, %v8107
      %v8114 = vpop.permute.xlu0 %8113
      %8117 = vset.pattern.permute.xlu0 0
      %8118 = vperm.xlu0 %8117, %v8108
      %v8119 = vpop.permute.xlu0 %8118
      %8122 = vset.pattern.permute.xlu0 0
      %8123 = vperm.xlu0 %8122, %v8109
      %v8124 = vpop.permute.xlu0 %8123
      %8127 = vset.pattern.permute.xlu0 0
      %8128 = vperm.xlu0 %8127, %v8110
      %v8129 = vpop.permute.xlu0 %8128
      %v8131 = vadd.f32 %v8095, %v8114
      %v8132 = vadd.f32 %v8096, %v8114
      %v8133 = vadd.f32 %v8097, %v8114
      %v8134 = vadd.f32 %v8098, %v8119
      %v8135 = vadd.f32 %v8099, %v8119
      %v8136 = vadd.f32 %v8100, %v8119
      %v8137 = vadd.f32 %v8101, %v8124
      %v8138 = vadd.f32 %v8102, %v8124
      %v8139 = vadd.f32 %v8103, %v8124
      %v8140 = vadd.f32 %v8104, %v8129
      %v8141 = vadd.f32 %v8105, %v8129
      %v8142 = vadd.f32 %v8106, %v8129
      %vm8143 = vcmp.ge.f32.partialorder %v8131, 0.0
      %vm8144 = vcmp.ge.f32.partialorder %v8132, 0.0
      %vm8145 = vcmp.ge.f32.partialorder %v8133, 0.0
      %vm8146 = vcmp.ge.f32.partialorder %v8134, 0.0
      %vm8147 = vcmp.ge.f32.partialorder %v8135, 0.0
      %vm8148 = vcmp.ge.f32.partialorder %v8136, 0.0
      %vm8149 = vcmp.ge.f32.partialorder %v8137, 0.0
      %vm8150 = vcmp.ge.f32.partialorder %v8138, 0.0
      %vm8151 = vcmp.ge.f32.partialorder %v8139, 0.0
      %vm8152 = vcmp.ge.f32.partialorder %v8140, 0.0
      %vm8153 = vcmp.ge.f32.partialorder %v8141, 0.0
      %vm8154 = vcmp.ge.f32.partialorder %v8142, 0.0
      %v8155 = vmul.f32 %v8131, 0.01
      %v8156 = vmul.f32 %v8132, 0.01
      %v8157 = vmul.f32 %v8133, 0.01
      %v8158 = vmul.f32 %v8134, 0.01
      %v8159 = vmul.f32 %v8135, 0.01
      %v8160 = vmul.f32 %v8136, 0.01
      %v8161 = vmul.f32 %v8137, 0.01
      %v8162 = vmul.f32 %v8138, 0.01
      %v8163 = vmul.f32 %v8139, 0.01
      %v8164 = vmul.f32 %v8140, 0.01
      %v8165 = vmul.f32 %v8141, 0.01
      %v8166 = vmul.f32 %v8142, 0.01
      %v8167 = vsel %vm8143, %v8131, %v8155
      %v8168 = vsel %vm8144, %v8132, %v8156
      %v8169 = vsel %vm8145, %v8133, %v8157
      %v8170 = vsel %vm8146, %v8134, %v8158
      %v8171 = vsel %vm8147, %v8135, %v8159
      %v8172 = vsel %vm8148, %v8136, %v8160
      %v8173 = vsel %vm8149, %v8137, %v8161
      %v8174 = vsel %vm8150, %v8138, %v8162
      %v8175 = vsel %vm8151, %v8139, %v8163
      %v8176 = vsel %vm8152, %v8140, %v8164
      %v8177 = vsel %vm8153, %v8141, %v8165
      %v8178 = vsel %vm8154, %v8142, %v8166
      %v8179 = vld [vmem:[%s11] sm:$0x7]
      %v8181 = vlaneseq
      %v8182 = vshrl.u32 %v8181, 7
      %v8183 = vsub.s32 0, %v8182
      %v8184 = vrot.slane %v8179, %v8183
      %v8185 = vlaneseq
      %v8186 = vshrl.u32 %v8185, 7
      %v8187 = vsub.s32 1, %v8186
      %v8188 = vrot.slane %v8179, %v8187
      %v8189 = vlaneseq
      %v8190 = vshrl.u32 %v8189, 7
      %v8191 = vsub.s32 2, %v8190
      %v8192 = vrot.slane %v8179, %v8191
      %v8196 = vmul.f32 %v8167, %v8184
      %v8197 = vmul.f32 %v8168, %v8188
      %v8198 = vmul.f32 %v8169, %v8192
      %v8199 = vmul.f32 %v8170, %v8184
      %v8200 = vmul.f32 %v8171, %v8188
      %v8201 = vmul.f32 %v8172, %v8192
      %v8202 = vmul.f32 %v8173, %v8184
      %v8203 = vmul.f32 %v8174, %v8188
      %v8204 = vmul.f32 %v8175, %v8192
      %v8205 = vmul.f32 %v8176, %v8184
      %v8206 = vmul.f32 %v8177, %v8188
      %v8207 = vmul.f32 %v8178, %v8192
      %8220 = vrot.lane.b32.xlu0 %v8196, 87
      %v8221 = vpop.permute.xlu0 %8220
      %8222 = vrot.lane.b32.xlu0 %v8197, 87
      %v8223 = vpop.permute.xlu0 %8222
      %8224 = vrot.lane.b32.xlu0 %v8198, 87
      %v8225 = vpop.permute.xlu0 %8224
      %8226 = vrot.lane.b32.xlu0 %v8199, 87
      %v8227 = vpop.permute.xlu0 %8226
      %8228 = vrot.lane.b32.xlu0 %v8200, 87
      %v8229 = vpop.permute.xlu0 %8228
      %8230 = vrot.lane.b32.xlu0 %v8201, 87
      %v8231 = vpop.permute.xlu0 %8230
      %8232 = vrot.lane.b32.xlu0 %v8202, 87
      %v8233 = vpop.permute.xlu0 %8232
      %8234 = vrot.lane.b32.xlu0 %v8203, 87
      %v8235 = vpop.permute.xlu0 %8234
      %8236 = vrot.lane.b32.xlu0 %v8204, 87
      %v8237 = vpop.permute.xlu0 %8236
      %8238 = vrot.lane.b32.xlu0 %v8205, 87
      %v8239 = vpop.permute.xlu0 %8238
      %8240 = vrot.lane.b32.xlu0 %v8206, 87
      %v8241 = vpop.permute.xlu0 %8240
      %8242 = vrot.lane.b32.xlu0 %v8207, 87
      %v8243 = vpop.permute.xlu0 %8242
      %v8244 = vsel %vm5762, %v8221, %v8223
      %v8245 = vsel %vm5762, %v8223, %v8225
      %v8246 = vsel %vm5762, %v8227, %v8229
      %v8247 = vsel %vm5762, %v8229, %v8231
      %v8248 = vsel %vm5762, %v8233, %v8235
      %v8249 = vsel %vm5762, %v8235, %v8237
      %v8250 = vsel %vm5762, %v8239, %v8241
      %v8251 = vsel %vm5762, %v8241, %v8243
      %vm8268 = vcmask 1048248
      %8269 = vst.msk [vmem:[#allocation4] sm:$0xff] %vm8268, %v8221
      %8270 = vst [vmem:[#allocation4 + $0x8] sm:$0xff] %v8244
      %8271 = vst [vmem:[#allocation4 + $0x10] sm:$0xff] %v8245
      %vm8272 = vcmask 662528
      %8273 = vst.msk [vmem:[#allocation4 + $0x18] sm:$0xff] %vm8272, %v8225
      %8274 = vst.msk [vmem:[#allocation4 + $0x28] sm:$0xff] %vm8268, %v8227
      %8275 = vst [vmem:[#allocation4 + $0x30] sm:$0xff] %v8246
      %8276 = vst [vmem:[#allocation4 + $0x38] sm:$0xff] %v8247
      %8277 = vst.msk [vmem:[#allocation4 + $0x40] sm:$0xff] %vm8272, %v8231
      %8278 = vst.msk [vmem:[#allocation4 + $0x50] sm:$0xff] %vm8268, %v8233
      %8279 = vst [vmem:[#allocation4 + $0x58] sm:$0xff] %v8248
      %8280 = vst [vmem:[#allocation4 + $0x60] sm:$0xff] %v8249
      %8281 = vst.msk [vmem:[#allocation4 + $0x68] sm:$0xff] %vm8272, %v8237
      %8282 = vst.msk [vmem:[#allocation4 + $0x78] sm:$0xff] %vm8268, %v8239
      %8283 = vst [vmem:[#allocation4 + $0x80] sm:$0xff] %v8250
      %8284 = vst [vmem:[#allocation4 + $0x88] sm:$0xff] %v8251
      %8285 = vst.msk [vmem:[#allocation4 + $0x90] sm:$0xff] %vm8272, %v8243
      %v8286 = vld [vmem:[#allocation4] sm:$0xff]
      %v8287 = vld [vmem:[#allocation4 + $0x28] sm:$0xff]
      %v8288 = vld [vmem:[#allocation4 + $0x50] sm:$0xff]
      %v8289 = vld [vmem:[#allocation4 + $0x78] sm:$0xff]
      %v8290 = vld [vmem:[%s7] sm:$0xff]
      %v8291 = vld [vmem:[%s7 + $0x8] sm:$0xff]
      %v8292 = vld [vmem:[%s7 + $0x10] sm:$0xff]
      %v8293 = vld [vmem:[%s7 + $0x18] sm:$0xff]
      %s8294 = scalar_lea.vmem %s7, 32
      %v8295 = vld [vmem:[%s8294] sm:$0xff]
      %v8296 = vld [vmem:[%s8294 + $0x8] sm:$0xff]
      %v8297 = vld [vmem:[%s8294 + $0x10] sm:$0xff]
      %v8298 = vld [vmem:[%s8294 + $0x18] sm:$0xff]
      %8303 = vrot.lane.b32.xlu0 %v8286, 120
      %v8304 = vpop.permute.xlu0 %8303
      %8305 = vrot.lane.b32.xlu0 %v8287, 120
      %v8306 = vpop.permute.xlu0 %8305
      %8307 = vrot.lane.b32.xlu0 %v8288, 120
      %v8308 = vpop.permute.xlu0 %8307
      %8309 = vrot.lane.b32.xlu0 %v8289, 120
      %v8310 = vpop.permute.xlu0 %8309
      %v8316 = vsel %vm2330, %v8295, 0
      %v8319 = vsel %vm2330, %v8296, 0
      %v8322 = vsel %vm2330, %v8297, 0
      %v8325 = vsel %vm2330, %v8298, 0
      %8327 = vmatprep.subr.mxu0 0.0
      %8328 = vmatpush1.msra.mxu0 0.0
      %8329 = vmatprep.subr.mxu0 0.0
      %8330 = vmatpush1.msra.mxu0 0.0
      %8331 = vmatprep.subr.mxu0 0.0
      %8332 = vmatpush1.msra.mxu0 0.0
      %8333 = vmatprep.subr.mxu0 0.0
      %8334 = vmatpush1.msra.mxu0 0.0
      %8335 = vmatprep.subr.mxu0 0.0
      %8336 = vmatpush1.msra.mxu0 0.0
      %8337 = vmatprep.subr.mxu0 0.0
      %8338 = vmatpush1.msra.mxu0 0.0
      %8339 = vmatprep.subr.mxu0 0.0
      %8340 = vmatpush1.msra.mxu0 0.0
      %8341 = vmatprep.subr.mxu0 0.0
      %8342 = vmatpush1.msra.mxu0 0.0
      %8343 = vmatprep.subr.mxu0 0.0
      %8344 = vmatpush1.msra.mxu0 0.0
      %8345 = vmatprep.subr.mxu0 0.0
      %8346 = vmatpush1.msra.mxu0 0.0
      %8347 = vmatprep.subr.mxu0 0.0
      %8348 = vmatpush1.msra.mxu0 0.0
      %8349 = vmatprep.subr.mxu0 0.0
      %8350 = vmatpush1.msra.mxu0 0.0
      %8351 = vmatprep.subr.mxu0 0.0
      %8352 = vmatpush1.msra.mxu0 %v8310
      %8353 = vmatprep.subr.mxu0 0.0
      %8354 = vmatpush1.msra.mxu0 %v8308
      %8355 = vmatprep.subr.mxu0 0.0
      %8356 = vmatpush1.msra.mxu0 %v8306
      %8357 = vmatprep.subr.mxu0 0.0
      %8358 = vmatpush1.msra.mxu0 %v8304
      %8359 = vmatprep.subr.mxu0 0.0
      %8360 = vmatpush2.msra.mxu0 0.0
      %8361 = vmatprep.subr.mxu0 0.0
      %8362 = vmatpush2.msra.mxu0 0.0
      %8363 = vmatprep.subr.mxu0 0.0
      %8364 = vmatpush2.msra.mxu0 0.0
      %8365 = vmatprep.subr.mxu0 0.0
      %8366 = vmatpush2.msra.mxu0 0.0
      %8367 = vmatprep.subr.mxu0 0.0
      %8368 = vmatpush2.msra.mxu0 0.0
      %8369 = vmatprep.subr.mxu0 0.0
      %8370 = vmatpush2.msra.mxu0 0.0
      %8371 = vmatprep.subr.mxu0 0.0
      %8372 = vmatpush2.msra.mxu0 0.0
      %8373 = vmatprep.subr.mxu0 0.0
      %8374 = vmatpush2.msra.mxu0 0.0
      %8375 = vmatprep.subr.mxu0 0.0
      %8376 = vmatpush2.msra.mxu0 0.0
      %8377 = vmatprep.subr.mxu0 0.0
      %8378 = vmatpush2.msra.mxu0 0.0
      %8379 = vmatprep.subr.mxu0 0.0
      %8380 = vmatpush2.msra.mxu0 0.0
      %8381 = vmatprep.subr.mxu0 0.0
      %8382 = vmatpush2.msra.mxu0 0.0
      %8383 = vmatprep.subr.mxu0 0.0
      %8384 = vmatpush2.msra.mxu0 0.0
      %8385 = vmatprep.subr.mxu0 0.0
      %8386 = vmatpush2.msra.mxu0 0.0
      %8387 = vmatprep.subr.mxu0 0.0
      %8388 = vmatpush2.msra.mxu0 0.0
      %8389 = vmatprep.subr.mxu0 0.0
      %8390 = vmatpush2.msra.mxu0 0.0
      %8391 = vmatprep.mubr.f32.mxu0 0.0
      %8392 = vmatmul.mubr.f32.gmra.mxu0 %v8316
      %v8393 = vpop.f32.mrf.mxu0
      %v8394 = vadd.f32 0.0, %v8393
      %v8395 = vpop.f32.mrf.mxu0
      %8396 = vmatprep.mubr.f32.mxu0 0.0
      %8397 = vmatmul.mubr.f32.gmra.mxu0 %v8319
      %v8398 = vpop.f32.mrf.mxu0
      %v8399 = vadd.f32 0.0, %v8398
      %v8400 = vpop.f32.mrf.mxu0
      %8401 = vmatprep.mubr.f32.mxu0 0.0
      %8402 = vmatmul.mubr.f32.gmra.mxu0 %v8322
      %v8403 = vpop.f32.mrf.mxu0
      %v8404 = vadd.f32 0.0, %v8403
      %v8405 = vpop.f32.mrf.mxu0
      %8406 = vmatprep.mubr.f32.mxu0 0.0
      %8407 = vmatmul.mubr.f32.gmra.mxu0 %v8325
      %v8408 = vpop.f32.mrf.mxu0
      %v8409 = vadd.f32 0.0, %v8408
      %v8410 = vpop.f32.mrf.mxu0
      %8411 = vdwg.mxu0
      %v8413 = vsel %vm2330, %v8290, 0
      %v8416 = vsel %vm2330, %v8291, 0
      %v8419 = vsel %vm2330, %v8292, 0
      %v8422 = vsel %vm2330, %v8293, 0
      %8424 = vmatprep.subr.mxu0 0.0
      %8425 = vmatpush1.msra.mxu0 0.0
      %8426 = vmatprep.subr.mxu0 0.0
      %8427 = vmatpush1.msra.mxu0 0.0
      %8428 = vmatprep.subr.mxu0 0.0
      %8429 = vmatpush1.msra.mxu0 0.0
      %8430 = vmatprep.subr.mxu0 0.0
      %8431 = vmatpush1.msra.mxu0 0.0
      %8432 = vmatprep.subr.mxu0 0.0
      %8433 = vmatpush1.msra.mxu0 0.0
      %8434 = vmatprep.subr.mxu0 0.0
      %8435 = vmatpush1.msra.mxu0 0.0
      %8436 = vmatprep.subr.mxu0 0.0
      %8437 = vmatpush1.msra.mxu0 0.0
      %8438 = vmatprep.subr.mxu0 0.0
      %8439 = vmatpush1.msra.mxu0 0.0
      %8440 = vmatprep.subr.mxu0 0.0
      %8441 = vmatpush1.msra.mxu0 0.0
      %8442 = vmatprep.subr.mxu0 0.0
      %8443 = vmatpush1.msra.mxu0 0.0
      %8444 = vmatprep.subr.mxu0 0.0
      %8445 = vmatpush1.msra.mxu0 0.0
      %8446 = vmatprep.subr.mxu0 0.0
      %8447 = vmatpush1.msra.mxu0 0.0
      %8448 = vmatprep.subr.mxu0 0.0
      %8449 = vmatpush1.msra.mxu0 %v8289
      %8450 = vmatprep.subr.mxu0 0.0
      %8451 = vmatpush1.msra.mxu0 %v8288
      %8452 = vmatprep.subr.mxu0 0.0
      %8453 = vmatpush1.msra.mxu0 %v8287
      %8454 = vmatprep.subr.mxu0 0.0
      %8455 = vmatpush1.msra.mxu0 %v8286
      %8456 = vmatprep.subr.mxu0 0.0
      %8457 = vmatpush2.msra.mxu0 0.0
      %8458 = vmatprep.subr.mxu0 0.0
      %8459 = vmatpush2.msra.mxu0 0.0
      %8460 = vmatprep.subr.mxu0 0.0
      %8461 = vmatpush2.msra.mxu0 0.0
      %8462 = vmatprep.subr.mxu0 0.0
      %8463 = vmatpush2.msra.mxu0 0.0
      %8464 = vmatprep.subr.mxu0 0.0
      %8465 = vmatpush2.msra.mxu0 0.0
      %8466 = vmatprep.subr.mxu0 0.0
      %8467 = vmatpush2.msra.mxu0 0.0
      %8468 = vmatprep.subr.mxu0 0.0
      %8469 = vmatpush2.msra.mxu0 0.0
      %8470 = vmatprep.subr.mxu0 0.0
      %8471 = vmatpush2.msra.mxu0 0.0
      %8472 = vmatprep.subr.mxu0 0.0
      %8473 = vmatpush2.msra.mxu0 0.0
      %8474 = vmatprep.subr.mxu0 0.0
      %8475 = vmatpush2.msra.mxu0 0.0
      %8476 = vmatprep.subr.mxu0 0.0
      %8477 = vmatpush2.msra.mxu0 0.0
      %8478 = vmatprep.subr.mxu0 0.0
      %8479 = vmatpush2.msra.mxu0 0.0
      %8480 = vmatprep.subr.mxu0 0.0
      %8481 = vmatpush2.msra.mxu0 0.0
      %8482 = vmatprep.subr.mxu0 0.0
      %8483 = vmatpush2.msra.mxu0 0.0
      %8484 = vmatprep.subr.mxu0 0.0
      %8485 = vmatpush2.msra.mxu0 0.0
      %8486 = vmatprep.subr.mxu0 0.0
      %8487 = vmatpush2.msra.mxu0 0.0
      %8488 = vmatprep.mubr.f32.mxu0 0.0
      %8489 = vmatmul.mubr.f32.gmra.mxu0 %v8413
      %v8490 = vpop.f32.mrf.mxu0
      %v8491 = vadd.f32 %v8394, %v8490
      %v8492 = vpop.f32.mrf.mxu0
      %8493 = vmatprep.mubr.f32.mxu0 0.0
      %8494 = vmatmul.mubr.f32.gmra.mxu0 %v8416
      %v8495 = vpop.f32.mrf.mxu0
      %v8496 = vadd.f32 %v8399, %v8495
      %v8497 = vpop.f32.mrf.mxu0
      %8498 = vmatprep.mubr.f32.mxu0 0.0
      %8499 = vmatmul.mubr.f32.gmra.mxu0 %v8419
      %v8500 = vpop.f32.mrf.mxu0
      %v8501 = vadd.f32 %v8404, %v8500
      %v8502 = vpop.f32.mrf.mxu0
      %8503 = vmatprep.mubr.f32.mxu0 0.0
      %8504 = vmatmul.mubr.f32.gmra.mxu0 %v8422
      %v8505 = vpop.f32.mrf.mxu0
      %v8506 = vadd.f32 %v8409, %v8505
      %v8507 = vpop.f32.mrf.mxu0
      %8508 = vdwg.mxu0
      %s8509 = scalar_lea.vmem %s7, 64
      %v8510 = vld [vmem:[%s8509] sm:$0xff]
      %v8511 = vld [vmem:[%s8509 + $0x8] sm:$0xff]
      %v8512 = vld [vmem:[%s8509 + $0x10] sm:$0xff]
      %v8513 = vld [vmem:[%s8509 + $0x18] sm:$0xff]
      %8514 = vrot.lane.b32.xlu0 %v8286, 112
      %v8515 = vpop.permute.xlu0 %8514
      %8516 = vrot.lane.b32.xlu0 %v8287, 112
      %v8517 = vpop.permute.xlu0 %8516
      %8518 = vrot.lane.b32.xlu0 %v8288, 112
      %v8519 = vpop.permute.xlu0 %8518
      %8520 = vrot.lane.b32.xlu0 %v8289, 112
      %v8521 = vpop.permute.xlu0 %8520
      %v8527 = vsel %vm2330, %v8510, 0
      %v8530 = vsel %vm2330, %v8511, 0
      %v8533 = vsel %vm2330, %v8512, 0
      %v8536 = vsel %vm2330, %v8513, 0
      %8538 = vmatprep.subr.mxu0 0.0
      %8539 = vmatpush1.msra.mxu0 0.0
      %8540 = vmatprep.subr.mxu0 0.0
      %8541 = vmatpush1.msra.mxu0 0.0
      %8542 = vmatprep.subr.mxu0 0.0
      %8543 = vmatpush1.msra.mxu0 0.0
      %8544 = vmatprep.subr.mxu0 0.0
      %8545 = vmatpush1.msra.mxu0 0.0
      %8546 = vmatprep.subr.mxu0 0.0
      %8547 = vmatpush1.msra.mxu0 0.0
      %8548 = vmatprep.subr.mxu0 0.0
      %8549 = vmatpush1.msra.mxu0 0.0
      %8550 = vmatprep.subr.mxu0 0.0
      %8551 = vmatpush1.msra.mxu0 0.0
      %8552 = vmatprep.subr.mxu0 0.0
      %8553 = vmatpush1.msra.mxu0 0.0
      %8554 = vmatprep.subr.mxu0 0.0
      %8555 = vmatpush1.msra.mxu0 0.0
      %8556 = vmatprep.subr.mxu0 0.0
      %8557 = vmatpush1.msra.mxu0 0.0
      %8558 = vmatprep.subr.mxu0 0.0
      %8559 = vmatpush1.msra.mxu0 0.0
      %8560 = vmatprep.subr.mxu0 0.0
      %8561 = vmatpush1.msra.mxu0 0.0
      %8562 = vmatprep.subr.mxu0 0.0
      %8563 = vmatpush1.msra.mxu0 %v8521
      %8564 = vmatprep.subr.mxu0 0.0
      %8565 = vmatpush1.msra.mxu0 %v8519
      %8566 = vmatprep.subr.mxu0 0.0
      %8567 = vmatpush1.msra.mxu0 %v8517
      %8568 = vmatprep.subr.mxu0 0.0
      %8569 = vmatpush1.msra.mxu0 %v8515
      %8570 = vmatprep.subr.mxu0 0.0
      %8571 = vmatpush2.msra.mxu0 0.0
      %8572 = vmatprep.subr.mxu0 0.0
      %8573 = vmatpush2.msra.mxu0 0.0
      %8574 = vmatprep.subr.mxu0 0.0
      %8575 = vmatpush2.msra.mxu0 0.0
      %8576 = vmatprep.subr.mxu0 0.0
      %8577 = vmatpush2.msra.mxu0 0.0
      %8578 = vmatprep.subr.mxu0 0.0
      %8579 = vmatpush2.msra.mxu0 0.0
      %8580 = vmatprep.subr.mxu0 0.0
      %8581 = vmatpush2.msra.mxu0 0.0
      %8582 = vmatprep.subr.mxu0 0.0
      %8583 = vmatpush2.msra.mxu0 0.0
      %8584 = vmatprep.subr.mxu0 0.0
      %8585 = vmatpush2.msra.mxu0 0.0
      %8586 = vmatprep.subr.mxu0 0.0
      %8587 = vmatpush2.msra.mxu0 0.0
      %8588 = vmatprep.subr.mxu0 0.0
      %8589 = vmatpush2.msra.mxu0 0.0
      %8590 = vmatprep.subr.mxu0 0.0
      %8591 = vmatpush2.msra.mxu0 0.0
      %8592 = vmatprep.subr.mxu0 0.0
      %8593 = vmatpush2.msra.mxu0 0.0
      %8594 = vmatprep.subr.mxu0 0.0
      %8595 = vmatpush2.msra.mxu0 0.0
      %8596 = vmatprep.subr.mxu0 0.0
      %8597 = vmatpush2.msra.mxu0 0.0
      %8598 = vmatprep.subr.mxu0 0.0
      %8599 = vmatpush2.msra.mxu0 0.0
      %8600 = vmatprep.subr.mxu0 0.0
      %8601 = vmatpush2.msra.mxu0 0.0
      %8602 = vmatprep.mubr.f32.mxu0 0.0
      %8603 = vmatmul.mubr.f32.gmra.mxu0 %v8527
      %v8604 = vpop.f32.mrf.mxu0
      %v8605 = vadd.f32 0.0, %v8604
      %v8606 = vpop.f32.mrf.mxu0
      %8607 = vmatprep.mubr.f32.mxu0 0.0
      %8608 = vmatmul.mubr.f32.gmra.mxu0 %v8530
      %v8609 = vpop.f32.mrf.mxu0
      %v8610 = vadd.f32 0.0, %v8609
      %v8611 = vpop.f32.mrf.mxu0
      %8612 = vmatprep.mubr.f32.mxu0 0.0
      %8613 = vmatmul.mubr.f32.gmra.mxu0 %v8533
      %v8614 = vpop.f32.mrf.mxu0
      %v8615 = vadd.f32 0.0, %v8614
      %v8616 = vpop.f32.mrf.mxu0
      %8617 = vmatprep.mubr.f32.mxu0 0.0
      %8618 = vmatmul.mubr.f32.gmra.mxu0 %v8536
      %v8619 = vpop.f32.mrf.mxu0
      %v8620 = vadd.f32 0.0, %v8619
      %v8621 = vpop.f32.mrf.mxu0
      %8622 = vdwg.mxu0
      %v8623 = vadd.f32 %v8491, %v8605
      %v8624 = vadd.f32 %v8496, %v8610
      %v8625 = vadd.f32 %v8501, %v8615
      %v8626 = vadd.f32 %v8506, %v8620
      %v8627 = vld [vmem:[#allocation4 + $0x8] sm:$0xff]
      %v8628 = vld [vmem:[#allocation4 + $0x10] sm:$0xff]
      %v8629 = vld [vmem:[#allocation4 + $0x30] sm:$0xff]
      %v8630 = vld [vmem:[#allocation4 + $0x38] sm:$0xff]
      %v8631 = vld [vmem:[#allocation4 + $0x58] sm:$0xff]
      %v8632 = vld [vmem:[#allocation4 + $0x60] sm:$0xff]
      %v8633 = vld [vmem:[#allocation4 + $0x80] sm:$0xff]
      %v8634 = vld [vmem:[#allocation4 + $0x88] sm:$0xff]
      %s8635 = scalar_lea.vmem %s7, 96
      %v8636 = vld [vmem:[%s8635] sm:$0xff]
      %v8637 = vld [vmem:[%s8635 + $0x8] sm:$0xff]
      %v8638 = vld [vmem:[%s8635 + $0x10] sm:$0xff]
      %v8639 = vld [vmem:[%s8635 + $0x18] sm:$0xff]
      %8648 = vrot.lane.b32.xlu0 %v8627, 32
      %v8649 = vpop.permute.xlu0 %8648
      %8650 = vrot.lane.b32.xlu0 %v8628, 32
      %v8651 = vpop.permute.xlu0 %8650
      %8652 = vrot.lane.b32.xlu0 %v8629, 32
      %v8653 = vpop.permute.xlu0 %8652
      %8654 = vrot.lane.b32.xlu0 %v8630, 32
      %v8655 = vpop.permute.xlu0 %8654
      %8656 = vrot.lane.b32.xlu0 %v8631, 32
      %v8657 = vpop.permute.xlu0 %8656
      %8658 = vrot.lane.b32.xlu0 %v8632, 32
      %v8659 = vpop.permute.xlu0 %8658
      %8660 = vrot.lane.b32.xlu0 %v8633, 32
      %v8661 = vpop.permute.xlu0 %8660
      %8662 = vrot.lane.b32.xlu0 %v8634, 32
      %v8663 = vpop.permute.xlu0 %8662
      %v8664 = vsel %vm2330, %v8649, %v8651
      %v8665 = vsel %vm2330, %v8653, %v8655
      %v8666 = vsel %vm2330, %v8657, %v8659
      %v8667 = vsel %vm2330, %v8661, %v8663
      %v8673 = vsel %vm2330, %v8636, 0
      %v8676 = vsel %vm2330, %v8637, 0
      %v8679 = vsel %vm2330, %v8638, 0
      %v8682 = vsel %vm2330, %v8639, 0
      %8684 = vmatprep.subr.mxu0 0.0
      %8685 = vmatpush1.msra.mxu0 0.0
      %8686 = vmatprep.subr.mxu0 0.0
      %8687 = vmatpush1.msra.mxu0 0.0
      %8688 = vmatprep.subr.mxu0 0.0
      %8689 = vmatpush1.msra.mxu0 0.0
      %8690 = vmatprep.subr.mxu0 0.0
      %8691 = vmatpush1.msra.mxu0 0.0
      %8692 = vmatprep.subr.mxu0 0.0
      %8693 = vmatpush1.msra.mxu0 0.0
      %8694 = vmatprep.subr.mxu0 0.0
      %8695 = vmatpush1.msra.mxu0 0.0
      %8696 = vmatprep.subr.mxu0 0.0
      %8697 = vmatpush1.msra.mxu0 0.0
      %8698 = vmatprep.subr.mxu0 0.0
      %8699 = vmatpush1.msra.mxu0 0.0
      %8700 = vmatprep.subr.mxu0 0.0
      %8701 = vmatpush1.msra.mxu0 0.0
      %8702 = vmatprep.subr.mxu0 0.0
      %8703 = vmatpush1.msra.mxu0 0.0
      %8704 = vmatprep.subr.mxu0 0.0
      %8705 = vmatpush1.msra.mxu0 0.0
      %8706 = vmatprep.subr.mxu0 0.0
      %8707 = vmatpush1.msra.mxu0 0.0
      %8708 = vmatprep.subr.mxu0 0.0
      %8709 = vmatpush1.msra.mxu0 %v8667
      %8710 = vmatprep.subr.mxu0 0.0
      %8711 = vmatpush1.msra.mxu0 %v8666
      %8712 = vmatprep.subr.mxu0 0.0
      %8713 = vmatpush1.msra.mxu0 %v8665
      %8714 = vmatprep.subr.mxu0 0.0
      %8715 = vmatpush1.msra.mxu0 %v8664
      %8716 = vmatprep.subr.mxu0 0.0
      %8717 = vmatpush2.msra.mxu0 0.0
      %8718 = vmatprep.subr.mxu0 0.0
      %8719 = vmatpush2.msra.mxu0 0.0
      %8720 = vmatprep.subr.mxu0 0.0
      %8721 = vmatpush2.msra.mxu0 0.0
      %8722 = vmatprep.subr.mxu0 0.0
      %8723 = vmatpush2.msra.mxu0 0.0
      %8724 = vmatprep.subr.mxu0 0.0
      %8725 = vmatpush2.msra.mxu0 0.0
      %8726 = vmatprep.subr.mxu0 0.0
      %8727 = vmatpush2.msra.mxu0 0.0
      %8728 = vmatprep.subr.mxu0 0.0
      %8729 = vmatpush2.msra.mxu0 0.0
      %8730 = vmatprep.subr.mxu0 0.0
      %8731 = vmatpush2.msra.mxu0 0.0
      %8732 = vmatprep.subr.mxu0 0.0
      %8733 = vmatpush2.msra.mxu0 0.0
      %8734 = vmatprep.subr.mxu0 0.0
      %8735 = vmatpush2.msra.mxu0 0.0
      %8736 = vmatprep.subr.mxu0 0.0
      %8737 = vmatpush2.msra.mxu0 0.0
      %8738 = vmatprep.subr.mxu0 0.0
      %8739 = vmatpush2.msra.mxu0 0.0
      %8740 = vmatprep.subr.mxu0 0.0
      %8741 = vmatpush2.msra.mxu0 0.0
      %8742 = vmatprep.subr.mxu0 0.0
      %8743 = vmatpush2.msra.mxu0 0.0
      %8744 = vmatprep.subr.mxu0 0.0
      %8745 = vmatpush2.msra.mxu0 0.0
      %8746 = vmatprep.subr.mxu0 0.0
      %8747 = vmatpush2.msra.mxu0 0.0
      %8748 = vmatprep.mubr.f32.mxu0 0.0
      %8749 = vmatmul.mubr.f32.gmra.mxu0 %v8673
      %v8750 = vpop.f32.mrf.mxu0
      %v8751 = vadd.f32 0.0, %v8750
      %v8752 = vpop.f32.mrf.mxu0
      %8753 = vmatprep.mubr.f32.mxu0 0.0
      %8754 = vmatmul.mubr.f32.gmra.mxu0 %v8676
      %v8755 = vpop.f32.mrf.mxu0
      %v8756 = vadd.f32 0.0, %v8755
      %v8757 = vpop.f32.mrf.mxu0
      %8758 = vmatprep.mubr.f32.mxu0 0.0
      %8759 = vmatmul.mubr.f32.gmra.mxu0 %v8679
      %v8760 = vpop.f32.mrf.mxu0
      %v8761 = vadd.f32 0.0, %v8760
      %v8762 = vpop.f32.mrf.mxu0
      %8763 = vmatprep.mubr.f32.mxu0 0.0
      %8764 = vmatmul.mubr.f32.gmra.mxu0 %v8682
      %v8765 = vpop.f32.mrf.mxu0
      %v8766 = vadd.f32 0.0, %v8765
      %v8767 = vpop.f32.mrf.mxu0
      %8768 = vdwg.mxu0
      %v8769 = vadd.f32 %v8623, %v8751
      %v8770 = vadd.f32 %v8624, %v8756
      %v8771 = vadd.f32 %v8625, %v8761
      %v8772 = vadd.f32 %v8626, %v8766
      %s8773 = scalar_lea.vmem %s7, 128
      %v8774 = vld [vmem:[%s8773] sm:$0xff]
      %v8775 = vld [vmem:[%s8773 + $0x8] sm:$0xff]
      %v8776 = vld [vmem:[%s8773 + $0x10] sm:$0xff]
      %v8777 = vld [vmem:[%s8773 + $0x18] sm:$0xff]
      %8778 = vrot.lane.b32.xlu0 %v8627, 24
      %v8779 = vpop.permute.xlu0 %8778
      %8780 = vrot.lane.b32.xlu0 %v8628, 24
      %v8781 = vpop.permute.xlu0 %8780
      %8782 = vrot.lane.b32.xlu0 %v8629, 24
      %v8783 = vpop.permute.xlu0 %8782
      %8784 = vrot.lane.b32.xlu0 %v8630, 24
      %v8785 = vpop.permute.xlu0 %8784
      %8786 = vrot.lane.b32.xlu0 %v8631, 24
      %v8787 = vpop.permute.xlu0 %8786
      %8788 = vrot.lane.b32.xlu0 %v8632, 24
      %v8789 = vpop.permute.xlu0 %8788
      %8790 = vrot.lane.b32.xlu0 %v8633, 24
      %v8791 = vpop.permute.xlu0 %8790
      %8792 = vrot.lane.b32.xlu0 %v8634, 24
      %v8793 = vpop.permute.xlu0 %8792
      %v8794 = vsel %vm7884, %v8779, %v8781
      %v8795 = vsel %vm7884, %v8783, %v8785
      %v8796 = vsel %vm7884, %v8787, %v8789
      %v8797 = vsel %vm7884, %v8791, %v8793
      %v8803 = vsel %vm2330, %v8774, 0
      %v8806 = vsel %vm2330, %v8775, 0
      %v8809 = vsel %vm2330, %v8776, 0
      %v8812 = vsel %vm2330, %v8777, 0
      %8814 = vmatprep.subr.mxu0 0.0
      %8815 = vmatpush1.msra.mxu0 0.0
      %8816 = vmatprep.subr.mxu0 0.0
      %8817 = vmatpush1.msra.mxu0 0.0
      %8818 = vmatprep.subr.mxu0 0.0
      %8819 = vmatpush1.msra.mxu0 0.0
      %8820 = vmatprep.subr.mxu0 0.0
      %8821 = vmatpush1.msra.mxu0 0.0
      %8822 = vmatprep.subr.mxu0 0.0
      %8823 = vmatpush1.msra.mxu0 0.0
      %8824 = vmatprep.subr.mxu0 0.0
      %8825 = vmatpush1.msra.mxu0 0.0
      %8826 = vmatprep.subr.mxu0 0.0
      %8827 = vmatpush1.msra.mxu0 0.0
      %8828 = vmatprep.subr.mxu0 0.0
      %8829 = vmatpush1.msra.mxu0 0.0
      %8830 = vmatprep.subr.mxu0 0.0
      %8831 = vmatpush1.msra.mxu0 0.0
      %8832 = vmatprep.subr.mxu0 0.0
      %8833 = vmatpush1.msra.mxu0 0.0
      %8834 = vmatprep.subr.mxu0 0.0
      %8835 = vmatpush1.msra.mxu0 0.0
      %8836 = vmatprep.subr.mxu0 0.0
      %8837 = vmatpush1.msra.mxu0 0.0
      %8838 = vmatprep.subr.mxu0 0.0
      %8839 = vmatpush1.msra.mxu0 %v8797
      %8840 = vmatprep.subr.mxu0 0.0
      %8841 = vmatpush1.msra.mxu0 %v8796
      %8842 = vmatprep.subr.mxu0 0.0
      %8843 = vmatpush1.msra.mxu0 %v8795
      %8844 = vmatprep.subr.mxu0 0.0
      %8845 = vmatpush1.msra.mxu0 %v8794
      %8846 = vmatprep.subr.mxu0 0.0
      %8847 = vmatpush2.msra.mxu0 0.0
      %8848 = vmatprep.subr.mxu0 0.0
      %8849 = vmatpush2.msra.mxu0 0.0
      %8850 = vmatprep.subr.mxu0 0.0
      %8851 = vmatpush2.msra.mxu0 0.0
      %8852 = vmatprep.subr.mxu0 0.0
      %8853 = vmatpush2.msra.mxu0 0.0
      %8854 = vmatprep.subr.mxu0 0.0
      %8855 = vmatpush2.msra.mxu0 0.0
      %8856 = vmatprep.subr.mxu0 0.0
      %8857 = vmatpush2.msra.mxu0 0.0
      %8858 = vmatprep.subr.mxu0 0.0
      %8859 = vmatpush2.msra.mxu0 0.0
      %8860 = vmatprep.subr.mxu0 0.0
      %8861 = vmatpush2.msra.mxu0 0.0
      %8862 = vmatprep.subr.mxu0 0.0
      %8863 = vmatpush2.msra.mxu0 0.0
      %8864 = vmatprep.subr.mxu0 0.0
      %8865 = vmatpush2.msra.mxu0 0.0
      %8866 = vmatprep.subr.mxu0 0.0
      %8867 = vmatpush2.msra.mxu0 0.0
      %8868 = vmatprep.subr.mxu0 0.0
      %8869 = vmatpush2.msra.mxu0 0.0
      %8870 = vmatprep.subr.mxu0 0.0
      %8871 = vmatpush2.msra.mxu0 0.0
      %8872 = vmatprep.subr.mxu0 0.0
      %8873 = vmatpush2.msra.mxu0 0.0
      %8874 = vmatprep.subr.mxu0 0.0
      %8875 = vmatpush2.msra.mxu0 0.0
      %8876 = vmatprep.subr.mxu0 0.0
      %8877 = vmatpush2.msra.mxu0 0.0
      %8878 = vmatprep.mubr.f32.mxu0 0.0
      %8879 = vmatmul.mubr.f32.gmra.mxu0 %v8803
      %v8880 = vpop.f32.mrf.mxu0
      %v8881 = vadd.f32 0.0, %v8880
      %v8882 = vpop.f32.mrf.mxu0
      %8883 = vmatprep.mubr.f32.mxu0 0.0
      %8884 = vmatmul.mubr.f32.gmra.mxu0 %v8806
      %v8885 = vpop.f32.mrf.mxu0
      %v8886 = vadd.f32 0.0, %v8885
      %v8887 = vpop.f32.mrf.mxu0
      %8888 = vmatprep.mubr.f32.mxu0 0.0
      %8889 = vmatmul.mubr.f32.gmra.mxu0 %v8809
      %v8890 = vpop.f32.mrf.mxu0
      %v8891 = vadd.f32 0.0, %v8890
      %v8892 = vpop.f32.mrf.mxu0
      %8893 = vmatprep.mubr.f32.mxu0 0.0
      %8894 = vmatmul.mubr.f32.gmra.mxu0 %v8812
      %v8895 = vpop.f32.mrf.mxu0
      %v8896 = vadd.f32 0.0, %v8895
      %v8897 = vpop.f32.mrf.mxu0
      %8898 = vdwg.mxu0
      %v8899 = vadd.f32 %v8769, %v8881
      %v8900 = vadd.f32 %v8770, %v8886
      %v8901 = vadd.f32 %v8771, %v8891
      %v8902 = vadd.f32 %v8772, %v8896
      %s8903 = scalar_lea.vmem %s7, 160
      %v8904 = vld [vmem:[%s8903] sm:$0xff]
      %v8905 = vld [vmem:[%s8903 + $0x8] sm:$0xff]
      %v8906 = vld [vmem:[%s8903 + $0x10] sm:$0xff]
      %v8907 = vld [vmem:[%s8903 + $0x18] sm:$0xff]
      %8908 = vrot.lane.b32.xlu0 %v8627, 16
      %v8909 = vpop.permute.xlu0 %8908
      %8910 = vrot.lane.b32.xlu0 %v8628, 16
      %v8911 = vpop.permute.xlu0 %8910
      %8912 = vrot.lane.b32.xlu0 %v8629, 16
      %v8913 = vpop.permute.xlu0 %8912
      %8914 = vrot.lane.b32.xlu0 %v8630, 16
      %v8915 = vpop.permute.xlu0 %8914
      %8916 = vrot.lane.b32.xlu0 %v8631, 16
      %v8917 = vpop.permute.xlu0 %8916
      %8918 = vrot.lane.b32.xlu0 %v8632, 16
      %v8919 = vpop.permute.xlu0 %8918
      %8920 = vrot.lane.b32.xlu0 %v8633, 16
      %v8921 = vpop.permute.xlu0 %8920
      %8922 = vrot.lane.b32.xlu0 %v8634, 16
      %v8923 = vpop.permute.xlu0 %8922
      %v8924 = vsel %vm4524, %v8909, %v8911
      %v8925 = vsel %vm4524, %v8913, %v8915
      %v8926 = vsel %vm4524, %v8917, %v8919
      %v8927 = vsel %vm4524, %v8921, %v8923
      %v8933 = vsel %vm2330, %v8904, 0
      %v8936 = vsel %vm2330, %v8905, 0
      %v8939 = vsel %vm2330, %v8906, 0
      %v8942 = vsel %vm2330, %v8907, 0
      %8944 = vmatprep.subr.mxu0 0.0
      %8945 = vmatpush1.msra.mxu0 0.0
      %8946 = vmatprep.subr.mxu0 0.0
      %8947 = vmatpush1.msra.mxu0 0.0
      %8948 = vmatprep.subr.mxu0 0.0
      %8949 = vmatpush1.msra.mxu0 0.0
      %8950 = vmatprep.subr.mxu0 0.0
      %8951 = vmatpush1.msra.mxu0 0.0
      %8952 = vmatprep.subr.mxu0 0.0
      %8953 = vmatpush1.msra.mxu0 0.0
      %8954 = vmatprep.subr.mxu0 0.0
      %8955 = vmatpush1.msra.mxu0 0.0
      %8956 = vmatprep.subr.mxu0 0.0
      %8957 = vmatpush1.msra.mxu0 0.0
      %8958 = vmatprep.subr.mxu0 0.0
      %8959 = vmatpush1.msra.mxu0 0.0
      %8960 = vmatprep.subr.mxu0 0.0
      %8961 = vmatpush1.msra.mxu0 0.0
      %8962 = vmatprep.subr.mxu0 0.0
      %8963 = vmatpush1.msra.mxu0 0.0
      %8964 = vmatprep.subr.mxu0 0.0
      %8965 = vmatpush1.msra.mxu0 0.0
      %8966 = vmatprep.subr.mxu0 0.0
      %8967 = vmatpush1.msra.mxu0 0.0
      %8968 = vmatprep.subr.mxu0 0.0
      %8969 = vmatpush1.msra.mxu0 %v8927
      %8970 = vmatprep.subr.mxu0 0.0
      %8971 = vmatpush1.msra.mxu0 %v8926
      %8972 = vmatprep.subr.mxu0 0.0
      %8973 = vmatpush1.msra.mxu0 %v8925
      %8974 = vmatprep.subr.mxu0 0.0
      %8975 = vmatpush1.msra.mxu0 %v8924
      %8976 = vmatprep.subr.mxu0 0.0
      %8977 = vmatpush2.msra.mxu0 0.0
      %8978 = vmatprep.subr.mxu0 0.0
      %8979 = vmatpush2.msra.mxu0 0.0
      %8980 = vmatprep.subr.mxu0 0.0
      %8981 = vmatpush2.msra.mxu0 0.0
      %8982 = vmatprep.subr.mxu0 0.0
      %8983 = vmatpush2.msra.mxu0 0.0
      %8984 = vmatprep.subr.mxu0 0.0
      %8985 = vmatpush2.msra.mxu0 0.0
      %8986 = vmatprep.subr.mxu0 0.0
      %8987 = vmatpush2.msra.mxu0 0.0
      %8988 = vmatprep.subr.mxu0 0.0
      %8989 = vmatpush2.msra.mxu0 0.0
      %8990 = vmatprep.subr.mxu0 0.0
      %8991 = vmatpush2.msra.mxu0 0.0
      %8992 = vmatprep.subr.mxu0 0.0
      %8993 = vmatpush2.msra.mxu0 0.0
      %8994 = vmatprep.subr.mxu0 0.0
      %8995 = vmatpush2.msra.mxu0 0.0
      %8996 = vmatprep.subr.mxu0 0.0
      %8997 = vmatpush2.msra.mxu0 0.0
      %8998 = vmatprep.subr.mxu0 0.0
      %8999 = vmatpush2.msra.mxu0 0.0
      %9000 = vmatprep.subr.mxu0 0.0
      %9001 = vmatpush2.msra.mxu0 0.0
      %9002 = vmatprep.subr.mxu0 0.0
      %9003 = vmatpush2.msra.mxu0 0.0
      %9004 = vmatprep.subr.mxu0 0.0
      %9005 = vmatpush2.msra.mxu0 0.0
      %9006 = vmatprep.subr.mxu0 0.0
      %9007 = vmatpush2.msra.mxu0 0.0
      %9008 = vmatprep.mubr.f32.mxu0 0.0
      %9009 = vmatmul.mubr.f32.gmra.mxu0 %v8933
      %v9010 = vpop.f32.mrf.mxu0
      %v9011 = vadd.f32 0.0, %v9010
      %v9012 = vpop.f32.mrf.mxu0
      %9013 = vmatprep.mubr.f32.mxu0 0.0
      %9014 = vmatmul.mubr.f32.gmra.mxu0 %v8936
      %v9015 = vpop.f32.mrf.mxu0
      %v9016 = vadd.f32 0.0, %v9015
      %v9017 = vpop.f32.mrf.mxu0
      %9018 = vmatprep.mubr.f32.mxu0 0.0
      %9019 = vmatmul.mubr.f32.gmra.mxu0 %v8939
      %v9020 = vpop.f32.mrf.mxu0
      %v9021 = vadd.f32 0.0, %v9020
      %v9022 = vpop.f32.mrf.mxu0
      %9023 = vmatprep.mubr.f32.mxu0 0.0
      %9024 = vmatmul.mubr.f32.gmra.mxu0 %v8942
      %v9025 = vpop.f32.mrf.mxu0
      %v9026 = vadd.f32 0.0, %v9025
      %v9027 = vpop.f32.mrf.mxu0
      %9028 = vdwg.mxu0
      %v9029 = vadd.f32 %v8899, %v9011
      %v9030 = vadd.f32 %v8900, %v9016
      %v9031 = vadd.f32 %v8901, %v9021
      %v9032 = vadd.f32 %v8902, %v9026
      %v9033 = vld [vmem:[#allocation4 + $0x18] sm:$0xff]
      %v9034 = vld [vmem:[#allocation4 + $0x20] sm:$0xff]
      %v9035 = vld [vmem:[#allocation4 + $0x40] sm:$0xff]
      %v9036 = vld [vmem:[#allocation4 + $0x48] sm:$0xff]
      %v9037 = vld [vmem:[#allocation4 + $0x68] sm:$0xff]
      %v9038 = vld [vmem:[#allocation4 + $0x70] sm:$0xff]
      %v9039 = vld [vmem:[#allocation4 + $0x90] sm:$0xff]
      %v9040 = vld [vmem:[#allocation4 + $0x98] sm:$0xff]
      %s9041 = scalar_lea.vmem %s7, 192
      %v9042 = vld [vmem:[%s9041] sm:$0xff]
      %v9043 = vld [vmem:[%s9041 + $0x8] sm:$0xff]
      %v9044 = vld [vmem:[%s9041 + $0x10] sm:$0xff]
      %v9045 = vld [vmem:[%s9041 + $0x18] sm:$0xff]
      %9054 = vrot.lane.b32.xlu0 %v9033, 64
      %v9055 = vpop.permute.xlu0 %9054
      %9056 = vrot.lane.b32.xlu0 %v9034, 64
      %v9057 = vpop.permute.xlu0 %9056
      %9058 = vrot.lane.b32.xlu0 %v9035, 64
      %v9059 = vpop.permute.xlu0 %9058
      %9060 = vrot.lane.b32.xlu0 %v9036, 64
      %v9061 = vpop.permute.xlu0 %9060
      %9062 = vrot.lane.b32.xlu0 %v9037, 64
      %v9063 = vpop.permute.xlu0 %9062
      %9064 = vrot.lane.b32.xlu0 %v9038, 64
      %v9065 = vpop.permute.xlu0 %9064
      %9066 = vrot.lane.b32.xlu0 %v9039, 64
      %v9067 = vpop.permute.xlu0 %9066
      %9068 = vrot.lane.b32.xlu0 %v9040, 64
      %v9069 = vpop.permute.xlu0 %9068
      %vm9070 = vcmask 523264
      %v9071 = vsel %vm9070, %v9055, %v9057
      %v9072 = vsel %vm9070, %v9059, %v9061
      %v9073 = vsel %vm9070, %v9063, %v9065
      %v9074 = vsel %vm9070, %v9067, %v9069
      %v9080 = vsel %vm2330, %v9042, 0
      %v9083 = vsel %vm2330, %v9043, 0
      %v9086 = vsel %vm2330, %v9044, 0
      %v9089 = vsel %vm2330, %v9045, 0
      %9091 = vmatprep.subr.mxu0 0.0
      %9092 = vmatpush1.msra.mxu0 0.0
      %9093 = vmatprep.subr.mxu0 0.0
      %9094 = vmatpush1.msra.mxu0 0.0
      %9095 = vmatprep.subr.mxu0 0.0
      %9096 = vmatpush1.msra.mxu0 0.0
      %9097 = vmatprep.subr.mxu0 0.0
      %9098 = vmatpush1.msra.mxu0 0.0
      %9099 = vmatprep.subr.mxu0 0.0
      %9100 = vmatpush1.msra.mxu0 0.0
      %9101 = vmatprep.subr.mxu0 0.0
      %9102 = vmatpush1.msra.mxu0 0.0
      %9103 = vmatprep.subr.mxu0 0.0
      %9104 = vmatpush1.msra.mxu0 0.0
      %9105 = vmatprep.subr.mxu0 0.0
      %9106 = vmatpush1.msra.mxu0 0.0
      %9107 = vmatprep.subr.mxu0 0.0
      %9108 = vmatpush1.msra.mxu0 0.0
      %9109 = vmatprep.subr.mxu0 0.0
      %9110 = vmatpush1.msra.mxu0 0.0
      %9111 = vmatprep.subr.mxu0 0.0
      %9112 = vmatpush1.msra.mxu0 0.0
      %9113 = vmatprep.subr.mxu0 0.0
      %9114 = vmatpush1.msra.mxu0 0.0
      %9115 = vmatprep.subr.mxu0 0.0
      %9116 = vmatpush1.msra.mxu0 %v9074
      %9117 = vmatprep.subr.mxu0 0.0
      %9118 = vmatpush1.msra.mxu0 %v9073
      %9119 = vmatprep.subr.mxu0 0.0
      %9120 = vmatpush1.msra.mxu0 %v9072
      %9121 = vmatprep.subr.mxu0 0.0
      %9122 = vmatpush1.msra.mxu0 %v9071
      %9123 = vmatprep.subr.mxu0 0.0
      %9124 = vmatpush2.msra.mxu0 0.0
      %9125 = vmatprep.subr.mxu0 0.0
      %9126 = vmatpush2.msra.mxu0 0.0
      %9127 = vmatprep.subr.mxu0 0.0
      %9128 = vmatpush2.msra.mxu0 0.0
      %9129 = vmatprep.subr.mxu0 0.0
      %9130 = vmatpush2.msra.mxu0 0.0
      %9131 = vmatprep.subr.mxu0 0.0
      %9132 = vmatpush2.msra.mxu0 0.0
      %9133 = vmatprep.subr.mxu0 0.0
      %9134 = vmatpush2.msra.mxu0 0.0
      %9135 = vmatprep.subr.mxu0 0.0
      %9136 = vmatpush2.msra.mxu0 0.0
      %9137 = vmatprep.subr.mxu0 0.0
      %9138 = vmatpush2.msra.mxu0 0.0
      %9139 = vmatprep.subr.mxu0 0.0
      %9140 = vmatpush2.msra.mxu0 0.0
      %9141 = vmatprep.subr.mxu0 0.0
      %9142 = vmatpush2.msra.mxu0 0.0
      %9143 = vmatprep.subr.mxu0 0.0
      %9144 = vmatpush2.msra.mxu0 0.0
      %9145 = vmatprep.subr.mxu0 0.0
      %9146 = vmatpush2.msra.mxu0 0.0
      %9147 = vmatprep.subr.mxu0 0.0
      %9148 = vmatpush2.msra.mxu0 0.0
      %9149 = vmatprep.subr.mxu0 0.0
      %9150 = vmatpush2.msra.mxu0 0.0
      %9151 = vmatprep.subr.mxu0 0.0
      %9152 = vmatpush2.msra.mxu0 0.0
      %9153 = vmatprep.subr.mxu0 0.0
      %9154 = vmatpush2.msra.mxu0 0.0
      %9155 = vmatprep.mubr.f32.mxu0 0.0
      %9156 = vmatmul.mubr.f32.gmra.mxu0 %v9080
      %v9157 = vpop.f32.mrf.mxu0
      %v9158 = vadd.f32 0.0, %v9157
      %v9159 = vpop.f32.mrf.mxu0
      %9160 = vmatprep.mubr.f32.mxu0 0.0
      %9161 = vmatmul.mubr.f32.gmra.mxu0 %v9083
      %v9162 = vpop.f32.mrf.mxu0
      %v9163 = vadd.f32 0.0, %v9162
      %v9164 = vpop.f32.mrf.mxu0
      %9165 = vmatprep.mubr.f32.mxu0 0.0
      %9166 = vmatmul.mubr.f32.gmra.mxu0 %v9086
      %v9167 = vpop.f32.mrf.mxu0
      %v9168 = vadd.f32 0.0, %v9167
      %v9169 = vpop.f32.mrf.mxu0
      %9170 = vmatprep.mubr.f32.mxu0 0.0
      %9171 = vmatmul.mubr.f32.gmra.mxu0 %v9089
      %v9172 = vpop.f32.mrf.mxu0
      %v9173 = vadd.f32 0.0, %v9172
      %v9174 = vpop.f32.mrf.mxu0
      %9175 = vdwg.mxu0
      %v9176 = vadd.f32 %v9029, %v9158
      %v9177 = vadd.f32 %v9030, %v9163
      %v9178 = vadd.f32 %v9031, %v9168
      %v9179 = vadd.f32 %v9032, %v9173
      %s9180 = scalar_lea.vmem %s7, 224
      %v9181 = vld [vmem:[%s9180] sm:$0xff]
      %v9182 = vld [vmem:[%s9180 + $0x8] sm:$0xff]
      %v9183 = vld [vmem:[%s9180 + $0x10] sm:$0xff]
      %v9184 = vld [vmem:[%s9180 + $0x18] sm:$0xff]
      %9185 = vrot.lane.b32.xlu0 %v9033, 56
      %v9186 = vpop.permute.xlu0 %9185
      %9187 = vrot.lane.b32.xlu0 %v9034, 56
      %v9188 = vpop.permute.xlu0 %9187
      %9189 = vrot.lane.b32.xlu0 %v9035, 56
      %v9190 = vpop.permute.xlu0 %9189
      %9191 = vrot.lane.b32.xlu0 %v9036, 56
      %v9192 = vpop.permute.xlu0 %9191
      %9193 = vrot.lane.b32.xlu0 %v9037, 56
      %v9194 = vpop.permute.xlu0 %9193
      %9195 = vrot.lane.b32.xlu0 %v9038, 56
      %v9196 = vpop.permute.xlu0 %9195
      %9197 = vrot.lane.b32.xlu0 %v9039, 56
      %v9198 = vpop.permute.xlu0 %9197
      %9199 = vrot.lane.b32.xlu0 %v9040, 56
      %v9200 = vpop.permute.xlu0 %9199
      %vm9201 = vcmask 457728
      %v9202 = vsel %vm9201, %v9186, %v9188
      %v9203 = vsel %vm9201, %v9190, %v9192
      %v9204 = vsel %vm9201, %v9194, %v9196
      %v9205 = vsel %vm9201, %v9198, %v9200
      %v9211 = vsel %vm2330, %v9181, 0
      %v9214 = vsel %vm2330, %v9182, 0
      %v9217 = vsel %vm2330, %v9183, 0
      %v9220 = vsel %vm2330, %v9184, 0
      %9222 = vmatprep.subr.mxu0 0.0
      %9223 = vmatpush1.msra.mxu0 0.0
      %9224 = vmatprep.subr.mxu0 0.0
      %9225 = vmatpush1.msra.mxu0 0.0
      %9226 = vmatprep.subr.mxu0 0.0
      %9227 = vmatpush1.msra.mxu0 0.0
      %9228 = vmatprep.subr.mxu0 0.0
      %9229 = vmatpush1.msra.mxu0 0.0
      %9230 = vmatprep.subr.mxu0 0.0
      %9231 = vmatpush1.msra.mxu0 0.0
      %9232 = vmatprep.subr.mxu0 0.0
      %9233 = vmatpush1.msra.mxu0 0.0
      %9234 = vmatprep.subr.mxu0 0.0
      %9235 = vmatpush1.msra.mxu0 0.0
      %9236 = vmatprep.subr.mxu0 0.0
      %9237 = vmatpush1.msra.mxu0 0.0
      %9238 = vmatprep.subr.mxu0 0.0
      %9239 = vmatpush1.msra.mxu0 0.0
      %9240 = vmatprep.subr.mxu0 0.0
      %9241 = vmatpush1.msra.mxu0 0.0
      %9242 = vmatprep.subr.mxu0 0.0
      %9243 = vmatpush1.msra.mxu0 0.0
      %9244 = vmatprep.subr.mxu0 0.0
      %9245 = vmatpush1.msra.mxu0 0.0
      %9246 = vmatprep.subr.mxu0 0.0
      %9247 = vmatpush1.msra.mxu0 %v9205
      %9248 = vmatprep.subr.mxu0 0.0
      %9249 = vmatpush1.msra.mxu0 %v9204
      %9250 = vmatprep.subr.mxu0 0.0
      %9251 = vmatpush1.msra.mxu0 %v9203
      %9252 = vmatprep.subr.mxu0 0.0
      %9253 = vmatpush1.msra.mxu0 %v9202
      %9254 = vmatprep.subr.mxu0 0.0
      %9255 = vmatpush2.msra.mxu0 0.0
      %9256 = vmatprep.subr.mxu0 0.0
      %9257 = vmatpush2.msra.mxu0 0.0
      %9258 = vmatprep.subr.mxu0 0.0
      %9259 = vmatpush2.msra.mxu0 0.0
      %9260 = vmatprep.subr.mxu0 0.0
      %9261 = vmatpush2.msra.mxu0 0.0
      %9262 = vmatprep.subr.mxu0 0.0
      %9263 = vmatpush2.msra.mxu0 0.0
      %9264 = vmatprep.subr.mxu0 0.0
      %9265 = vmatpush2.msra.mxu0 0.0
      %9266 = vmatprep.subr.mxu0 0.0
      %9267 = vmatpush2.msra.mxu0 0.0
      %9268 = vmatprep.subr.mxu0 0.0
      %9269 = vmatpush2.msra.mxu0 0.0
      %9270 = vmatprep.subr.mxu0 0.0
      %9271 = vmatpush2.msra.mxu0 0.0
      %9272 = vmatprep.subr.mxu0 0.0
      %9273 = vmatpush2.msra.mxu0 0.0
      %9274 = vmatprep.subr.mxu0 0.0
      %9275 = vmatpush2.msra.mxu0 0.0
      %9276 = vmatprep.subr.mxu0 0.0
      %9277 = vmatpush2.msra.mxu0 0.0
      %9278 = vmatprep.subr.mxu0 0.0
      %9279 = vmatpush2.msra.mxu0 0.0
      %9280 = vmatprep.subr.mxu0 0.0
      %9281 = vmatpush2.msra.mxu0 0.0
      %9282 = vmatprep.subr.mxu0 0.0
      %9283 = vmatpush2.msra.mxu0 0.0
      %9284 = vmatprep.subr.mxu0 0.0
      %9285 = vmatpush2.msra.mxu0 0.0
      %9286 = vmatprep.mubr.f32.mxu0 0.0
      %9287 = vmatmul.mubr.f32.gmra.mxu0 %v9211
      %v9288 = vpop.f32.mrf.mxu0
      %v9289 = vadd.f32 0.0, %v9288
      %v9290 = vpop.f32.mrf.mxu0
      %9291 = vmatprep.mubr.f32.mxu0 0.0
      %9292 = vmatmul.mubr.f32.gmra.mxu0 %v9214
      %v9293 = vpop.f32.mrf.mxu0
      %v9294 = vadd.f32 0.0, %v9293
      %v9295 = vpop.f32.mrf.mxu0
      %9296 = vmatprep.mubr.f32.mxu0 0.0
      %9297 = vmatmul.mubr.f32.gmra.mxu0 %v9217
      %v9298 = vpop.f32.mrf.mxu0
      %v9299 = vadd.f32 0.0, %v9298
      %v9300 = vpop.f32.mrf.mxu0
      %9301 = vmatprep.mubr.f32.mxu0 0.0
      %9302 = vmatmul.mubr.f32.gmra.mxu0 %v9220
      %v9303 = vpop.f32.mrf.mxu0
      %v9304 = vadd.f32 0.0, %v9303
      %v9305 = vpop.f32.mrf.mxu0
      %9306 = vdwg.mxu0
      %v9307 = vadd.f32 %v9176, %v9289
      %v9308 = vadd.f32 %v9177, %v9294
      %v9309 = vadd.f32 %v9178, %v9299
      %v9310 = vadd.f32 %v9179, %v9304
      %s9311 = scalar_lea.vmem %s7, 256
      %v9312 = vld [vmem:[%s9311] sm:$0xff]
      %v9313 = vld [vmem:[%s9311 + $0x8] sm:$0xff]
      %v9314 = vld [vmem:[%s9311 + $0x10] sm:$0xff]
      %v9315 = vld [vmem:[%s9311 + $0x18] sm:$0xff]
      %9316 = vrot.lane.b32.xlu0 %v9033, 48
      %v9317 = vpop.permute.xlu0 %9316
      %9318 = vrot.lane.b32.xlu0 %v9034, 48
      %v9319 = vpop.permute.xlu0 %9318
      %9320 = vrot.lane.b32.xlu0 %v9035, 48
      %v9321 = vpop.permute.xlu0 %9320
      %9322 = vrot.lane.b32.xlu0 %v9036, 48
      %v9323 = vpop.permute.xlu0 %9322
      %9324 = vrot.lane.b32.xlu0 %v9037, 48
      %v9325 = vpop.permute.xlu0 %9324
      %9326 = vrot.lane.b32.xlu0 %v9038, 48
      %v9327 = vpop.permute.xlu0 %9326
      %9328 = vrot.lane.b32.xlu0 %v9039, 48
      %v9329 = vpop.permute.xlu0 %9328
      %9330 = vrot.lane.b32.xlu0 %v9040, 48
      %v9331 = vpop.permute.xlu0 %9330
      %vm9332 = vcmask 392192
      %v9333 = vsel %vm9332, %v9317, %v9319
      %v9334 = vsel %vm9332, %v9321, %v9323
      %v9335 = vsel %vm9332, %v9325, %v9327
      %v9336 = vsel %vm9332, %v9329, %v9331
      %v9342 = vsel %vm2330, %v9312, 0
      %v9345 = vsel %vm2330, %v9313, 0
      %v9348 = vsel %vm2330, %v9314, 0
      %v9351 = vsel %vm2330, %v9315, 0
      %9353 = vmatprep.subr.mxu0 0.0
      %9354 = vmatpush1.msra.mxu0 0.0
      %9355 = vmatprep.subr.mxu0 0.0
      %9356 = vmatpush1.msra.mxu0 0.0
      %9357 = vmatprep.subr.mxu0 0.0
      %9358 = vmatpush1.msra.mxu0 0.0
      %9359 = vmatprep.subr.mxu0 0.0
      %9360 = vmatpush1.msra.mxu0 0.0
      %9361 = vmatprep.subr.mxu0 0.0
      %9362 = vmatpush1.msra.mxu0 0.0
      %9363 = vmatprep.subr.mxu0 0.0
      %9364 = vmatpush1.msra.mxu0 0.0
      %9365 = vmatprep.subr.mxu0 0.0
      %9366 = vmatpush1.msra.mxu0 0.0
      %9367 = vmatprep.subr.mxu0 0.0
      %9368 = vmatpush1.msra.mxu0 0.0
      %9369 = vmatprep.subr.mxu0 0.0
      %9370 = vmatpush1.msra.mxu0 0.0
      %9371 = vmatprep.subr.mxu0 0.0
      %9372 = vmatpush1.msra.mxu0 0.0
      %9373 = vmatprep.subr.mxu0 0.0
      %9374 = vmatpush1.msra.mxu0 0.0
      %9375 = vmatprep.subr.mxu0 0.0
      %9376 = vmatpush1.msra.mxu0 0.0
      %9377 = vmatprep.subr.mxu0 0.0
      %9378 = vmatpush1.msra.mxu0 %v9336
      %9379 = vmatprep.subr.mxu0 0.0
      %9380 = vmatpush1.msra.mxu0 %v9335
      %9381 = vmatprep.subr.mxu0 0.0
      %9382 = vmatpush1.msra.mxu0 %v9334
      %9383 = vmatprep.subr.mxu0 0.0
      %9384 = vmatpush1.msra.mxu0 %v9333
      %9385 = vmatprep.subr.mxu0 0.0
      %9386 = vmatpush2.msra.mxu0 0.0
      %9387 = vmatprep.subr.mxu0 0.0
      %9388 = vmatpush2.msra.mxu0 0.0
      %9389 = vmatprep.subr.mxu0 0.0
      %9390 = vmatpush2.msra.mxu0 0.0
      %9391 = vmatprep.subr.mxu0 0.0
      %9392 = vmatpush2.msra.mxu0 0.0
      %9393 = vmatprep.subr.mxu0 0.0
      %9394 = vmatpush2.msra.mxu0 0.0
      %9395 = vmatprep.subr.mxu0 0.0
      %9396 = vmatpush2.msra.mxu0 0.0
      %9397 = vmatprep.subr.mxu0 0.0
      %9398 = vmatpush2.msra.mxu0 0.0
      %9399 = vmatprep.subr.mxu0 0.0
      %9400 = vmatpush2.msra.mxu0 0.0
      %9401 = vmatprep.subr.mxu0 0.0
      %9402 = vmatpush2.msra.mxu0 0.0
      %9403 = vmatprep.subr.mxu0 0.0
      %9404 = vmatpush2.msra.mxu0 0.0
      %9405 = vmatprep.subr.mxu0 0.0
      %9406 = vmatpush2.msra.mxu0 0.0
      %9407 = vmatprep.subr.mxu0 0.0
      %9408 = vmatpush2.msra.mxu0 0.0
      %9409 = vmatprep.subr.mxu0 0.0
      %9410 = vmatpush2.msra.mxu0 0.0
      %9411 = vmatprep.subr.mxu0 0.0
      %9412 = vmatpush2.msra.mxu0 0.0
      %9413 = vmatprep.subr.mxu0 0.0
      %9414 = vmatpush2.msra.mxu0 0.0
      %9415 = vmatprep.subr.mxu0 0.0
      %9416 = vmatpush2.msra.mxu0 0.0
      %9417 = vmatprep.mubr.f32.mxu0 0.0
      %9418 = vmatmul.mubr.f32.gmra.mxu0 %v9342
      %v9419 = vpop.f32.mrf.mxu0
      %v9420 = vadd.f32 0.0, %v9419
      %v9421 = vpop.f32.mrf.mxu0
      %9422 = vmatprep.mubr.f32.mxu0 0.0
      %9423 = vmatmul.mubr.f32.gmra.mxu0 %v9345
      %v9424 = vpop.f32.mrf.mxu0
      %v9425 = vadd.f32 0.0, %v9424
      %v9426 = vpop.f32.mrf.mxu0
      %9427 = vmatprep.mubr.f32.mxu0 0.0
      %9428 = vmatmul.mubr.f32.gmra.mxu0 %v9348
      %v9429 = vpop.f32.mrf.mxu0
      %v9430 = vadd.f32 0.0, %v9429
      %v9431 = vpop.f32.mrf.mxu0
      %9432 = vmatprep.mubr.f32.mxu0 0.0
      %9433 = vmatmul.mubr.f32.gmra.mxu0 %v9351
      %v9434 = vpop.f32.mrf.mxu0
      %v9435 = vadd.f32 0.0, %v9434
      %v9436 = vpop.f32.mrf.mxu0
      %9437 = vdwg.mxu0
      %v9438 = vadd.f32 %v9307, %v9420
      %v9439 = vadd.f32 %v9308, %v9425
      %v9440 = vadd.f32 %v9309, %v9430
      %v9441 = vadd.f32 %v9310, %v9435
      %v9442 = vld [vmem:[%s8] sm:$0xff]
      %v9443 = vld [vmem:[%s8 + $0x8] sm:$0xff]
      %v9444 = vld [vmem:[%s8 + $0x10] sm:$0xff]
      %v9445 = vld [vmem:[%s8 + $0x18] sm:$0xff]
      %9447 = vset.pattern.permute.xlu0 0
      %9448 = vperm.xlu0 %9447, %v9442
      %v9449 = vpop.permute.xlu0 %9448
      %9452 = vset.pattern.permute.xlu0 0
      %9453 = vperm.xlu0 %9452, %v9443
      %v9454 = vpop.permute.xlu0 %9453
      %9457 = vset.pattern.permute.xlu0 0
      %9458 = vperm.xlu0 %9457, %v9444
      %v9459 = vpop.permute.xlu0 %9458
      %9462 = vset.pattern.permute.xlu0 0
      %9463 = vperm.xlu0 %9462, %v9445
      %v9464 = vpop.permute.xlu0 %9463
      %v9466 = vadd.f32 %v9438, %v9449
      %v9467 = vadd.f32 %v9439, %v9454
      %v9468 = vadd.f32 %v9440, %v9459
      %v9469 = vadd.f32 %v9441, %v9464
      %vm9470 = vcmp.ge.f32.partialorder %v9466, 0.0
      %vm9471 = vcmp.ge.f32.partialorder %v9467, 0.0
      %vm9472 = vcmp.ge.f32.partialorder %v9468, 0.0
      %vm9473 = vcmp.ge.f32.partialorder %v9469, 0.0
      %v9474 = vmul.f32 %v9466, 0.01
      %v9475 = vmul.f32 %v9467, 0.01
      %v9476 = vmul.f32 %v9468, 0.01
      %v9477 = vmul.f32 %v9469, 0.01
      %v9478 = vsel %vm9470, %v9466, %v9474
      %v9479 = vsel %vm9471, %v9467, %v9475
      %v9480 = vsel %vm9472, %v9468, %v9476
      %v9481 = vsel %vm9473, %v9469, %v9477
      %vm9482 = vcmask 719872
      %9483 = vst.msk [vmem:[#allocation5] sm:$0xff] %vm9482, %v9478
      %9484 = vst.msk [vmem:[#allocation5 + $0x8] sm:$0xff] %vm9482, %v9479
      %9485 = vst.msk [vmem:[#allocation5 + $0x10] sm:$0xff] %vm9482, %v9480
      %9486 = vst.msk [vmem:[#allocation5 + $0x18] sm:$0xff] %vm9482, %v9481
      %v9487 = vld [vmem:[#allocation5] sm:$0xff]
      %v9488 = vld [vmem:[#allocation5 + $0x8] sm:$0xff]
      %v9489 = vld [vmem:[#allocation5 + $0x10] sm:$0xff]
      %v9490 = vld [vmem:[#allocation5 + $0x18] sm:$0xff]
      %v9491 = vld [vmem:[%s9] sm:$0xff]
      %v9492 = vld [vmem:[%s9 + $0x8] sm:$0x3]
      %s9493 = scalar_lea.vmem %s9, 16
      %v9494 = vld [vmem:[%s9493] sm:$0xff]
      %v9495 = vld [vmem:[%s9493 + $0x8] sm:$0x3]
      %9500 = vrot.lane.b32.xlu0 %v9487, 127
      %v9501 = vpop.permute.xlu0 %9500
      %9502 = vrot.lane.b32.xlu0 %v9488, 127
      %v9503 = vpop.permute.xlu0 %9502
      %9504 = vrot.lane.b32.xlu0 %v9489, 127
      %v9505 = vpop.permute.xlu0 %9504
      %9506 = vrot.lane.b32.xlu0 %v9490, 127
      %v9507 = vpop.permute.xlu0 %9506
      %v9513 = vsel %vm2330, %v9494, 0
      %v9516 = vsel %vm2330, %v9495, 0
      %9518 = vmatprep.subr.mxu0 0.0
      %9519 = vmatpush1.msra.mxu0 0.0
      %9520 = vmatprep.subr.mxu0 0.0
      %9521 = vmatpush1.msra.mxu0 0.0
      %9522 = vmatprep.subr.mxu0 0.0
      %9523 = vmatpush1.msra.mxu0 0.0
      %9524 = vmatprep.subr.mxu0 0.0
      %9525 = vmatpush1.msra.mxu0 0.0
      %9526 = vmatprep.subr.mxu0 0.0
      %9527 = vmatpush1.msra.mxu0 0.0
      %9528 = vmatprep.subr.mxu0 0.0
      %9529 = vmatpush1.msra.mxu0 0.0
      %9530 = vmatprep.subr.mxu0 0.0
      %9531 = vmatpush1.msra.mxu0 0.0
      %9532 = vmatprep.subr.mxu0 0.0
      %9533 = vmatpush1.msra.mxu0 0.0
      %9534 = vmatprep.subr.mxu0 0.0
      %9535 = vmatpush1.msra.mxu0 0.0
      %9536 = vmatprep.subr.mxu0 0.0
      %9537 = vmatpush1.msra.mxu0 0.0
      %9538 = vmatprep.subr.mxu0 0.0
      %9539 = vmatpush1.msra.mxu0 0.0
      %9540 = vmatprep.subr.mxu0 0.0
      %9541 = vmatpush1.msra.mxu0 0.0
      %9542 = vmatprep.subr.mxu0 0.0
      %9543 = vmatpush1.msra.mxu0 %v9507
      %9544 = vmatprep.subr.mxu0 0.0
      %9545 = vmatpush1.msra.mxu0 %v9505
      %9546 = vmatprep.subr.mxu0 0.0
      %9547 = vmatpush1.msra.mxu0 %v9503
      %9548 = vmatprep.subr.mxu0 0.0
      %9549 = vmatpush1.msra.mxu0 %v9501
      %9550 = vmatprep.subr.mxu0 0.0
      %9551 = vmatpush2.msra.mxu0 0.0
      %9552 = vmatprep.subr.mxu0 0.0
      %9553 = vmatpush2.msra.mxu0 0.0
      %9554 = vmatprep.subr.mxu0 0.0
      %9555 = vmatpush2.msra.mxu0 0.0
      %9556 = vmatprep.subr.mxu0 0.0
      %9557 = vmatpush2.msra.mxu0 0.0
      %9558 = vmatprep.subr.mxu0 0.0
      %9559 = vmatpush2.msra.mxu0 0.0
      %9560 = vmatprep.subr.mxu0 0.0
      %9561 = vmatpush2.msra.mxu0 0.0
      %9562 = vmatprep.subr.mxu0 0.0
      %9563 = vmatpush2.msra.mxu0 0.0
      %9564 = vmatprep.subr.mxu0 0.0
      %9565 = vmatpush2.msra.mxu0 0.0
      %9566 = vmatprep.subr.mxu0 0.0
      %9567 = vmatpush2.msra.mxu0 0.0
      %9568 = vmatprep.subr.mxu0 0.0
      %9569 = vmatpush2.msra.mxu0 0.0
      %9570 = vmatprep.subr.mxu0 0.0
      %9571 = vmatpush2.msra.mxu0 0.0
      %9572 = vmatprep.subr.mxu0 0.0
      %9573 = vmatpush2.msra.mxu0 0.0
      %9574 = vmatprep.subr.mxu0 0.0
      %9575 = vmatpush2.msra.mxu0 0.0
      %9576 = vmatprep.subr.mxu0 0.0
      %9577 = vmatpush2.msra.mxu0 0.0
      %9578 = vmatprep.subr.mxu0 0.0
      %9579 = vmatpush2.msra.mxu0 0.0
      %9580 = vmatprep.subr.mxu0 0.0
      %9581 = vmatpush2.msra.mxu0 0.0
      %9582 = vmatprep.mubr.f32.mxu0 0.0
      %9583 = vmatmul.mubr.f32.gmra.mxu0 %v9513
      %v9584 = vpop.f32.mrf.mxu0
      %v9585 = vadd.f32 0.0, %v9584
      %v9586 = vpop.f32.mrf.mxu0
      %9587 = vmatprep.mubr.f32.mxu0 0.0
      %9588 = vmatmul.mubr.f32.gmra.mxu0 %v9516
      %v9589 = vpop.f32.mrf.mxu0
      %v9590 = vadd.f32 0.0, %v9589
      %v9591 = vpop.f32.mrf.mxu0
      %9592 = vdwg.mxu0
      %v9594 = vsel %vm2330, %v9491, 0
      %v9597 = vsel %vm2330, %v9492, 0
      %9599 = vmatprep.subr.mxu0 0.0
      %9600 = vmatpush1.msra.mxu0 0.0
      %9601 = vmatprep.subr.mxu0 0.0
      %9602 = vmatpush1.msra.mxu0 0.0
      %9603 = vmatprep.subr.mxu0 0.0
      %9604 = vmatpush1.msra.mxu0 0.0
      %9605 = vmatprep.subr.mxu0 0.0
      %9606 = vmatpush1.msra.mxu0 0.0
      %9607 = vmatprep.subr.mxu0 0.0
      %9608 = vmatpush1.msra.mxu0 0.0
      %9609 = vmatprep.subr.mxu0 0.0
      %9610 = vmatpush1.msra.mxu0 0.0
      %9611 = vmatprep.subr.mxu0 0.0
      %9612 = vmatpush1.msra.mxu0 0.0
      %9613 = vmatprep.subr.mxu0 0.0
      %9614 = vmatpush1.msra.mxu0 0.0
      %9615 = vmatprep.subr.mxu0 0.0
      %9616 = vmatpush1.msra.mxu0 0.0
      %9617 = vmatprep.subr.mxu0 0.0
      %9618 = vmatpush1.msra.mxu0 0.0
      %9619 = vmatprep.subr.mxu0 0.0
      %9620 = vmatpush1.msra.mxu0 0.0
      %9621 = vmatprep.subr.mxu0 0.0
      %9622 = vmatpush1.msra.mxu0 0.0
      %9623 = vmatprep.subr.mxu0 0.0
      %9624 = vmatpush1.msra.mxu0 %v9490
      %9625 = vmatprep.subr.mxu0 0.0
      %9626 = vmatpush1.msra.mxu0 %v9489
      %9627 = vmatprep.subr.mxu0 0.0
      %9628 = vmatpush1.msra.mxu0 %v9488
      %9629 = vmatprep.subr.mxu0 0.0
      %9630 = vmatpush1.msra.mxu0 %v9487
      %9631 = vmatprep.subr.mxu0 0.0
      %9632 = vmatpush2.msra.mxu0 0.0
      %9633 = vmatprep.subr.mxu0 0.0
      %9634 = vmatpush2.msra.mxu0 0.0
      %9635 = vmatprep.subr.mxu0 0.0
      %9636 = vmatpush2.msra.mxu0 0.0
      %9637 = vmatprep.subr.mxu0 0.0
      %9638 = vmatpush2.msra.mxu0 0.0
      %9639 = vmatprep.subr.mxu0 0.0
      %9640 = vmatpush2.msra.mxu0 0.0
      %9641 = vmatprep.subr.mxu0 0.0
      %9642 = vmatpush2.msra.mxu0 0.0
      %9643 = vmatprep.subr.mxu0 0.0
      %9644 = vmatpush2.msra.mxu0 0.0
      %9645 = vmatprep.subr.mxu0 0.0
      %9646 = vmatpush2.msra.mxu0 0.0
      %9647 = vmatprep.subr.mxu0 0.0
      %9648 = vmatpush2.msra.mxu0 0.0
      %9649 = vmatprep.subr.mxu0 0.0
      %9650 = vmatpush2.msra.mxu0 0.0
      %9651 = vmatprep.subr.mxu0 0.0
      %9652 = vmatpush2.msra.mxu0 0.0
      %9653 = vmatprep.subr.mxu0 0.0
      %9654 = vmatpush2.msra.mxu0 0.0
      %9655 = vmatprep.subr.mxu0 0.0
      %9656 = vmatpush2.msra.mxu0 0.0
      %9657 = vmatprep.subr.mxu0 0.0
      %9658 = vmatpush2.msra.mxu0 0.0
      %9659 = vmatprep.subr.mxu0 0.0
      %9660 = vmatpush2.msra.mxu0 0.0
      %9661 = vmatprep.subr.mxu0 0.0
      %9662 = vmatpush2.msra.mxu0 0.0
      %9663 = vmatprep.mubr.f32.mxu0 0.0
      %9664 = vmatmul.mubr.f32.gmra.mxu0 %v9594
      %v9665 = vpop.f32.mrf.mxu0
      %v9666 = vadd.f32 %v9585, %v9665
      %v9667 = vpop.f32.mrf.mxu0
      %9668 = vmatprep.mubr.f32.mxu0 0.0
      %9669 = vmatmul.mubr.f32.gmra.mxu0 %v9597
      %v9670 = vpop.f32.mrf.mxu0
      %v9671 = vadd.f32 %v9590, %v9670
      %v9672 = vpop.f32.mrf.mxu0
      %9673 = vdwg.mxu0
      %s9674 = scalar_lea.vmem %s9, 32
      %v9675 = vld [vmem:[%s9674] sm:$0xff]
      %v9676 = vld [vmem:[%s9674 + $0x8] sm:$0x3]
      %9677 = vrot.lane.b32.xlu0 %v9487, 126
      %v9678 = vpop.permute.xlu0 %9677
      %9679 = vrot.lane.b32.xlu0 %v9488, 126
      %v9680 = vpop.permute.xlu0 %9679
      %9681 = vrot.lane.b32.xlu0 %v9489, 126
      %v9682 = vpop.permute.xlu0 %9681
      %9683 = vrot.lane.b32.xlu0 %v9490, 126
      %v9684 = vpop.permute.xlu0 %9683
      %v9690 = vsel %vm2330, %v9675, 0
      %v9693 = vsel %vm2330, %v9676, 0
      %9695 = vmatprep.subr.mxu0 0.0
      %9696 = vmatpush1.msra.mxu0 0.0
      %9697 = vmatprep.subr.mxu0 0.0
      %9698 = vmatpush1.msra.mxu0 0.0
      %9699 = vmatprep.subr.mxu0 0.0
      %9700 = vmatpush1.msra.mxu0 0.0
      %9701 = vmatprep.subr.mxu0 0.0
      %9702 = vmatpush1.msra.mxu0 0.0
      %9703 = vmatprep.subr.mxu0 0.0
      %9704 = vmatpush1.msra.mxu0 0.0
      %9705 = vmatprep.subr.mxu0 0.0
      %9706 = vmatpush1.msra.mxu0 0.0
      %9707 = vmatprep.subr.mxu0 0.0
      %9708 = vmatpush1.msra.mxu0 0.0
      %9709 = vmatprep.subr.mxu0 0.0
      %9710 = vmatpush1.msra.mxu0 0.0
      %9711 = vmatprep.subr.mxu0 0.0
      %9712 = vmatpush1.msra.mxu0 0.0
      %9713 = vmatprep.subr.mxu0 0.0
      %9714 = vmatpush1.msra.mxu0 0.0
      %9715 = vmatprep.subr.mxu0 0.0
      %9716 = vmatpush1.msra.mxu0 0.0
      %9717 = vmatprep.subr.mxu0 0.0
      %9718 = vmatpush1.msra.mxu0 0.0
      %9719 = vmatprep.subr.mxu0 0.0
      %9720 = vmatpush1.msra.mxu0 %v9684
      %9721 = vmatprep.subr.mxu0 0.0
      %9722 = vmatpush1.msra.mxu0 %v9682
      %9723 = vmatprep.subr.mxu0 0.0
      %9724 = vmatpush1.msra.mxu0 %v9680
      %9725 = vmatprep.subr.mxu0 0.0
      %9726 = vmatpush1.msra.mxu0 %v9678
      %9727 = vmatprep.subr.mxu0 0.0
      %9728 = vmatpush2.msra.mxu0 0.0
      %9729 = vmatprep.subr.mxu0 0.0
      %9730 = vmatpush2.msra.mxu0 0.0
      %9731 = vmatprep.subr.mxu0 0.0
      %9732 = vmatpush2.msra.mxu0 0.0
      %9733 = vmatprep.subr.mxu0 0.0
      %9734 = vmatpush2.msra.mxu0 0.0
      %9735 = vmatprep.subr.mxu0 0.0
      %9736 = vmatpush2.msra.mxu0 0.0
      %9737 = vmatprep.subr.mxu0 0.0
      %9738 = vmatpush2.msra.mxu0 0.0
      %9739 = vmatprep.subr.mxu0 0.0
      %9740 = vmatpush2.msra.mxu0 0.0
      %9741 = vmatprep.subr.mxu0 0.0
      %9742 = vmatpush2.msra.mxu0 0.0
      %9743 = vmatprep.subr.mxu0 0.0
      %9744 = vmatpush2.msra.mxu0 0.0
      %9745 = vmatprep.subr.mxu0 0.0
      %9746 = vmatpush2.msra.mxu0 0.0
      %9747 = vmatprep.subr.mxu0 0.0
      %9748 = vmatpush2.msra.mxu0 0.0
      %9749 = vmatprep.subr.mxu0 0.0
      %9750 = vmatpush2.msra.mxu0 0.0
      %9751 = vmatprep.subr.mxu0 0.0
      %9752 = vmatpush2.msra.mxu0 0.0
      %9753 = vmatprep.subr.mxu0 0.0
      %9754 = vmatpush2.msra.mxu0 0.0
      %9755 = vmatprep.subr.mxu0 0.0
      %9756 = vmatpush2.msra.mxu0 0.0
      %9757 = vmatprep.subr.mxu0 0.0
      %9758 = vmatpush2.msra.mxu0 0.0
      %9759 = vmatprep.mubr.f32.mxu0 0.0
      %9760 = vmatmul.mubr.f32.gmra.mxu0 %v9690
      %v9761 = vpop.f32.mrf.mxu0
      %v9762 = vadd.f32 0.0, %v9761
      %v9763 = vpop.f32.mrf.mxu0
      %9764 = vmatprep.mubr.f32.mxu0 0.0
      %9765 = vmatmul.mubr.f32.gmra.mxu0 %v9693
      %v9766 = vpop.f32.mrf.mxu0
      %v9767 = vadd.f32 0.0, %v9766
      %v9768 = vpop.f32.mrf.mxu0
      %9769 = vdwg.mxu0
      %v9770 = vadd.f32 %v9666, %v9762
      %v9771 = vadd.f32 %v9671, %v9767
      %s9772 = scalar_lea.vmem %s9, 48
      %v9773 = vld [vmem:[%s9772] sm:$0xff]
      %v9774 = vld [vmem:[%s9772 + $0x8] sm:$0x3]
      %9775 = vrot.lane.b32.xlu0 %v9487, 100
      %v9776 = vpop.permute.xlu0 %9775
      %9777 = vrot.lane.b32.xlu0 %v9488, 100
      %v9778 = vpop.permute.xlu0 %9777
      %9779 = vrot.lane.b32.xlu0 %v9489, 100
      %v9780 = vpop.permute.xlu0 %9779
      %9781 = vrot.lane.b32.xlu0 %v9490, 100
      %v9782 = vpop.permute.xlu0 %9781
      %v9788 = vsel %vm2330, %v9773, 0
      %v9791 = vsel %vm2330, %v9774, 0
      %9793 = vmatprep.subr.mxu0 0.0
      %9794 = vmatpush1.msra.mxu0 0.0
      %9795 = vmatprep.subr.mxu0 0.0
      %9796 = vmatpush1.msra.mxu0 0.0
      %9797 = vmatprep.subr.mxu0 0.0
      %9798 = vmatpush1.msra.mxu0 0.0
      %9799 = vmatprep.subr.mxu0 0.0
      %9800 = vmatpush1.msra.mxu0 0.0
      %9801 = vmatprep.subr.mxu0 0.0
      %9802 = vmatpush1.msra.mxu0 0.0
      %9803 = vmatprep.subr.mxu0 0.0
      %9804 = vmatpush1.msra.mxu0 0.0
      %9805 = vmatprep.subr.mxu0 0.0
      %9806 = vmatpush1.msra.mxu0 0.0
      %9807 = vmatprep.subr.mxu0 0.0
      %9808 = vmatpush1.msra.mxu0 0.0
      %9809 = vmatprep.subr.mxu0 0.0
      %9810 = vmatpush1.msra.mxu0 0.0
      %9811 = vmatprep.subr.mxu0 0.0
      %9812 = vmatpush1.msra.mxu0 0.0
      %9813 = vmatprep.subr.mxu0 0.0
      %9814 = vmatpush1.msra.mxu0 0.0
      %9815 = vmatprep.subr.mxu0 0.0
      %9816 = vmatpush1.msra.mxu0 0.0
      %9817 = vmatprep.subr.mxu0 0.0
      %9818 = vmatpush1.msra.mxu0 %v9782
      %9819 = vmatprep.subr.mxu0 0.0
      %9820 = vmatpush1.msra.mxu0 %v9780
      %9821 = vmatprep.subr.mxu0 0.0
      %9822 = vmatpush1.msra.mxu0 %v9778
      %9823 = vmatprep.subr.mxu0 0.0
      %9824 = vmatpush1.msra.mxu0 %v9776
      %9825 = vmatprep.subr.mxu0 0.0
      %9826 = vmatpush2.msra.mxu0 0.0
      %9827 = vmatprep.subr.mxu0 0.0
      %9828 = vmatpush2.msra.mxu0 0.0
      %9829 = vmatprep.subr.mxu0 0.0
      %9830 = vmatpush2.msra.mxu0 0.0
      %9831 = vmatprep.subr.mxu0 0.0
      %9832 = vmatpush2.msra.mxu0 0.0
      %9833 = vmatprep.subr.mxu0 0.0
      %9834 = vmatpush2.msra.mxu0 0.0
      %9835 = vmatprep.subr.mxu0 0.0
      %9836 = vmatpush2.msra.mxu0 0.0
      %9837 = vmatprep.subr.mxu0 0.0
      %9838 = vmatpush2.msra.mxu0 0.0
      %9839 = vmatprep.subr.mxu0 0.0
      %9840 = vmatpush2.msra.mxu0 0.0
      %9841 = vmatprep.subr.mxu0 0.0
      %9842 = vmatpush2.msra.mxu0 0.0
      %9843 = vmatprep.subr.mxu0 0.0
      %9844 = vmatpush2.msra.mxu0 0.0
      %9845 = vmatprep.subr.mxu0 0.0
      %9846 = vmatpush2.msra.mxu0 0.0
      %9847 = vmatprep.subr.mxu0 0.0
      %9848 = vmatpush2.msra.mxu0 0.0
      %9849 = vmatprep.subr.mxu0 0.0
      %9850 = vmatpush2.msra.mxu0 0.0
      %9851 = vmatprep.subr.mxu0 0.0
      %9852 = vmatpush2.msra.mxu0 0.0
      %9853 = vmatprep.subr.mxu0 0.0
      %9854 = vmatpush2.msra.mxu0 0.0
      %9855 = vmatprep.subr.mxu0 0.0
      %9856 = vmatpush2.msra.mxu0 0.0
      %9857 = vmatprep.mubr.f32.mxu0 0.0
      %9858 = vmatmul.mubr.f32.gmra.mxu0 %v9788
      %v9859 = vpop.f32.mrf.mxu0
      %v9860 = vadd.f32 0.0, %v9859
      %v9861 = vpop.f32.mrf.mxu0
      %9862 = vmatprep.mubr.f32.mxu0 0.0
      %9863 = vmatmul.mubr.f32.gmra.mxu0 %v9791
      %v9864 = vpop.f32.mrf.mxu0
      %v9865 = vadd.f32 0.0, %v9864
      %v9866 = vpop.f32.mrf.mxu0
      %9867 = vdwg.mxu0
      %v9868 = vadd.f32 %v9770, %v9860
      %v9869 = vadd.f32 %v9771, %v9865
      %s9870 = scalar_lea.vmem %s9, 64
      %v9871 = vld [vmem:[%s9870] sm:$0xff]
      %v9872 = vld [vmem:[%s9870 + $0x8] sm:$0x3]
      %9873 = vrot.lane.b32.xlu0 %v9487, 99
      %v9874 = vpop.permute.xlu0 %9873
      %9875 = vrot.lane.b32.xlu0 %v9488, 99
      %v9876 = vpop.permute.xlu0 %9875
      %9877 = vrot.lane.b32.xlu0 %v9489, 99
      %v9878 = vpop.permute.xlu0 %9877
      %9879 = vrot.lane.b32.xlu0 %v9490, 99
      %v9880 = vpop.permute.xlu0 %9879
      %v9886 = vsel %vm2330, %v9871, 0
      %v9889 = vsel %vm2330, %v9872, 0
      %9891 = vmatprep.subr.mxu0 0.0
      %9892 = vmatpush1.msra.mxu0 0.0
      %9893 = vmatprep.subr.mxu0 0.0
      %9894 = vmatpush1.msra.mxu0 0.0
      %9895 = vmatprep.subr.mxu0 0.0
      %9896 = vmatpush1.msra.mxu0 0.0
      %9897 = vmatprep.subr.mxu0 0.0
      %9898 = vmatpush1.msra.mxu0 0.0
      %9899 = vmatprep.subr.mxu0 0.0
      %9900 = vmatpush1.msra.mxu0 0.0
      %9901 = vmatprep.subr.mxu0 0.0
      %9902 = vmatpush1.msra.mxu0 0.0
      %9903 = vmatprep.subr.mxu0 0.0
      %9904 = vmatpush1.msra.mxu0 0.0
      %9905 = vmatprep.subr.mxu0 0.0
      %9906 = vmatpush1.msra.mxu0 0.0
      %9907 = vmatprep.subr.mxu0 0.0
      %9908 = vmatpush1.msra.mxu0 0.0
      %9909 = vmatprep.subr.mxu0 0.0
      %9910 = vmatpush1.msra.mxu0 0.0
      %9911 = vmatprep.subr.mxu0 0.0
      %9912 = vmatpush1.msra.mxu0 0.0
      %9913 = vmatprep.subr.mxu0 0.0
      %9914 = vmatpush1.msra.mxu0 0.0
      %9915 = vmatprep.subr.mxu0 0.0
      %9916 = vmatpush1.msra.mxu0 %v9880
      %9917 = vmatprep.subr.mxu0 0.0
      %9918 = vmatpush1.msra.mxu0 %v9878
      %9919 = vmatprep.subr.mxu0 0.0
      %9920 = vmatpush1.msra.mxu0 %v9876
      %9921 = vmatprep.subr.mxu0 0.0
      %9922 = vmatpush1.msra.mxu0 %v9874
      %9923 = vmatprep.subr.mxu0 0.0
      %9924 = vmatpush2.msra.mxu0 0.0
      %9925 = vmatprep.subr.mxu0 0.0
      %9926 = vmatpush2.msra.mxu0 0.0
      %9927 = vmatprep.subr.mxu0 0.0
      %9928 = vmatpush2.msra.mxu0 0.0
      %9929 = vmatprep.subr.mxu0 0.0
      %9930 = vmatpush2.msra.mxu0 0.0
      %9931 = vmatprep.subr.mxu0 0.0
      %9932 = vmatpush2.msra.mxu0 0.0
      %9933 = vmatprep.subr.mxu0 0.0
      %9934 = vmatpush2.msra.mxu0 0.0
      %9935 = vmatprep.subr.mxu0 0.0
      %9936 = vmatpush2.msra.mxu0 0.0
      %9937 = vmatprep.subr.mxu0 0.0
      %9938 = vmatpush2.msra.mxu0 0.0
      %9939 = vmatprep.subr.mxu0 0.0
      %9940 = vmatpush2.msra.mxu0 0.0
      %9941 = vmatprep.subr.mxu0 0.0
      %9942 = vmatpush2.msra.mxu0 0.0
      %9943 = vmatprep.subr.mxu0 0.0
      %9944 = vmatpush2.msra.mxu0 0.0
      %9945 = vmatprep.subr.mxu0 0.0
      %9946 = vmatpush2.msra.mxu0 0.0
      %9947 = vmatprep.subr.mxu0 0.0
      %9948 = vmatpush2.msra.mxu0 0.0
      %9949 = vmatprep.subr.mxu0 0.0
      %9950 = vmatpush2.msra.mxu0 0.0
      %9951 = vmatprep.subr.mxu0 0.0
      %9952 = vmatpush2.msra.mxu0 0.0
      %9953 = vmatprep.subr.mxu0 0.0
      %9954 = vmatpush2.msra.mxu0 0.0
      %9955 = vmatprep.mubr.f32.mxu0 0.0
      %9956 = vmatmul.mubr.f32.gmra.mxu0 %v9886
      %v9957 = vpop.f32.mrf.mxu0
      %v9958 = vadd.f32 0.0, %v9957
      %v9959 = vpop.f32.mrf.mxu0
      %9960 = vmatprep.mubr.f32.mxu0 0.0
      %9961 = vmatmul.mubr.f32.gmra.mxu0 %v9889
      %v9962 = vpop.f32.mrf.mxu0
      %v9963 = vadd.f32 0.0, %v9962
      %v9964 = vpop.f32.mrf.mxu0
      %9965 = vdwg.mxu0
      %v9966 = vadd.f32 %v9868, %v9958
      %v9967 = vadd.f32 %v9869, %v9963
      %s9968 = scalar_lea.vmem %s9, 80
      %v9969 = vld [vmem:[%s9968] sm:$0xff]
      %v9970 = vld [vmem:[%s9968 + $0x8] sm:$0x3]
      %9971 = vrot.lane.b32.xlu0 %v9487, 98
      %v9972 = vpop.permute.xlu0 %9971
      %9973 = vrot.lane.b32.xlu0 %v9488, 98
      %v9974 = vpop.permute.xlu0 %9973
      %9975 = vrot.lane.b32.xlu0 %v9489, 98
      %v9976 = vpop.permute.xlu0 %9975
      %9977 = vrot.lane.b32.xlu0 %v9490, 98
      %v9978 = vpop.permute.xlu0 %9977
      %v9984 = vsel %vm2330, %v9969, 0
      %v9987 = vsel %vm2330, %v9970, 0
      %9989 = vmatprep.subr.mxu0 0.0
      %9990 = vmatpush1.msra.mxu0 0.0
      %9991 = vmatprep.subr.mxu0 0.0
      %9992 = vmatpush1.msra.mxu0 0.0
      %9993 = vmatprep.subr.mxu0 0.0
      %9994 = vmatpush1.msra.mxu0 0.0
      %9995 = vmatprep.subr.mxu0 0.0
      %9996 = vmatpush1.msra.mxu0 0.0
      %9997 = vmatprep.subr.mxu0 0.0
      %9998 = vmatpush1.msra.mxu0 0.0
      %9999 = vmatprep.subr.mxu0 0.0
      %10000 = vmatpush1.msra.mxu0 0.0
      %10001 = vmatprep.subr.mxu0 0.0
      %10002 = vmatpush1.msra.mxu0 0.0
      %10003 = vmatprep.subr.mxu0 0.0
      %10004 = vmatpush1.msra.mxu0 0.0
      %10005 = vmatprep.subr.mxu0 0.0
      %10006 = vmatpush1.msra.mxu0 0.0
      %10007 = vmatprep.subr.mxu0 0.0
      %10008 = vmatpush1.msra.mxu0 0.0
      %10009 = vmatprep.subr.mxu0 0.0
      %10010 = vmatpush1.msra.mxu0 0.0
      %10011 = vmatprep.subr.mxu0 0.0
      %10012 = vmatpush1.msra.mxu0 0.0
      %10013 = vmatprep.subr.mxu0 0.0
      %10014 = vmatpush1.msra.mxu0 %v9978
      %10015 = vmatprep.subr.mxu0 0.0
      %10016 = vmatpush1.msra.mxu0 %v9976
      %10017 = vmatprep.subr.mxu0 0.0
      %10018 = vmatpush1.msra.mxu0 %v9974
      %10019 = vmatprep.subr.mxu0 0.0
      %10020 = vmatpush1.msra.mxu0 %v9972
      %10021 = vmatprep.subr.mxu0 0.0
      %10022 = vmatpush2.msra.mxu0 0.0
      %10023 = vmatprep.subr.mxu0 0.0
      %10024 = vmatpush2.msra.mxu0 0.0
      %10025 = vmatprep.subr.mxu0 0.0
      %10026 = vmatpush2.msra.mxu0 0.0
      %10027 = vmatprep.subr.mxu0 0.0
      %10028 = vmatpush2.msra.mxu0 0.0
      %10029 = vmatprep.subr.mxu0 0.0
      %10030 = vmatpush2.msra.mxu0 0.0
      %10031 = vmatprep.subr.mxu0 0.0
      %10032 = vmatpush2.msra.mxu0 0.0
      %10033 = vmatprep.subr.mxu0 0.0
      %10034 = vmatpush2.msra.mxu0 0.0
      %10035 = vmatprep.subr.mxu0 0.0
      %10036 = vmatpush2.msra.mxu0 0.0
      %10037 = vmatprep.subr.mxu0 0.0
      %10038 = vmatpush2.msra.mxu0 0.0
      %10039 = vmatprep.subr.mxu0 0.0
      %10040 = vmatpush2.msra.mxu0 0.0
      %10041 = vmatprep.subr.mxu0 0.0
      %10042 = vmatpush2.msra.mxu0 0.0
      %10043 = vmatprep.subr.mxu0 0.0
      %10044 = vmatpush2.msra.mxu0 0.0
      %10045 = vmatprep.subr.mxu0 0.0
      %10046 = vmatpush2.msra.mxu0 0.0
      %10047 = vmatprep.subr.mxu0 0.0
      %10048 = vmatpush2.msra.mxu0 0.0
      %10049 = vmatprep.subr.mxu0 0.0
      %10050 = vmatpush2.msra.mxu0 0.0
      %10051 = vmatprep.subr.mxu0 0.0
      %10052 = vmatpush2.msra.mxu0 0.0
      %10053 = vmatprep.mubr.f32.mxu0 0.0
      %10054 = vmatmul.mubr.f32.gmra.mxu0 %v9984
      %v10055 = vpop.f32.mrf.mxu0
      %v10056 = vadd.f32 0.0, %v10055
      %v10057 = vpop.f32.mrf.mxu0
      %10058 = vmatprep.mubr.f32.mxu0 0.0
      %10059 = vmatmul.mubr.f32.gmra.mxu0 %v9987
      %v10060 = vpop.f32.mrf.mxu0
      %v10061 = vadd.f32 0.0, %v10060
      %v10062 = vpop.f32.mrf.mxu0
      %10063 = vdwg.mxu0
      %v10064 = vadd.f32 %v9966, %v10056
      %v10065 = vadd.f32 %v9967, %v10061
      %s10066 = scalar_lea.vmem %s9, 96
      %v10067 = vld [vmem:[%s10066] sm:$0xff]
      %v10068 = vld [vmem:[%s10066 + $0x8] sm:$0x3]
      %10069 = vrot.lane.b32.xlu0 %v9487, 72
      %v10070 = vpop.permute.xlu0 %10069
      %10071 = vrot.lane.b32.xlu0 %v9488, 72
      %v10072 = vpop.permute.xlu0 %10071
      %10073 = vrot.lane.b32.xlu0 %v9489, 72
      %v10074 = vpop.permute.xlu0 %10073
      %10075 = vrot.lane.b32.xlu0 %v9490, 72
      %v10076 = vpop.permute.xlu0 %10075
      %v10082 = vsel %vm2330, %v10067, 0
      %v10085 = vsel %vm2330, %v10068, 0
      %10087 = vmatprep.subr.mxu0 0.0
      %10088 = vmatpush1.msra.mxu0 0.0
      %10089 = vmatprep.subr.mxu0 0.0
      %10090 = vmatpush1.msra.mxu0 0.0
      %10091 = vmatprep.subr.mxu0 0.0
      %10092 = vmatpush1.msra.mxu0 0.0
      %10093 = vmatprep.subr.mxu0 0.0
      %10094 = vmatpush1.msra.mxu0 0.0
      %10095 = vmatprep.subr.mxu0 0.0
      %10096 = vmatpush1.msra.mxu0 0.0
      %10097 = vmatprep.subr.mxu0 0.0
      %10098 = vmatpush1.msra.mxu0 0.0
      %10099 = vmatprep.subr.mxu0 0.0
      %10100 = vmatpush1.msra.mxu0 0.0
      %10101 = vmatprep.subr.mxu0 0.0
      %10102 = vmatpush1.msra.mxu0 0.0
      %10103 = vmatprep.subr.mxu0 0.0
      %10104 = vmatpush1.msra.mxu0 0.0
      %10105 = vmatprep.subr.mxu0 0.0
      %10106 = vmatpush1.msra.mxu0 0.0
      %10107 = vmatprep.subr.mxu0 0.0
      %10108 = vmatpush1.msra.mxu0 0.0
      %10109 = vmatprep.subr.mxu0 0.0
      %10110 = vmatpush1.msra.mxu0 0.0
      %10111 = vmatprep.subr.mxu0 0.0
      %10112 = vmatpush1.msra.mxu0 %v10076
      %10113 = vmatprep.subr.mxu0 0.0
      %10114 = vmatpush1.msra.mxu0 %v10074
      %10115 = vmatprep.subr.mxu0 0.0
      %10116 = vmatpush1.msra.mxu0 %v10072
      %10117 = vmatprep.subr.mxu0 0.0
      %10118 = vmatpush1.msra.mxu0 %v10070
      %10119 = vmatprep.subr.mxu0 0.0
      %10120 = vmatpush2.msra.mxu0 0.0
      %10121 = vmatprep.subr.mxu0 0.0
      %10122 = vmatpush2.msra.mxu0 0.0
      %10123 = vmatprep.subr.mxu0 0.0
      %10124 = vmatpush2.msra.mxu0 0.0
      %10125 = vmatprep.subr.mxu0 0.0
      %10126 = vmatpush2.msra.mxu0 0.0
      %10127 = vmatprep.subr.mxu0 0.0
      %10128 = vmatpush2.msra.mxu0 0.0
      %10129 = vmatprep.subr.mxu0 0.0
      %10130 = vmatpush2.msra.mxu0 0.0
      %10131 = vmatprep.subr.mxu0 0.0
      %10132 = vmatpush2.msra.mxu0 0.0
      %10133 = vmatprep.subr.mxu0 0.0
      %10134 = vmatpush2.msra.mxu0 0.0
      %10135 = vmatprep.subr.mxu0 0.0
      %10136 = vmatpush2.msra.mxu0 0.0
      %10137 = vmatprep.subr.mxu0 0.0
      %10138 = vmatpush2.msra.mxu0 0.0
      %10139 = vmatprep.subr.mxu0 0.0
      %10140 = vmatpush2.msra.mxu0 0.0
      %10141 = vmatprep.subr.mxu0 0.0
      %10142 = vmatpush2.msra.mxu0 0.0
      %10143 = vmatprep.subr.mxu0 0.0
      %10144 = vmatpush2.msra.mxu0 0.0
      %10145 = vmatprep.subr.mxu0 0.0
      %10146 = vmatpush2.msra.mxu0 0.0
      %10147 = vmatprep.subr.mxu0 0.0
      %10148 = vmatpush2.msra.mxu0 0.0
      %10149 = vmatprep.subr.mxu0 0.0
      %10150 = vmatpush2.msra.mxu0 0.0
      %10151 = vmatprep.mubr.f32.mxu0 0.0
      %10152 = vmatmul.mubr.f32.gmra.mxu0 %v10082
      %v10153 = vpop.f32.mrf.mxu0
      %v10154 = vadd.f32 0.0, %v10153
      %v10155 = vpop.f32.mrf.mxu0
      %10156 = vmatprep.mubr.f32.mxu0 0.0
      %10157 = vmatmul.mubr.f32.gmra.mxu0 %v10085
      %v10158 = vpop.f32.mrf.mxu0
      %v10159 = vadd.f32 0.0, %v10158
      %v10160 = vpop.f32.mrf.mxu0
      %10161 = vdwg.mxu0
      %v10162 = vadd.f32 %v10064, %v10154
      %v10163 = vadd.f32 %v10065, %v10159
      %s10164 = scalar_lea.vmem %s9, 112
      %v10165 = vld [vmem:[%s10164] sm:$0xff]
      %v10166 = vld [vmem:[%s10164 + $0x8] sm:$0x3]
      %10167 = vrot.lane.b32.xlu0 %v9487, 71
      %v10168 = vpop.permute.xlu0 %10167
      %10169 = vrot.lane.b32.xlu0 %v9488, 71
      %v10170 = vpop.permute.xlu0 %10169
      %10171 = vrot.lane.b32.xlu0 %v9489, 71
      %v10172 = vpop.permute.xlu0 %10171
      %10173 = vrot.lane.b32.xlu0 %v9490, 71
      %v10174 = vpop.permute.xlu0 %10173
      %v10180 = vsel %vm2330, %v10165, 0
      %v10183 = vsel %vm2330, %v10166, 0
      %10185 = vmatprep.subr.mxu0 0.0
      %10186 = vmatpush1.msra.mxu0 0.0
      %10187 = vmatprep.subr.mxu0 0.0
      %10188 = vmatpush1.msra.mxu0 0.0
      %10189 = vmatprep.subr.mxu0 0.0
      %10190 = vmatpush1.msra.mxu0 0.0
      %10191 = vmatprep.subr.mxu0 0.0
      %10192 = vmatpush1.msra.mxu0 0.0
      %10193 = vmatprep.subr.mxu0 0.0
      %10194 = vmatpush1.msra.mxu0 0.0
      %10195 = vmatprep.subr.mxu0 0.0
      %10196 = vmatpush1.msra.mxu0 0.0
      %10197 = vmatprep.subr.mxu0 0.0
      %10198 = vmatpush1.msra.mxu0 0.0
      %10199 = vmatprep.subr.mxu0 0.0
      %10200 = vmatpush1.msra.mxu0 0.0
      %10201 = vmatprep.subr.mxu0 0.0
      %10202 = vmatpush1.msra.mxu0 0.0
      %10203 = vmatprep.subr.mxu0 0.0
      %10204 = vmatpush1.msra.mxu0 0.0
      %10205 = vmatprep.subr.mxu0 0.0
      %10206 = vmatpush1.msra.mxu0 0.0
      %10207 = vmatprep.subr.mxu0 0.0
      %10208 = vmatpush1.msra.mxu0 0.0
      %10209 = vmatprep.subr.mxu0 0.0
      %10210 = vmatpush1.msra.mxu0 %v10174
      %10211 = vmatprep.subr.mxu0 0.0
      %10212 = vmatpush1.msra.mxu0 %v10172
      %10213 = vmatprep.subr.mxu0 0.0
      %10214 = vmatpush1.msra.mxu0 %v10170
      %10215 = vmatprep.subr.mxu0 0.0
      %10216 = vmatpush1.msra.mxu0 %v10168
      %10217 = vmatprep.subr.mxu0 0.0
      %10218 = vmatpush2.msra.mxu0 0.0
      %10219 = vmatprep.subr.mxu0 0.0
      %10220 = vmatpush2.msra.mxu0 0.0
      %10221 = vmatprep.subr.mxu0 0.0
      %10222 = vmatpush2.msra.mxu0 0.0
      %10223 = vmatprep.subr.mxu0 0.0
      %10224 = vmatpush2.msra.mxu0 0.0
      %10225 = vmatprep.subr.mxu0 0.0
      %10226 = vmatpush2.msra.mxu0 0.0
      %10227 = vmatprep.subr.mxu0 0.0
      %10228 = vmatpush2.msra.mxu0 0.0
      %10229 = vmatprep.subr.mxu0 0.0
      %10230 = vmatpush2.msra.mxu0 0.0
      %10231 = vmatprep.subr.mxu0 0.0
      %10232 = vmatpush2.msra.mxu0 0.0
      %10233 = vmatprep.subr.mxu0 0.0
      %10234 = vmatpush2.msra.mxu0 0.0
      %10235 = vmatprep.subr.mxu0 0.0
      %10236 = vmatpush2.msra.mxu0 0.0
      %10237 = vmatprep.subr.mxu0 0.0
      %10238 = vmatpush2.msra.mxu0 0.0
      %10239 = vmatprep.subr.mxu0 0.0
      %10240 = vmatpush2.msra.mxu0 0.0
      %10241 = vmatprep.subr.mxu0 0.0
      %10242 = vmatpush2.msra.mxu0 0.0
      %10243 = vmatprep.subr.mxu0 0.0
      %10244 = vmatpush2.msra.mxu0 0.0
      %10245 = vmatprep.subr.mxu0 0.0
      %10246 = vmatpush2.msra.mxu0 0.0
      %10247 = vmatprep.subr.mxu0 0.0
      %10248 = vmatpush2.msra.mxu0 0.0
      %10249 = vmatprep.mubr.f32.mxu0 0.0
      %10250 = vmatmul.mubr.f32.gmra.mxu0 %v10180
      %v10251 = vpop.f32.mrf.mxu0
      %v10252 = vadd.f32 0.0, %v10251
      %v10253 = vpop.f32.mrf.mxu0
      %10254 = vmatprep.mubr.f32.mxu0 0.0
      %10255 = vmatmul.mubr.f32.gmra.mxu0 %v10183
      %v10256 = vpop.f32.mrf.mxu0
      %v10257 = vadd.f32 0.0, %v10256
      %v10258 = vpop.f32.mrf.mxu0
      %10259 = vdwg.mxu0
      %v10260 = vadd.f32 %v10162, %v10252
      %v10261 = vadd.f32 %v10163, %v10257
      %s10262 = scalar_lea.vmem %s9, 128
      %v10263 = vld [vmem:[%s10262] sm:$0xff]
      %v10264 = vld [vmem:[%s10262 + $0x8] sm:$0x3]
      %10265 = vrot.lane.b32.xlu0 %v9487, 70
      %v10266 = vpop.permute.xlu0 %10265
      %10267 = vrot.lane.b32.xlu0 %v9488, 70
      %v10268 = vpop.permute.xlu0 %10267
      %10269 = vrot.lane.b32.xlu0 %v9489, 70
      %v10270 = vpop.permute.xlu0 %10269
      %10271 = vrot.lane.b32.xlu0 %v9490, 70
      %v10272 = vpop.permute.xlu0 %10271
      %v10278 = vsel %vm2330, %v10263, 0
      %v10281 = vsel %vm2330, %v10264, 0
      %10283 = vmatprep.subr.mxu0 0.0
      %10284 = vmatpush1.msra.mxu0 0.0
      %10285 = vmatprep.subr.mxu0 0.0
      %10286 = vmatpush1.msra.mxu0 0.0
      %10287 = vmatprep.subr.mxu0 0.0
      %10288 = vmatpush1.msra.mxu0 0.0
      %10289 = vmatprep.subr.mxu0 0.0
      %10290 = vmatpush1.msra.mxu0 0.0
      %10291 = vmatprep.subr.mxu0 0.0
      %10292 = vmatpush1.msra.mxu0 0.0
      %10293 = vmatprep.subr.mxu0 0.0
      %10294 = vmatpush1.msra.mxu0 0.0
      %10295 = vmatprep.subr.mxu0 0.0
      %10296 = vmatpush1.msra.mxu0 0.0
      %10297 = vmatprep.subr.mxu0 0.0
      %10298 = vmatpush1.msra.mxu0 0.0
      %10299 = vmatprep.subr.mxu0 0.0
      %10300 = vmatpush1.msra.mxu0 0.0
      %10301 = vmatprep.subr.mxu0 0.0
      %10302 = vmatpush1.msra.mxu0 0.0
      %10303 = vmatprep.subr.mxu0 0.0
      %10304 = vmatpush1.msra.mxu0 0.0
      %10305 = vmatprep.subr.mxu0 0.0
      %10306 = vmatpush1.msra.mxu0 0.0
      %10307 = vmatprep.subr.mxu0 0.0
      %10308 = vmatpush1.msra.mxu0 %v10272
      %10309 = vmatprep.subr.mxu0 0.0
      %10310 = vmatpush1.msra.mxu0 %v10270
      %10311 = vmatprep.subr.mxu0 0.0
      %10312 = vmatpush1.msra.mxu0 %v10268
      %10313 = vmatprep.subr.mxu0 0.0
      %10314 = vmatpush1.msra.mxu0 %v10266
      %10315 = vmatprep.subr.mxu0 0.0
      %10316 = vmatpush2.msra.mxu0 0.0
      %10317 = vmatprep.subr.mxu0 0.0
      %10318 = vmatpush2.msra.mxu0 0.0
      %10319 = vmatprep.subr.mxu0 0.0
      %10320 = vmatpush2.msra.mxu0 0.0
      %10321 = vmatprep.subr.mxu0 0.0
      %10322 = vmatpush2.msra.mxu0 0.0
      %10323 = vmatprep.subr.mxu0 0.0
      %10324 = vmatpush2.msra.mxu0 0.0
      %10325 = vmatprep.subr.mxu0 0.0
      %10326 = vmatpush2.msra.mxu0 0.0
      %10327 = vmatprep.subr.mxu0 0.0
      %10328 = vmatpush2.msra.mxu0 0.0
      %10329 = vmatprep.subr.mxu0 0.0
      %10330 = vmatpush2.msra.mxu0 0.0
      %10331 = vmatprep.subr.mxu0 0.0
      %10332 = vmatpush2.msra.mxu0 0.0
      %10333 = vmatprep.subr.mxu0 0.0
      %10334 = vmatpush2.msra.mxu0 0.0
      %10335 = vmatprep.subr.mxu0 0.0
      %10336 = vmatpush2.msra.mxu0 0.0
      %10337 = vmatprep.subr.mxu0 0.0
      %10338 = vmatpush2.msra.mxu0 0.0
      %10339 = vmatprep.subr.mxu0 0.0
      %10340 = vmatpush2.msra.mxu0 0.0
      %10341 = vmatprep.subr.mxu0 0.0
      %10342 = vmatpush2.msra.mxu0 0.0
      %10343 = vmatprep.subr.mxu0 0.0
      %10344 = vmatpush2.msra.mxu0 0.0
      %10345 = vmatprep.subr.mxu0 0.0
      %10346 = vmatpush2.msra.mxu0 0.0
      %10347 = vmatprep.mubr.f32.mxu0 0.0
      %10348 = vmatmul.mubr.f32.gmra.mxu0 %v10278
      %v10349 = vpop.f32.mrf.mxu0
      %v10350 = vadd.f32 0.0, %v10349
      %v10351 = vpop.f32.mrf.mxu0
      %10352 = vmatprep.mubr.f32.mxu0 0.0
      %10353 = vmatmul.mubr.f32.gmra.mxu0 %v10281
      %v10354 = vpop.f32.mrf.mxu0
      %v10355 = vadd.f32 0.0, %v10354
      %v10356 = vpop.f32.mrf.mxu0
      %10357 = vdwg.mxu0
      %v10358 = vadd.f32 %v10260, %v10350
      %v10359 = vadd.f32 %v10261, %v10355
      %v10360 = vld [vmem:[%s10] sm:$0xff]
      %v10361 = vld [vmem:[%s10 + $0x8] sm:$0x3]
      %10363 = vset.pattern.permute.xlu0 0
      %10364 = vperm.xlu0 %10363, %v10360
      %v10365 = vpop.permute.xlu0 %10364
      %10368 = vset.pattern.permute.xlu0 0
      %10369 = vperm.xlu0 %10368, %v10361
      %v10370 = vpop.permute.xlu0 %10369
      %v10372 = vadd.f32 %v10358, %v10365
      %v10373 = vadd.f32 %v10359, %v10370
      %10376 = vrot.lane.b32.xlu0 %v10372, 127
      %v10377 = vpop.permute.xlu0 %10376
      %10378 = vrot.lane.b32.xlu0 %v10373, 127
      %v10379 = vpop.permute.xlu0 %10378
      %v10382 = vmax.f32 %v10372, %v10377
      %v10383 = vmax.f32 %v10373, %v10379
      %10386 = vrot.lane.b32.xlu0 %v10382, 100
      %v10387 = vpop.permute.xlu0 %10386
      %10388 = vrot.lane.b32.xlu0 %v10383, 100
      %v10389 = vpop.permute.xlu0 %10388
      %v10392 = vmax.f32 %v10382, %v10387
      %v10393 = vmax.f32 %v10383, %v10389
      %vm10394 = vcmask 7168
      %10395 = vst.msk [vmem:[%s410] sm:$0xff] %vm10394, %v10392
      %vm10396 = vcmask 1024
      %10397 = vst.msk [vmem:[%s410 + $0x8] sm:$0x3] %vm10396, %v10393
      %p10398 = scmp.lt.s32.totalorder %s23, 1
      %s10399 = scalar_select %p10398, %s23, 1
      %s10400 = smul.addr %s10399, 2
      %s10401 = smul.addr %s10400, 8
      %s10402 = scalar_lea.vmem %s12, %s10401
      // Predicated region
      $region69: #{can_forward.1} parent=67 // pred_check
        %p10403 = pneg %p298
      $region70: #{can_forward.1} parent=67 // pred_check_branch
        %10405 = sbr.rel (%p10403) target = $region72
      $region71: #{can_forward.1} parent=67 // pred_region
        _
      $region72: #{can_forward.1} parent=67 // pred_fallthru
        _
    $region68: #{can_forward.1} parent=5 // pred_fallthru
      _
    %p10406 = scmp.le.s32.totalorder 2, %s18
    // Predicated region
    $region73: #{can_forward.1} parent=5 // pred_check
      %p10407 = pneg %p10406
    $region74: #{can_forward.1} parent=5 // pred_check_branch
      %10409 = sbr.rel (%p10407) target = $region76
    $region75: #{can_forward.1} parent=5 // pred_region
      %s10410 = ssub.s32 %s18, 2
      // Predicated region
      $region77: #{can_forward.1} parent=75 // pred_check
        %p10411 = pneg %p304
      $region78: #{can_forward.1} parent=75 // pred_check_branch
        %10413 = sbr.rel (%p10411) target = $region80
      $region79: #{can_forward.1} parent=75 // pred_region
        %p10414 = scmp.lt.s32.totalorder %s24, 1
        %s10415 = scalar_select %p10414, %s24, 1
        %s10416 = smul.addr %s10415, 2
        %s10417 = smul.addr %s10416, 8
        %s10418 = scalar_lea.vmem %s12, %s10417
      $region80: #{can_forward.1} parent=75 // pred_fallthru
        _
    $region76: #{can_forward.1} parent=5 // pred_fallthru
      _
  $region6: #{can_forward.1} parent=0 // loop_footer
    %s22 = sadd.s32 1, %s18
  $region7: #{can_forward.1} parent=0 // loop_footer_branch
    %17 = sbr.rel target = $region3
  $region8: #{can_forward.1} parent=0 // loop_exit
    _

</llo_original>
